<compile_context>
chip_gen: v7x
topology: tpu7x:2x2x1
jax: 0.10.0
libtpu: 0.0.40
codegen_flags: <defaults>
</compile_context>

<pallas_src>
import functools

import jax
import jax.numpy as jnp
from jax import lax
from jax.experimental import pallas as pl
from jax.experimental.pallas import tpu as pltpu

HIDDEN_LSTM = 24
HIDDEN_DENSE = 64
INPUT_DIM = 20
SEQ_TOTAL = 238  # module indexes positions up to 68, but expects L = 238

SEQ_SLICES = (
    ("pep", (0, 9)),      # np.arange(9)
    ("cdr3a", (24, 39)),  # np.arange(24, 39)
    ("cdr3b", (52, 69)),  # np.arange(52, 69)
)
SEQ_LENS = tuple(e - s for _, (s, e) in SEQ_SLICES)   # (9, 15, 17)
N_SEQ = len(SEQ_SLICES)
N_DIR = 2 * N_SEQ                                     # 6 directions
HH = N_DIR * HIDDEN_LSTM                              # 144 true stacked hidden
HH_PAD = 256                                          # gate blocks 128-aligned
G_PAD = 4 * HH_PAD                                    # 1024 gate columns
FEAT = 128                                            # 6*20=120 bands -> 128 lanes


def _sigmoid(x):
    # exact identity sigma(x) = 0.5*(1 + tanh(x/2)): single EUP op per vreg.
    return 0.5 * jnp.tanh(0.5 * x) + 0.5


# ----------------------------------------------------------------------------
# Fused Pallas kernel: 6 LSTM directions + dense head (one batch tile)
# ----------------------------------------------------------------------------
def _fused_lstm_dense_kernel(xcat_ref, wih_ref, b_ref, whh_ref,
                             w1_ref, b1_ref, w2_ref, b2_ref,
                             out_ref, xw_ref, *, seq_lens, hidden):
    """Fused forward for one batch tile of TB rows.

    xcat_ref : (t_max, TB, FEAT) f32   time-major; band d = direction d's input
                                       (reverse directions already reversed).
    wih_ref  : (FEAT, G_PAD)   bf16    combined input->gate weights (gate-major).
    b_ref    : (1, G_PAD)      f32     combined bias (b_ih + b_hh per direction).
    whh_ref  : (HH_PAD, G_PAD) bf16    block-diagonal hidden->gate weights.
    w1_ref   : (HH_PAD, HD) bf16, b1_ref (1, HD) f32     dense_in
    w2_ref   : (HD, 1) bf16,      b2_ref (1, 1)  f32     dense_out
    out_ref  : (TB, 1)         f32     sigmoid output
    xw_ref   : (t_max*TB, G_PAD) f32   scratch: hoisted input projection
    """
    t_max = max(seq_lens)
    tb = out_ref.shape[0]
    feat = xcat_ref.shape[-1]
    hhp = whh_ref.shape[0]
    H = hidden

    # ---- hoisted input projection (+bias): all steps/directions/gates at once.
    # (t_max, tb, feat) -> (t_max*tb, feat) collapse is layout-preserving for
    # f32 with tb % 8 == 0; cast to bf16 only for the MXU operand.
    xflat = xcat_ref[...].reshape(t_max * tb, feat).astype(jnp.bfloat16)
    proj = jnp.dot(xflat, wih_ref[...], preferred_element_type=jnp.float32)
    xw_ref[...] = proj + b_ref[...]

    whh = whh_ref[...]                                 # bf16, VMEM-resident

    # ---- snapshot masks (built once; used at 3 static steps only) ----
    hcol = lax.broadcasted_iota(jnp.int32, (tb, hhp), 1)
    snap = [jnp.logical_and(hcol >= 2 * s * H, hcol < 2 * (s + 1) * H)
            for s in range(len(seq_lens))]

    h = jnp.zeros((tb, hhp), jnp.float32)
    c = jnp.zeros((tb, hhp), jnp.float32)
    h_feat = jnp.zeros((tb, hhp), jnp.float32)

    # ---- single shared recurrence, fully unrolled (t_max static steps) ----
    for t in range(t_max):
        gates = xw_ref[pl.ds(t * tb, tb), :] + jnp.dot(
            h.astype(jnp.bfloat16), whh, preferred_element_type=jnp.float32)
        # gate blocks are 128-lane aligned (hhp = 256): clean aligned slices
        i_g = _sigmoid(gates[:, 0 * hhp:1 * hhp])
        f_g = _sigmoid(gates[:, 1 * hhp:2 * hhp])
        g_g = jnp.tanh(gates[:, 2 * hhp:3 * hhp])
        o_g = _sigmoid(gates[:, 3 * hhp:4 * hhp])
        c = f_g * c + i_g * g_g
        h = o_g * jnp.tanh(c)
        # capture the final hidden state of any sequence that ends at this step
        # (shorter sequences may keep evolving afterwards on zero inputs, but
        #  whh is block-diagonal so they cannot perturb other directions and
        #  their later values are never read).
        for s, ts in enumerate(seq_lens):
            if t == ts - 1:
                h_feat = jnp.where(snap[s], h, h_feat)

    # ---- fused dense head: relu(dense_in) -> sigmoid(dense_out) ----
    hid = jnp.maximum(
        jnp.dot(h_feat.astype(jnp.bfloat16), w1_ref[...],
                preferred_element_type=jnp.float32) + b1_ref[...],
        0.0)
    y = jnp.dot(hid.astype(jnp.bfloat16), w2_ref[...],
                preferred_element_type=jnp.float32) + b2_ref[...]
    out_ref[...] = _sigmoid(y)


def _run_fused(xcat, cp, *, b_pad, tb):
    t_max = max(SEQ_LENS)
    feat = xcat.shape[-1]
    hhp = cp["whh"].shape[0]
    g = cp["whh"].shape[1]
    hd = cp["w1"].shape[1]
    n_tiles = b_pad // tb

    kernel = functools.partial(_fused_lstm_dense_kernel,
                               seq_lens=SEQ_LENS, hidden=HIDDEN_LSTM)
    return pl.pallas_call(
        kernel,
        out_shape=jax.ShapeDtypeStruct((b_pad, 1), jnp.float32),
        grid=(n_tiles,),
        in_specs=[
            pl.BlockSpec((t_max, tb, feat), lambda i: (0, i, 0)),  # batch-tiled
            pl.BlockSpec((feat, g), lambda i: (0, 0)),   # weights stay resident
            pl.BlockSpec((1, g), lambda i: (0, 0)),
            pl.BlockSpec((hhp, g), lambda i: (0, 0)),
            pl.BlockSpec((hhp, hd), lambda i: (0, 0)),
            pl.BlockSpec((1, hd), lambda i: (0, 0)),
            pl.BlockSpec((hd, 1), lambda i: (0, 0)),
            pl.BlockSpec((1, 1), lambda i: (0, 0)),
        ],
        out_specs=pl.BlockSpec((tb, 1), lambda i: (i, 0)),
        scratch_shapes=[pltpu.VMEM((t_max * tb, g), jnp.float32)],
        compiler_params=pltpu.CompilerParams(
            dimension_semantics=("parallel",),          # v7x: 2 TCs over batch
            vmem_limit_bytes=48 * 1024 * 1024),         # headroom < v7x 64 MiB
    )(xcat, cp["wih"], cp["b"], cp["whh"],
      cp["w1"], cp["b1"], cp["w2"], cp["b2"])


# ----------------------------------------------------------------------------
# Wrapper
# ----------------------------------------------------------------------------
def lstm_net_forward(cparams, x, *, batch_tile=256):
    """x: (B, 20, 238) channel-first, matching the PyTorch module's input.

    batch_tile: rows per grid step. ~256 for v6e/v7x; ~128 on v5e (smaller
    default scoped VMEM).
    """
    B = x.shape[0]
    t_max = max(SEQ_LENS)
    D = INPUT_DIM

    b8 = ((B + 7) // 8) * 8                     # sublane-dense batch
    tb = min(batch_tile, b8)
    n_tiles = -(-b8 // tb)
    b_pad = n_tiles * tb

    x_t = jnp.transpose(x, (0, 2, 1))           # (B, L, 20) == transpose(x, 1, 2)
    xcat = jnp.zeros((t_max, b_pad, FEAT), jnp.float32)
    for s, ((_, (lo, hi)), ts) in enumerate(zip(SEQ_SLICES, SEQ_LENS)):
        seq = jnp.transpose(x_t[:, lo:hi, :], (1, 0, 2))          # (ts, B, 20)
        pad = ((0, t_max - ts), (0, b_pad - B), (0, 0))
        fwd = jnp.pad(seq, pad)                  # forward band: x[0..ts-1], 0...
        rev = jnp.pad(seq[::-1], pad)            # reverse band: x[ts-1..0], 0...
        xcat = xcat.at[:, :, (2 * s) * D:(2 * s + 1) * D].set(fwd)
        xcat = xcat.at[:, :, (2 * s + 1) * D:(2 * s + 2) * D].set(rev)

    out = _run_fused(xcat, cparams, b_pad=b_pad, tb=tb)
    return out[:B]


# ----------------------------------------------------------------------------
# Parameter combination: per-direction PyTorch params -> fused kernel layouts
# ----------------------------------------------------------------------------
def combine_params(params):
    """Build padded, gate-major, block-diagonal layouts used by the kernel.

    Direction order d = [pep_f, pep_r, cdr3a_f, cdr3a_r, cdr3b_f, cdr3b_r].
    Gate columns: 4 blocks of HH_PAD lanes [i | f | g | o], each block
    direction-major in chunks of H; lanes >= 6*H in a block are zero-padded.
    wih rows: per-direction 20-wide input bands (band d = direction d).
    """
    H = HIDDEN_LSTM
    D = INPUT_DIM

    wih_c = jnp.zeros((FEAT, G_PAD), jnp.float32)
    whh_c = jnp.zeros((HH_PAD, G_PAD), jnp.float32)
    b_c = jnp.zeros((1, G_PAD), jnp.float32)
    for s, (name, _) in enumerate(SEQ_SLICES):
        for j, tag in enumerate(("f", "r")):
            d = 2 * s + j
            wih = params[name][f"wih_{tag}"]   # (D, 4H), torch gate order i,f,g,o
            whh = params[name][f"whh_{tag}"]   # (H, 4H)
            b = params[name][f"b_{tag}"]       # (1, 4H)
            for k in range(4):
                col = k * HH_PAD + d * H
                wih_c = wih_c.at[d * D:(d + 1) * D, col:col + H].set(
                    wih[:, k * H:(k + 1) * H])
                whh_c = whh_c.at[d * H:(d + 1) * H, col:col + H].set(
                    whh[:, k * H:(k + 1) * H])
                b_c = b_c.at[:, col:col + H].set(b[:, k * H:(k + 1) * H])

    w1 = params["w1"]
    w1_p = jnp.zeros((HH_PAD, w1.shape[1]), jnp.float32).at[:HH, :].set(w1)

    return {"wih": wih_c.astype(jnp.bfloat16),
            "whh": whh_c.astype(jnp.bfloat16),
            "b": b_c,
            "w1": w1_p.astype(jnp.bfloat16),
            "b1": params["b1"],
            "w2": params["w2"].astype(jnp.bfloat16),
            "b2": params["b2"]}


# ----------------------------------------------------------------------------
# Deterministic parameter init (PyTorch-style uniform(-1/sqrt(fan), 1/sqrt(fan)))
# ----------------------------------------------------------------------------
def init_params(key, hidden_lstm=HIDDEN_LSTM, hidden_dense=HIDDEN_DENSE,
                input_dim=INPUT_DIM):
    names = [n for n, _ in SEQ_SLICES]
    keys = iter(jax.random.split(key, len(names) * 8 + 4))

    def u(k, shape, bound):
        return jax.random.uniform(k, shape, jnp.float32, -bound, bound)

    params = {}
    bound = 1.0 / (hidden_lstm ** 0.5)
    for name in names:
        p = {}
        for tag in ("f", "r"):  # forward / reverse direction
            wih = u(next(keys), (4 * hidden_lstm, input_dim), bound)    # torch layout
            whh = u(next(keys), (4 * hidden_lstm, hidden_lstm), bound)  # torch layout
            bih = u(next(keys), (4 * hidden_lstm,), bound)
            bhh = u(next(keys), (4 * hidden_lstm,), bound)
            p[f"wih_{tag}"] = wih.T                  # (D, 4H) for x @ W
            p[f"whh_{tag}"] = whh.T                  # (H, 4H) for h @ W
            p[f"b_{tag}"] = (bih + bhh)[None, :]     # (1, 4H)
        params[name] = p

    in_feat = hidden_lstm * 3 * 2
    b1 = 1.0 / (in_feat ** 0.5)
    params["w1"] = u(next(keys), (in_feat, hidden_dense), b1)
    params["b1"] = u(next(keys), (1, hidden_dense), b1)
    b2 = 1.0 / (hidden_dense ** 0.5)
    params["w2"] = u(next(keys), (hidden_dense, 1), b2)
    params["b2"] = u(next(keys), (1, 1), b2)
    return params


# ----------------------------------------------------------------------------
# Pure-JAX references (per-direction LSTMs; correctness checks)
# ----------------------------------------------------------------------------
def _lstm_ref(seq_tm, wih, whh, b, mm):
    H = whh.shape[0]
    B = seq_tm.shape[1]

    def step(carry, xt):
        h, c = carry
        gates = mm(xt, wih) + mm(h, whh) + b
        i = jax.nn.sigmoid(gates[:, 0:H])
        f = jax.nn.sigmoid(gates[:, H:2 * H])
        g = jnp.tanh(gates[:, 2 * H:3 * H])
        o = jax.nn.sigmoid(gates[:, 3 * H:4 * H])
        c = f * c + i * g
        h = o * jnp.tanh(c)
        return (h, c), None

    (h, _), _ = lax.scan(
        step,
        (jnp.zeros((B, H), jnp.float32), jnp.zeros((B, H), jnp.float32)),
        seq_tm)
    return h


def forward_ref(params, x, *, bf16_matmul=False):
    if bf16_matmul:
        def mm(a, b):
            return jnp.dot(a.astype(jnp.bfloat16), b.astype(jnp.bfloat16),
                           preferred_element_type=jnp.float32)
    else:
        def mm(a, b):
            return jnp.dot(a, b, preferred_element_type=jnp.float32)

    x_t = jnp.transpose(x, (0, 2, 1))
    feats = []
    for name, (s, e) in SEQ_SLICES:
        seq_tm = jnp.transpose(x_t[:, s:e, :], (1, 0, 2))
        p = params[name]
        h_f = _lstm_ref(seq_tm, p["wih_f"], p["whh_f"], p["b_f"], mm)
        h_r = _lstm_ref(seq_tm[::-1], p["wih_r"], p["whh_r"], p["b_r"], mm)
        feats.append(jnp.concatenate([h_f, h_r], axis=-1))
    stacked = jnp.concatenate(feats, axis=-1)
    h = jnp.maximum(mm(stacked, params["w1"]) + params["b1"], 0.0)
    return jax.nn.sigmoid(mm(h, params["w2"]) + params["b2"])


# ----------------------------------------------------------------------------
if __name__ == "__main__":
    key = jax.random.PRNGKey(0)
    pkey, xkey = jax.random.split(key)

    params = init_params(pkey)
    cparams = combine_params(params)

    B = 2
    x = jax.random.normal(xkey, (B, INPUT_DIM, SEQ_TOTAL), dtype=jnp.float32)

    fwd = jax.jit(functools.partial(lstm_net_forward, cparams))
    out = jax.block_until_ready(fwd(x))

    ref_b16 = jax.block_until_ready(forward_ref(params, x, bf16_matmul=True))
    ref_f32 = jax.block_until_ready(forward_ref(params, x))

    assert out.shape == (B, 1), out.shape
    assert bool(jnp.all(jnp.isfinite(out)))
    # matched-precision reference (bf16 MXU operands, f32 accumulation)
    assert bool(jnp.allclose(out, ref_b16, atol=5e-3)), (out, ref_b16)
    # full-f32 reference: allow bf16 operand-rounding drift over the 17-step chain
    assert bool(jnp.allclose(out, ref_f32, atol=2.5e-2)), (out, ref_f32)

    print("KERNEL_OK")
</pallas_src>

<mosaic_0001>
module attributes {stable_mosaic.version = 11 : i64} {
  func.func @_fused_lstm_dense_kernel(%arg0: i32, %arg1: memref<17x8x128xf32, #tpu.memory_space<vmem>>, %arg2: memref<128x1024xbf16, #tpu.memory_space<vmem>>, %arg3: memref<1x1024xf32, #tpu.memory_space<vmem>>, %arg4: memref<256x1024xbf16, #tpu.memory_space<vmem>>, %arg5: memref<256x64xbf16, #tpu.memory_space<vmem>>, %arg6: memref<1x64xf32, #tpu.memory_space<vmem>>, %arg7: memref<64x1xbf16, #tpu.memory_space<vmem>>, %arg8: memref<1x1xf32, #tpu.memory_space<vmem>>, %arg9: memref<8x1xf32, #tpu.memory_space<vmem>>, %arg10: memref<136x1024xf32, #tpu.memory_space<vmem>>) attributes {dimension_semantics = [#tpu.dimension_semantics<parallel>], iteration_bounds = array<i64: 1>, scalar_prefetch = 0 : i64, scratch_operands = 1 : i64, tpu.core_type = #tpu.core_type<tc>, window_params = [{transform_indices = @transform_0, window_bounds = array<i64: 17, 8, 128>}, {pipeline_mode = #tpu.pipeline_mode<synchronous>, transform_indices = @transform_1, window_bounds = array<i64: 128, 1024>}, {pipeline_mode = #tpu.pipeline_mode<synchronous>, transform_indices = @transform_2, window_bounds = array<i64: 1, 1024>}, {pipeline_mode = #tpu.pipeline_mode<synchronous>, transform_indices = @transform_3, window_bounds = array<i64: 256, 1024>}, {pipeline_mode = #tpu.pipeline_mode<synchronous>, transform_indices = @transform_4, window_bounds = array<i64: 256, 64>}, {pipeline_mode = #tpu.pipeline_mode<synchronous>, transform_indices = @transform_5, window_bounds = array<i64: 1, 64>}, {pipeline_mode = #tpu.pipeline_mode<synchronous>, transform_indices = @transform_6, window_bounds = array<i64: 64, 1>}, {pipeline_mode = #tpu.pipeline_mode<synchronous>, transform_indices = @transform_7, window_bounds = array<i64: 1, 1>}, {transform_indices = @transform_8, window_bounds = array<i64: 8, 1>}]} {
    %c0 = arith.constant 0 : index
    %c0_0 = arith.constant 0 : index
    %c0_1 = arith.constant 0 : index
    %0 = vector.load %arg1[%c0, %c0_0, %c0_1] : memref<17x8x128xf32, #tpu.memory_space<vmem>>, vector<17x8x128xf32>
    %1 = vector.shape_cast %0 : vector<17x8x128xf32> to vector<136x128xf32>
    %2 = arith.truncf %1 : vector<136x128xf32> to vector<136x128xbf16>
    %c0_2 = arith.constant 0 : index
    %c0_3 = arith.constant 0 : index
    %3 = vector.load %arg2[%c0_2, %c0_3] : memref<128x1024xbf16, #tpu.memory_space<vmem>>, vector<128x1024xbf16>
    %cst = arith.constant dense<0.000000e+00> : vector<136x1024xf32>
    %4 = tpu.matmul %2, %3, %cst {dimension_numbers = #tpu.dot_dimension_numbers<[1], [0], [0], [1], [0, 0, 1, 1], [], []>} : vector<136x128xbf16>, vector<128x1024xbf16>, vector<136x1024xf32> -> vector<136x1024xf32>
    %c0_4 = arith.constant 0 : index
    %c0_5 = arith.constant 0 : index
    %5 = vector.load %arg3[%c0_4, %c0_5] : memref<1x1024xf32, #tpu.memory_space<vmem>>, vector<1x1024xf32>
    %6 = vector.broadcast %5 : vector<1x1024xf32> to vector<136x1024xf32>
    %7 = arith.addf %4, %6 : vector<136x1024xf32>
    %c0_6 = arith.constant 0 : index
    %c0_7 = arith.constant 0 : index
    %8 = vector.load %arg10[%c0_6, %c0_7] : memref<136x1024xf32, #tpu.memory_space<vmem>>, vector<136x1024xf32>
    tpu.vector_store %arg10[%c0_6, %c0_7], %7 {strides = array<i32>} : memref<136x1024xf32, #tpu.memory_space<vmem>>, vector<136x1024xf32>,
    %c0_8 = arith.constant 0 : index
    %c0_9 = arith.constant 0 : index
    %9 = vector.load %arg4[%c0_8, %c0_9] : memref<256x1024xbf16, #tpu.memory_space<vmem>>, vector<256x1024xbf16>
    %10 = tpu.iota {dimensions = array<i32: 1>} : vector<8x256xi32>
    %c0_i32 = arith.constant 0 : i32
    %11 = vector.broadcast %c0_i32 : i32 to vector<8x256xi32>
    %12 = arith.cmpi sge, %10, %11 : vector<8x256xi32>
    %c48_i32 = arith.constant 48 : i32
    %13 = vector.broadcast %c48_i32 : i32 to vector<8x256xi32>
    %14 = arith.cmpi slt, %10, %13 : vector<8x256xi32>
    %15 = arith.andi %12, %14 : vector<8x256xi1>
    %c48_i32_10 = arith.constant 48 : i32
    %16 = vector.broadcast %c48_i32_10 : i32 to vector<8x256xi32>
    %17 = arith.cmpi sge, %10, %16 : vector<8x256xi32>
    %c96_i32 = arith.constant 96 : i32
    %18 = vector.broadcast %c96_i32 : i32 to vector<8x256xi32>
    %19 = arith.cmpi slt, %10, %18 : vector<8x256xi32>
    %20 = arith.andi %17, %19 : vector<8x256xi1>
    %c96_i32_11 = arith.constant 96 : i32
    %21 = vector.broadcast %c96_i32_11 : i32 to vector<8x256xi32>
    %22 = arith.cmpi sge, %10, %21 : vector<8x256xi32>
    %c144_i32 = arith.constant 144 : i32
    %23 = vector.broadcast %c144_i32 : i32 to vector<8x256xi32>
    %24 = arith.cmpi slt, %10, %23 : vector<8x256xi32>
    %25 = arith.andi %22, %24 : vector<8x256xi1>
    %cst_12 = arith.constant 0.000000e+00 : f32
    %26 = vector.broadcast %cst_12 : f32 to vector<8x256xf32>
    %cst_13 = arith.constant 0.000000e+00 : f32
    %27 = vector.broadcast %cst_13 : f32 to vector<8x256xf32>
    %cst_14 = arith.constant 0.000000e+00 : f32
    %28 = vector.broadcast %cst_14 : f32 to vector<8x256xf32>
    %c0_15 = arith.constant 0 : index
    %c0_16 = arith.constant 0 : index
    %29 = vector.load %arg10[%c0_15, %c0_16] : memref<136x1024xf32, #tpu.memory_space<vmem>>, vector<8x1024xf32>
    %30 = arith.truncf %26 : vector<8x256xf32> to vector<8x256xbf16>
    %cst_17 = arith.constant dense<0.000000e+00> : vector<8x1024xf32>
    %31 = tpu.matmul %30, %9, %cst_17 {dimension_numbers = #tpu.dot_dimension_numbers<[1], [0], [0], [1], [0, 0, 1, 1], [], []>} : vector<8x256xbf16>, vector<256x1024xbf16>, vector<8x1024xf32> -> vector<8x1024xf32>
    %32 = arith.addf %29, %31 : vector<8x1024xf32>
    %33 = vector.extract_strided_slice %32 {offsets = [0, 0], sizes = [8, 256], strides = [1, 1]} : vector<8x1024xf32> to vector<8x256xf32>
    %cst_18 = arith.constant 5.000000e-01 : f32
    %34 = vector.broadcast %cst_18 : f32 to vector<8x256xf32>
    %35 = arith.mulf %34, %33 : vector<8x256xf32>
    %36 = math.tanh %35 : vector<8x256xf32>
    %cst_19 = arith.constant 5.000000e-01 : f32
    %37 = vector.broadcast %cst_19 : f32 to vector<8x256xf32>
    %38 = arith.mulf %37, %36 : vector<8x256xf32>
    %cst_20 = arith.constant 5.000000e-01 : f32
    %39 = vector.broadcast %cst_20 : f32 to vector<8x256xf32>
    %40 = arith.addf %38, %39 : vector<8x256xf32>
    %41 = vector.extract_strided_slice %32 {offsets = [0, 256], sizes = [8, 256], strides = [1, 1]} : vector<8x1024xf32> to vector<8x256xf32>
    %cst_21 = arith.constant 5.000000e-01 : f32
    %42 = vector.broadcast %cst_21 : f32 to vector<8x256xf32>
    %43 = arith.mulf %42, %41 : vector<8x256xf32>
    %44 = math.tanh %43 : vector<8x256xf32>
    %cst_22 = arith.constant 5.000000e-01 : f32
    %45 = vector.broadcast %cst_22 : f32 to vector<8x256xf32>
    %46 = arith.mulf %45, %44 : vector<8x256xf32>
    %cst_23 = arith.constant 5.000000e-01 : f32
    %47 = vector.broadcast %cst_23 : f32 to vector<8x256xf32>
    %48 = arith.addf %46, %47 : vector<8x256xf32>
    %49 = vector.extract_strided_slice %32 {offsets = [0, 512], sizes = [8, 256], strides = [1, 1]} : vector<8x1024xf32> to vector<8x256xf32>
    %50 = math.tanh %49 : vector<8x256xf32>
    %51 = vector.extract_strided_slice %32 {offsets = [0, 768], sizes = [8, 256], strides = [1, 1]} : vector<8x1024xf32> to vector<8x256xf32>
    %cst_24 = arith.constant 5.000000e-01 : f32
    %52 = vector.broadcast %cst_24 : f32 to vector<8x256xf32>
    %53 = arith.mulf %52, %51 : vector<8x256xf32>
    %54 = math.tanh %53 : vector<8x256xf32>
    %cst_25 = arith.constant 5.000000e-01 : f32
    %55 = vector.broadcast %cst_25 : f32 to vector<8x256xf32>
    %56 = arith.mulf %55, %54 : vector<8x256xf32>
    %cst_26 = arith.constant 5.000000e-01 : f32
    %57 = vector.broadcast %cst_26 : f32 to vector<8x256xf32>
    %58 = arith.addf %56, %57 : vector<8x256xf32>
    %59 = arith.mulf %48, %27 : vector<8x256xf32>
    %60 = arith.mulf %40, %50 : vector<8x256xf32>
    %61 = arith.addf %59, %60 : vector<8x256xf32>
    %62 = math.tanh %61 : vector<8x256xf32>
    %63 = arith.mulf %58, %62 : vector<8x256xf32>
    %c8 = arith.constant 8 : index
    %c0_27 = arith.constant 0 : index
    %64 = vector.load %arg10[%c8, %c0_27] : memref<136x1024xf32, #tpu.memory_space<vmem>>, vector<8x1024xf32>
    %65 = arith.truncf %63 : vector<8x256xf32> to vector<8x256xbf16>
    %cst_28 = arith.constant dense<0.000000e+00> : vector<8x1024xf32>
    %66 = tpu.matmul %65, %9, %cst_28 {dimension_numbers = #tpu.dot_dimension_numbers<[1], [0], [0], [1], [0, 0, 1, 1], [], []>} : vector<8x256xbf16>, vector<256x1024xbf16>, vector<8x1024xf32> -> vector<8x1024xf32>
    %67 = arith.addf %64, %66 : vector<8x1024xf32>
    %68 = vector.extract_strided_slice %67 {offsets = [0, 0], sizes = [8, 256], strides = [1, 1]} : vector<8x1024xf32> to vector<8x256xf32>
    %cst_29 = arith.constant 5.000000e-01 : f32
    %69 = vector.broadcast %cst_29 : f32 to vector<8x256xf32>
    %70 = arith.mulf %69, %68 : vector<8x256xf32>
    %71 = math.tanh %70 : vector<8x256xf32>
    %cst_30 = arith.constant 5.000000e-01 : f32
    %72 = vector.broadcast %cst_30 : f32 to vector<8x256xf32>
    %73 = arith.mulf %72, %71 : vector<8x256xf32>
    %cst_31 = arith.constant 5.000000e-01 : f32
    %74 = vector.broadcast %cst_31 : f32 to vector<8x256xf32>
    %75 = arith.addf %73, %74 : vector<8x256xf32>
    %76 = vector.extract_strided_slice %67 {offsets = [0, 256], sizes = [8, 256], strides = [1, 1]} : vector<8x1024xf32> to vector<8x256xf32>
    %cst_32 = arith.constant 5.000000e-01 : f32
    %77 = vector.broadcast %cst_32 : f32 to vector<8x256xf32>
    %78 = arith.mulf %77, %76 : vector<8x256xf32>
    %79 = math.tanh %78 : vector<8x256xf32>
    %cst_33 = arith.constant 5.000000e-01 : f32
    %80 = vector.broadcast %cst_33 : f32 to vector<8x256xf32>
    %81 = arith.mulf %80, %79 : vector<8x256xf32>
    %cst_34 = arith.constant 5.000000e-01 : f32
    %82 = vector.broadcast %cst_34 : f32 to vector<8x256xf32>
    %83 = arith.addf %81, %82 : vector<8x256xf32>
    %84 = vector.extract_strided_slice %67 {offsets = [0, 512], sizes = [8, 256], strides = [1, 1]} : vector<8x1024xf32> to vector<8x256xf32>
    %85 = math.tanh %84 : vector<8x256xf32>
    %86 = vector.extract_strided_slice %67 {offsets = [0, 768], sizes = [8, 256], strides = [1, 1]} : vector<8x1024xf32> to vector<8x256xf32>
    %cst_35 = arith.constant 5.000000e-01 : f32
    %87 = vector.broadcast %cst_35 : f32 to vector<8x256xf32>
    %88 = arith.mulf %87, %86 : vector<8x256xf32>
    %89 = math.tanh %88 : vector<8x256xf32>
    %cst_36 = arith.constant 5.000000e-01 : f32
    %90 = vector.broadcast %cst_36 : f32 to vector<8x256xf32>
    %91 = arith.mulf %90, %89 : vector<8x256xf32>
    %cst_37 = arith.constant 5.000000e-01 : f32
    %92 = vector.broadcast %cst_37 : f32 to vector<8x256xf32>
    %93 = arith.addf %91, %92 : vector<8x256xf32>
    %94 = arith.mulf %83, %61 : vector<8x256xf32>
    %95 = arith.mulf %75, %85 : vector<8x256xf32>
    %96 = arith.addf %94, %95 : vector<8x256xf32>
    %97 = math.tanh %96 : vector<8x256xf32>
    %98 = arith.mulf %93, %97 : vector<8x256xf32>
    %c16 = arith.constant 16 : index
    %c0_38 = arith.constant 0 : index
    %99 = vector.load %arg10[%c16, %c0_38] : memref<136x1024xf32, #tpu.memory_space<vmem>>, vector<8x1024xf32>
    %100 = arith.truncf %98 : vector<8x256xf32> to vector<8x256xbf16>
    %cst_39 = arith.constant dense<0.000000e+00> : vector<8x1024xf32>
    %101 = tpu.matmul %100, %9, %cst_39 {dimension_numbers = #tpu.dot_dimension_numbers<[1], [0], [0], [1], [0, 0, 1, 1], [], []>} : vector<8x256xbf16>, vector<256x1024xbf16>, vector<8x1024xf32> -> vector<8x1024xf32>
    %102 = arith.addf %99, %101 : vector<8x1024xf32>
    %103 = vector.extract_strided_slice %102 {offsets = [0, 0], sizes = [8, 256], strides = [1, 1]} : vector<8x1024xf32> to vector<8x256xf32>
    %cst_40 = arith.constant 5.000000e-01 : f32
    %104 = vector.broadcast %cst_40 : f32 to vector<8x256xf32>
    %105 = arith.mulf %104, %103 : vector<8x256xf32>
    %106 = math.tanh %105 : vector<8x256xf32>
    %cst_41 = arith.constant 5.000000e-01 : f32
    %107 = vector.broadcast %cst_41 : f32 to vector<8x256xf32>
    %108 = arith.mulf %107, %106 : vector<8x256xf32>
    %cst_42 = arith.constant 5.000000e-01 : f32
    %109 = vector.broadcast %cst_42 : f32 to vector<8x256xf32>
    %110 = arith.addf %108, %109 : vector<8x256xf32>
    %111 = vector.extract_strided_slice %102 {offsets = [0, 256], sizes = [8, 256], strides = [1, 1]} : vector<8x1024xf32> to vector<8x256xf32>
    %cst_43 = arith.constant 5.000000e-01 : f32
    %112 = vector.broadcast %cst_43 : f32 to vector<8x256xf32>
    %113 = arith.mulf %112, %111 : vector<8x256xf32>
    %114 = math.tanh %113 : vector<8x256xf32>
    %cst_44 = arith.constant 5.000000e-01 : f32
    %115 = vector.broadcast %cst_44 : f32 to vector<8x256xf32>
    %116 = arith.mulf %115, %114 : vector<8x256xf32>
    %cst_45 = arith.constant 5.000000e-01 : f32
    %117 = vector.broadcast %cst_45 : f32 to vector<8x256xf32>
    %118 = arith.addf %116, %117 : vector<8x256xf32>
    %119 = vector.extract_strided_slice %102 {offsets = [0, 512], sizes = [8, 256], strides = [1, 1]} : vector<8x1024xf32> to vector<8x256xf32>
    %120 = math.tanh %119 : vector<8x256xf32>
    %121 = vector.extract_strided_slice %102 {offsets = [0, 768], sizes = [8, 256], strides = [1, 1]} : vector<8x1024xf32> to vector<8x256xf32>
    %cst_46 = arith.constant 5.000000e-01 : f32
    %122 = vector.broadcast %cst_46 : f32 to vector<8x256xf32>
    %123 = arith.mulf %122, %121 : vector<8x256xf32>
    %124 = math.tanh %123 : vector<8x256xf32>
    %cst_47 = arith.constant 5.000000e-01 : f32
    %125 = vector.broadcast %cst_47 : f32 to vector<8x256xf32>
    %126 = arith.mulf %125, %124 : vector<8x256xf32>
    %cst_48 = arith.constant 5.000000e-01 : f32
    %127 = vector.broadcast %cst_48 : f32 to vector<8x256xf32>
    %128 = arith.addf %126, %127 : vector<8x256xf32>
    %129 = arith.mulf %118, %96 : vector<8x256xf32>
    %130 = arith.mulf %110, %120 : vector<8x256xf32>
    %131 = arith.addf %129, %130 : vector<8x256xf32>
    %132 = math.tanh %131 : vector<8x256xf32>
    %133 = arith.mulf %128, %132 : vector<8x256xf32>
    %c24 = arith.constant 24 : index
    %c0_49 = arith.constant 0 : index
    %134 = vector.load %arg10[%c24, %c0_49] : memref<136x1024xf32, #tpu.memory_space<vmem>>, vector<8x1024xf32>
    %135 = arith.truncf %133 : vector<8x256xf32> to vector<8x256xbf16>
    %cst_50 = arith.constant dense<0.000000e+00> : vector<8x1024xf32>
    %136 = tpu.matmul %135, %9, %cst_50 {dimension_numbers = #tpu.dot_dimension_numbers<[1], [0], [0], [1], [0, 0, 1, 1], [], []>} : vector<8x256xbf16>, vector<256x1024xbf16>, vector<8x1024xf32> -> vector<8x1024xf32>
    %137 = arith.addf %134, %136 : vector<8x1024xf32>
    %138 = vector.extract_strided_slice %137 {offsets = [0, 0], sizes = [8, 256], strides = [1, 1]} : vector<8x1024xf32> to vector<8x256xf32>
    %cst_51 = arith.constant 5.000000e-01 : f32
    %139 = vector.broadcast %cst_51 : f32 to vector<8x256xf32>
    %140 = arith.mulf %139, %138 : vector<8x256xf32>
    %141 = math.tanh %140 : vector<8x256xf32>
    %cst_52 = arith.constant 5.000000e-01 : f32
    %142 = vector.broadcast %cst_52 : f32 to vector<8x256xf32>
    %143 = arith.mulf %142, %141 : vector<8x256xf32>
    %cst_53 = arith.constant 5.000000e-01 : f32
    %144 = vector.broadcast %cst_53 : f32 to vector<8x256xf32>
    %145 = arith.addf %143, %144 : vector<8x256xf32>
    %146 = vector.extract_strided_slice %137 {offsets = [0, 256], sizes = [8, 256], strides = [1, 1]} : vector<8x1024xf32> to vector<8x256xf32>
    %cst_54 = arith.constant 5.000000e-01 : f32
    %147 = vector.broadcast %cst_54 : f32 to vector<8x256xf32>
    %148 = arith.mulf %147, %146 : vector<8x256xf32>
    %149 = math.tanh %148 : vector<8x256xf32>
    %cst_55 = arith.constant 5.000000e-01 : f32
    %150 = vector.broadcast %cst_55 : f32 to vector<8x256xf32>
    %151 = arith.mulf %150, %149 : vector<8x256xf32>
    %cst_56 = arith.constant 5.000000e-01 : f32
    %152 = vector.broadcast %cst_56 : f32 to vector<8x256xf32>
    %153 = arith.addf %151, %152 : vector<8x256xf32>
    %154 = vector.extract_strided_slice %137 {offsets = [0, 512], sizes = [8, 256], strides = [1, 1]} : vector<8x1024xf32> to vector<8x256xf32>
    %155 = math.tanh %154 : vector<8x256xf32>
    %156 = vector.extract_strided_slice %137 {offsets = [0, 768], sizes = [8, 256], strides = [1, 1]} : vector<8x1024xf32> to vector<8x256xf32>
    %cst_57 = arith.constant 5.000000e-01 : f32
    %157 = vector.broadcast %cst_57 : f32 to vector<8x256xf32>
    %158 = arith.mulf %157, %156 : vector<8x256xf32>
    %159 = math.tanh %158 : vector<8x256xf32>
    %cst_58 = arith.constant 5.000000e-01 : f32
    %160 = vector.broadcast %cst_58 : f32 to vector<8x256xf32>
    %161 = arith.mulf %160, %159 : vector<8x256xf32>
    %cst_59 = arith.constant 5.000000e-01 : f32
    %162 = vector.broadcast %cst_59 : f32 to vector<8x256xf32>
    %163 = arith.addf %161, %162 : vector<8x256xf32>
    %164 = arith.mulf %153, %131 : vector<8x256xf32>
    %165 = arith.mulf %145, %155 : vector<8x256xf32>
    %166 = arith.addf %164, %165 : vector<8x256xf32>
    %167 = math.tanh %166 : vector<8x256xf32>
    %168 = arith.mulf %163, %167 : vector<8x256xf32>
    %c32 = arith.constant 32 : index
    %c0_60 = arith.constant 0 : index
    %169 = vector.load %arg10[%c32, %c0_60] : memref<136x1024xf32, #tpu.memory_space<vmem>>, vector<8x1024xf32>
    %170 = arith.truncf %168 : vector<8x256xf32> to vector<8x256xbf16>
    %cst_61 = arith.constant dense<0.000000e+00> : vector<8x1024xf32>
    %171 = tpu.matmul %170, %9, %cst_61 {dimension_numbers = #tpu.dot_dimension_numbers<[1], [0], [0], [1], [0, 0, 1, 1], [], []>} : vector<8x256xbf16>, vector<256x1024xbf16>, vector<8x1024xf32> -> vector<8x1024xf32>
    %172 = arith.addf %169, %171 : vector<8x1024xf32>
    %173 = vector.extract_strided_slice %172 {offsets = [0, 0], sizes = [8, 256], strides = [1, 1]} : vector<8x1024xf32> to vector<8x256xf32>
    %cst_62 = arith.constant 5.000000e-01 : f32
    %174 = vector.broadcast %cst_62 : f32 to vector<8x256xf32>
    %175 = arith.mulf %174, %173 : vector<8x256xf32>
    %176 = math.tanh %175 : vector<8x256xf32>
    %cst_63 = arith.constant 5.000000e-01 : f32
    %177 = vector.broadcast %cst_63 : f32 to vector<8x256xf32>
    %178 = arith.mulf %177, %176 : vector<8x256xf32>
    %cst_64 = arith.constant 5.000000e-01 : f32
    %179 = vector.broadcast %cst_64 : f32 to vector<8x256xf32>
    %180 = arith.addf %178, %179 : vector<8x256xf32>
    %181 = vector.extract_strided_slice %172 {offsets = [0, 256], sizes = [8, 256], strides = [1, 1]} : vector<8x1024xf32> to vector<8x256xf32>
    %cst_65 = arith.constant 5.000000e-01 : f32
    %182 = vector.broadcast %cst_65 : f32 to vector<8x256xf32>
    %183 = arith.mulf %182, %181 : vector<8x256xf32>
    %184 = math.tanh %183 : vector<8x256xf32>
    %cst_66 = arith.constant 5.000000e-01 : f32
    %185 = vector.broadcast %cst_66 : f32 to vector<8x256xf32>
    %186 = arith.mulf %185, %184 : vector<8x256xf32>
    %cst_67 = arith.constant 5.000000e-01 : f32
    %187 = vector.broadcast %cst_67 : f32 to vector<8x256xf32>
    %188 = arith.addf %186, %187 : vector<8x256xf32>
    %189 = vector.extract_strided_slice %172 {offsets = [0, 512], sizes = [8, 256], strides = [1, 1]} : vector<8x1024xf32> to vector<8x256xf32>
    %190 = math.tanh %189 : vector<8x256xf32>
    %191 = vector.extract_strided_slice %172 {offsets = [0, 768], sizes = [8, 256], strides = [1, 1]} : vector<8x1024xf32> to vector<8x256xf32>
    %cst_68 = arith.constant 5.000000e-01 : f32
    %192 = vector.broadcast %cst_68 : f32 to vector<8x256xf32>
    %193 = arith.mulf %192, %191 : vector<8x256xf32>
    %194 = math.tanh %193 : vector<8x256xf32>
    %cst_69 = arith.constant 5.000000e-01 : f32
    %195 = vector.broadcast %cst_69 : f32 to vector<8x256xf32>
    %196 = arith.mulf %195, %194 : vector<8x256xf32>
    %cst_70 = arith.constant 5.000000e-01 : f32
    %197 = vector.broadcast %cst_70 : f32 to vector<8x256xf32>
    %198 = arith.addf %196, %197 : vector<8x256xf32>
    %199 = arith.mulf %188, %166 : vector<8x256xf32>
    %200 = arith.mulf %180, %190 : vector<8x256xf32>
    %201 = arith.addf %199, %200 : vector<8x256xf32>
    %202 = math.tanh %201 : vector<8x256xf32>
    %203 = arith.mulf %198, %202 : vector<8x256xf32>
    %c40 = arith.constant 40 : index
    %c0_71 = arith.constant 0 : index
    %204 = vector.load %arg10[%c40, %c0_71] : memref<136x1024xf32, #tpu.memory_space<vmem>>, vector<8x1024xf32>
    %205 = arith.truncf %203 : vector<8x256xf32> to vector<8x256xbf16>
    %cst_72 = arith.constant dense<0.000000e+00> : vector<8x1024xf32>
    %206 = tpu.matmul %205, %9, %cst_72 {dimension_numbers = #tpu.dot_dimension_numbers<[1], [0], [0], [1], [0, 0, 1, 1], [], []>} : vector<8x256xbf16>, vector<256x1024xbf16>, vector<8x1024xf32> -> vector<8x1024xf32>
    %207 = arith.addf %204, %206 : vector<8x1024xf32>
    %208 = vector.extract_strided_slice %207 {offsets = [0, 0], sizes = [8, 256], strides = [1, 1]} : vector<8x1024xf32> to vector<8x256xf32>
    %cst_73 = arith.constant 5.000000e-01 : f32
    %209 = vector.broadcast %cst_73 : f32 to vector<8x256xf32>
    %210 = arith.mulf %209, %208 : vector<8x256xf32>
    %211 = math.tanh %210 : vector<8x256xf32>
    %cst_74 = arith.constant 5.000000e-01 : f32
    %212 = vector.broadcast %cst_74 : f32 to vector<8x256xf32>
    %213 = arith.mulf %212, %211 : vector<8x256xf32>
    %cst_75 = arith.constant 5.000000e-01 : f32
    %214 = vector.broadcast %cst_75 : f32 to vector<8x256xf32>
    %215 = arith.addf %213, %214 : vector<8x256xf32>
    %216 = vector.extract_strided_slice %207 {offsets = [0, 256], sizes = [8, 256], strides = [1, 1]} : vector<8x1024xf32> to vector<8x256xf32>
    %cst_76 = arith.constant 5.000000e-01 : f32
    %217 = vector.broadcast %cst_76 : f32 to vector<8x256xf32>
    %218 = arith.mulf %217, %216 : vector<8x256xf32>
    %219 = math.tanh %218 : vector<8x256xf32>
    %cst_77 = arith.constant 5.000000e-01 : f32
    %220 = vector.broadcast %cst_77 : f32 to vector<8x256xf32>
    %221 = arith.mulf %220, %219 : vector<8x256xf32>
    %cst_78 = arith.constant 5.000000e-01 : f32
    %222 = vector.broadcast %cst_78 : f32 to vector<8x256xf32>
    %223 = arith.addf %221, %222 : vector<8x256xf32>
    %224 = vector.extract_strided_slice %207 {offsets = [0, 512], sizes = [8, 256], strides = [1, 1]} : vector<8x1024xf32> to vector<8x256xf32>
    %225 = math.tanh %224 : vector<8x256xf32>
    %226 = vector.extract_strided_slice %207 {offsets = [0, 768], sizes = [8, 256], strides = [1, 1]} : vector<8x1024xf32> to vector<8x256xf32>
    %cst_79 = arith.constant 5.000000e-01 : f32
    %227 = vector.broadcast %cst_79 : f32 to vector<8x256xf32>
    %228 = arith.mulf %227, %226 : vector<8x256xf32>
    %229 = math.tanh %228 : vector<8x256xf32>
    %cst_80 = arith.constant 5.000000e-01 : f32
    %230 = vector.broadcast %cst_80 : f32 to vector<8x256xf32>
    %231 = arith.mulf %230, %229 : vector<8x256xf32>
    %cst_81 = arith.constant 5.000000e-01 : f32
    %232 = vector.broadcast %cst_81 : f32 to vector<8x256xf32>
    %233 = arith.addf %231, %232 : vector<8x256xf32>
    %234 = arith.mulf %223, %201 : vector<8x256xf32>
    %235 = arith.mulf %215, %225 : vector<8x256xf32>
    %236 = arith.addf %234, %235 : vector<8x256xf32>
    %237 = math.tanh %236 : vector<8x256xf32>
    %238 = arith.mulf %233, %237 : vector<8x256xf32>
    %c48 = arith.constant 48 : index
    %c0_82 = arith.constant 0 : index
    %239 = vector.load %arg10[%c48, %c0_82] : memref<136x1024xf32, #tpu.memory_space<vmem>>, vector<8x1024xf32>
    %240 = arith.truncf %238 : vector<8x256xf32> to vector<8x256xbf16>
    %cst_83 = arith.constant dense<0.000000e+00> : vector<8x1024xf32>
    %241 = tpu.matmul %240, %9, %cst_83 {dimension_numbers = #tpu.dot_dimension_numbers<[1], [0], [0], [1], [0, 0, 1, 1], [], []>} : vector<8x256xbf16>, vector<256x1024xbf16>, vector<8x1024xf32> -> vector<8x1024xf32>
    %242 = arith.addf %239, %241 : vector<8x1024xf32>
    %243 = vector.extract_strided_slice %242 {offsets = [0, 0], sizes = [8, 256], strides = [1, 1]} : vector<8x1024xf32> to vector<8x256xf32>
    %cst_84 = arith.constant 5.000000e-01 : f32
    %244 = vector.broadcast %cst_84 : f32 to vector<8x256xf32>
    %245 = arith.mulf %244, %243 : vector<8x256xf32>
    %246 = math.tanh %245 : vector<8x256xf32>
    %cst_85 = arith.constant 5.000000e-01 : f32
    %247 = vector.broadcast %cst_85 : f32 to vector<8x256xf32>
    %248 = arith.mulf %247, %246 : vector<8x256xf32>
    %cst_86 = arith.constant 5.000000e-01 : f32
    %249 = vector.broadcast %cst_86 : f32 to vector<8x256xf32>
    %250 = arith.addf %248, %249 : vector<8x256xf32>
    %251 = vector.extract_strided_slice %242 {offsets = [0, 256], sizes = [8, 256], strides = [1, 1]} : vector<8x1024xf32> to vector<8x256xf32>
    %cst_87 = arith.constant 5.000000e-01 : f32
    %252 = vector.broadcast %cst_87 : f32 to vector<8x256xf32>
    %253 = arith.mulf %252, %251 : vector<8x256xf32>
    %254 = math.tanh %253 : vector<8x256xf32>
    %cst_88 = arith.constant 5.000000e-01 : f32
    %255 = vector.broadcast %cst_88 : f32 to vector<8x256xf32>
    %256 = arith.mulf %255, %254 : vector<8x256xf32>
    %cst_89 = arith.constant 5.000000e-01 : f32
    %257 = vector.broadcast %cst_89 : f32 to vector<8x256xf32>
    %258 = arith.addf %256, %257 : vector<8x256xf32>
    %259 = vector.extract_strided_slice %242 {offsets = [0, 512], sizes = [8, 256], strides = [1, 1]} : vector<8x1024xf32> to vector<8x256xf32>
    %260 = math.tanh %259 : vector<8x256xf32>
    %261 = vector.extract_strided_slice %242 {offsets = [0, 768], sizes = [8, 256], strides = [1, 1]} : vector<8x1024xf32> to vector<8x256xf32>
    %cst_90 = arith.constant 5.000000e-01 : f32
    %262 = vector.broadcast %cst_90 : f32 to vector<8x256xf32>
    %263 = arith.mulf %262, %261 : vector<8x256xf32>
    %264 = math.tanh %263 : vector<8x256xf32>
    %cst_91 = arith.constant 5.000000e-01 : f32
    %265 = vector.broadcast %cst_91 : f32 to vector<8x256xf32>
    %266 = arith.mulf %265, %264 : vector<8x256xf32>
    %cst_92 = arith.constant 5.000000e-01 : f32
    %267 = vector.broadcast %cst_92 : f32 to vector<8x256xf32>
    %268 = arith.addf %266, %267 : vector<8x256xf32>
    %269 = arith.mulf %258, %236 : vector<8x256xf32>
    %270 = arith.mulf %250, %260 : vector<8x256xf32>
    %271 = arith.addf %269, %270 : vector<8x256xf32>
    %272 = math.tanh %271 : vector<8x256xf32>
    %273 = arith.mulf %268, %272 : vector<8x256xf32>
    %c56 = arith.constant 56 : index
    %c0_93 = arith.constant 0 : index
    %274 = vector.load %arg10[%c56, %c0_93] : memref<136x1024xf32, #tpu.memory_space<vmem>>, vector<8x1024xf32>
    %275 = arith.truncf %273 : vector<8x256xf32> to vector<8x256xbf16>
    %cst_94 = arith.constant dense<0.000000e+00> : vector<8x1024xf32>
    %276 = tpu.matmul %275, %9, %cst_94 {dimension_numbers = #tpu.dot_dimension_numbers<[1], [0], [0], [1], [0, 0, 1, 1], [], []>} : vector<8x256xbf16>, vector<256x1024xbf16>, vector<8x1024xf32> -> vector<8x1024xf32>
    %277 = arith.addf %274, %276 : vector<8x1024xf32>
    %278 = vector.extract_strided_slice %277 {offsets = [0, 0], sizes = [8, 256], strides = [1, 1]} : vector<8x1024xf32> to vector<8x256xf32>
    %cst_95 = arith.constant 5.000000e-01 : f32
    %279 = vector.broadcast %cst_95 : f32 to vector<8x256xf32>
    %280 = arith.mulf %279, %278 : vector<8x256xf32>
    %281 = math.tanh %280 : vector<8x256xf32>
    %cst_96 = arith.constant 5.000000e-01 : f32
    %282 = vector.broadcast %cst_96 : f32 to vector<8x256xf32>
    %283 = arith.mulf %282, %281 : vector<8x256xf32>
    %cst_97 = arith.constant 5.000000e-01 : f32
    %284 = vector.broadcast %cst_97 : f32 to vector<8x256xf32>
    %285 = arith.addf %283, %284 : vector<8x256xf32>
    %286 = vector.extract_strided_slice %277 {offsets = [0, 256], sizes = [8, 256], strides = [1, 1]} : vector<8x1024xf32> to vector<8x256xf32>
    %cst_98 = arith.constant 5.000000e-01 : f32
    %287 = vector.broadcast %cst_98 : f32 to vector<8x256xf32>
    %288 = arith.mulf %287, %286 : vector<8x256xf32>
    %289 = math.tanh %288 : vector<8x256xf32>
    %cst_99 = arith.constant 5.000000e-01 : f32
    %290 = vector.broadcast %cst_99 : f32 to vector<8x256xf32>
    %291 = arith.mulf %290, %289 : vector<8x256xf32>
    %cst_100 = arith.constant 5.000000e-01 : f32
    %292 = vector.broadcast %cst_100 : f32 to vector<8x256xf32>
    %293 = arith.addf %291, %292 : vector<8x256xf32>
    %294 = vector.extract_strided_slice %277 {offsets = [0, 512], sizes = [8, 256], strides = [1, 1]} : vector<8x1024xf32> to vector<8x256xf32>
    %295 = math.tanh %294 : vector<8x256xf32>
    %296 = vector.extract_strided_slice %277 {offsets = [0, 768], sizes = [8, 256], strides = [1, 1]} : vector<8x1024xf32> to vector<8x256xf32>
    %cst_101 = arith.constant 5.000000e-01 : f32
    %297 = vector.broadcast %cst_101 : f32 to vector<8x256xf32>
    %298 = arith.mulf %297, %296 : vector<8x256xf32>
    %299 = math.tanh %298 : vector<8x256xf32>
    %cst_102 = arith.constant 5.000000e-01 : f32
    %300 = vector.broadcast %cst_102 : f32 to vector<8x256xf32>
    %301 = arith.mulf %300, %299 : vector<8x256xf32>
    %cst_103 = arith.constant 5.000000e-01 : f32
    %302 = vector.broadcast %cst_103 : f32 to vector<8x256xf32>
    %303 = arith.addf %301, %302 : vector<8x256xf32>
    %304 = arith.mulf %293, %271 : vector<8x256xf32>
    %305 = arith.mulf %285, %295 : vector<8x256xf32>
    %306 = arith.addf %304, %305 : vector<8x256xf32>
    %307 = math.tanh %306 : vector<8x256xf32>
    %308 = arith.mulf %303, %307 : vector<8x256xf32>
    %c64 = arith.constant 64 : index
    %c0_104 = arith.constant 0 : index
    %309 = vector.load %arg10[%c64, %c0_104] : memref<136x1024xf32, #tpu.memory_space<vmem>>, vector<8x1024xf32>
    %310 = arith.truncf %308 : vector<8x256xf32> to vector<8x256xbf16>
    %cst_105 = arith.constant dense<0.000000e+00> : vector<8x1024xf32>
    %311 = tpu.matmul %310, %9, %cst_105 {dimension_numbers = #tpu.dot_dimension_numbers<[1], [0], [0], [1], [0, 0, 1, 1], [], []>} : vector<8x256xbf16>, vector<256x1024xbf16>, vector<8x1024xf32> -> vector<8x1024xf32>
    %312 = arith.addf %309, %311 : vector<8x1024xf32>
    %313 = vector.extract_strided_slice %312 {offsets = [0, 0], sizes = [8, 256], strides = [1, 1]} : vector<8x1024xf32> to vector<8x256xf32>
    %cst_106 = arith.constant 5.000000e-01 : f32
    %314 = vector.broadcast %cst_106 : f32 to vector<8x256xf32>
    %315 = arith.mulf %314, %313 : vector<8x256xf32>
    %316 = math.tanh %315 : vector<8x256xf32>
    %cst_107 = arith.constant 5.000000e-01 : f32
    %317 = vector.broadcast %cst_107 : f32 to vector<8x256xf32>
    %318 = arith.mulf %317, %316 : vector<8x256xf32>
    %cst_108 = arith.constant 5.000000e-01 : f32
    %319 = vector.broadcast %cst_108 : f32 to vector<8x256xf32>
    %320 = arith.addf %318, %319 : vector<8x256xf32>
    %321 = vector.extract_strided_slice %312 {offsets = [0, 256], sizes = [8, 256], strides = [1, 1]} : vector<8x1024xf32> to vector<8x256xf32>
    %cst_109 = arith.constant 5.000000e-01 : f32
    %322 = vector.broadcast %cst_109 : f32 to vector<8x256xf32>
    %323 = arith.mulf %322, %321 : vector<8x256xf32>
    %324 = math.tanh %323 : vector<8x256xf32>
    %cst_110 = arith.constant 5.000000e-01 : f32
    %325 = vector.broadcast %cst_110 : f32 to vector<8x256xf32>
    %326 = arith.mulf %325, %324 : vector<8x256xf32>
    %cst_111 = arith.constant 5.000000e-01 : f32
    %327 = vector.broadcast %cst_111 : f32 to vector<8x256xf32>
    %328 = arith.addf %326, %327 : vector<8x256xf32>
    %329 = vector.extract_strided_slice %312 {offsets = [0, 512], sizes = [8, 256], strides = [1, 1]} : vector<8x1024xf32> to vector<8x256xf32>
    %330 = math.tanh %329 : vector<8x256xf32>
    %331 = vector.extract_strided_slice %312 {offsets = [0, 768], sizes = [8, 256], strides = [1, 1]} : vector<8x1024xf32> to vector<8x256xf32>
    %cst_112 = arith.constant 5.000000e-01 : f32
    %332 = vector.broadcast %cst_112 : f32 to vector<8x256xf32>
    %333 = arith.mulf %332, %331 : vector<8x256xf32>
    %334 = math.tanh %333 : vector<8x256xf32>
    %cst_113 = arith.constant 5.000000e-01 : f32
    %335 = vector.broadcast %cst_113 : f32 to vector<8x256xf32>
    %336 = arith.mulf %335, %334 : vector<8x256xf32>
    %cst_114 = arith.constant 5.000000e-01 : f32
    %337 = vector.broadcast %cst_114 : f32 to vector<8x256xf32>
    %338 = arith.addf %336, %337 : vector<8x256xf32>
    %339 = arith.mulf %328, %306 : vector<8x256xf32>
    %340 = arith.mulf %320, %330 : vector<8x256xf32>
    %341 = arith.addf %339, %340 : vector<8x256xf32>
    %342 = math.tanh %341 : vector<8x256xf32>
    %343 = arith.mulf %338, %342 : vector<8x256xf32>
    %344 = arith.select %15, %343, %28 : vector<8x256xi1>, vector<8x256xf32>
    %c72 = arith.constant 72 : index
    %c0_115 = arith.constant 0 : index
    %345 = vector.load %arg10[%c72, %c0_115] : memref<136x1024xf32, #tpu.memory_space<vmem>>, vector<8x1024xf32>
    %346 = arith.truncf %343 : vector<8x256xf32> to vector<8x256xbf16>
    %cst_116 = arith.constant dense<0.000000e+00> : vector<8x1024xf32>
    %347 = tpu.matmul %346, %9, %cst_116 {dimension_numbers = #tpu.dot_dimension_numbers<[1], [0], [0], [1], [0, 0, 1, 1], [], []>} : vector<8x256xbf16>, vector<256x1024xbf16>, vector<8x1024xf32> -> vector<8x1024xf32>
    %348 = arith.addf %345, %347 : vector<8x1024xf32>
    %349 = vector.extract_strided_slice %348 {offsets = [0, 0], sizes = [8, 256], strides = [1, 1]} : vector<8x1024xf32> to vector<8x256xf32>
    %cst_117 = arith.constant 5.000000e-01 : f32
    %350 = vector.broadcast %cst_117 : f32 to vector<8x256xf32>
    %351 = arith.mulf %350, %349 : vector<8x256xf32>
    %352 = math.tanh %351 : vector<8x256xf32>
    %cst_118 = arith.constant 5.000000e-01 : f32
    %353 = vector.broadcast %cst_118 : f32 to vector<8x256xf32>
    %354 = arith.mulf %353, %352 : vector<8x256xf32>
    %cst_119 = arith.constant 5.000000e-01 : f32
    %355 = vector.broadcast %cst_119 : f32 to vector<8x256xf32>
    %356 = arith.addf %354, %355 : vector<8x256xf32>
    %357 = vector.extract_strided_slice %348 {offsets = [0, 256], sizes = [8, 256], strides = [1, 1]} : vector<8x1024xf32> to vector<8x256xf32>
    %cst_120 = arith.constant 5.000000e-01 : f32
    %358 = vector.broadcast %cst_120 : f32 to vector<8x256xf32>
    %359 = arith.mulf %358, %357 : vector<8x256xf32>
    %360 = math.tanh %359 : vector<8x256xf32>
    %cst_121 = arith.constant 5.000000e-01 : f32
    %361 = vector.broadcast %cst_121 : f32 to vector<8x256xf32>
    %362 = arith.mulf %361, %360 : vector<8x256xf32>
    %cst_122 = arith.constant 5.000000e-01 : f32
    %363 = vector.broadcast %cst_122 : f32 to vector<8x256xf32>
    %364 = arith.addf %362, %363 : vector<8x256xf32>
    %365 = vector.extract_strided_slice %348 {offsets = [0, 512], sizes = [8, 256], strides = [1, 1]} : vector<8x1024xf32> to vector<8x256xf32>
    %366 = math.tanh %365 : vector<8x256xf32>
    %367 = vector.extract_strided_slice %348 {offsets = [0, 768], sizes = [8, 256], strides = [1, 1]} : vector<8x1024xf32> to vector<8x256xf32>
    %cst_123 = arith.constant 5.000000e-01 : f32
    %368 = vector.broadcast %cst_123 : f32 to vector<8x256xf32>
    %369 = arith.mulf %368, %367 : vector<8x256xf32>
    %370 = math.tanh %369 : vector<8x256xf32>
    %cst_124 = arith.constant 5.000000e-01 : f32
    %371 = vector.broadcast %cst_124 : f32 to vector<8x256xf32>
    %372 = arith.mulf %371, %370 : vector<8x256xf32>
    %cst_125 = arith.constant 5.000000e-01 : f32
    %373 = vector.broadcast %cst_125 : f32 to vector<8x256xf32>
    %374 = arith.addf %372, %373 : vector<8x256xf32>
    %375 = arith.mulf %364, %341 : vector<8x256xf32>
    %376 = arith.mulf %356, %366 : vector<8x256xf32>
    %377 = arith.addf %375, %376 : vector<8x256xf32>
    %378 = math.tanh %377 : vector<8x256xf32>
    %379 = arith.mulf %374, %378 : vector<8x256xf32>
    %c80 = arith.constant 80 : index
    %c0_126 = arith.constant 0 : index
    %380 = vector.load %arg10[%c80, %c0_126] : memref<136x1024xf32, #tpu.memory_space<vmem>>, vector<8x1024xf32>
    %381 = arith.truncf %379 : vector<8x256xf32> to vector<8x256xbf16>
    %cst_127 = arith.constant dense<0.000000e+00> : vector<8x1024xf32>
    %382 = tpu.matmul %381, %9, %cst_127 {dimension_numbers = #tpu.dot_dimension_numbers<[1], [0], [0], [1], [0, 0, 1, 1], [], []>} : vector<8x256xbf16>, vector<256x1024xbf16>, vector<8x1024xf32> -> vector<8x1024xf32>
    %383 = arith.addf %380, %382 : vector<8x1024xf32>
    %384 = vector.extract_strided_slice %383 {offsets = [0, 0], sizes = [8, 256], strides = [1, 1]} : vector<8x1024xf32> to vector<8x256xf32>
    %cst_128 = arith.constant 5.000000e-01 : f32
    %385 = vector.broadcast %cst_128 : f32 to vector<8x256xf32>
    %386 = arith.mulf %385, %384 : vector<8x256xf32>
    %387 = math.tanh %386 : vector<8x256xf32>
    %cst_129 = arith.constant 5.000000e-01 : f32
    %388 = vector.broadcast %cst_129 : f32 to vector<8x256xf32>
    %389 = arith.mulf %388, %387 : vector<8x256xf32>
    %cst_130 = arith.constant 5.000000e-01 : f32
    %390 = vector.broadcast %cst_130 : f32 to vector<8x256xf32>
    %391 = arith.addf %389, %390 : vector<8x256xf32>
    %392 = vector.extract_strided_slice %383 {offsets = [0, 256], sizes = [8, 256], strides = [1, 1]} : vector<8x1024xf32> to vector<8x256xf32>
    %cst_131 = arith.constant 5.000000e-01 : f32
    %393 = vector.broadcast %cst_131 : f32 to vector<8x256xf32>
    %394 = arith.mulf %393, %392 : vector<8x256xf32>
    %395 = math.tanh %394 : vector<8x256xf32>
    %cst_132 = arith.constant 5.000000e-01 : f32
    %396 = vector.broadcast %cst_132 : f32 to vector<8x256xf32>
    %397 = arith.mulf %396, %395 : vector<8x256xf32>
    %cst_133 = arith.constant 5.000000e-01 : f32
    %398 = vector.broadcast %cst_133 : f32 to vector<8x256xf32>
    %399 = arith.addf %397, %398 : vector<8x256xf32>
    %400 = vector.extract_strided_slice %383 {offsets = [0, 512], sizes = [8, 256], strides = [1, 1]} : vector<8x1024xf32> to vector<8x256xf32>
    %401 = math.tanh %400 : vector<8x256xf32>
    %402 = vector.extract_strided_slice %383 {offsets = [0, 768], sizes = [8, 256], strides = [1, 1]} : vector<8x1024xf32> to vector<8x256xf32>
    %cst_134 = arith.constant 5.000000e-01 : f32
    %403 = vector.broadcast %cst_134 : f32 to vector<8x256xf32>
    %404 = arith.mulf %403, %402 : vector<8x256xf32>
    %405 = math.tanh %404 : vector<8x256xf32>
    %cst_135 = arith.constant 5.000000e-01 : f32
    %406 = vector.broadcast %cst_135 : f32 to vector<8x256xf32>
    %407 = arith.mulf %406, %405 : vector<8x256xf32>
    %cst_136 = arith.constant 5.000000e-01 : f32
    %408 = vector.broadcast %cst_136 : f32 to vector<8x256xf32>
    %409 = arith.addf %407, %408 : vector<8x256xf32>
    %410 = arith.mulf %399, %377 : vector<8x256xf32>
    %411 = arith.mulf %391, %401 : vector<8x256xf32>
    %412 = arith.addf %410, %411 : vector<8x256xf32>
    %413 = math.tanh %412 : vector<8x256xf32>
    %414 = arith.mulf %409, %413 : vector<8x256xf32>
    %c88 = arith.constant 88 : index
    %c0_137 = arith.constant 0 : index
    %415 = vector.load %arg10[%c88, %c0_137] : memref<136x1024xf32, #tpu.memory_space<vmem>>, vector<8x1024xf32>
    %416 = arith.truncf %414 : vector<8x256xf32> to vector<8x256xbf16>
    %cst_138 = arith.constant dense<0.000000e+00> : vector<8x1024xf32>
    %417 = tpu.matmul %416, %9, %cst_138 {dimension_numbers = #tpu.dot_dimension_numbers<[1], [0], [0], [1], [0, 0, 1, 1], [], []>} : vector<8x256xbf16>, vector<256x1024xbf16>, vector<8x1024xf32> -> vector<8x1024xf32>
    %418 = arith.addf %415, %417 : vector<8x1024xf32>
    %419 = vector.extract_strided_slice %418 {offsets = [0, 0], sizes = [8, 256], strides = [1, 1]} : vector<8x1024xf32> to vector<8x256xf32>
    %cst_139 = arith.constant 5.000000e-01 : f32
    %420 = vector.broadcast %cst_139 : f32 to vector<8x256xf32>
    %421 = arith.mulf %420, %419 : vector<8x256xf32>
    %422 = math.tanh %421 : vector<8x256xf32>
    %cst_140 = arith.constant 5.000000e-01 : f32
    %423 = vector.broadcast %cst_140 : f32 to vector<8x256xf32>
    %424 = arith.mulf %423, %422 : vector<8x256xf32>
    %cst_141 = arith.constant 5.000000e-01 : f32
    %425 = vector.broadcast %cst_141 : f32 to vector<8x256xf32>
    %426 = arith.addf %424, %425 : vector<8x256xf32>
    %427 = vector.extract_strided_slice %418 {offsets = [0, 256], sizes = [8, 256], strides = [1, 1]} : vector<8x1024xf32> to vector<8x256xf32>
    %cst_142 = arith.constant 5.000000e-01 : f32
    %428 = vector.broadcast %cst_142 : f32 to vector<8x256xf32>
    %429 = arith.mulf %428, %427 : vector<8x256xf32>
    %430 = math.tanh %429 : vector<8x256xf32>
    %cst_143 = arith.constant 5.000000e-01 : f32
    %431 = vector.broadcast %cst_143 : f32 to vector<8x256xf32>
    %432 = arith.mulf %431, %430 : vector<8x256xf32>
    %cst_144 = arith.constant 5.000000e-01 : f32
    %433 = vector.broadcast %cst_144 : f32 to vector<8x256xf32>
    %434 = arith.addf %432, %433 : vector<8x256xf32>
    %435 = vector.extract_strided_slice %418 {offsets = [0, 512], sizes = [8, 256], strides = [1, 1]} : vector<8x1024xf32> to vector<8x256xf32>
    %436 = math.tanh %435 : vector<8x256xf32>
    %437 = vector.extract_strided_slice %418 {offsets = [0, 768], sizes = [8, 256], strides = [1, 1]} : vector<8x1024xf32> to vector<8x256xf32>
    %cst_145 = arith.constant 5.000000e-01 : f32
    %438 = vector.broadcast %cst_145 : f32 to vector<8x256xf32>
    %439 = arith.mulf %438, %437 : vector<8x256xf32>
    %440 = math.tanh %439 : vector<8x256xf32>
    %cst_146 = arith.constant 5.000000e-01 : f32
    %441 = vector.broadcast %cst_146 : f32 to vector<8x256xf32>
    %442 = arith.mulf %441, %440 : vector<8x256xf32>
    %cst_147 = arith.constant 5.000000e-01 : f32
    %443 = vector.broadcast %cst_147 : f32 to vector<8x256xf32>
    %444 = arith.addf %442, %443 : vector<8x256xf32>
    %445 = arith.mulf %434, %412 : vector<8x256xf32>
    %446 = arith.mulf %426, %436 : vector<8x256xf32>
    %447 = arith.addf %445, %446 : vector<8x256xf32>
    %448 = math.tanh %447 : vector<8x256xf32>
    %449 = arith.mulf %444, %448 : vector<8x256xf32>
    %c96 = arith.constant 96 : index
    %c0_148 = arith.constant 0 : index
    %450 = vector.load %arg10[%c96, %c0_148] : memref<136x1024xf32, #tpu.memory_space<vmem>>, vector<8x1024xf32>
    %451 = arith.truncf %449 : vector<8x256xf32> to vector<8x256xbf16>
    %cst_149 = arith.constant dense<0.000000e+00> : vector<8x1024xf32>
    %452 = tpu.matmul %451, %9, %cst_149 {dimension_numbers = #tpu.dot_dimension_numbers<[1], [0], [0], [1], [0, 0, 1, 1], [], []>} : vector<8x256xbf16>, vector<256x1024xbf16>, vector<8x1024xf32> -> vector<8x1024xf32>
    %453 = arith.addf %450, %452 : vector<8x1024xf32>
    %454 = vector.extract_strided_slice %453 {offsets = [0, 0], sizes = [8, 256], strides = [1, 1]} : vector<8x1024xf32> to vector<8x256xf32>
    %cst_150 = arith.constant 5.000000e-01 : f32
    %455 = vector.broadcast %cst_150 : f32 to vector<8x256xf32>
    %456 = arith.mulf %455, %454 : vector<8x256xf32>
    %457 = math.tanh %456 : vector<8x256xf32>
    %cst_151 = arith.constant 5.000000e-01 : f32
    %458 = vector.broadcast %cst_151 : f32 to vector<8x256xf32>
    %459 = arith.mulf %458, %457 : vector<8x256xf32>
    %cst_152 = arith.constant 5.000000e-01 : f32
    %460 = vector.broadcast %cst_152 : f32 to vector<8x256xf32>
    %461 = arith.addf %459, %460 : vector<8x256xf32>
    %462 = vector.extract_strided_slice %453 {offsets = [0, 256], sizes = [8, 256], strides = [1, 1]} : vector<8x1024xf32> to vector<8x256xf32>
    %cst_153 = arith.constant 5.000000e-01 : f32
    %463 = vector.broadcast %cst_153 : f32 to vector<8x256xf32>
    %464 = arith.mulf %463, %462 : vector<8x256xf32>
    %465 = math.tanh %464 : vector<8x256xf32>
    %cst_154 = arith.constant 5.000000e-01 : f32
    %466 = vector.broadcast %cst_154 : f32 to vector<8x256xf32>
    %467 = arith.mulf %466, %465 : vector<8x256xf32>
    %cst_155 = arith.constant 5.000000e-01 : f32
    %468 = vector.broadcast %cst_155 : f32 to vector<8x256xf32>
    %469 = arith.addf %467, %468 : vector<8x256xf32>
    %470 = vector.extract_strided_slice %453 {offsets = [0, 512], sizes = [8, 256], strides = [1, 1]} : vector<8x1024xf32> to vector<8x256xf32>
    %471 = math.tanh %470 : vector<8x256xf32>
    %472 = vector.extract_strided_slice %453 {offsets = [0, 768], sizes = [8, 256], strides = [1, 1]} : vector<8x1024xf32> to vector<8x256xf32>
    %cst_156 = arith.constant 5.000000e-01 : f32
    %473 = vector.broadcast %cst_156 : f32 to vector<8x256xf32>
    %474 = arith.mulf %473, %472 : vector<8x256xf32>
    %475 = math.tanh %474 : vector<8x256xf32>
    %cst_157 = arith.constant 5.000000e-01 : f32
    %476 = vector.broadcast %cst_157 : f32 to vector<8x256xf32>
    %477 = arith.mulf %476, %475 : vector<8x256xf32>
    %cst_158 = arith.constant 5.000000e-01 : f32
    %478 = vector.broadcast %cst_158 : f32 to vector<8x256xf32>
    %479 = arith.addf %477, %478 : vector<8x256xf32>
    %480 = arith.mulf %469, %447 : vector<8x256xf32>
    %481 = arith.mulf %461, %471 : vector<8x256xf32>
    %482 = arith.addf %480, %481 : vector<8x256xf32>
    %483 = math.tanh %482 : vector<8x256xf32>
    %484 = arith.mulf %479, %483 : vector<8x256xf32>
    %c104 = arith.constant 104 : index
    %c0_159 = arith.constant 0 : index
    %485 = vector.load %arg10[%c104, %c0_159] : memref<136x1024xf32, #tpu.memory_space<vmem>>, vector<8x1024xf32>
    %486 = arith.truncf %484 : vector<8x256xf32> to vector<8x256xbf16>
    %cst_160 = arith.constant dense<0.000000e+00> : vector<8x1024xf32>
    %487 = tpu.matmul %486, %9, %cst_160 {dimension_numbers = #tpu.dot_dimension_numbers<[1], [0], [0], [1], [0, 0, 1, 1], [], []>} : vector<8x256xbf16>, vector<256x1024xbf16>, vector<8x1024xf32> -> vector<8x1024xf32>
    %488 = arith.addf %485, %487 : vector<8x1024xf32>
    %489 = vector.extract_strided_slice %488 {offsets = [0, 0], sizes = [8, 256], strides = [1, 1]} : vector<8x1024xf32> to vector<8x256xf32>
    %cst_161 = arith.constant 5.000000e-01 : f32
    %490 = vector.broadcast %cst_161 : f32 to vector<8x256xf32>
    %491 = arith.mulf %490, %489 : vector<8x256xf32>
    %492 = math.tanh %491 : vector<8x256xf32>
    %cst_162 = arith.constant 5.000000e-01 : f32
    %493 = vector.broadcast %cst_162 : f32 to vector<8x256xf32>
    %494 = arith.mulf %493, %492 : vector<8x256xf32>
    %cst_163 = arith.constant 5.000000e-01 : f32
    %495 = vector.broadcast %cst_163 : f32 to vector<8x256xf32>
    %496 = arith.addf %494, %495 : vector<8x256xf32>
    %497 = vector.extract_strided_slice %488 {offsets = [0, 256], sizes = [8, 256], strides = [1, 1]} : vector<8x1024xf32> to vector<8x256xf32>
    %cst_164 = arith.constant 5.000000e-01 : f32
    %498 = vector.broadcast %cst_164 : f32 to vector<8x256xf32>
    %499 = arith.mulf %498, %497 : vector<8x256xf32>
    %500 = math.tanh %499 : vector<8x256xf32>
    %cst_165 = arith.constant 5.000000e-01 : f32
    %501 = vector.broadcast %cst_165 : f32 to vector<8x256xf32>
    %502 = arith.mulf %501, %500 : vector<8x256xf32>
    %cst_166 = arith.constant 5.000000e-01 : f32
    %503 = vector.broadcast %cst_166 : f32 to vector<8x256xf32>
    %504 = arith.addf %502, %503 : vector<8x256xf32>
    %505 = vector.extract_strided_slice %488 {offsets = [0, 512], sizes = [8, 256], strides = [1, 1]} : vector<8x1024xf32> to vector<8x256xf32>
    %506 = math.tanh %505 : vector<8x256xf32>
    %507 = vector.extract_strided_slice %488 {offsets = [0, 768], sizes = [8, 256], strides = [1, 1]} : vector<8x1024xf32> to vector<8x256xf32>
    %cst_167 = arith.constant 5.000000e-01 : f32
    %508 = vector.broadcast %cst_167 : f32 to vector<8x256xf32>
    %509 = arith.mulf %508, %507 : vector<8x256xf32>
    %510 = math.tanh %509 : vector<8x256xf32>
    %cst_168 = arith.constant 5.000000e-01 : f32
    %511 = vector.broadcast %cst_168 : f32 to vector<8x256xf32>
    %512 = arith.mulf %511, %510 : vector<8x256xf32>
    %cst_169 = arith.constant 5.000000e-01 : f32
    %513 = vector.broadcast %cst_169 : f32 to vector<8x256xf32>
    %514 = arith.addf %512, %513 : vector<8x256xf32>
    %515 = arith.mulf %504, %482 : vector<8x256xf32>
    %516 = arith.mulf %496, %506 : vector<8x256xf32>
    %517 = arith.addf %515, %516 : vector<8x256xf32>
    %518 = math.tanh %517 : vector<8x256xf32>
    %519 = arith.mulf %514, %518 : vector<8x256xf32>
    %c112 = arith.constant 112 : index
    %c0_170 = arith.constant 0 : index
    %520 = vector.load %arg10[%c112, %c0_170] : memref<136x1024xf32, #tpu.memory_space<vmem>>, vector<8x1024xf32>
    %521 = arith.truncf %519 : vector<8x256xf32> to vector<8x256xbf16>
    %cst_171 = arith.constant dense<0.000000e+00> : vector<8x1024xf32>
    %522 = tpu.matmul %521, %9, %cst_171 {dimension_numbers = #tpu.dot_dimension_numbers<[1], [0], [0], [1], [0, 0, 1, 1], [], []>} : vector<8x256xbf16>, vector<256x1024xbf16>, vector<8x1024xf32> -> vector<8x1024xf32>
    %523 = arith.addf %520, %522 : vector<8x1024xf32>
    %524 = vector.extract_strided_slice %523 {offsets = [0, 0], sizes = [8, 256], strides = [1, 1]} : vector<8x1024xf32> to vector<8x256xf32>
    %cst_172 = arith.constant 5.000000e-01 : f32
    %525 = vector.broadcast %cst_172 : f32 to vector<8x256xf32>
    %526 = arith.mulf %525, %524 : vector<8x256xf32>
    %527 = math.tanh %526 : vector<8x256xf32>
    %cst_173 = arith.constant 5.000000e-01 : f32
    %528 = vector.broadcast %cst_173 : f32 to vector<8x256xf32>
    %529 = arith.mulf %528, %527 : vector<8x256xf32>
    %cst_174 = arith.constant 5.000000e-01 : f32
    %530 = vector.broadcast %cst_174 : f32 to vector<8x256xf32>
    %531 = arith.addf %529, %530 : vector<8x256xf32>
    %532 = vector.extract_strided_slice %523 {offsets = [0, 256], sizes = [8, 256], strides = [1, 1]} : vector<8x1024xf32> to vector<8x256xf32>
    %cst_175 = arith.constant 5.000000e-01 : f32
    %533 = vector.broadcast %cst_175 : f32 to vector<8x256xf32>
    %534 = arith.mulf %533, %532 : vector<8x256xf32>
    %535 = math.tanh %534 : vector<8x256xf32>
    %cst_176 = arith.constant 5.000000e-01 : f32
    %536 = vector.broadcast %cst_176 : f32 to vector<8x256xf32>
    %537 = arith.mulf %536, %535 : vector<8x256xf32>
    %cst_177 = arith.constant 5.000000e-01 : f32
    %538 = vector.broadcast %cst_177 : f32 to vector<8x256xf32>
    %539 = arith.addf %537, %538 : vector<8x256xf32>
    %540 = vector.extract_strided_slice %523 {offsets = [0, 512], sizes = [8, 256], strides = [1, 1]} : vector<8x1024xf32> to vector<8x256xf32>
    %541 = math.tanh %540 : vector<8x256xf32>
    %542 = vector.extract_strided_slice %523 {offsets = [0, 768], sizes = [8, 256], strides = [1, 1]} : vector<8x1024xf32> to vector<8x256xf32>
    %cst_178 = arith.constant 5.000000e-01 : f32
    %543 = vector.broadcast %cst_178 : f32 to vector<8x256xf32>
    %544 = arith.mulf %543, %542 : vector<8x256xf32>
    %545 = math.tanh %544 : vector<8x256xf32>
    %cst_179 = arith.constant 5.000000e-01 : f32
    %546 = vector.broadcast %cst_179 : f32 to vector<8x256xf32>
    %547 = arith.mulf %546, %545 : vector<8x256xf32>
    %cst_180 = arith.constant 5.000000e-01 : f32
    %548 = vector.broadcast %cst_180 : f32 to vector<8x256xf32>
    %549 = arith.addf %547, %548 : vector<8x256xf32>
    %550 = arith.mulf %539, %517 : vector<8x256xf32>
    %551 = arith.mulf %531, %541 : vector<8x256xf32>
    %552 = arith.addf %550, %551 : vector<8x256xf32>
    %553 = math.tanh %552 : vector<8x256xf32>
    %554 = arith.mulf %549, %553 : vector<8x256xf32>
    %555 = arith.select %20, %554, %344 : vector<8x256xi1>, vector<8x256xf32>
    %c120 = arith.constant 120 : index
    %c0_181 = arith.constant 0 : index
    %556 = vector.load %arg10[%c120, %c0_181] : memref<136x1024xf32, #tpu.memory_space<vmem>>, vector<8x1024xf32>
    %557 = arith.truncf %554 : vector<8x256xf32> to vector<8x256xbf16>
    %cst_182 = arith.constant dense<0.000000e+00> : vector<8x1024xf32>
    %558 = tpu.matmul %557, %9, %cst_182 {dimension_numbers = #tpu.dot_dimension_numbers<[1], [0], [0], [1], [0, 0, 1, 1], [], []>} : vector<8x256xbf16>, vector<256x1024xbf16>, vector<8x1024xf32> -> vector<8x1024xf32>
    %559 = arith.addf %556, %558 : vector<8x1024xf32>
    %560 = vector.extract_strided_slice %559 {offsets = [0, 0], sizes = [8, 256], strides = [1, 1]} : vector<8x1024xf32> to vector<8x256xf32>
    %cst_183 = arith.constant 5.000000e-01 : f32
    %561 = vector.broadcast %cst_183 : f32 to vector<8x256xf32>
    %562 = arith.mulf %561, %560 : vector<8x256xf32>
    %563 = math.tanh %562 : vector<8x256xf32>
    %cst_184 = arith.constant 5.000000e-01 : f32
    %564 = vector.broadcast %cst_184 : f32 to vector<8x256xf32>
    %565 = arith.mulf %564, %563 : vector<8x256xf32>
    %cst_185 = arith.constant 5.000000e-01 : f32
    %566 = vector.broadcast %cst_185 : f32 to vector<8x256xf32>
    %567 = arith.addf %565, %566 : vector<8x256xf32>
    %568 = vector.extract_strided_slice %559 {offsets = [0, 256], sizes = [8, 256], strides = [1, 1]} : vector<8x1024xf32> to vector<8x256xf32>
    %cst_186 = arith.constant 5.000000e-01 : f32
    %569 = vector.broadcast %cst_186 : f32 to vector<8x256xf32>
    %570 = arith.mulf %569, %568 : vector<8x256xf32>
    %571 = math.tanh %570 : vector<8x256xf32>
    %cst_187 = arith.constant 5.000000e-01 : f32
    %572 = vector.broadcast %cst_187 : f32 to vector<8x256xf32>
    %573 = arith.mulf %572, %571 : vector<8x256xf32>
    %cst_188 = arith.constant 5.000000e-01 : f32
    %574 = vector.broadcast %cst_188 : f32 to vector<8x256xf32>
    %575 = arith.addf %573, %574 : vector<8x256xf32>
    %576 = vector.extract_strided_slice %559 {offsets = [0, 512], sizes = [8, 256], strides = [1, 1]} : vector<8x1024xf32> to vector<8x256xf32>
    %577 = math.tanh %576 : vector<8x256xf32>
    %578 = vector.extract_strided_slice %559 {offsets = [0, 768], sizes = [8, 256], strides = [1, 1]} : vector<8x1024xf32> to vector<8x256xf32>
    %cst_189 = arith.constant 5.000000e-01 : f32
    %579 = vector.broadcast %cst_189 : f32 to vector<8x256xf32>
    %580 = arith.mulf %579, %578 : vector<8x256xf32>
    %581 = math.tanh %580 : vector<8x256xf32>
    %cst_190 = arith.constant 5.000000e-01 : f32
    %582 = vector.broadcast %cst_190 : f32 to vector<8x256xf32>
    %583 = arith.mulf %582, %581 : vector<8x256xf32>
    %cst_191 = arith.constant 5.000000e-01 : f32
    %584 = vector.broadcast %cst_191 : f32 to vector<8x256xf32>
    %585 = arith.addf %583, %584 : vector<8x256xf32>
    %586 = arith.mulf %575, %552 : vector<8x256xf32>
    %587 = arith.mulf %567, %577 : vector<8x256xf32>
    %588 = arith.addf %586, %587 : vector<8x256xf32>
    %589 = math.tanh %588 : vector<8x256xf32>
    %590 = arith.mulf %585, %589 : vector<8x256xf32>
    %c128 = arith.constant 128 : index
    %c0_192 = arith.constant 0 : index
    %591 = vector.load %arg10[%c128, %c0_192] : memref<136x1024xf32, #tpu.memory_space<vmem>>, vector<8x1024xf32>
    %592 = arith.truncf %590 : vector<8x256xf32> to vector<8x256xbf16>
    %cst_193 = arith.constant dense<0.000000e+00> : vector<8x1024xf32>
    %593 = tpu.matmul %592, %9, %cst_193 {dimension_numbers = #tpu.dot_dimension_numbers<[1], [0], [0], [1], [0, 0, 1, 1], [], []>} : vector<8x256xbf16>, vector<256x1024xbf16>, vector<8x1024xf32> -> vector<8x1024xf32>
    %594 = arith.addf %591, %593 : vector<8x1024xf32>
    %595 = vector.extract_strided_slice %594 {offsets = [0, 0], sizes = [8, 256], strides = [1, 1]} : vector<8x1024xf32> to vector<8x256xf32>
    %cst_194 = arith.constant 5.000000e-01 : f32
    %596 = vector.broadcast %cst_194 : f32 to vector<8x256xf32>
    %597 = arith.mulf %596, %595 : vector<8x256xf32>
    %598 = math.tanh %597 : vector<8x256xf32>
    %cst_195 = arith.constant 5.000000e-01 : f32
    %599 = vector.broadcast %cst_195 : f32 to vector<8x256xf32>
    %600 = arith.mulf %599, %598 : vector<8x256xf32>
    %cst_196 = arith.constant 5.000000e-01 : f32
    %601 = vector.broadcast %cst_196 : f32 to vector<8x256xf32>
    %602 = arith.addf %600, %601 : vector<8x256xf32>
    %603 = vector.extract_strided_slice %594 {offsets = [0, 256], sizes = [8, 256], strides = [1, 1]} : vector<8x1024xf32> to vector<8x256xf32>
    %cst_197 = arith.constant 5.000000e-01 : f32
    %604 = vector.broadcast %cst_197 : f32 to vector<8x256xf32>
    %605 = arith.mulf %604, %603 : vector<8x256xf32>
    %606 = math.tanh %605 : vector<8x256xf32>
    %cst_198 = arith.constant 5.000000e-01 : f32
    %607 = vector.broadcast %cst_198 : f32 to vector<8x256xf32>
    %608 = arith.mulf %607, %606 : vector<8x256xf32>
    %cst_199 = arith.constant 5.000000e-01 : f32
    %609 = vector.broadcast %cst_199 : f32 to vector<8x256xf32>
    %610 = arith.addf %608, %609 : vector<8x256xf32>
    %611 = vector.extract_strided_slice %594 {offsets = [0, 512], sizes = [8, 256], strides = [1, 1]} : vector<8x1024xf32> to vector<8x256xf32>
    %612 = math.tanh %611 : vector<8x256xf32>
    %613 = vector.extract_strided_slice %594 {offsets = [0, 768], sizes = [8, 256], strides = [1, 1]} : vector<8x1024xf32> to vector<8x256xf32>
    %cst_200 = arith.constant 5.000000e-01 : f32
    %614 = vector.broadcast %cst_200 : f32 to vector<8x256xf32>
    %615 = arith.mulf %614, %613 : vector<8x256xf32>
    %616 = math.tanh %615 : vector<8x256xf32>
    %cst_201 = arith.constant 5.000000e-01 : f32
    %617 = vector.broadcast %cst_201 : f32 to vector<8x256xf32>
    %618 = arith.mulf %617, %616 : vector<8x256xf32>
    %cst_202 = arith.constant 5.000000e-01 : f32
    %619 = vector.broadcast %cst_202 : f32 to vector<8x256xf32>
    %620 = arith.addf %618, %619 : vector<8x256xf32>
    %621 = arith.mulf %610, %588 : vector<8x256xf32>
    %622 = arith.mulf %602, %612 : vector<8x256xf32>
    %623 = arith.addf %621, %622 : vector<8x256xf32>
    %624 = math.tanh %623 : vector<8x256xf32>
    %625 = arith.mulf %620, %624 : vector<8x256xf32>
    %626 = arith.select %25, %625, %555 : vector<8x256xi1>, vector<8x256xf32>
    %627 = arith.truncf %626 : vector<8x256xf32> to vector<8x256xbf16>
    %c0_203 = arith.constant 0 : index
    %c0_204 = arith.constant 0 : index
    %628 = vector.load %arg5[%c0_203, %c0_204] : memref<256x64xbf16, #tpu.memory_space<vmem>>, vector<256x64xbf16>
    %cst_205 = arith.constant dense<0.000000e+00> : vector<8x64xf32>
    %629 = tpu.matmul %627, %628, %cst_205 {dimension_numbers = #tpu.dot_dimension_numbers<[1], [0], [0], [1], [0, 0, 1, 1], [], []>} : vector<8x256xbf16>, vector<256x64xbf16>, vector<8x64xf32> -> vector<8x64xf32>
    %c0_206 = arith.constant 0 : index
    %c0_207 = arith.constant 0 : index
    %630 = vector.load %arg6[%c0_206, %c0_207] : memref<1x64xf32, #tpu.memory_space<vmem>>, vector<1x64xf32>
    %631 = vector.broadcast %630 : vector<1x64xf32> to vector<8x64xf32>
    %632 = arith.addf %629, %631 : vector<8x64xf32>
    %cst_208 = arith.constant 0.000000e+00 : f32
    %633 = vector.broadcast %cst_208 : f32 to vector<8x64xf32>
    %634 = arith.maximumf %632, %633 : vector<8x64xf32>
    %635 = arith.truncf %634 : vector<8x64xf32> to vector<8x64xbf16>
    %c0_209 = arith.constant 0 : index
    %c0_210 = arith.constant 0 : index
    %636 = vector.load %arg7[%c0_209, %c0_210] : memref<64x1xbf16, #tpu.memory_space<vmem>>, vector<64x1xbf16>
    %cst_211 = arith.constant dense<0.000000e+00> : vector<8x1xf32>
    %637 = tpu.matmul %635, %636, %cst_211 {dimension_numbers = #tpu.dot_dimension_numbers<[1], [0], [0], [1], [0, 0, 1, 1], [], []>} : vector<8x64xbf16>, vector<64x1xbf16>, vector<8x1xf32> -> vector<8x1xf32>
    %c0_212 = arith.constant 0 : index
    %c0_213 = arith.constant 0 : index
    %638 = vector.load %arg8[%c0_212, %c0_213] : memref<1x1xf32, #tpu.memory_space<vmem>>, vector<1x1xf32>
    %639 = vector.broadcast %638 : vector<1x1xf32> to vector<8x1xf32>
    %640 = arith.addf %637, %639 : vector<8x1xf32>
    %cst_214 = arith.constant 5.000000e-01 : f32
    %641 = vector.broadcast %cst_214 : f32 to vector<8x1xf32>
    %642 = arith.mulf %641, %640 : vector<8x1xf32>
    %643 = math.tanh %642 : vector<8x1xf32>
    %cst_215 = arith.constant 5.000000e-01 : f32
    %644 = vector.broadcast %cst_215 : f32 to vector<8x1xf32>
    %645 = arith.mulf %644, %643 : vector<8x1xf32>
    %cst_216 = arith.constant 5.000000e-01 : f32
    %646 = vector.broadcast %cst_216 : f32 to vector<8x1xf32>
    %647 = arith.addf %645, %646 : vector<8x1xf32>
    %c0_217 = arith.constant 0 : index
    %c0_218 = arith.constant 0 : index
    %648 = vector.load %arg9[%c0_217, %c0_218] : memref<8x1xf32, #tpu.memory_space<vmem>>, vector<8x1xf32>
    tpu.vector_store %arg9[%c0_217, %c0_218], %647 {strides = array<i32>} : memref<8x1xf32, #tpu.memory_space<vmem>>, vector<8x1xf32>,
    return
  }
  func.func @transform_0(%arg0: i32) -> (i32, i32, i32) {
    %c0_i32 = arith.constant 0 : i32
    %c0_i32_0 = arith.constant 0 : i32
    %c0_i32_1 = arith.constant 0 : i32
    return %c0_i32, %arg0, %c0_i32_0 : i32, i32, i32
  }
  func.func @transform_1(%arg0: i32) -> (i32, i32) {
    %c0_i32 = arith.constant 0 : i32
    %c0_i32_0 = arith.constant 0 : i32
    %c0_i32_1 = arith.constant 0 : i32
    return %c0_i32, %c0_i32_0 : i32, i32
  }
  func.func @transform_2(%arg0: i32) -> (i32, i32) {
    %c0_i32 = arith.constant 0 : i32
    %c0_i32_0 = arith.constant 0 : i32
    %c0_i32_1 = arith.constant 0 : i32
    return %c0_i32, %c0_i32_0 : i32, i32
  }
  func.func @transform_3(%arg0: i32) -> (i32, i32) {
    %c0_i32 = arith.constant 0 : i32
    %c0_i32_0 = arith.constant 0 : i32
    %c0_i32_1 = arith.constant 0 : i32
    return %c0_i32, %c0_i32_0 : i32, i32
  }
  func.func @transform_4(%arg0: i32) -> (i32, i32) {
    %c0_i32 = arith.constant 0 : i32
    %c0_i32_0 = arith.constant 0 : i32
    %c0_i32_1 = arith.constant 0 : i32
    return %c0_i32, %c0_i32_0 : i32, i32
  }
  func.func @transform_5(%arg0: i32) -> (i32, i32) {
    %c0_i32 = arith.constant 0 : i32
    %c0_i32_0 = arith.constant 0 : i32
    %c0_i32_1 = arith.constant 0 : i32
    return %c0_i32, %c0_i32_0 : i32, i32
  }
  func.func @transform_6(%arg0: i32) -> (i32, i32) {
    %c0_i32 = arith.constant 0 : i32
    %c0_i32_0 = arith.constant 0 : i32
    %c0_i32_1 = arith.constant 0 : i32
    return %c0_i32, %c0_i32_0 : i32, i32
  }
  func.func @transform_7(%arg0: i32) -> (i32, i32) {
    %c0_i32 = arith.constant 0 : i32
    %c0_i32_0 = arith.constant 0 : i32
    %c0_i32_1 = arith.constant 0 : i32
    return %c0_i32, %c0_i32_0 : i32, i32
  }
  func.func @transform_8(%arg0: i32) -> (i32, i32) {
    %c0_i32 = arith.constant 0 : i32
    %c0_i32_0 = arith.constant 0 : i32
    return %arg0, %c0_i32 : i32, i32
  }
}

</mosaic_0001>

<llo_original>
// kernel: lstm_net_forward.1
$region0: #{lstm_net_forward.1}
  #allocation0 [shape = 'u32[]', space=smem, size = 0x4, offset = 0x4, fixed_abs, tag = 'smem constant byte address 0x4 - core index']
  #allocation1 [shape = 'u32[144,128]{1,0:T(1,128)}', space=vmem, size = 0x12000, scoped, tag = 'internal scratch']
  #allocation2 [shape = 'f32[136,1024]{1,0:T(8,128)}', space=vmem, size = 0x88000, scoped, tag = 'scratch operand']
  #allocation3 [shape = 'f32[1,1]{1,0:T(1,128)S(1)}', space=vmem, size = 0x200, scoped, tag = 'scoped memory for lstm_net_forward.1']
  %s0 = inlined_call_operand.vmem [shape: f32[17,8,128], index: 0, kind: input, shape index: {}]
  %s1 = inlined_call_operand.vmem [shape: bf16[128,1024], index: 1, kind: input, shape index: {}]
  %s2 = inlined_call_operand.vmem [shape: f32[1,1024], index: 2, kind: input, shape index: {}]
  %s3 = inlined_call_operand.vmem [shape: bf16[256,1024], index: 3, kind: input, shape index: {}]
  %s4 = inlined_call_operand.vmem [shape: bf16[256,64], index: 4, kind: input, shape index: {}]
  %s5 = inlined_call_operand.vmem [shape: f32[1,64], index: 5, kind: input, shape index: {}]
  %s6 = inlined_call_operand.vmem [shape: bf16[64,1], index: 6, kind: input, shape index: {}]
  %s7 = inlined_call_operand.<no memory space> [shape: f32[1,1], index: 7, kind: input, shape index: {}]
  %s8 = inlined_call_operand.vmem [shape: f32[8,1], index: 8, kind: output, shape index: {}]
  %s9 = sld [smem:[#allocation0]]
  $region42: #{lstm_net_forward.1} parent=0
    _
  %s11 = ssub.s32 1, %s9
  %s12 = scalar_select 0, %s11, %s9
  %v13 = vstv %s7
  %14 = vst [vmem:[#allocation3] sm:$0x1] %v13
  // Predicated region
  $region2: #{lstm_net_forward.1} parent=0 // pred_check
    _
  $region3: #{lstm_net_forward.1} parent=0 // pred_check_branch
    %16 = sbr.rel (0) target = $region5
  $region4: #{lstm_net_forward.1} parent=0 // pred_region
    _
  $region5: #{lstm_net_forward.1} parent=0 // pred_fallthru
    _
  // Predicated region
  $region6: #{lstm_net_forward.1} parent=0 // pred_check
    _
  $region7: #{lstm_net_forward.1} parent=0 // pred_check_branch
    %18 = sbr.rel (0) target = $region9
  $region8: #{lstm_net_forward.1} parent=0 // pred_region
    _
  $region9: #{lstm_net_forward.1} parent=0 // pred_fallthru
    _
  // Predicated region
  $region10: #{lstm_net_forward.1} parent=0 // pred_check
    _
  $region11: #{lstm_net_forward.1} parent=0 // pred_check_branch
    %20 = sbr.rel (0) target = $region13
  $region12: #{lstm_net_forward.1} parent=0 // pred_region
    _
  $region13: #{lstm_net_forward.1} parent=0 // pred_fallthru
    _
  // Predicated region
  $region14: #{lstm_net_forward.1} parent=0 // pred_check
    _
  $region15: #{lstm_net_forward.1} parent=0 // pred_check_branch
    %22 = sbr.rel (0) target = $region17
  $region16: #{lstm_net_forward.1} parent=0 // pred_region
    _
  $region17: #{lstm_net_forward.1} parent=0 // pred_fallthru
    _
  // Predicated region
  $region18: #{lstm_net_forward.1} parent=0 // pred_check
    _
  $region19: #{lstm_net_forward.1} parent=0 // pred_check_branch
    %24 = sbr.rel (0) target = $region21
  $region20: #{lstm_net_forward.1} parent=0 // pred_region
    _
  $region21: #{lstm_net_forward.1} parent=0 // pred_fallthru
    _
  // Predicated region
  $region22: #{lstm_net_forward.1} parent=0 // pred_check
    _
  $region23: #{lstm_net_forward.1} parent=0 // pred_check_branch
    %26 = sbr.rel (0) target = $region25
  $region24: #{lstm_net_forward.1} parent=0 // pred_region
    _
  $region25: #{lstm_net_forward.1} parent=0 // pred_fallthru
    _
  // Predicated region
  $region26: #{lstm_net_forward.1} parent=0 // pred_check
    _
  $region27: #{lstm_net_forward.1} parent=0 // pred_check_branch
    %28 = sbr.rel (0) target = $region29
  $region28: #{lstm_net_forward.1} parent=0 // pred_region
    _
  $region29: #{lstm_net_forward.1} parent=0 // pred_fallthru
    _
  // Predicated region
  $region30: #{lstm_net_forward.1} parent=0 // pred_check
    _
  $region31: #{lstm_net_forward.1} parent=0 // pred_check_branch
    %30 = sbr.rel (0) target = $region33
  $region32: #{lstm_net_forward.1} parent=0 // pred_region
    _
  $region33: #{lstm_net_forward.1} parent=0 // pred_fallthru
    _
  %v32 = vld [vmem:[%s0] sm:$0xff]
  %v33 = vld [vmem:[%s0 + $0x8] sm:$0xff]
  %v34 = vld [vmem:[%s0 + $0x10] sm:$0xff]
  %v35 = vld [vmem:[%s0 + $0x18] sm:$0xff]
  %v36 = vld [vmem:[%s0 + $0x20] sm:$0xff]
  %v37 = vld [vmem:[%s0 + $0x28] sm:$0xff]
  %v38 = vld [vmem:[%s0 + $0x30] sm:$0xff]
  %v39 = vld [vmem:[%s0 + $0x38] sm:$0xff]
  %v40 = vld [vmem:[%s0 + $0x40] sm:$0xff]
  %v41 = vld [vmem:[%s0 + $0x48] sm:$0xff]
  %v42 = vld [vmem:[%s0 + $0x50] sm:$0xff]
  %v43 = vld [vmem:[%s0 + $0x58] sm:$0xff]
  %v44 = vld [vmem:[%s0 + $0x60] sm:$0xff]
  %v45 = vld [vmem:[%s0 + $0x68] sm:$0xff]
  %v46 = vld [vmem:[%s0 + $0x70] sm:$0xff]
  %v47 = vld [vmem:[%s0 + $0x78] sm:$0xff]
  %v48 = vld [vmem:[%s0 + $0x80] sm:$0xff]
  %v49 = vpack.c.bf16 %v33, %v32
  %v50 = vpack.c.bf16 %v35, %v34
  %v51 = vpack.c.bf16 %v37, %v36
  %v52 = vpack.c.bf16 %v39, %v38
  %v53 = vpack.c.bf16 %v41, %v40
  %v54 = vpack.c.bf16 %v43, %v42
  %v55 = vpack.c.bf16 %v45, %v44
  %v56 = vpack.c.bf16 %v47, %v46
  %v57 = vpack.c.bf16 %v48, %v48
  %v58 = vld [vmem:[%s1] sm:$0xff]
  %v59 = vld [vmem:[%s1 + $0x8] sm:$0xff]
  %v60 = vld [vmem:[%s1 + $0x10] sm:$0xff]
  %v61 = vld [vmem:[%s1 + $0x18] sm:$0xff]
  %v62 = vld [vmem:[%s1 + $0x20] sm:$0xff]
  %v63 = vld [vmem:[%s1 + $0x28] sm:$0xff]
  %v64 = vld [vmem:[%s1 + $0x30] sm:$0xff]
  %v65 = vld [vmem:[%s1 + $0x38] sm:$0xff]
  %v66 = vld [vmem:[%s1 + $0x40] sm:$0xff]
  %v67 = vld [vmem:[%s1 + $0x48] sm:$0xff]
  %v68 = vld [vmem:[%s1 + $0x50] sm:$0xff]
  %v69 = vld [vmem:[%s1 + $0x58] sm:$0xff]
  %v70 = vld [vmem:[%s1 + $0x60] sm:$0xff]
  %v71 = vld [vmem:[%s1 + $0x68] sm:$0xff]
  %v72 = vld [vmem:[%s1 + $0x70] sm:$0xff]
  %v73 = vld [vmem:[%s1 + $0x78] sm:$0xff]
  %v74 = vld [vmem:[%s1 + $0x80] sm:$0xff]
  %v75 = vld [vmem:[%s1 + $0x88] sm:$0xff]
  %v76 = vld [vmem:[%s1 + $0x90] sm:$0xff]
  %v77 = vld [vmem:[%s1 + $0x98] sm:$0xff]
  %v78 = vld [vmem:[%s1 + $0xa0] sm:$0xff]
  %v79 = vld [vmem:[%s1 + $0xa8] sm:$0xff]
  %v80 = vld [vmem:[%s1 + $0xb0] sm:$0xff]
  %v81 = vld [vmem:[%s1 + $0xb8] sm:$0xff]
  %v82 = vld [vmem:[%s1 + $0xc0] sm:$0xff]
  %v83 = vld [vmem:[%s1 + $0xc8] sm:$0xff]
  %v84 = vld [vmem:[%s1 + $0xd0] sm:$0xff]
  %v85 = vld [vmem:[%s1 + $0xd8] sm:$0xff]
  %v86 = vld [vmem:[%s1 + $0xe0] sm:$0xff]
  %v87 = vld [vmem:[%s1 + $0xe8] sm:$0xff]
  %v88 = vld [vmem:[%s1 + $0xf0] sm:$0xff]
  %v89 = vld [vmem:[%s1 + $0xf8] sm:$0xff]
  %v90 = vld [vmem:[%s1 + $0x100] sm:$0xff]
  %v91 = vld [vmem:[%s1 + $0x108] sm:$0xff]
  %v92 = vld [vmem:[%s1 + $0x110] sm:$0xff]
  %v93 = vld [vmem:[%s1 + $0x118] sm:$0xff]
  %v94 = vld [vmem:[%s1 + $0x120] sm:$0xff]
  %v95 = vld [vmem:[%s1 + $0x128] sm:$0xff]
  %v96 = vld [vmem:[%s1 + $0x130] sm:$0xff]
  %v97 = vld [vmem:[%s1 + $0x138] sm:$0xff]
  %v98 = vld [vmem:[%s1 + $0x140] sm:$0xff]
  %v99 = vld [vmem:[%s1 + $0x148] sm:$0xff]
  %v100 = vld [vmem:[%s1 + $0x150] sm:$0xff]
  %v101 = vld [vmem:[%s1 + $0x158] sm:$0xff]
  %v102 = vld [vmem:[%s1 + $0x160] sm:$0xff]
  %v103 = vld [vmem:[%s1 + $0x168] sm:$0xff]
  %v104 = vld [vmem:[%s1 + $0x170] sm:$0xff]
  %v105 = vld [vmem:[%s1 + $0x178] sm:$0xff]
  %v106 = vld [vmem:[%s1 + $0x180] sm:$0xff]
  %v107 = vld [vmem:[%s1 + $0x188] sm:$0xff]
  %v108 = vld [vmem:[%s1 + $0x190] sm:$0xff]
  %v109 = vld [vmem:[%s1 + $0x198] sm:$0xff]
  %v110 = vld [vmem:[%s1 + $0x1a0] sm:$0xff]
  %v111 = vld [vmem:[%s1 + $0x1a8] sm:$0xff]
  %v112 = vld [vmem:[%s1 + $0x1b0] sm:$0xff]
  %v113 = vld [vmem:[%s1 + $0x1b8] sm:$0xff]
  %v114 = vld [vmem:[%s1 + $0x1c0] sm:$0xff]
  %v115 = vld [vmem:[%s1 + $0x1c8] sm:$0xff]
  %v116 = vld [vmem:[%s1 + $0x1d0] sm:$0xff]
  %v117 = vld [vmem:[%s1 + $0x1d8] sm:$0xff]
  %v118 = vld [vmem:[%s1 + $0x1e0] sm:$0xff]
  %v119 = vld [vmem:[%s1 + $0x1e8] sm:$0xff]
  %v120 = vld [vmem:[%s1 + $0x1f0] sm:$0xff]
  %v121 = vld [vmem:[%s1 + $0x1f8] sm:$0xff]
  %v122 = vld [vmem:[%s2] sm:$0xff]
  %v124 = vlaneseq
  %v125 = vshrl.u32 %v124, 7
  %v126 = vsub.s32 0, %v125
  %v127 = vrot.slane %v122, %v126
  %v128 = vlaneseq
  %v129 = vshrl.u32 %v128, 7
  %v130 = vsub.s32 1, %v129
  %v131 = vrot.slane %v122, %v130
  %v132 = vlaneseq
  %v133 = vshrl.u32 %v132, 7
  %v134 = vsub.s32 2, %v133
  %v135 = vrot.slane %v122, %v134
  %v136 = vlaneseq
  %v137 = vshrl.u32 %v136, 7
  %v138 = vsub.s32 3, %v137
  %v139 = vrot.slane %v122, %v138
  %v140 = vlaneseq
  %v141 = vshrl.u32 %v140, 7
  %v142 = vsub.s32 4, %v141
  %v143 = vrot.slane %v122, %v142
  %v144 = vlaneseq
  %v145 = vshrl.u32 %v144, 7
  %v146 = vsub.s32 5, %v145
  %v147 = vrot.slane %v122, %v146
  %v148 = vlaneseq
  %v149 = vshrl.u32 %v148, 7
  %v150 = vsub.s32 6, %v149
  %v151 = vrot.slane %v122, %v150
  %v152 = vlaneseq
  %v153 = vshrl.u32 %v152, 7
  %v154 = vsub.s32 7, %v153
  %v155 = vrot.slane %v122, %v154
  %v228 = vunpack.c.l.b16 %v58
  %v229 = vunpack.c.h.b16 %v58
  %v230 = vunpack.c.l.b16 %v59
  %v231 = vunpack.c.h.b16 %v59
  %v232 = vunpack.c.l.b16 %v60
  %v233 = vunpack.c.h.b16 %v60
  %v234 = vunpack.c.l.b16 %v61
  %v235 = vunpack.c.h.b16 %v61
  %v236 = vunpack.c.l.b16 %v62
  %v237 = vunpack.c.h.b16 %v62
  %v238 = vunpack.c.l.b16 %v63
  %v239 = vunpack.c.h.b16 %v63
  %v240 = vunpack.c.l.b16 %v64
  %v241 = vunpack.c.h.b16 %v64
  %v242 = vunpack.c.l.b16 %v65
  %v243 = vunpack.c.h.b16 %v65
  %v244 = vunpack.c.l.b16 %v66
  %v245 = vunpack.c.h.b16 %v66
  %v246 = vunpack.c.l.b16 %v67
  %v247 = vunpack.c.h.b16 %v67
  %v248 = vunpack.c.l.b16 %v68
  %v249 = vunpack.c.h.b16 %v68
  %v250 = vunpack.c.l.b16 %v69
  %v251 = vunpack.c.h.b16 %v69
  %v252 = vunpack.c.l.b16 %v70
  %v253 = vunpack.c.h.b16 %v70
  %v254 = vunpack.c.l.b16 %v71
  %v255 = vunpack.c.h.b16 %v71
  %v256 = vunpack.c.l.b16 %v72
  %v257 = vunpack.c.h.b16 %v72
  %v258 = vunpack.c.l.b16 %v73
  %v259 = vunpack.c.h.b16 %v73
  %v260 = vunpack.c.l.b16 %v74
  %v261 = vunpack.c.h.b16 %v74
  %v262 = vunpack.c.l.b16 %v75
  %v263 = vunpack.c.h.b16 %v75
  %v264 = vunpack.c.l.b16 %v76
  %v265 = vunpack.c.h.b16 %v76
  %v266 = vunpack.c.l.b16 %v77
  %v267 = vunpack.c.h.b16 %v77
  %v268 = vunpack.c.l.b16 %v78
  %v269 = vunpack.c.h.b16 %v78
  %v270 = vunpack.c.l.b16 %v79
  %v271 = vunpack.c.h.b16 %v79
  %v272 = vunpack.c.l.b16 %v80
  %v273 = vunpack.c.h.b16 %v80
  %v274 = vunpack.c.l.b16 %v81
  %v275 = vunpack.c.h.b16 %v81
  %v276 = vunpack.c.l.b16 %v82
  %v277 = vunpack.c.h.b16 %v82
  %v278 = vunpack.c.l.b16 %v83
  %v279 = vunpack.c.h.b16 %v83
  %v280 = vunpack.c.l.b16 %v84
  %v281 = vunpack.c.h.b16 %v84
  %v282 = vunpack.c.l.b16 %v85
  %v283 = vunpack.c.h.b16 %v85
  %v284 = vunpack.c.l.b16 %v86
  %v285 = vunpack.c.h.b16 %v86
  %v286 = vunpack.c.l.b16 %v87
  %v287 = vunpack.c.h.b16 %v87
  %v288 = vunpack.c.l.b16 %v88
  %v289 = vunpack.c.h.b16 %v88
  %v290 = vunpack.c.l.b16 %v89
  %v291 = vunpack.c.h.b16 %v89
  %v292 = vunpack.c.l.b16 %v90
  %v293 = vunpack.c.h.b16 %v90
  %v294 = vunpack.c.l.b16 %v91
  %v295 = vunpack.c.h.b16 %v91
  %v296 = vunpack.c.l.b16 %v92
  %v297 = vunpack.c.h.b16 %v92
  %v298 = vunpack.c.l.b16 %v93
  %v299 = vunpack.c.h.b16 %v93
  %v300 = vunpack.c.l.b16 %v94
  %v301 = vunpack.c.h.b16 %v94
  %v302 = vunpack.c.l.b16 %v95
  %v303 = vunpack.c.h.b16 %v95
  %v304 = vunpack.c.l.b16 %v96
  %v305 = vunpack.c.h.b16 %v96
  %v306 = vunpack.c.l.b16 %v97
  %v307 = vunpack.c.h.b16 %v97
  %v308 = vunpack.c.l.b16 %v98
  %v309 = vunpack.c.h.b16 %v98
  %v310 = vunpack.c.l.b16 %v99
  %v311 = vunpack.c.h.b16 %v99
  %v312 = vunpack.c.l.b16 %v100
  %v313 = vunpack.c.h.b16 %v100
  %v314 = vunpack.c.l.b16 %v101
  %v315 = vunpack.c.h.b16 %v101
  %v316 = vunpack.c.l.b16 %v102
  %v317 = vunpack.c.h.b16 %v102
  %v318 = vunpack.c.l.b16 %v103
  %v319 = vunpack.c.h.b16 %v103
  %v320 = vunpack.c.l.b16 %v104
  %v321 = vunpack.c.h.b16 %v104
  %v322 = vunpack.c.l.b16 %v105
  %v323 = vunpack.c.h.b16 %v105
  %v324 = vunpack.c.l.b16 %v106
  %v325 = vunpack.c.h.b16 %v106
  %v326 = vunpack.c.l.b16 %v107
  %v327 = vunpack.c.h.b16 %v107
  %v328 = vunpack.c.l.b16 %v108
  %v329 = vunpack.c.h.b16 %v108
  %v330 = vunpack.c.l.b16 %v109
  %v331 = vunpack.c.h.b16 %v109
  %v332 = vunpack.c.l.b16 %v110
  %v333 = vunpack.c.h.b16 %v110
  %v334 = vunpack.c.l.b16 %v111
  %v335 = vunpack.c.h.b16 %v111
  %v336 = vunpack.c.l.b16 %v112
  %v337 = vunpack.c.h.b16 %v112
  %v338 = vunpack.c.l.b16 %v113
  %v339 = vunpack.c.h.b16 %v113
  %v340 = vunpack.c.l.b16 %v114
  %v341 = vunpack.c.h.b16 %v114
  %v342 = vunpack.c.l.b16 %v115
  %v343 = vunpack.c.h.b16 %v115
  %v344 = vunpack.c.l.b16 %v116
  %v345 = vunpack.c.h.b16 %v116
  %v346 = vunpack.c.l.b16 %v117
  %v347 = vunpack.c.h.b16 %v117
  %v348 = vunpack.c.l.b16 %v118
  %v349 = vunpack.c.h.b16 %v118
  %v350 = vunpack.c.l.b16 %v119
  %v351 = vunpack.c.h.b16 %v119
  %v352 = vunpack.c.l.b16 %v120
  %v353 = vunpack.c.h.b16 %v120
  %v354 = vunpack.c.l.b16 %v121
  %v355 = vunpack.c.h.b16 %v121
  %v356 = vpack.c.b16 %v236, %v228
  %v357 = vpack.c.b16 %v237, %v229
  %v358 = vpack.c.b16 %v238, %v230
  %v359 = vpack.c.b16 %v239, %v231
  %v360 = vpack.c.b16 %v240, %v232
  %v361 = vpack.c.b16 %v241, %v233
  %v362 = vpack.c.b16 %v242, %v234
  %v363 = vpack.c.b16 %v243, %v235
  %v364 = vpack.c.b16 %v252, %v244
  %v365 = vpack.c.b16 %v253, %v245
  %v366 = vpack.c.b16 %v254, %v246
  %v367 = vpack.c.b16 %v255, %v247
  %v368 = vpack.c.b16 %v256, %v248
  %v369 = vpack.c.b16 %v257, %v249
  %v370 = vpack.c.b16 %v258, %v250
  %v371 = vpack.c.b16 %v259, %v251
  %v372 = vpack.c.b16 %v268, %v260
  %v373 = vpack.c.b16 %v269, %v261
  %v374 = vpack.c.b16 %v270, %v262
  %v375 = vpack.c.b16 %v271, %v263
  %v376 = vpack.c.b16 %v272, %v264
  %v377 = vpack.c.b16 %v273, %v265
  %v378 = vpack.c.b16 %v274, %v266
  %v379 = vpack.c.b16 %v275, %v267
  %v380 = vpack.c.b16 %v284, %v276
  %v381 = vpack.c.b16 %v285, %v277
  %v382 = vpack.c.b16 %v286, %v278
  %v383 = vpack.c.b16 %v287, %v279
  %v384 = vpack.c.b16 %v288, %v280
  %v385 = vpack.c.b16 %v289, %v281
  %v386 = vpack.c.b16 %v290, %v282
  %v387 = vpack.c.b16 %v291, %v283
  %v388 = vpack.c.b16 %v300, %v292
  %v389 = vpack.c.b16 %v301, %v293
  %v390 = vpack.c.b16 %v302, %v294
  %v391 = vpack.c.b16 %v303, %v295
  %v392 = vpack.c.b16 %v304, %v296
  %v393 = vpack.c.b16 %v305, %v297
  %v394 = vpack.c.b16 %v306, %v298
  %v395 = vpack.c.b16 %v307, %v299
  %v396 = vpack.c.b16 %v316, %v308
  %v397 = vpack.c.b16 %v317, %v309
  %v398 = vpack.c.b16 %v318, %v310
  %v399 = vpack.c.b16 %v319, %v311
  %v400 = vpack.c.b16 %v320, %v312
  %v401 = vpack.c.b16 %v321, %v313
  %v402 = vpack.c.b16 %v322, %v314
  %v403 = vpack.c.b16 %v323, %v315
  %v404 = vpack.c.b16 %v332, %v324
  %v405 = vpack.c.b16 %v333, %v325
  %v406 = vpack.c.b16 %v334, %v326
  %v407 = vpack.c.b16 %v335, %v327
  %v408 = vpack.c.b16 %v336, %v328
  %v409 = vpack.c.b16 %v337, %v329
  %v410 = vpack.c.b16 %v338, %v330
  %v411 = vpack.c.b16 %v339, %v331
  %v412 = vpack.c.b16 %v348, %v340
  %v413 = vpack.c.b16 %v349, %v341
  %v414 = vpack.c.b16 %v350, %v342
  %v415 = vpack.c.b16 %v351, %v343
  %v416 = vpack.c.b16 %v352, %v344
  %v417 = vpack.c.b16 %v353, %v345
  %v418 = vpack.c.b16 %v354, %v346
  %v419 = vpack.c.b16 %v355, %v347
  %484 = vmatprep.subr.bf16.mxu0 %v357
  %485 = vmatpush1.bf16.msra.mxu0 %v356
  %486 = vmatprep.subr.bf16.mxu0 %v365
  %487 = vmatpush1.bf16.msra.mxu0 %v364
  %488 = vmatprep.subr.bf16.mxu0 %v373
  %489 = vmatpush1.bf16.msra.mxu0 %v372
  %490 = vmatprep.subr.bf16.mxu0 %v381
  %491 = vmatpush1.bf16.msra.mxu0 %v380
  %492 = vmatprep.subr.bf16.mxu0 %v389
  %493 = vmatpush1.bf16.msra.mxu0 %v388
  %494 = vmatprep.subr.bf16.mxu0 %v397
  %495 = vmatpush1.bf16.msra.mxu0 %v396
  %496 = vmatprep.subr.bf16.mxu0 %v405
  %497 = vmatpush1.bf16.msra.mxu0 %v404
  %498 = vmatprep.subr.bf16.mxu0 %v413
  %499 = vmatpush1.bf16.msra.mxu0 %v412
  %500 = vmatprep.subr.bf16.mxu0 0
  %501 = vmatpush1.bf16.msra.mxu0 0
  %502 = vmatprep.subr.bf16.mxu0 0
  %503 = vmatpush1.bf16.msra.mxu0 0
  %504 = vmatprep.subr.bf16.mxu0 0
  %505 = vmatpush1.bf16.msra.mxu0 0
  %506 = vmatprep.subr.bf16.mxu0 0
  %507 = vmatpush1.bf16.msra.mxu0 0
  %508 = vmatprep.subr.bf16.mxu0 0
  %509 = vmatpush1.bf16.msra.mxu0 0
  %510 = vmatprep.subr.bf16.mxu0 0
  %511 = vmatpush1.bf16.msra.mxu0 0
  %512 = vmatprep.subr.bf16.mxu0 0
  %513 = vmatpush1.bf16.msra.mxu0 0
  %514 = vmatprep.subr.bf16.mxu0 0
  %515 = vmatpush1.bf16.msra.mxu0 0
  %516 = vmatprep.mubr.bf16.mxu0 0
  %517 = vmatmul.mubr.bf16.gmra.mrb[0].mxu0 %v49
  %v518 = vpop.f32.mrb[0].mxu0
  %v519 = vadd.f32 %v127, %v518
  %v520 = vpop.f32.mrb[0].mxu0
  %v521 = vadd.f32 %v131, %v520
  %v522 = vpop.f32.mrb[0].mxu0
  %v523 = vadd.f32 %v127, %v522
  %v524 = vpop.f32.mrb[0].mxu0
  %v525 = vadd.f32 %v131, %v524
  %526 = vmatprep.mubr.bf16.mxu0 0
  %527 = vmatmul.mubr.bf16.gmra.mrb[0].mxu0 %v50
  %v528 = vpop.f32.mrb[0].mxu0
  %v529 = vadd.f32 %v127, %v528
  %v530 = vpop.f32.mrb[0].mxu0
  %v531 = vadd.f32 %v131, %v530
  %v532 = vpop.f32.mrb[0].mxu0
  %v533 = vadd.f32 %v127, %v532
  %v534 = vpop.f32.mrb[0].mxu0
  %v535 = vadd.f32 %v131, %v534
  %536 = vmatprep.mubr.bf16.mxu0 0
  %537 = vmatmul.mubr.bf16.gmra.mrb[0].mxu0 %v51
  %v538 = vpop.f32.mrb[0].mxu0
  %v539 = vadd.f32 %v127, %v538
  %v540 = vpop.f32.mrb[0].mxu0
  %v541 = vadd.f32 %v131, %v540
  %v542 = vpop.f32.mrb[0].mxu0
  %v543 = vadd.f32 %v127, %v542
  %v544 = vpop.f32.mrb[0].mxu0
  %v545 = vadd.f32 %v131, %v544
  %546 = vmatprep.mubr.bf16.mxu0 0
  %547 = vmatmul.mubr.bf16.gmra.mrb[0].mxu0 %v52
  %v548 = vpop.f32.mrb[0].mxu0
  %v549 = vadd.f32 %v127, %v548
  %v550 = vpop.f32.mrb[0].mxu0
  %v551 = vadd.f32 %v131, %v550
  %v552 = vpop.f32.mrb[0].mxu0
  %v553 = vadd.f32 %v127, %v552
  %v554 = vpop.f32.mrb[0].mxu0
  %v555 = vadd.f32 %v131, %v554
  %556 = vmatprep.mubr.bf16.mxu0 0
  %557 = vmatmul.mubr.bf16.gmra.mrb[0].mxu0 %v53
  %v558 = vpop.f32.mrb[0].mxu0
  %v559 = vadd.f32 %v127, %v558
  %v560 = vpop.f32.mrb[0].mxu0
  %v561 = vadd.f32 %v131, %v560
  %v562 = vpop.f32.mrb[0].mxu0
  %v563 = vadd.f32 %v127, %v562
  %v564 = vpop.f32.mrb[0].mxu0
  %v565 = vadd.f32 %v131, %v564
  %566 = vmatprep.mubr.bf16.mxu0 0
  %567 = vmatmul.mubr.bf16.gmra.mrb[0].mxu0 %v54
  %v568 = vpop.f32.mrb[0].mxu0
  %v569 = vadd.f32 %v127, %v568
  %v570 = vpop.f32.mrb[0].mxu0
  %v571 = vadd.f32 %v131, %v570
  %v572 = vpop.f32.mrb[0].mxu0
  %v573 = vadd.f32 %v127, %v572
  %v574 = vpop.f32.mrb[0].mxu0
  %v575 = vadd.f32 %v131, %v574
  %576 = vmatprep.mubr.bf16.mxu0 0
  %577 = vmatmul.mubr.bf16.gmra.mrb[0].mxu0 %v55
  %v578 = vpop.f32.mrb[0].mxu0
  %v579 = vadd.f32 %v127, %v578
  %v580 = vpop.f32.mrb[0].mxu0
  %v581 = vadd.f32 %v131, %v580
  %v582 = vpop.f32.mrb[0].mxu0
  %v583 = vadd.f32 %v127, %v582
  %v584 = vpop.f32.mrb[0].mxu0
  %v585 = vadd.f32 %v131, %v584
  %586 = vmatprep.mubr.bf16.mxu0 0
  %587 = vmatmul.mubr.bf16.gmra.mrb[0].mxu0 %v56
  %v588 = vpop.f32.mrb[0].mxu0
  %v589 = vadd.f32 %v127, %v588
  %v590 = vpop.f32.mrb[0].mxu0
  %v591 = vadd.f32 %v131, %v590
  %v592 = vpop.f32.mrb[0].mxu0
  %v593 = vadd.f32 %v127, %v592
  %v594 = vpop.f32.mrb[0].mxu0
  %v595 = vadd.f32 %v131, %v594
  %596 = vmatprep.mubr.bf16.mxu0 0
  %597 = vmatmul.mubr.bf16.gmra.mrb[0].mxu0 %v57
  %v598 = vpop.f32.mrb[0].mxu0
  %v599 = vadd.f32 %v127, %v598
  %v600 = vpop.f32.mrb[0].mxu0
  %v601 = vadd.f32 %v131, %v600
  %v602 = vpop.f32.mrb[0].mxu0
  %v603 = vpop.f32.mrb[0].mxu0
  %604 = vdwg.mxu0
  %605 = vmatprep.subr.bf16.mxu0 %v359
  %606 = vmatpush1.bf16.msra.mxu0 %v358
  %607 = vmatprep.subr.bf16.mxu0 %v367
  %608 = vmatpush1.bf16.msra.mxu0 %v366
  %609 = vmatprep.subr.bf16.mxu0 %v375
  %610 = vmatpush1.bf16.msra.mxu0 %v374
  %611 = vmatprep.subr.bf16.mxu0 %v383
  %612 = vmatpush1.bf16.msra.mxu0 %v382
  %613 = vmatprep.subr.bf16.mxu0 %v391
  %614 = vmatpush1.bf16.msra.mxu0 %v390
  %615 = vmatprep.subr.bf16.mxu0 %v399
  %616 = vmatpush1.bf16.msra.mxu0 %v398
  %617 = vmatprep.subr.bf16.mxu0 %v407
  %618 = vmatpush1.bf16.msra.mxu0 %v406
  %619 = vmatprep.subr.bf16.mxu0 %v415
  %620 = vmatpush1.bf16.msra.mxu0 %v414
  %621 = vmatprep.subr.bf16.mxu0 0
  %622 = vmatpush1.bf16.msra.mxu0 0
  %623 = vmatprep.subr.bf16.mxu0 0
  %624 = vmatpush1.bf16.msra.mxu0 0
  %625 = vmatprep.subr.bf16.mxu0 0
  %626 = vmatpush1.bf16.msra.mxu0 0
  %627 = vmatprep.subr.bf16.mxu0 0
  %628 = vmatpush1.bf16.msra.mxu0 0
  %629 = vmatprep.subr.bf16.mxu0 0
  %630 = vmatpush1.bf16.msra.mxu0 0
  %631 = vmatprep.subr.bf16.mxu0 0
  %632 = vmatpush1.bf16.msra.mxu0 0
  %633 = vmatprep.subr.bf16.mxu0 0
  %634 = vmatpush1.bf16.msra.mxu0 0
  %635 = vmatprep.subr.bf16.mxu0 0
  %636 = vmatpush1.bf16.msra.mxu0 0
  %637 = vmatprep.mubr.bf16.mxu0 0
  %638 = vmatmul.mubr.bf16.gmra.mrb[0].mxu0 %v49
  %v639 = vpop.f32.mrb[0].mxu0
  %v640 = vadd.f32 %v135, %v639
  %v641 = vpop.f32.mrb[0].mxu0
  %v642 = vadd.f32 %v139, %v641
  %v643 = vpop.f32.mrb[0].mxu0
  %v644 = vadd.f32 %v135, %v643
  %v645 = vpop.f32.mrb[0].mxu0
  %v646 = vadd.f32 %v139, %v645
  %647 = vmatprep.mubr.bf16.mxu0 0
  %648 = vmatmul.mubr.bf16.gmra.mrb[0].mxu0 %v50
  %v649 = vpop.f32.mrb[0].mxu0
  %v650 = vadd.f32 %v135, %v649
  %v651 = vpop.f32.mrb[0].mxu0
  %v652 = vadd.f32 %v139, %v651
  %v653 = vpop.f32.mrb[0].mxu0
  %v654 = vadd.f32 %v135, %v653
  %v655 = vpop.f32.mrb[0].mxu0
  %v656 = vadd.f32 %v139, %v655
  %657 = vmatprep.mubr.bf16.mxu0 0
  %658 = vmatmul.mubr.bf16.gmra.mrb[0].mxu0 %v51
  %v659 = vpop.f32.mrb[0].mxu0
  %v660 = vadd.f32 %v135, %v659
  %v661 = vpop.f32.mrb[0].mxu0
  %v662 = vadd.f32 %v139, %v661
  %v663 = vpop.f32.mrb[0].mxu0
  %v664 = vadd.f32 %v135, %v663
  %v665 = vpop.f32.mrb[0].mxu0
  %v666 = vadd.f32 %v139, %v665
  %667 = vmatprep.mubr.bf16.mxu0 0
  %668 = vmatmul.mubr.bf16.gmra.mrb[0].mxu0 %v52
  %v669 = vpop.f32.mrb[0].mxu0
  %v670 = vadd.f32 %v135, %v669
  %v671 = vpop.f32.mrb[0].mxu0
  %v672 = vadd.f32 %v139, %v671
  %v673 = vpop.f32.mrb[0].mxu0
  %v674 = vadd.f32 %v135, %v673
  %v675 = vpop.f32.mrb[0].mxu0
  %v676 = vadd.f32 %v139, %v675
  %677 = vmatprep.mubr.bf16.mxu0 0
  %678 = vmatmul.mubr.bf16.gmra.mrb[0].mxu0 %v53
  %v679 = vpop.f32.mrb[0].mxu0
  %v680 = vadd.f32 %v135, %v679
  %v681 = vpop.f32.mrb[0].mxu0
  %v682 = vadd.f32 %v139, %v681
  %v683 = vpop.f32.mrb[0].mxu0
  %v684 = vadd.f32 %v135, %v683
  %v685 = vpop.f32.mrb[0].mxu0
  %v686 = vadd.f32 %v139, %v685
  %687 = vmatprep.mubr.bf16.mxu0 0
  %688 = vmatmul.mubr.bf16.gmra.mrb[0].mxu0 %v54
  %v689 = vpop.f32.mrb[0].mxu0
  %v690 = vadd.f32 %v135, %v689
  %v691 = vpop.f32.mrb[0].mxu0
  %v692 = vadd.f32 %v139, %v691
  %v693 = vpop.f32.mrb[0].mxu0
  %v694 = vadd.f32 %v135, %v693
  %v695 = vpop.f32.mrb[0].mxu0
  %v696 = vadd.f32 %v139, %v695
  %697 = vmatprep.mubr.bf16.mxu0 0
  %698 = vmatmul.mubr.bf16.gmra.mrb[0].mxu0 %v55
  %v699 = vpop.f32.mrb[0].mxu0
  %v700 = vadd.f32 %v135, %v699
  %v701 = vpop.f32.mrb[0].mxu0
  %v702 = vadd.f32 %v139, %v701
  %v703 = vpop.f32.mrb[0].mxu0
  %v704 = vadd.f32 %v135, %v703
  %v705 = vpop.f32.mrb[0].mxu0
  %v706 = vadd.f32 %v139, %v705
  %707 = vmatprep.mubr.bf16.mxu0 0
  %708 = vmatmul.mubr.bf16.gmra.mrb[0].mxu0 %v56
  %v709 = vpop.f32.mrb[0].mxu0
  %v710 = vadd.f32 %v135, %v709
  %v711 = vpop.f32.mrb[0].mxu0
  %v712 = vadd.f32 %v139, %v711
  %v713 = vpop.f32.mrb[0].mxu0
  %v714 = vadd.f32 %v135, %v713
  %v715 = vpop.f32.mrb[0].mxu0
  %v716 = vadd.f32 %v139, %v715
  %717 = vmatprep.mubr.bf16.mxu0 0
  %718 = vmatmul.mubr.bf16.gmra.mrb[0].mxu0 %v57
  %v719 = vpop.f32.mrb[0].mxu0
  %v720 = vadd.f32 %v135, %v719
  %v721 = vpop.f32.mrb[0].mxu0
  %v722 = vadd.f32 %v139, %v721
  %v723 = vpop.f32.mrb[0].mxu0
  %v724 = vpop.f32.mrb[0].mxu0
  %725 = vdwg.mxu0
  %726 = vmatprep.subr.bf16.mxu0 %v361
  %727 = vmatpush1.bf16.msra.mxu0 %v360
  %728 = vmatprep.subr.bf16.mxu0 %v369
  %729 = vmatpush1.bf16.msra.mxu0 %v368
  %730 = vmatprep.subr.bf16.mxu0 %v377
  %731 = vmatpush1.bf16.msra.mxu0 %v376
  %732 = vmatprep.subr.bf16.mxu0 %v385
  %733 = vmatpush1.bf16.msra.mxu0 %v384
  %734 = vmatprep.subr.bf16.mxu0 %v393
  %735 = vmatpush1.bf16.msra.mxu0 %v392
  %736 = vmatprep.subr.bf16.mxu0 %v401
  %737 = vmatpush1.bf16.msra.mxu0 %v400
  %738 = vmatprep.subr.bf16.mxu0 %v409
  %739 = vmatpush1.bf16.msra.mxu0 %v408
  %740 = vmatprep.subr.bf16.mxu0 %v417
  %741 = vmatpush1.bf16.msra.mxu0 %v416
  %742 = vmatprep.subr.bf16.mxu0 0
  %743 = vmatpush1.bf16.msra.mxu0 0
  %744 = vmatprep.subr.bf16.mxu0 0
  %745 = vmatpush1.bf16.msra.mxu0 0
  %746 = vmatprep.subr.bf16.mxu0 0
  %747 = vmatpush1.bf16.msra.mxu0 0
  %748 = vmatprep.subr.bf16.mxu0 0
  %749 = vmatpush1.bf16.msra.mxu0 0
  %750 = vmatprep.subr.bf16.mxu0 0
  %751 = vmatpush1.bf16.msra.mxu0 0
  %752 = vmatprep.subr.bf16.mxu0 0
  %753 = vmatpush1.bf16.msra.mxu0 0
  %754 = vmatprep.subr.bf16.mxu0 0
  %755 = vmatpush1.bf16.msra.mxu0 0
  %756 = vmatprep.subr.bf16.mxu0 0
  %757 = vmatpush1.bf16.msra.mxu0 0
  %758 = vmatprep.mubr.bf16.mxu0 0
  %759 = vmatmul.mubr.bf16.gmra.mrb[0].mxu0 %v49
  %v760 = vpop.f32.mrb[0].mxu0
  %v761 = vadd.f32 %v143, %v760
  %v762 = vpop.f32.mrb[0].mxu0
  %v763 = vadd.f32 %v147, %v762
  %v764 = vpop.f32.mrb[0].mxu0
  %v765 = vadd.f32 %v143, %v764
  %v766 = vpop.f32.mrb[0].mxu0
  %v767 = vadd.f32 %v147, %v766
  %768 = vmatprep.mubr.bf16.mxu0 0
  %769 = vmatmul.mubr.bf16.gmra.mrb[0].mxu0 %v50
  %v770 = vpop.f32.mrb[0].mxu0
  %v771 = vadd.f32 %v143, %v770
  %v772 = vpop.f32.mrb[0].mxu0
  %v773 = vadd.f32 %v147, %v772
  %v774 = vpop.f32.mrb[0].mxu0
  %v775 = vadd.f32 %v143, %v774
  %v776 = vpop.f32.mrb[0].mxu0
  %v777 = vadd.f32 %v147, %v776
  %778 = vmatprep.mubr.bf16.mxu0 0
  %779 = vmatmul.mubr.bf16.gmra.mrb[0].mxu0 %v51
  %v780 = vpop.f32.mrb[0].mxu0
  %v781 = vadd.f32 %v143, %v780
  %v782 = vpop.f32.mrb[0].mxu0
  %v783 = vadd.f32 %v147, %v782
  %v784 = vpop.f32.mrb[0].mxu0
  %v785 = vadd.f32 %v143, %v784
  %v786 = vpop.f32.mrb[0].mxu0
  %v787 = vadd.f32 %v147, %v786
  %788 = vmatprep.mubr.bf16.mxu0 0
  %789 = vmatmul.mubr.bf16.gmra.mrb[0].mxu0 %v52
  %v790 = vpop.f32.mrb[0].mxu0
  %v791 = vadd.f32 %v143, %v790
  %v792 = vpop.f32.mrb[0].mxu0
  %v793 = vadd.f32 %v147, %v792
  %v794 = vpop.f32.mrb[0].mxu0
  %v795 = vadd.f32 %v143, %v794
  %v796 = vpop.f32.mrb[0].mxu0
  %v797 = vadd.f32 %v147, %v796
  %798 = vmatprep.mubr.bf16.mxu0 0
  %799 = vmatmul.mubr.bf16.gmra.mrb[0].mxu0 %v53
  %v800 = vpop.f32.mrb[0].mxu0
  %v801 = vadd.f32 %v143, %v800
  %v802 = vpop.f32.mrb[0].mxu0
  %v803 = vadd.f32 %v147, %v802
  %v804 = vpop.f32.mrb[0].mxu0
  %v805 = vadd.f32 %v143, %v804
  %v806 = vpop.f32.mrb[0].mxu0
  %v807 = vadd.f32 %v147, %v806
  %808 = vmatprep.mubr.bf16.mxu0 0
  %809 = vmatmul.mubr.bf16.gmra.mrb[0].mxu0 %v54
  %v810 = vpop.f32.mrb[0].mxu0
  %v811 = vadd.f32 %v143, %v810
  %v812 = vpop.f32.mrb[0].mxu0
  %v813 = vadd.f32 %v147, %v812
  %v814 = vpop.f32.mrb[0].mxu0
  %v815 = vadd.f32 %v143, %v814
  %v816 = vpop.f32.mrb[0].mxu0
  %v817 = vadd.f32 %v147, %v816
  %818 = vmatprep.mubr.bf16.mxu0 0
  %819 = vmatmul.mubr.bf16.gmra.mrb[0].mxu0 %v55
  %v820 = vpop.f32.mrb[0].mxu0
  %v821 = vadd.f32 %v143, %v820
  %v822 = vpop.f32.mrb[0].mxu0
  %v823 = vadd.f32 %v147, %v822
  %v824 = vpop.f32.mrb[0].mxu0
  %v825 = vadd.f32 %v143, %v824
  %v826 = vpop.f32.mrb[0].mxu0
  %v827 = vadd.f32 %v147, %v826
  %828 = vmatprep.mubr.bf16.mxu0 0
  %829 = vmatmul.mubr.bf16.gmra.mrb[0].mxu0 %v56
  %v830 = vpop.f32.mrb[0].mxu0
  %v831 = vadd.f32 %v143, %v830
  %v832 = vpop.f32.mrb[0].mxu0
  %v833 = vadd.f32 %v147, %v832
  %v834 = vpop.f32.mrb[0].mxu0
  %v835 = vadd.f32 %v143, %v834
  %v836 = vpop.f32.mrb[0].mxu0
  %v837 = vadd.f32 %v147, %v836
  %838 = vmatprep.mubr.bf16.mxu0 0
  %839 = vmatmul.mubr.bf16.gmra.mrb[0].mxu0 %v57
  %v840 = vpop.f32.mrb[0].mxu0
  %v841 = vadd.f32 %v143, %v840
  %v842 = vpop.f32.mrb[0].mxu0
  %v843 = vadd.f32 %v147, %v842
  %v844 = vpop.f32.mrb[0].mxu0
  %v845 = vpop.f32.mrb[0].mxu0
  %846 = vdwg.mxu0
  %847 = vmatprep.subr.bf16.mxu0 %v363
  %848 = vmatpush1.bf16.msra.mxu0 %v362
  %849 = vmatprep.subr.bf16.mxu0 %v371
  %850 = vmatpush1.bf16.msra.mxu0 %v370
  %851 = vmatprep.subr.bf16.mxu0 %v379
  %852 = vmatpush1.bf16.msra.mxu0 %v378
  %853 = vmatprep.subr.bf16.mxu0 %v387
  %854 = vmatpush1.bf16.msra.mxu0 %v386
  %855 = vmatprep.subr.bf16.mxu0 %v395
  %856 = vmatpush1.bf16.msra.mxu0 %v394
  %857 = vmatprep.subr.bf16.mxu0 %v403
  %858 = vmatpush1.bf16.msra.mxu0 %v402
  %859 = vmatprep.subr.bf16.mxu0 %v411
  %860 = vmatpush1.bf16.msra.mxu0 %v410
  %861 = vmatprep.subr.bf16.mxu0 %v419
  %862 = vmatpush1.bf16.msra.mxu0 %v418
  %863 = vmatprep.subr.bf16.mxu0 0
  %864 = vmatpush1.bf16.msra.mxu0 0
  %865 = vmatprep.subr.bf16.mxu0 0
  %866 = vmatpush1.bf16.msra.mxu0 0
  %867 = vmatprep.subr.bf16.mxu0 0
  %868 = vmatpush1.bf16.msra.mxu0 0
  %869 = vmatprep.subr.bf16.mxu0 0
  %870 = vmatpush1.bf16.msra.mxu0 0
  %871 = vmatprep.subr.bf16.mxu0 0
  %872 = vmatpush1.bf16.msra.mxu0 0
  %873 = vmatprep.subr.bf16.mxu0 0
  %874 = vmatpush1.bf16.msra.mxu0 0
  %875 = vmatprep.subr.bf16.mxu0 0
  %876 = vmatpush1.bf16.msra.mxu0 0
  %877 = vmatprep.subr.bf16.mxu0 0
  %878 = vmatpush1.bf16.msra.mxu0 0
  %879 = vmatprep.mubr.bf16.mxu0 0
  %880 = vmatmul.mubr.bf16.gmra.mrb[0].mxu0 %v49
  %v881 = vpop.f32.mrb[0].mxu0
  %v882 = vadd.f32 %v151, %v881
  %v883 = vpop.f32.mrb[0].mxu0
  %v884 = vadd.f32 %v155, %v883
  %v885 = vpop.f32.mrb[0].mxu0
  %v886 = vadd.f32 %v151, %v885
  %v887 = vpop.f32.mrb[0].mxu0
  %v888 = vadd.f32 %v155, %v887
  %889 = vmatprep.mubr.bf16.mxu0 0
  %890 = vmatmul.mubr.bf16.gmra.mrb[0].mxu0 %v50
  %v891 = vpop.f32.mrb[0].mxu0
  %v892 = vadd.f32 %v151, %v891
  %v893 = vpop.f32.mrb[0].mxu0
  %v894 = vadd.f32 %v155, %v893
  %v895 = vpop.f32.mrb[0].mxu0
  %v896 = vadd.f32 %v151, %v895
  %v897 = vpop.f32.mrb[0].mxu0
  %v898 = vadd.f32 %v155, %v897
  %899 = vmatprep.mubr.bf16.mxu0 0
  %900 = vmatmul.mubr.bf16.gmra.mrb[0].mxu0 %v51
  %v901 = vpop.f32.mrb[0].mxu0
  %v902 = vadd.f32 %v151, %v901
  %v903 = vpop.f32.mrb[0].mxu0
  %v904 = vadd.f32 %v155, %v903
  %v905 = vpop.f32.mrb[0].mxu0
  %v906 = vadd.f32 %v151, %v905
  %v907 = vpop.f32.mrb[0].mxu0
  %v908 = vadd.f32 %v155, %v907
  %909 = vmatprep.mubr.bf16.mxu0 0
  %910 = vmatmul.mubr.bf16.gmra.mrb[0].mxu0 %v52
  %v911 = vpop.f32.mrb[0].mxu0
  %v912 = vadd.f32 %v151, %v911
  %v913 = vpop.f32.mrb[0].mxu0
  %v914 = vadd.f32 %v155, %v913
  %v915 = vpop.f32.mrb[0].mxu0
  %v916 = vadd.f32 %v151, %v915
  %v917 = vpop.f32.mrb[0].mxu0
  %v918 = vadd.f32 %v155, %v917
  %919 = vmatprep.mubr.bf16.mxu0 0
  %920 = vmatmul.mubr.bf16.gmra.mrb[0].mxu0 %v53
  %v921 = vpop.f32.mrb[0].mxu0
  %v922 = vadd.f32 %v151, %v921
  %v923 = vpop.f32.mrb[0].mxu0
  %v924 = vadd.f32 %v155, %v923
  %v925 = vpop.f32.mrb[0].mxu0
  %v926 = vadd.f32 %v151, %v925
  %v927 = vpop.f32.mrb[0].mxu0
  %v928 = vadd.f32 %v155, %v927
  %929 = vmatprep.mubr.bf16.mxu0 0
  %930 = vmatmul.mubr.bf16.gmra.mrb[0].mxu0 %v54
  %v931 = vpop.f32.mrb[0].mxu0
  %v932 = vadd.f32 %v151, %v931
  %v933 = vpop.f32.mrb[0].mxu0
  %v934 = vadd.f32 %v155, %v933
  %v935 = vpop.f32.mrb[0].mxu0
  %v936 = vadd.f32 %v151, %v935
  %v937 = vpop.f32.mrb[0].mxu0
  %v938 = vadd.f32 %v155, %v937
  %939 = vmatprep.mubr.bf16.mxu0 0
  %940 = vmatmul.mubr.bf16.gmra.mrb[0].mxu0 %v55
  %v941 = vpop.f32.mrb[0].mxu0
  %v942 = vadd.f32 %v151, %v941
  %v943 = vpop.f32.mrb[0].mxu0
  %v944 = vadd.f32 %v155, %v943
  %v945 = vpop.f32.mrb[0].mxu0
  %v946 = vadd.f32 %v151, %v945
  %v947 = vpop.f32.mrb[0].mxu0
  %v948 = vadd.f32 %v155, %v947
  %949 = vmatprep.mubr.bf16.mxu0 0
  %950 = vmatmul.mubr.bf16.gmra.mrb[0].mxu0 %v56
  %v951 = vpop.f32.mrb[0].mxu0
  %v952 = vadd.f32 %v151, %v951
  %v953 = vpop.f32.mrb[0].mxu0
  %v954 = vadd.f32 %v155, %v953
  %v955 = vpop.f32.mrb[0].mxu0
  %v956 = vadd.f32 %v151, %v955
  %v957 = vpop.f32.mrb[0].mxu0
  %v958 = vadd.f32 %v155, %v957
  %959 = vmatprep.mubr.bf16.mxu0 0
  %960 = vmatmul.mubr.bf16.gmra.mrb[0].mxu0 %v57
  %v961 = vpop.f32.mrb[0].mxu0
  %v962 = vadd.f32 %v151, %v961
  %v963 = vpop.f32.mrb[0].mxu0
  %v964 = vadd.f32 %v155, %v963
  %v965 = vpop.f32.mrb[0].mxu0
  %v966 = vpop.f32.mrb[0].mxu0
  %967 = vdwg.mxu0
  %968 = vst [vmem:[#allocation2] sm:$0xff] %v519
  %969 = vst [vmem:[#allocation2 + $0x8] sm:$0xff] %v521
  %970 = vst [vmem:[#allocation2 + $0x10] sm:$0xff] %v640
  %971 = vst [vmem:[#allocation2 + $0x18] sm:$0xff] %v642
  %972 = vst [vmem:[#allocation2 + $0x20] sm:$0xff] %v761
  %973 = vst [vmem:[#allocation2 + $0x28] sm:$0xff] %v763
  %974 = vst [vmem:[#allocation2 + $0x30] sm:$0xff] %v882
  %975 = vst [vmem:[#allocation2 + $0x38] sm:$0xff] %v884
  %976 = vst [vmem:[#allocation2 + $0x40] sm:$0xff] %v523
  %977 = vst [vmem:[#allocation2 + $0x48] sm:$0xff] %v525
  %978 = vst [vmem:[#allocation2 + $0x50] sm:$0xff] %v644
  %979 = vst [vmem:[#allocation2 + $0x58] sm:$0xff] %v646
  %980 = vst [vmem:[#allocation2 + $0x60] sm:$0xff] %v765
  %981 = vst [vmem:[#allocation2 + $0x68] sm:$0xff] %v767
  %982 = vst [vmem:[#allocation2 + $0x70] sm:$0xff] %v886
  %983 = vst [vmem:[#allocation2 + $0x78] sm:$0xff] %v888
  %984 = vst [vmem:[#allocation2 + $0x80] sm:$0xff] %v529
  %985 = vst [vmem:[#allocation2 + $0x88] sm:$0xff] %v531
  %986 = vst [vmem:[#allocation2 + $0x90] sm:$0xff] %v650
  %987 = vst [vmem:[#allocation2 + $0x98] sm:$0xff] %v652
  %988 = vst [vmem:[#allocation2 + $0xa0] sm:$0xff] %v771
  %989 = vst [vmem:[#allocation2 + $0xa8] sm:$0xff] %v773
  %990 = vst [vmem:[#allocation2 + $0xb0] sm:$0xff] %v892
  %991 = vst [vmem:[#allocation2 + $0xb8] sm:$0xff] %v894
  %992 = vst [vmem:[#allocation2 + $0xc0] sm:$0xff] %v533
  %993 = vst [vmem:[#allocation2 + $0xc8] sm:$0xff] %v535
  %994 = vst [vmem:[#allocation2 + $0xd0] sm:$0xff] %v654
  %995 = vst [vmem:[#allocation2 + $0xd8] sm:$0xff] %v656
  %996 = vst [vmem:[#allocation2 + $0xe0] sm:$0xff] %v775
  %997 = vst [vmem:[#allocation2 + $0xe8] sm:$0xff] %v777
  %998 = vst [vmem:[#allocation2 + $0xf0] sm:$0xff] %v896
  %999 = vst [vmem:[#allocation2 + $0xf8] sm:$0xff] %v898
  %1000 = vst [vmem:[#allocation2 + $0x100] sm:$0xff] %v539
  %1001 = vst [vmem:[#allocation2 + $0x108] sm:$0xff] %v541
  %1002 = vst [vmem:[#allocation2 + $0x110] sm:$0xff] %v660
  %1003 = vst [vmem:[#allocation2 + $0x118] sm:$0xff] %v662
  %1004 = vst [vmem:[#allocation2 + $0x120] sm:$0xff] %v781
  %1005 = vst [vmem:[#allocation2 + $0x128] sm:$0xff] %v783
  %1006 = vst [vmem:[#allocation2 + $0x130] sm:$0xff] %v902
  %1007 = vst [vmem:[#allocation2 + $0x138] sm:$0xff] %v904
  %1008 = vst [vmem:[#allocation2 + $0x140] sm:$0xff] %v543
  %1009 = vst [vmem:[#allocation2 + $0x148] sm:$0xff] %v545
  %1010 = vst [vmem:[#allocation2 + $0x150] sm:$0xff] %v664
  %1011 = vst [vmem:[#allocation2 + $0x158] sm:$0xff] %v666
  %1012 = vst [vmem:[#allocation2 + $0x160] sm:$0xff] %v785
  %1013 = vst [vmem:[#allocation2 + $0x168] sm:$0xff] %v787
  %1014 = vst [vmem:[#allocation2 + $0x170] sm:$0xff] %v906
  %1015 = vst [vmem:[#allocation2 + $0x178] sm:$0xff] %v908
  %1016 = vst [vmem:[#allocation2 + $0x180] sm:$0xff] %v549
  %1017 = vst [vmem:[#allocation2 + $0x188] sm:$0xff] %v551
  %1018 = vst [vmem:[#allocation2 + $0x190] sm:$0xff] %v670
  %1019 = vst [vmem:[#allocation2 + $0x198] sm:$0xff] %v672
  %1020 = vst [vmem:[#allocation2 + $0x1a0] sm:$0xff] %v791
  %1021 = vst [vmem:[#allocation2 + $0x1a8] sm:$0xff] %v793
  %1022 = vst [vmem:[#allocation2 + $0x1b0] sm:$0xff] %v912
  %1023 = vst [vmem:[#allocation2 + $0x1b8] sm:$0xff] %v914
  %1024 = vst [vmem:[#allocation2 + $0x1c0] sm:$0xff] %v553
  %1025 = vst [vmem:[#allocation2 + $0x1c8] sm:$0xff] %v555
  %1026 = vst [vmem:[#allocation2 + $0x1d0] sm:$0xff] %v674
  %1027 = vst [vmem:[#allocation2 + $0x1d8] sm:$0xff] %v676
  %1028 = vst [vmem:[#allocation2 + $0x1e0] sm:$0xff] %v795
  %1029 = vst [vmem:[#allocation2 + $0x1e8] sm:$0xff] %v797
  %1030 = vst [vmem:[#allocation2 + $0x1f0] sm:$0xff] %v916
  %1031 = vst [vmem:[#allocation2 + $0x1f8] sm:$0xff] %v918
  %1032 = vst [vmem:[#allocation2 + $0x200] sm:$0xff] %v559
  %1033 = vst [vmem:[#allocation2 + $0x208] sm:$0xff] %v561
  %1034 = vst [vmem:[#allocation2 + $0x210] sm:$0xff] %v680
  %1035 = vst [vmem:[#allocation2 + $0x218] sm:$0xff] %v682
  %1036 = vst [vmem:[#allocation2 + $0x220] sm:$0xff] %v801
  %1037 = vst [vmem:[#allocation2 + $0x228] sm:$0xff] %v803
  %1038 = vst [vmem:[#allocation2 + $0x230] sm:$0xff] %v922
  %1039 = vst [vmem:[#allocation2 + $0x238] sm:$0xff] %v924
  %1040 = vst [vmem:[#allocation2 + $0x240] sm:$0xff] %v563
  %1041 = vst [vmem:[#allocation2 + $0x248] sm:$0xff] %v565
  %1042 = vst [vmem:[#allocation2 + $0x250] sm:$0xff] %v684
  %1043 = vst [vmem:[#allocation2 + $0x258] sm:$0xff] %v686
  %1044 = vst [vmem:[#allocation2 + $0x260] sm:$0xff] %v805
  %1045 = vst [vmem:[#allocation2 + $0x268] sm:$0xff] %v807
  %1046 = vst [vmem:[#allocation2 + $0x270] sm:$0xff] %v926
  %1047 = vst [vmem:[#allocation2 + $0x278] sm:$0xff] %v928
  %1048 = vst [vmem:[#allocation2 + $0x280] sm:$0xff] %v569
  %1049 = vst [vmem:[#allocation2 + $0x288] sm:$0xff] %v571
  %1050 = vst [vmem:[#allocation2 + $0x290] sm:$0xff] %v690
  %1051 = vst [vmem:[#allocation2 + $0x298] sm:$0xff] %v692
  %1052 = vst [vmem:[#allocation2 + $0x2a0] sm:$0xff] %v811
  %1053 = vst [vmem:[#allocation2 + $0x2a8] sm:$0xff] %v813
  %1054 = vst [vmem:[#allocation2 + $0x2b0] sm:$0xff] %v932
  %1055 = vst [vmem:[#allocation2 + $0x2b8] sm:$0xff] %v934
  %1056 = vst [vmem:[#allocation2 + $0x2c0] sm:$0xff] %v573
  %1057 = vst [vmem:[#allocation2 + $0x2c8] sm:$0xff] %v575
  %1058 = vst [vmem:[#allocation2 + $0x2d0] sm:$0xff] %v694
  %1059 = vst [vmem:[#allocation2 + $0x2d8] sm:$0xff] %v696
  %1060 = vst [vmem:[#allocation2 + $0x2e0] sm:$0xff] %v815
  %1061 = vst [vmem:[#allocation2 + $0x2e8] sm:$0xff] %v817
  %1062 = vst [vmem:[#allocation2 + $0x2f0] sm:$0xff] %v936
  %1063 = vst [vmem:[#allocation2 + $0x2f8] sm:$0xff] %v938
  %1064 = vst [vmem:[#allocation2 + $0x300] sm:$0xff] %v579
  %1065 = vst [vmem:[#allocation2 + $0x308] sm:$0xff] %v581
  %1066 = vst [vmem:[#allocation2 + $0x310] sm:$0xff] %v700
  %1067 = vst [vmem:[#allocation2 + $0x318] sm:$0xff] %v702
  %1068 = vst [vmem:[#allocation2 + $0x320] sm:$0xff] %v821
  %1069 = vst [vmem:[#allocation2 + $0x328] sm:$0xff] %v823
  %1070 = vst [vmem:[#allocation2 + $0x330] sm:$0xff] %v942
  %1071 = vst [vmem:[#allocation2 + $0x338] sm:$0xff] %v944
  %1072 = vst [vmem:[#allocation2 + $0x340] sm:$0xff] %v583
  %1073 = vst [vmem:[#allocation2 + $0x348] sm:$0xff] %v585
  %1074 = vst [vmem:[#allocation2 + $0x350] sm:$0xff] %v704
  %1075 = vst [vmem:[#allocation2 + $0x358] sm:$0xff] %v706
  %1076 = vst [vmem:[#allocation2 + $0x360] sm:$0xff] %v825
  %1077 = vst [vmem:[#allocation2 + $0x368] sm:$0xff] %v827
  %1078 = vst [vmem:[#allocation2 + $0x370] sm:$0xff] %v946
  %1079 = vst [vmem:[#allocation2 + $0x378] sm:$0xff] %v948
  %1080 = vst [vmem:[#allocation2 + $0x380] sm:$0xff] %v589
  %1081 = vst [vmem:[#allocation2 + $0x388] sm:$0xff] %v591
  %1082 = vst [vmem:[#allocation2 + $0x390] sm:$0xff] %v710
  %1083 = vst [vmem:[#allocation2 + $0x398] sm:$0xff] %v712
  %1084 = vst [vmem:[#allocation2 + $0x3a0] sm:$0xff] %v831
  %1085 = vst [vmem:[#allocation2 + $0x3a8] sm:$0xff] %v833
  %1086 = vst [vmem:[#allocation2 + $0x3b0] sm:$0xff] %v952
  %1087 = vst [vmem:[#allocation2 + $0x3b8] sm:$0xff] %v954
  %1088 = vst [vmem:[#allocation2 + $0x3c0] sm:$0xff] %v593
  %1089 = vst [vmem:[#allocation2 + $0x3c8] sm:$0xff] %v595
  %1090 = vst [vmem:[#allocation2 + $0x3d0] sm:$0xff] %v714
  %1091 = vst [vmem:[#allocation2 + $0x3d8] sm:$0xff] %v716
  %1092 = vst [vmem:[#allocation2 + $0x3e0] sm:$0xff] %v835
  %1093 = vst [vmem:[#allocation2 + $0x3e8] sm:$0xff] %v837
  %1094 = vst [vmem:[#allocation2 + $0x3f0] sm:$0xff] %v956
  %1095 = vst [vmem:[#allocation2 + $0x3f8] sm:$0xff] %v958
  %1096 = vst [vmem:[#allocation2 + $0x400] sm:$0xff] %v599
  %1097 = vst [vmem:[#allocation2 + $0x408] sm:$0xff] %v601
  %1098 = vst [vmem:[#allocation2 + $0x410] sm:$0xff] %v720
  %1099 = vst [vmem:[#allocation2 + $0x418] sm:$0xff] %v722
  %1100 = vst [vmem:[#allocation2 + $0x420] sm:$0xff] %v841
  %1101 = vst [vmem:[#allocation2 + $0x428] sm:$0xff] %v843
  %1102 = vst [vmem:[#allocation2 + $0x430] sm:$0xff] %v962
  %1103 = vst [vmem:[#allocation2 + $0x438] sm:$0xff] %v964
  %v1104 = vld [vmem:[%s3] sm:$0xff]
  %v1105 = vld [vmem:[%s3 + $0x8] sm:$0xff]
  %v1106 = vld [vmem:[%s3 + $0x10] sm:$0xff]
  %v1107 = vld [vmem:[%s3 + $0x18] sm:$0xff]
  %v1108 = vld [vmem:[%s3 + $0x20] sm:$0xff]
  %v1109 = vld [vmem:[%s3 + $0x28] sm:$0xff]
  %v1110 = vld [vmem:[%s3 + $0x30] sm:$0xff]
  %v1111 = vld [vmem:[%s3 + $0x38] sm:$0xff]
  %v1112 = vld [vmem:[%s3 + $0x40] sm:$0xff]
  %v1113 = vld [vmem:[%s3 + $0x48] sm:$0xff]
  %v1114 = vld [vmem:[%s3 + $0x50] sm:$0xff]
  %v1115 = vld [vmem:[%s3 + $0x58] sm:$0xff]
  %v1116 = vld [vmem:[%s3 + $0x60] sm:$0xff]
  %v1117 = vld [vmem:[%s3 + $0x68] sm:$0xff]
  %v1118 = vld [vmem:[%s3 + $0x70] sm:$0xff]
  %v1119 = vld [vmem:[%s3 + $0x78] sm:$0xff]
  %v1120 = vld [vmem:[%s3 + $0x80] sm:$0xff]
  %v1121 = vld [vmem:[%s3 + $0x88] sm:$0xff]
  %v1122 = vld [vmem:[%s3 + $0x90] sm:$0xff]
  %v1123 = vld [vmem:[%s3 + $0x98] sm:$0xff]
  %v1124 = vld [vmem:[%s3 + $0xa0] sm:$0xff]
  %v1125 = vld [vmem:[%s3 + $0xa8] sm:$0xff]
  %v1126 = vld [vmem:[%s3 + $0xb0] sm:$0xff]
  %v1127 = vld [vmem:[%s3 + $0xb8] sm:$0xff]
  %v1128 = vld [vmem:[%s3 + $0xc0] sm:$0xff]
  %v1129 = vld [vmem:[%s3 + $0xc8] sm:$0xff]
  %v1130 = vld [vmem:[%s3 + $0xd0] sm:$0xff]
  %v1131 = vld [vmem:[%s3 + $0xd8] sm:$0xff]
  %v1132 = vld [vmem:[%s3 + $0xe0] sm:$0xff]
  %v1133 = vld [vmem:[%s3 + $0xe8] sm:$0xff]
  %v1134 = vld [vmem:[%s3 + $0xf0] sm:$0xff]
  %v1135 = vld [vmem:[%s3 + $0xf8] sm:$0xff]
  %v1136 = vld [vmem:[%s3 + $0x100] sm:$0xff]
  %v1137 = vld [vmem:[%s3 + $0x108] sm:$0xff]
  %v1138 = vld [vmem:[%s3 + $0x110] sm:$0xff]
  %v1139 = vld [vmem:[%s3 + $0x118] sm:$0xff]
  %v1140 = vld [vmem:[%s3 + $0x120] sm:$0xff]
  %v1141 = vld [vmem:[%s3 + $0x128] sm:$0xff]
  %v1142 = vld [vmem:[%s3 + $0x130] sm:$0xff]
  %v1143 = vld [vmem:[%s3 + $0x138] sm:$0xff]
  %v1144 = vld [vmem:[%s3 + $0x140] sm:$0xff]
  %v1145 = vld [vmem:[%s3 + $0x148] sm:$0xff]
  %v1146 = vld [vmem:[%s3 + $0x150] sm:$0xff]
  %v1147 = vld [vmem:[%s3 + $0x158] sm:$0xff]
  %v1148 = vld [vmem:[%s3 + $0x160] sm:$0xff]
  %v1149 = vld [vmem:[%s3 + $0x168] sm:$0xff]
  %v1150 = vld [vmem:[%s3 + $0x170] sm:$0xff]
  %v1151 = vld [vmem:[%s3 + $0x178] sm:$0xff]
  %v1152 = vld [vmem:[%s3 + $0x180] sm:$0xff]
  %v1153 = vld [vmem:[%s3 + $0x188] sm:$0xff]
  %v1154 = vld [vmem:[%s3 + $0x190] sm:$0xff]
  %v1155 = vld [vmem:[%s3 + $0x198] sm:$0xff]
  %v1156 = vld [vmem:[%s3 + $0x1a0] sm:$0xff]
  %v1157 = vld [vmem:[%s3 + $0x1a8] sm:$0xff]
  %v1158 = vld [vmem:[%s3 + $0x1b0] sm:$0xff]
  %v1159 = vld [vmem:[%s3 + $0x1b8] sm:$0xff]
  %v1160 = vld [vmem:[%s3 + $0x1c0] sm:$0xff]
  %v1161 = vld [vmem:[%s3 + $0x1c8] sm:$0xff]
  %v1162 = vld [vmem:[%s3 + $0x1d0] sm:$0xff]
  %v1163 = vld [vmem:[%s3 + $0x1d8] sm:$0xff]
  %v1164 = vld [vmem:[%s3 + $0x1e0] sm:$0xff]
  %v1165 = vld [vmem:[%s3 + $0x1e8] sm:$0xff]
  %v1166 = vld [vmem:[%s3 + $0x1f0] sm:$0xff]
  %v1167 = vld [vmem:[%s3 + $0x1f8] sm:$0xff]
  %v1168 = vld [vmem:[%s3 + $0x200] sm:$0xff]
  %v1169 = vld [vmem:[%s3 + $0x208] sm:$0xff]
  %v1170 = vld [vmem:[%s3 + $0x210] sm:$0xff]
  %v1171 = vld [vmem:[%s3 + $0x218] sm:$0xff]
  %v1172 = vld [vmem:[%s3 + $0x220] sm:$0xff]
  %v1173 = vld [vmem:[%s3 + $0x228] sm:$0xff]
  %v1174 = vld [vmem:[%s3 + $0x230] sm:$0xff]
  %v1175 = vld [vmem:[%s3 + $0x238] sm:$0xff]
  %v1176 = vld [vmem:[%s3 + $0x240] sm:$0xff]
  %v1177 = vld [vmem:[%s3 + $0x248] sm:$0xff]
  %v1178 = vld [vmem:[%s3 + $0x250] sm:$0xff]
  %v1179 = vld [vmem:[%s3 + $0x258] sm:$0xff]
  %v1180 = vld [vmem:[%s3 + $0x260] sm:$0xff]
  %v1181 = vld [vmem:[%s3 + $0x268] sm:$0xff]
  %v1182 = vld [vmem:[%s3 + $0x270] sm:$0xff]
  %v1183 = vld [vmem:[%s3 + $0x278] sm:$0xff]
  %v1184 = vld [vmem:[%s3 + $0x280] sm:$0xff]
  %v1185 = vld [vmem:[%s3 + $0x288] sm:$0xff]
  %v1186 = vld [vmem:[%s3 + $0x290] sm:$0xff]
  %v1187 = vld [vmem:[%s3 + $0x298] sm:$0xff]
  %v1188 = vld [vmem:[%s3 + $0x2a0] sm:$0xff]
  %v1189 = vld [vmem:[%s3 + $0x2a8] sm:$0xff]
  %v1190 = vld [vmem:[%s3 + $0x2b0] sm:$0xff]
  %v1191 = vld [vmem:[%s3 + $0x2b8] sm:$0xff]
  %v1192 = vld [vmem:[%s3 + $0x2c0] sm:$0xff]
  %v1193 = vld [vmem:[%s3 + $0x2c8] sm:$0xff]
  %v1194 = vld [vmem:[%s3 + $0x2d0] sm:$0xff]
  %v1195 = vld [vmem:[%s3 + $0x2d8] sm:$0xff]
  %v1196 = vld [vmem:[%s3 + $0x2e0] sm:$0xff]
  %v1197 = vld [vmem:[%s3 + $0x2e8] sm:$0xff]
  %v1198 = vld [vmem:[%s3 + $0x2f0] sm:$0xff]
  %v1199 = vld [vmem:[%s3 + $0x2f8] sm:$0xff]
  %v1200 = vld [vmem:[%s3 + $0x300] sm:$0xff]
  %v1201 = vld [vmem:[%s3 + $0x308] sm:$0xff]
  %v1202 = vld [vmem:[%s3 + $0x310] sm:$0xff]
  %v1203 = vld [vmem:[%s3 + $0x318] sm:$0xff]
  %v1204 = vld [vmem:[%s3 + $0x320] sm:$0xff]
  %v1205 = vld [vmem:[%s3 + $0x328] sm:$0xff]
  %v1206 = vld [vmem:[%s3 + $0x330] sm:$0xff]
  %v1207 = vld [vmem:[%s3 + $0x338] sm:$0xff]
  %v1208 = vld [vmem:[%s3 + $0x340] sm:$0xff]
  %v1209 = vld [vmem:[%s3 + $0x348] sm:$0xff]
  %v1210 = vld [vmem:[%s3 + $0x350] sm:$0xff]
  %v1211 = vld [vmem:[%s3 + $0x358] sm:$0xff]
  %v1212 = vld [vmem:[%s3 + $0x360] sm:$0xff]
  %v1213 = vld [vmem:[%s3 + $0x368] sm:$0xff]
  %v1214 = vld [vmem:[%s3 + $0x370] sm:$0xff]
  %v1215 = vld [vmem:[%s3 + $0x378] sm:$0xff]
  %v1216 = vld [vmem:[%s3 + $0x380] sm:$0xff]
  %v1217 = vld [vmem:[%s3 + $0x388] sm:$0xff]
  %v1218 = vld [vmem:[%s3 + $0x390] sm:$0xff]
  %v1219 = vld [vmem:[%s3 + $0x398] sm:$0xff]
  %v1220 = vld [vmem:[%s3 + $0x3a0] sm:$0xff]
  %v1221 = vld [vmem:[%s3 + $0x3a8] sm:$0xff]
  %v1222 = vld [vmem:[%s3 + $0x3b0] sm:$0xff]
  %v1223 = vld [vmem:[%s3 + $0x3b8] sm:$0xff]
  %v1224 = vld [vmem:[%s3 + $0x3c0] sm:$0xff]
  %v1225 = vld [vmem:[%s3 + $0x3c8] sm:$0xff]
  %v1226 = vld [vmem:[%s3 + $0x3d0] sm:$0xff]
  %v1227 = vld [vmem:[%s3 + $0x3d8] sm:$0xff]
  %v1228 = vld [vmem:[%s3 + $0x3e0] sm:$0xff]
  %v1229 = vld [vmem:[%s3 + $0x3e8] sm:$0xff]
  %v1230 = vld [vmem:[%s3 + $0x3f0] sm:$0xff]
  %v1231 = vld [vmem:[%s3 + $0x3f8] sm:$0xff]
  %v1232 = vlaneseq
  %v1233 = vand.u32 %v1232, 127
  %v1234 = vadd.s32 %v1233, 128
  %vm1235 = vcmp.ge.s32.totalorder %v1233, 0
  %vm1236 = vcmp.ge.s32.totalorder %v1234, 0
  %vm1237 = vcmp.lt.s32.totalorder %v1233, 48
  %vm1238 = vcmp.lt.s32.totalorder %v1234, 48
  %vm1239 = vmand %vm1235, %vm1237
  %vm1240 = vmand %vm1236, %vm1238
  %vm1241 = vcmp.ge.s32.totalorder %v1233, 48
  %vm1242 = vcmp.ge.s32.totalorder %v1234, 48
  %vm1243 = vcmp.lt.s32.totalorder %v1233, 96
  %vm1244 = vcmp.lt.s32.totalorder %v1234, 96
  %vm1245 = vmand %vm1241, %vm1243
  %vm1246 = vmand %vm1242, %vm1244
  %vm1247 = vcmp.ge.s32.totalorder %v1233, 96
  %vm1248 = vcmp.ge.s32.totalorder %v1234, 96
  %vm1249 = vcmp.lt.s32.totalorder %v1233, 144
  %vm1250 = vcmp.lt.s32.totalorder %v1234, 144
  %vm1251 = vmand %vm1247, %vm1249
  %vm1252 = vmand %vm1248, %vm1250
  %v1253 = vld [vmem:[#allocation2] sm:$0xff]
  %v1254 = vld [vmem:[#allocation2 + $0x8] sm:$0xff]
  %v1255 = vld [vmem:[#allocation2 + $0x10] sm:$0xff]
  %v1256 = vld [vmem:[#allocation2 + $0x18] sm:$0xff]
  %v1257 = vld [vmem:[#allocation2 + $0x20] sm:$0xff]
  %v1258 = vld [vmem:[#allocation2 + $0x28] sm:$0xff]
  %v1259 = vld [vmem:[#allocation2 + $0x30] sm:$0xff]
  %v1260 = vld [vmem:[#allocation2 + $0x38] sm:$0xff]
  %v1389 = vunpack.c.l.b16 %v1104
  %v1390 = vunpack.c.h.b16 %v1104
  %v1391 = vunpack.c.l.b16 %v1105
  %v1392 = vunpack.c.h.b16 %v1105
  %v1393 = vunpack.c.l.b16 %v1106
  %v1394 = vunpack.c.h.b16 %v1106
  %v1395 = vunpack.c.l.b16 %v1107
  %v1396 = vunpack.c.h.b16 %v1107
  %v1397 = vunpack.c.l.b16 %v1108
  %v1398 = vunpack.c.h.b16 %v1108
  %v1399 = vunpack.c.l.b16 %v1109
  %v1400 = vunpack.c.h.b16 %v1109
  %v1401 = vunpack.c.l.b16 %v1110
  %v1402 = vunpack.c.h.b16 %v1110
  %v1403 = vunpack.c.l.b16 %v1111
  %v1404 = vunpack.c.h.b16 %v1111
  %v1405 = vunpack.c.l.b16 %v1112
  %v1406 = vunpack.c.h.b16 %v1112
  %v1407 = vunpack.c.l.b16 %v1113
  %v1408 = vunpack.c.h.b16 %v1113
  %v1409 = vunpack.c.l.b16 %v1114
  %v1410 = vunpack.c.h.b16 %v1114
  %v1411 = vunpack.c.l.b16 %v1115
  %v1412 = vunpack.c.h.b16 %v1115
  %v1413 = vunpack.c.l.b16 %v1116
  %v1414 = vunpack.c.h.b16 %v1116
  %v1415 = vunpack.c.l.b16 %v1117
  %v1416 = vunpack.c.h.b16 %v1117
  %v1417 = vunpack.c.l.b16 %v1118
  %v1418 = vunpack.c.h.b16 %v1118
  %v1419 = vunpack.c.l.b16 %v1119
  %v1420 = vunpack.c.h.b16 %v1119
  %v1421 = vunpack.c.l.b16 %v1120
  %v1422 = vunpack.c.h.b16 %v1120
  %v1423 = vunpack.c.l.b16 %v1121
  %v1424 = vunpack.c.h.b16 %v1121
  %v1425 = vunpack.c.l.b16 %v1122
  %v1426 = vunpack.c.h.b16 %v1122
  %v1427 = vunpack.c.l.b16 %v1123
  %v1428 = vunpack.c.h.b16 %v1123
  %v1429 = vunpack.c.l.b16 %v1124
  %v1430 = vunpack.c.h.b16 %v1124
  %v1431 = vunpack.c.l.b16 %v1125
  %v1432 = vunpack.c.h.b16 %v1125
  %v1433 = vunpack.c.l.b16 %v1126
  %v1434 = vunpack.c.h.b16 %v1126
  %v1435 = vunpack.c.l.b16 %v1127
  %v1436 = vunpack.c.h.b16 %v1127
  %v1437 = vunpack.c.l.b16 %v1128
  %v1438 = vunpack.c.h.b16 %v1128
  %v1439 = vunpack.c.l.b16 %v1129
  %v1440 = vunpack.c.h.b16 %v1129
  %v1441 = vunpack.c.l.b16 %v1130
  %v1442 = vunpack.c.h.b16 %v1130
  %v1443 = vunpack.c.l.b16 %v1131
  %v1444 = vunpack.c.h.b16 %v1131
  %v1445 = vunpack.c.l.b16 %v1132
  %v1446 = vunpack.c.h.b16 %v1132
  %v1447 = vunpack.c.l.b16 %v1133
  %v1448 = vunpack.c.h.b16 %v1133
  %v1449 = vunpack.c.l.b16 %v1134
  %v1450 = vunpack.c.h.b16 %v1134
  %v1451 = vunpack.c.l.b16 %v1135
  %v1452 = vunpack.c.h.b16 %v1135
  %v1453 = vunpack.c.l.b16 %v1136
  %v1454 = vunpack.c.h.b16 %v1136
  %v1455 = vunpack.c.l.b16 %v1137
  %v1456 = vunpack.c.h.b16 %v1137
  %v1457 = vunpack.c.l.b16 %v1138
  %v1458 = vunpack.c.h.b16 %v1138
  %v1459 = vunpack.c.l.b16 %v1139
  %v1460 = vunpack.c.h.b16 %v1139
  %v1461 = vunpack.c.l.b16 %v1140
  %v1462 = vunpack.c.h.b16 %v1140
  %v1463 = vunpack.c.l.b16 %v1141
  %v1464 = vunpack.c.h.b16 %v1141
  %v1465 = vunpack.c.l.b16 %v1142
  %v1466 = vunpack.c.h.b16 %v1142
  %v1467 = vunpack.c.l.b16 %v1143
  %v1468 = vunpack.c.h.b16 %v1143
  %v1469 = vunpack.c.l.b16 %v1144
  %v1470 = vunpack.c.h.b16 %v1144
  %v1471 = vunpack.c.l.b16 %v1145
  %v1472 = vunpack.c.h.b16 %v1145
  %v1473 = vunpack.c.l.b16 %v1146
  %v1474 = vunpack.c.h.b16 %v1146
  %v1475 = vunpack.c.l.b16 %v1147
  %v1476 = vunpack.c.h.b16 %v1147
  %v1477 = vunpack.c.l.b16 %v1148
  %v1478 = vunpack.c.h.b16 %v1148
  %v1479 = vunpack.c.l.b16 %v1149
  %v1480 = vunpack.c.h.b16 %v1149
  %v1481 = vunpack.c.l.b16 %v1150
  %v1482 = vunpack.c.h.b16 %v1150
  %v1483 = vunpack.c.l.b16 %v1151
  %v1484 = vunpack.c.h.b16 %v1151
  %v1485 = vunpack.c.l.b16 %v1152
  %v1486 = vunpack.c.h.b16 %v1152
  %v1487 = vunpack.c.l.b16 %v1153
  %v1488 = vunpack.c.h.b16 %v1153
  %v1489 = vunpack.c.l.b16 %v1154
  %v1490 = vunpack.c.h.b16 %v1154
  %v1491 = vunpack.c.l.b16 %v1155
  %v1492 = vunpack.c.h.b16 %v1155
  %v1493 = vunpack.c.l.b16 %v1156
  %v1494 = vunpack.c.h.b16 %v1156
  %v1495 = vunpack.c.l.b16 %v1157
  %v1496 = vunpack.c.h.b16 %v1157
  %v1497 = vunpack.c.l.b16 %v1158
  %v1498 = vunpack.c.h.b16 %v1158
  %v1499 = vunpack.c.l.b16 %v1159
  %v1500 = vunpack.c.h.b16 %v1159
  %v1501 = vunpack.c.l.b16 %v1160
  %v1502 = vunpack.c.h.b16 %v1160
  %v1503 = vunpack.c.l.b16 %v1161
  %v1504 = vunpack.c.h.b16 %v1161
  %v1505 = vunpack.c.l.b16 %v1162
  %v1506 = vunpack.c.h.b16 %v1162
  %v1507 = vunpack.c.l.b16 %v1163
  %v1508 = vunpack.c.h.b16 %v1163
  %v1509 = vunpack.c.l.b16 %v1164
  %v1510 = vunpack.c.h.b16 %v1164
  %v1511 = vunpack.c.l.b16 %v1165
  %v1512 = vunpack.c.h.b16 %v1165
  %v1513 = vunpack.c.l.b16 %v1166
  %v1514 = vunpack.c.h.b16 %v1166
  %v1515 = vunpack.c.l.b16 %v1167
  %v1516 = vunpack.c.h.b16 %v1167
  %v1517 = vunpack.c.l.b16 %v1168
  %v1518 = vunpack.c.h.b16 %v1168
  %v1519 = vunpack.c.l.b16 %v1169
  %v1520 = vunpack.c.h.b16 %v1169
  %v1521 = vunpack.c.l.b16 %v1170
  %v1522 = vunpack.c.h.b16 %v1170
  %v1523 = vunpack.c.l.b16 %v1171
  %v1524 = vunpack.c.h.b16 %v1171
  %v1525 = vunpack.c.l.b16 %v1172
  %v1526 = vunpack.c.h.b16 %v1172
  %v1527 = vunpack.c.l.b16 %v1173
  %v1528 = vunpack.c.h.b16 %v1173
  %v1529 = vunpack.c.l.b16 %v1174
  %v1530 = vunpack.c.h.b16 %v1174
  %v1531 = vunpack.c.l.b16 %v1175
  %v1532 = vunpack.c.h.b16 %v1175
  %v1533 = vunpack.c.l.b16 %v1176
  %v1534 = vunpack.c.h.b16 %v1176
  %v1535 = vunpack.c.l.b16 %v1177
  %v1536 = vunpack.c.h.b16 %v1177
  %v1537 = vunpack.c.l.b16 %v1178
  %v1538 = vunpack.c.h.b16 %v1178
  %v1539 = vunpack.c.l.b16 %v1179
  %v1540 = vunpack.c.h.b16 %v1179
  %v1541 = vunpack.c.l.b16 %v1180
  %v1542 = vunpack.c.h.b16 %v1180
  %v1543 = vunpack.c.l.b16 %v1181
  %v1544 = vunpack.c.h.b16 %v1181
  %v1545 = vunpack.c.l.b16 %v1182
  %v1546 = vunpack.c.h.b16 %v1182
  %v1547 = vunpack.c.l.b16 %v1183
  %v1548 = vunpack.c.h.b16 %v1183
  %v1549 = vunpack.c.l.b16 %v1184
  %v1550 = vunpack.c.h.b16 %v1184
  %v1551 = vunpack.c.l.b16 %v1185
  %v1552 = vunpack.c.h.b16 %v1185
  %v1553 = vunpack.c.l.b16 %v1186
  %v1554 = vunpack.c.h.b16 %v1186
  %v1555 = vunpack.c.l.b16 %v1187
  %v1556 = vunpack.c.h.b16 %v1187
  %v1557 = vunpack.c.l.b16 %v1188
  %v1558 = vunpack.c.h.b16 %v1188
  %v1559 = vunpack.c.l.b16 %v1189
  %v1560 = vunpack.c.h.b16 %v1189
  %v1561 = vunpack.c.l.b16 %v1190
  %v1562 = vunpack.c.h.b16 %v1190
  %v1563 = vunpack.c.l.b16 %v1191
  %v1564 = vunpack.c.h.b16 %v1191
  %v1565 = vunpack.c.l.b16 %v1192
  %v1566 = vunpack.c.h.b16 %v1192
  %v1567 = vunpack.c.l.b16 %v1193
  %v1568 = vunpack.c.h.b16 %v1193
  %v1569 = vunpack.c.l.b16 %v1194
  %v1570 = vunpack.c.h.b16 %v1194
  %v1571 = vunpack.c.l.b16 %v1195
  %v1572 = vunpack.c.h.b16 %v1195
  %v1573 = vunpack.c.l.b16 %v1196
  %v1574 = vunpack.c.h.b16 %v1196
  %v1575 = vunpack.c.l.b16 %v1197
  %v1576 = vunpack.c.h.b16 %v1197
  %v1577 = vunpack.c.l.b16 %v1198
  %v1578 = vunpack.c.h.b16 %v1198
  %v1579 = vunpack.c.l.b16 %v1199
  %v1580 = vunpack.c.h.b16 %v1199
  %v1581 = vunpack.c.l.b16 %v1200
  %v1582 = vunpack.c.h.b16 %v1200
  %v1583 = vunpack.c.l.b16 %v1201
  %v1584 = vunpack.c.h.b16 %v1201
  %v1585 = vunpack.c.l.b16 %v1202
  %v1586 = vunpack.c.h.b16 %v1202
  %v1587 = vunpack.c.l.b16 %v1203
  %v1588 = vunpack.c.h.b16 %v1203
  %v1589 = vunpack.c.l.b16 %v1204
  %v1590 = vunpack.c.h.b16 %v1204
  %v1591 = vunpack.c.l.b16 %v1205
  %v1592 = vunpack.c.h.b16 %v1205
  %v1593 = vunpack.c.l.b16 %v1206
  %v1594 = vunpack.c.h.b16 %v1206
  %v1595 = vunpack.c.l.b16 %v1207
  %v1596 = vunpack.c.h.b16 %v1207
  %v1597 = vunpack.c.l.b16 %v1208
  %v1598 = vunpack.c.h.b16 %v1208
  %v1599 = vunpack.c.l.b16 %v1209
  %v1600 = vunpack.c.h.b16 %v1209
  %v1601 = vunpack.c.l.b16 %v1210
  %v1602 = vunpack.c.h.b16 %v1210
  %v1603 = vunpack.c.l.b16 %v1211
  %v1604 = vunpack.c.h.b16 %v1211
  %v1605 = vunpack.c.l.b16 %v1212
  %v1606 = vunpack.c.h.b16 %v1212
  %v1607 = vunpack.c.l.b16 %v1213
  %v1608 = vunpack.c.h.b16 %v1213
  %v1609 = vunpack.c.l.b16 %v1214
  %v1610 = vunpack.c.h.b16 %v1214
  %v1611 = vunpack.c.l.b16 %v1215
  %v1612 = vunpack.c.h.b16 %v1215
  %v1613 = vunpack.c.l.b16 %v1216
  %v1614 = vunpack.c.h.b16 %v1216
  %v1615 = vunpack.c.l.b16 %v1217
  %v1616 = vunpack.c.h.b16 %v1217
  %v1617 = vunpack.c.l.b16 %v1218
  %v1618 = vunpack.c.h.b16 %v1218
  %v1619 = vunpack.c.l.b16 %v1219
  %v1620 = vunpack.c.h.b16 %v1219
  %v1621 = vunpack.c.l.b16 %v1220
  %v1622 = vunpack.c.h.b16 %v1220
  %v1623 = vunpack.c.l.b16 %v1221
  %v1624 = vunpack.c.h.b16 %v1221
  %v1625 = vunpack.c.l.b16 %v1222
  %v1626 = vunpack.c.h.b16 %v1222
  %v1627 = vunpack.c.l.b16 %v1223
  %v1628 = vunpack.c.h.b16 %v1223
  %v1629 = vunpack.c.l.b16 %v1224
  %v1630 = vunpack.c.h.b16 %v1224
  %v1631 = vunpack.c.l.b16 %v1225
  %v1632 = vunpack.c.h.b16 %v1225
  %v1633 = vunpack.c.l.b16 %v1226
  %v1634 = vunpack.c.h.b16 %v1226
  %v1635 = vunpack.c.l.b16 %v1227
  %v1636 = vunpack.c.h.b16 %v1227
  %v1637 = vunpack.c.l.b16 %v1228
  %v1638 = vunpack.c.h.b16 %v1228
  %v1639 = vunpack.c.l.b16 %v1229
  %v1640 = vunpack.c.h.b16 %v1229
  %v1641 = vunpack.c.l.b16 %v1230
  %v1642 = vunpack.c.h.b16 %v1230
  %v1643 = vunpack.c.l.b16 %v1231
  %v1644 = vunpack.c.h.b16 %v1231
  %v1645 = vpack.c.b16 %v1397, %v1389
  %v1646 = vpack.c.b16 %v1398, %v1390
  %v1647 = vpack.c.b16 %v1399, %v1391
  %v1648 = vpack.c.b16 %v1400, %v1392
  %v1649 = vpack.c.b16 %v1401, %v1393
  %v1650 = vpack.c.b16 %v1402, %v1394
  %v1651 = vpack.c.b16 %v1403, %v1395
  %v1652 = vpack.c.b16 %v1404, %v1396
  %v1653 = vpack.c.b16 %v1413, %v1405
  %v1654 = vpack.c.b16 %v1414, %v1406
  %v1655 = vpack.c.b16 %v1415, %v1407
  %v1656 = vpack.c.b16 %v1416, %v1408
  %v1657 = vpack.c.b16 %v1417, %v1409
  %v1658 = vpack.c.b16 %v1418, %v1410
  %v1659 = vpack.c.b16 %v1419, %v1411
  %v1660 = vpack.c.b16 %v1420, %v1412
  %v1661 = vpack.c.b16 %v1429, %v1421
  %v1662 = vpack.c.b16 %v1430, %v1422
  %v1663 = vpack.c.b16 %v1431, %v1423
  %v1664 = vpack.c.b16 %v1432, %v1424
  %v1665 = vpack.c.b16 %v1433, %v1425
  %v1666 = vpack.c.b16 %v1434, %v1426
  %v1667 = vpack.c.b16 %v1435, %v1427
  %v1668 = vpack.c.b16 %v1436, %v1428
  %v1669 = vpack.c.b16 %v1445, %v1437
  %v1670 = vpack.c.b16 %v1446, %v1438
  %v1671 = vpack.c.b16 %v1447, %v1439
  %v1672 = vpack.c.b16 %v1448, %v1440
  %v1673 = vpack.c.b16 %v1449, %v1441
  %v1674 = vpack.c.b16 %v1450, %v1442
  %v1675 = vpack.c.b16 %v1451, %v1443
  %v1676 = vpack.c.b16 %v1452, %v1444
  %v1677 = vpack.c.b16 %v1461, %v1453
  %v1678 = vpack.c.b16 %v1462, %v1454
  %v1679 = vpack.c.b16 %v1463, %v1455
  %v1680 = vpack.c.b16 %v1464, %v1456
  %v1681 = vpack.c.b16 %v1465, %v1457
  %v1682 = vpack.c.b16 %v1466, %v1458
  %v1683 = vpack.c.b16 %v1467, %v1459
  %v1684 = vpack.c.b16 %v1468, %v1460
  %v1685 = vpack.c.b16 %v1477, %v1469
  %v1686 = vpack.c.b16 %v1478, %v1470
  %v1687 = vpack.c.b16 %v1479, %v1471
  %v1688 = vpack.c.b16 %v1480, %v1472
  %v1689 = vpack.c.b16 %v1481, %v1473
  %v1690 = vpack.c.b16 %v1482, %v1474
  %v1691 = vpack.c.b16 %v1483, %v1475
  %v1692 = vpack.c.b16 %v1484, %v1476
  %v1693 = vpack.c.b16 %v1493, %v1485
  %v1694 = vpack.c.b16 %v1494, %v1486
  %v1695 = vpack.c.b16 %v1495, %v1487
  %v1696 = vpack.c.b16 %v1496, %v1488
  %v1697 = vpack.c.b16 %v1497, %v1489
  %v1698 = vpack.c.b16 %v1498, %v1490
  %v1699 = vpack.c.b16 %v1499, %v1491
  %v1700 = vpack.c.b16 %v1500, %v1492
  %v1701 = vpack.c.b16 %v1509, %v1501
  %v1702 = vpack.c.b16 %v1510, %v1502
  %v1703 = vpack.c.b16 %v1511, %v1503
  %v1704 = vpack.c.b16 %v1512, %v1504
  %v1705 = vpack.c.b16 %v1513, %v1505
  %v1706 = vpack.c.b16 %v1514, %v1506
  %v1707 = vpack.c.b16 %v1515, %v1507
  %v1708 = vpack.c.b16 %v1516, %v1508
  %v1709 = vpack.c.b16 %v1525, %v1517
  %v1710 = vpack.c.b16 %v1526, %v1518
  %v1711 = vpack.c.b16 %v1527, %v1519
  %v1712 = vpack.c.b16 %v1528, %v1520
  %v1713 = vpack.c.b16 %v1529, %v1521
  %v1714 = vpack.c.b16 %v1530, %v1522
  %v1715 = vpack.c.b16 %v1531, %v1523
  %v1716 = vpack.c.b16 %v1532, %v1524
  %v1717 = vpack.c.b16 %v1541, %v1533
  %v1718 = vpack.c.b16 %v1542, %v1534
  %v1719 = vpack.c.b16 %v1543, %v1535
  %v1720 = vpack.c.b16 %v1544, %v1536
  %v1721 = vpack.c.b16 %v1545, %v1537
  %v1722 = vpack.c.b16 %v1546, %v1538
  %v1723 = vpack.c.b16 %v1547, %v1539
  %v1724 = vpack.c.b16 %v1548, %v1540
  %v1725 = vpack.c.b16 %v1557, %v1549
  %v1726 = vpack.c.b16 %v1558, %v1550
  %v1727 = vpack.c.b16 %v1559, %v1551
  %v1728 = vpack.c.b16 %v1560, %v1552
  %v1729 = vpack.c.b16 %v1561, %v1553
  %v1730 = vpack.c.b16 %v1562, %v1554
  %v1731 = vpack.c.b16 %v1563, %v1555
  %v1732 = vpack.c.b16 %v1564, %v1556
  %v1733 = vpack.c.b16 %v1573, %v1565
  %v1734 = vpack.c.b16 %v1574, %v1566
  %v1735 = vpack.c.b16 %v1575, %v1567
  %v1736 = vpack.c.b16 %v1576, %v1568
  %v1737 = vpack.c.b16 %v1577, %v1569
  %v1738 = vpack.c.b16 %v1578, %v1570
  %v1739 = vpack.c.b16 %v1579, %v1571
  %v1740 = vpack.c.b16 %v1580, %v1572
  %v1741 = vpack.c.b16 %v1589, %v1581
  %v1742 = vpack.c.b16 %v1590, %v1582
  %v1743 = vpack.c.b16 %v1591, %v1583
  %v1744 = vpack.c.b16 %v1592, %v1584
  %v1745 = vpack.c.b16 %v1593, %v1585
  %v1746 = vpack.c.b16 %v1594, %v1586
  %v1747 = vpack.c.b16 %v1595, %v1587
  %v1748 = vpack.c.b16 %v1596, %v1588
  %v1749 = vpack.c.b16 %v1605, %v1597
  %v1750 = vpack.c.b16 %v1606, %v1598
  %v1751 = vpack.c.b16 %v1607, %v1599
  %v1752 = vpack.c.b16 %v1608, %v1600
  %v1753 = vpack.c.b16 %v1609, %v1601
  %v1754 = vpack.c.b16 %v1610, %v1602
  %v1755 = vpack.c.b16 %v1611, %v1603
  %v1756 = vpack.c.b16 %v1612, %v1604
  %v1757 = vpack.c.b16 %v1621, %v1613
  %v1758 = vpack.c.b16 %v1622, %v1614
  %v1759 = vpack.c.b16 %v1623, %v1615
  %v1760 = vpack.c.b16 %v1624, %v1616
  %v1761 = vpack.c.b16 %v1625, %v1617
  %v1762 = vpack.c.b16 %v1626, %v1618
  %v1763 = vpack.c.b16 %v1627, %v1619
  %v1764 = vpack.c.b16 %v1628, %v1620
  %v1765 = vpack.c.b16 %v1637, %v1629
  %v1766 = vpack.c.b16 %v1638, %v1630
  %v1767 = vpack.c.b16 %v1639, %v1631
  %v1768 = vpack.c.b16 %v1640, %v1632
  %v1769 = vpack.c.b16 %v1641, %v1633
  %v1770 = vpack.c.b16 %v1642, %v1634
  %v1771 = vpack.c.b16 %v1643, %v1635
  %v1772 = vpack.c.b16 %v1644, %v1636
  %1901 = vmatprep.subr.bf16.mxu0 %v1646
  %1902 = vmatpush1.bf16.msra.mxu0 %v1645
  %1903 = vmatprep.subr.bf16.mxu0 %v1654
  %1904 = vmatpush1.bf16.msra.mxu0 %v1653
  %1905 = vmatprep.subr.bf16.mxu0 %v1662
  %1906 = vmatpush1.bf16.msra.mxu0 %v1661
  %1907 = vmatprep.subr.bf16.mxu0 %v1670
  %1908 = vmatpush1.bf16.msra.mxu0 %v1669
  %1909 = vmatprep.subr.bf16.mxu0 %v1678
  %1910 = vmatpush1.bf16.msra.mxu0 %v1677
  %1911 = vmatprep.subr.bf16.mxu0 %v1686
  %1912 = vmatpush1.bf16.msra.mxu0 %v1685
  %1913 = vmatprep.subr.bf16.mxu0 %v1694
  %1914 = vmatpush1.bf16.msra.mxu0 %v1693
  %1915 = vmatprep.subr.bf16.mxu0 %v1702
  %1916 = vmatpush1.bf16.msra.mxu0 %v1701
  %1917 = vmatprep.subr.bf16.mxu0 %v1710
  %1918 = vmatpush1.bf16.msra.mxu0 %v1709
  %1919 = vmatprep.subr.bf16.mxu0 %v1718
  %1920 = vmatpush1.bf16.msra.mxu0 %v1717
  %1921 = vmatprep.subr.bf16.mxu0 %v1726
  %1922 = vmatpush1.bf16.msra.mxu0 %v1725
  %1923 = vmatprep.subr.bf16.mxu0 %v1734
  %1924 = vmatpush1.bf16.msra.mxu0 %v1733
  %1925 = vmatprep.subr.bf16.mxu0 %v1742
  %1926 = vmatpush1.bf16.msra.mxu0 %v1741
  %1927 = vmatprep.subr.bf16.mxu0 %v1750
  %1928 = vmatpush1.bf16.msra.mxu0 %v1749
  %1929 = vmatprep.subr.bf16.mxu0 %v1758
  %1930 = vmatpush1.bf16.msra.mxu0 %v1757
  %1931 = vmatprep.subr.bf16.mxu0 %v1766
  %1932 = vmatpush1.bf16.msra.mxu0 %v1765
  %1933 = vmatprep.mubr.bf16.mxu0 0
  %1934 = vmatmul.mubr.bf16.gmra.mrb[0].mxu0 0
  %v1935 = vpop.f32.mrb[0].mxu0
  %v1936 = vadd.f32 0.0, %v1935
  %v1937 = vpop.f32.mrb[0].mxu0
  %v1938 = vadd.f32 0.0, %v1937
  %v1939 = vpop.f32.mrb[0].mxu0
  %v1940 = vpop.f32.mrb[0].mxu0
  %1941 = vdwg.mxu0
  %1942 = vmatprep.subr.bf16.mxu0 %v1648
  %1943 = vmatpush1.bf16.msra.mxu0 %v1647
  %1944 = vmatprep.subr.bf16.mxu0 %v1656
  %1945 = vmatpush1.bf16.msra.mxu0 %v1655
  %1946 = vmatprep.subr.bf16.mxu0 %v1664
  %1947 = vmatpush1.bf16.msra.mxu0 %v1663
  %1948 = vmatprep.subr.bf16.mxu0 %v1672
  %1949 = vmatpush1.bf16.msra.mxu0 %v1671
  %1950 = vmatprep.subr.bf16.mxu0 %v1680
  %1951 = vmatpush1.bf16.msra.mxu0 %v1679
  %1952 = vmatprep.subr.bf16.mxu0 %v1688
  %1953 = vmatpush1.bf16.msra.mxu0 %v1687
  %1954 = vmatprep.subr.bf16.mxu0 %v1696
  %1955 = vmatpush1.bf16.msra.mxu0 %v1695
  %1956 = vmatprep.subr.bf16.mxu0 %v1704
  %1957 = vmatpush1.bf16.msra.mxu0 %v1703
  %1958 = vmatprep.subr.bf16.mxu0 %v1712
  %1959 = vmatpush1.bf16.msra.mxu0 %v1711
  %1960 = vmatprep.subr.bf16.mxu0 %v1720
  %1961 = vmatpush1.bf16.msra.mxu0 %v1719
  %1962 = vmatprep.subr.bf16.mxu0 %v1728
  %1963 = vmatpush1.bf16.msra.mxu0 %v1727
  %1964 = vmatprep.subr.bf16.mxu0 %v1736
  %1965 = vmatpush1.bf16.msra.mxu0 %v1735
  %1966 = vmatprep.subr.bf16.mxu0 %v1744
  %1967 = vmatpush1.bf16.msra.mxu0 %v1743
  %1968 = vmatprep.subr.bf16.mxu0 %v1752
  %1969 = vmatpush1.bf16.msra.mxu0 %v1751
  %1970 = vmatprep.subr.bf16.mxu0 %v1760
  %1971 = vmatpush1.bf16.msra.mxu0 %v1759
  %1972 = vmatprep.subr.bf16.mxu0 %v1768
  %1973 = vmatpush1.bf16.msra.mxu0 %v1767
  %1974 = vmatprep.mubr.bf16.mxu0 0
  %1975 = vmatmul.mubr.bf16.gmra.mrb[0].mxu0 0
  %v1976 = vpop.f32.mrb[0].mxu0
  %v1977 = vadd.f32 0.0, %v1976
  %v1978 = vpop.f32.mrb[0].mxu0
  %v1979 = vadd.f32 0.0, %v1978
  %v1980 = vpop.f32.mrb[0].mxu0
  %v1981 = vpop.f32.mrb[0].mxu0
  %1982 = vdwg.mxu0
  %1983 = vmatprep.subr.bf16.mxu0 %v1650
  %1984 = vmatpush1.bf16.msra.mxu0 %v1649
  %1985 = vmatprep.subr.bf16.mxu0 %v1658
  %1986 = vmatpush1.bf16.msra.mxu0 %v1657
  %1987 = vmatprep.subr.bf16.mxu0 %v1666
  %1988 = vmatpush1.bf16.msra.mxu0 %v1665
  %1989 = vmatprep.subr.bf16.mxu0 %v1674
  %1990 = vmatpush1.bf16.msra.mxu0 %v1673
  %1991 = vmatprep.subr.bf16.mxu0 %v1682
  %1992 = vmatpush1.bf16.msra.mxu0 %v1681
  %1993 = vmatprep.subr.bf16.mxu0 %v1690
  %1994 = vmatpush1.bf16.msra.mxu0 %v1689
  %1995 = vmatprep.subr.bf16.mxu0 %v1698
  %1996 = vmatpush1.bf16.msra.mxu0 %v1697
  %1997 = vmatprep.subr.bf16.mxu0 %v1706
  %1998 = vmatpush1.bf16.msra.mxu0 %v1705
  %1999 = vmatprep.subr.bf16.mxu0 %v1714
  %2000 = vmatpush1.bf16.msra.mxu0 %v1713
  %2001 = vmatprep.subr.bf16.mxu0 %v1722
  %2002 = vmatpush1.bf16.msra.mxu0 %v1721
  %2003 = vmatprep.subr.bf16.mxu0 %v1730
  %2004 = vmatpush1.bf16.msra.mxu0 %v1729
  %2005 = vmatprep.subr.bf16.mxu0 %v1738
  %2006 = vmatpush1.bf16.msra.mxu0 %v1737
  %2007 = vmatprep.subr.bf16.mxu0 %v1746
  %2008 = vmatpush1.bf16.msra.mxu0 %v1745
  %2009 = vmatprep.subr.bf16.mxu0 %v1754
  %2010 = vmatpush1.bf16.msra.mxu0 %v1753
  %2011 = vmatprep.subr.bf16.mxu0 %v1762
  %2012 = vmatpush1.bf16.msra.mxu0 %v1761
  %2013 = vmatprep.subr.bf16.mxu0 %v1770
  %2014 = vmatpush1.bf16.msra.mxu0 %v1769
  %2015 = vmatprep.mubr.bf16.mxu0 0
  %2016 = vmatmul.mubr.bf16.gmra.mrb[0].mxu0 0
  %v2017 = vpop.f32.mrb[0].mxu0
  %v2018 = vadd.f32 0.0, %v2017
  %v2019 = vpop.f32.mrb[0].mxu0
  %v2020 = vadd.f32 0.0, %v2019
  %v2021 = vpop.f32.mrb[0].mxu0
  %v2022 = vpop.f32.mrb[0].mxu0
  %2023 = vdwg.mxu0
  %2024 = vmatprep.subr.bf16.mxu0 %v1652
  %2025 = vmatpush1.bf16.msra.mxu0 %v1651
  %2026 = vmatprep.subr.bf16.mxu0 %v1660
  %2027 = vmatpush1.bf16.msra.mxu0 %v1659
  %2028 = vmatprep.subr.bf16.mxu0 %v1668
  %2029 = vmatpush1.bf16.msra.mxu0 %v1667
  %2030 = vmatprep.subr.bf16.mxu0 %v1676
  %2031 = vmatpush1.bf16.msra.mxu0 %v1675
  %2032 = vmatprep.subr.bf16.mxu0 %v1684
  %2033 = vmatpush1.bf16.msra.mxu0 %v1683
  %2034 = vmatprep.subr.bf16.mxu0 %v1692
  %2035 = vmatpush1.bf16.msra.mxu0 %v1691
  %2036 = vmatprep.subr.bf16.mxu0 %v1700
  %2037 = vmatpush1.bf16.msra.mxu0 %v1699
  %2038 = vmatprep.subr.bf16.mxu0 %v1708
  %2039 = vmatpush1.bf16.msra.mxu0 %v1707
  %2040 = vmatprep.subr.bf16.mxu0 %v1716
  %2041 = vmatpush1.bf16.msra.mxu0 %v1715
  %2042 = vmatprep.subr.bf16.mxu0 %v1724
  %2043 = vmatpush1.bf16.msra.mxu0 %v1723
  %2044 = vmatprep.subr.bf16.mxu0 %v1732
  %2045 = vmatpush1.bf16.msra.mxu0 %v1731
  %2046 = vmatprep.subr.bf16.mxu0 %v1740
  %2047 = vmatpush1.bf16.msra.mxu0 %v1739
  %2048 = vmatprep.subr.bf16.mxu0 %v1748
  %2049 = vmatpush1.bf16.msra.mxu0 %v1747
  %2050 = vmatprep.subr.bf16.mxu0 %v1756
  %2051 = vmatpush1.bf16.msra.mxu0 %v1755
  %2052 = vmatprep.subr.bf16.mxu0 %v1764
  %2053 = vmatpush1.bf16.msra.mxu0 %v1763
  %2054 = vmatprep.subr.bf16.mxu0 %v1772
  %2055 = vmatpush1.bf16.msra.mxu0 %v1771
  %2056 = vmatprep.mubr.bf16.mxu0 0
  %2057 = vmatmul.mubr.bf16.gmra.mrb[0].mxu0 0
  %v2058 = vpop.f32.mrb[0].mxu0
  %v2059 = vadd.f32 0.0, %v2058
  %v2060 = vpop.f32.mrb[0].mxu0
  %v2061 = vadd.f32 0.0, %v2060
  %v2062 = vpop.f32.mrb[0].mxu0
  %v2063 = vpop.f32.mrb[0].mxu0
  %2064 = vdwg.mxu0
  %v2065 = vadd.f32 %v1253, %v1936
  %v2066 = vadd.f32 %v1254, %v1938
  %v2067 = vadd.f32 %v1255, %v1977
  %v2068 = vadd.f32 %v1256, %v1979
  %v2069 = vadd.f32 %v1257, %v2018
  %v2070 = vadd.f32 %v1258, %v2020
  %v2071 = vadd.f32 %v1259, %v2059
  %v2072 = vadd.f32 %v1260, %v2061
  %v2073 = vmul.f32 %v2065, 0.5
  %v2074 = vmul.f32 %v2066, 0.5
  %v2075 = vtanh.pop %v2073
  %v2076 = vtanh.pop %v2074
  %v2077 = vmul.f32 %v2075, 0.5
  %v2078 = vmul.f32 %v2076, 0.5
  %v2079 = vadd.f32 %v2077, 0.5
  %v2080 = vadd.f32 %v2078, 0.5
  %v2081 = vmul.f32 %v2067, 0.5
  %v2082 = vmul.f32 %v2068, 0.5
  %v2083 = vtanh.pop %v2081
  %v2084 = vtanh.pop %v2082
  %v2085 = vmul.f32 %v2083, 0.5
  %v2086 = vmul.f32 %v2084, 0.5
  %v2087 = vadd.f32 %v2085, 0.5
  %v2088 = vadd.f32 %v2086, 0.5
  %v2089 = vtanh.pop %v2069
  %v2090 = vtanh.pop %v2070
  %v2091 = vmul.f32 %v2071, 0.5
  %v2092 = vmul.f32 %v2072, 0.5
  %v2093 = vtanh.pop %v2091
  %v2094 = vtanh.pop %v2092
  %v2095 = vmul.f32 %v2093, 0.5
  %v2096 = vmul.f32 %v2094, 0.5
  %v2097 = vadd.f32 %v2095, 0.5
  %v2098 = vadd.f32 %v2096, 0.5
  %v2099 = vmul.f32 %v2087, 0.0
  %v2100 = vmul.f32 %v2088, 0.0
  %v2101 = vmul.f32 %v2079, %v2089
  %v2102 = vmul.f32 %v2080, %v2090
  %v2103 = vadd.f32 %v2099, %v2101
  %v2104 = vadd.f32 %v2100, %v2102
  %v2105 = vtanh.pop %v2103
  %v2106 = vtanh.pop %v2104
  %v2107 = vmul.f32 %v2097, %v2105
  %v2108 = vmul.f32 %v2098, %v2106
  %v2109 = vld [vmem:[#allocation2 + $0x40] sm:$0xff]
  %v2110 = vld [vmem:[#allocation2 + $0x48] sm:$0xff]
  %v2111 = vld [vmem:[#allocation2 + $0x50] sm:$0xff]
  %v2112 = vld [vmem:[#allocation2 + $0x58] sm:$0xff]
  %v2113 = vld [vmem:[#allocation2 + $0x60] sm:$0xff]
  %v2114 = vld [vmem:[#allocation2 + $0x68] sm:$0xff]
  %v2115 = vld [vmem:[#allocation2 + $0x70] sm:$0xff]
  %v2116 = vld [vmem:[#allocation2 + $0x78] sm:$0xff]
  %v2117 = vpack.c.bf16 %v2107, %v2107
  %v2118 = vpack.c.bf16 %v2108, %v2108
  %2119 = vmatprep.subr.bf16.mxu0 %v1646
  %2120 = vmatpush1.bf16.msra.mxu0 %v1645
  %2121 = vmatprep.subr.bf16.mxu0 %v1654
  %2122 = vmatpush1.bf16.msra.mxu0 %v1653
  %2123 = vmatprep.subr.bf16.mxu0 %v1662
  %2124 = vmatpush1.bf16.msra.mxu0 %v1661
  %2125 = vmatprep.subr.bf16.mxu0 %v1670
  %2126 = vmatpush1.bf16.msra.mxu0 %v1669
  %2127 = vmatprep.subr.bf16.mxu0 %v1678
  %2128 = vmatpush1.bf16.msra.mxu0 %v1677
  %2129 = vmatprep.subr.bf16.mxu0 %v1686
  %2130 = vmatpush1.bf16.msra.mxu0 %v1685
  %2131 = vmatprep.subr.bf16.mxu0 %v1694
  %2132 = vmatpush1.bf16.msra.mxu0 %v1693
  %2133 = vmatprep.subr.bf16.mxu0 %v1702
  %2134 = vmatpush1.bf16.msra.mxu0 %v1701
  %2135 = vmatprep.subr.bf16.mxu0 %v1710
  %2136 = vmatpush1.bf16.msra.mxu0 %v1709
  %2137 = vmatprep.subr.bf16.mxu0 %v1718
  %2138 = vmatpush1.bf16.msra.mxu0 %v1717
  %2139 = vmatprep.subr.bf16.mxu0 %v1726
  %2140 = vmatpush1.bf16.msra.mxu0 %v1725
  %2141 = vmatprep.subr.bf16.mxu0 %v1734
  %2142 = vmatpush1.bf16.msra.mxu0 %v1733
  %2143 = vmatprep.subr.bf16.mxu0 %v1742
  %2144 = vmatpush1.bf16.msra.mxu0 %v1741
  %2145 = vmatprep.subr.bf16.mxu0 %v1750
  %2146 = vmatpush1.bf16.msra.mxu0 %v1749
  %2147 = vmatprep.subr.bf16.mxu0 %v1758
  %2148 = vmatpush1.bf16.msra.mxu0 %v1757
  %2149 = vmatprep.subr.bf16.mxu0 %v1766
  %2150 = vmatpush1.bf16.msra.mxu0 %v1765
  %2151 = vmatprep.mubr.bf16.mxu0 %v2118
  %2152 = vmatmul.mubr.bf16.gmra.mrb[0].mxu0 %v2117
  %v2153 = vpop.f32.mrb[0].mxu0
  %v2154 = vadd.f32 0.0, %v2153
  %v2155 = vpop.f32.mrb[0].mxu0
  %v2156 = vadd.f32 0.0, %v2155
  %v2157 = vpop.f32.mrb[0].mxu0
  %v2158 = vpop.f32.mrb[0].mxu0
  %2159 = vdwg.mxu0
  %2160 = vmatprep.subr.bf16.mxu0 %v1648
  %2161 = vmatpush1.bf16.msra.mxu0 %v1647
  %2162 = vmatprep.subr.bf16.mxu0 %v1656
  %2163 = vmatpush1.bf16.msra.mxu0 %v1655
  %2164 = vmatprep.subr.bf16.mxu0 %v1664
  %2165 = vmatpush1.bf16.msra.mxu0 %v1663
  %2166 = vmatprep.subr.bf16.mxu0 %v1672
  %2167 = vmatpush1.bf16.msra.mxu0 %v1671
  %2168 = vmatprep.subr.bf16.mxu0 %v1680
  %2169 = vmatpush1.bf16.msra.mxu0 %v1679
  %2170 = vmatprep.subr.bf16.mxu0 %v1688
  %2171 = vmatpush1.bf16.msra.mxu0 %v1687
  %2172 = vmatprep.subr.bf16.mxu0 %v1696
  %2173 = vmatpush1.bf16.msra.mxu0 %v1695
  %2174 = vmatprep.subr.bf16.mxu0 %v1704
  %2175 = vmatpush1.bf16.msra.mxu0 %v1703
  %2176 = vmatprep.subr.bf16.mxu0 %v1712
  %2177 = vmatpush1.bf16.msra.mxu0 %v1711
  %2178 = vmatprep.subr.bf16.mxu0 %v1720
  %2179 = vmatpush1.bf16.msra.mxu0 %v1719
  %2180 = vmatprep.subr.bf16.mxu0 %v1728
  %2181 = vmatpush1.bf16.msra.mxu0 %v1727
  %2182 = vmatprep.subr.bf16.mxu0 %v1736
  %2183 = vmatpush1.bf16.msra.mxu0 %v1735
  %2184 = vmatprep.subr.bf16.mxu0 %v1744
  %2185 = vmatpush1.bf16.msra.mxu0 %v1743
  %2186 = vmatprep.subr.bf16.mxu0 %v1752
  %2187 = vmatpush1.bf16.msra.mxu0 %v1751
  %2188 = vmatprep.subr.bf16.mxu0 %v1760
  %2189 = vmatpush1.bf16.msra.mxu0 %v1759
  %2190 = vmatprep.subr.bf16.mxu0 %v1768
  %2191 = vmatpush1.bf16.msra.mxu0 %v1767
  %2192 = vmatprep.mubr.bf16.mxu0 %v2118
  %2193 = vmatmul.mubr.bf16.gmra.mrb[0].mxu0 %v2117
  %v2194 = vpop.f32.mrb[0].mxu0
  %v2195 = vadd.f32 0.0, %v2194
  %v2196 = vpop.f32.mrb[0].mxu0
  %v2197 = vadd.f32 0.0, %v2196
  %v2198 = vpop.f32.mrb[0].mxu0
  %v2199 = vpop.f32.mrb[0].mxu0
  %2200 = vdwg.mxu0
  %2201 = vmatprep.subr.bf16.mxu0 %v1650
  %2202 = vmatpush1.bf16.msra.mxu0 %v1649
  %2203 = vmatprep.subr.bf16.mxu0 %v1658
  %2204 = vmatpush1.bf16.msra.mxu0 %v1657
  %2205 = vmatprep.subr.bf16.mxu0 %v1666
  %2206 = vmatpush1.bf16.msra.mxu0 %v1665
  %2207 = vmatprep.subr.bf16.mxu0 %v1674
  %2208 = vmatpush1.bf16.msra.mxu0 %v1673
  %2209 = vmatprep.subr.bf16.mxu0 %v1682
  %2210 = vmatpush1.bf16.msra.mxu0 %v1681
  %2211 = vmatprep.subr.bf16.mxu0 %v1690
  %2212 = vmatpush1.bf16.msra.mxu0 %v1689
  %2213 = vmatprep.subr.bf16.mxu0 %v1698
  %2214 = vmatpush1.bf16.msra.mxu0 %v1697
  %2215 = vmatprep.subr.bf16.mxu0 %v1706
  %2216 = vmatpush1.bf16.msra.mxu0 %v1705
  %2217 = vmatprep.subr.bf16.mxu0 %v1714
  %2218 = vmatpush1.bf16.msra.mxu0 %v1713
  %2219 = vmatprep.subr.bf16.mxu0 %v1722
  %2220 = vmatpush1.bf16.msra.mxu0 %v1721
  %2221 = vmatprep.subr.bf16.mxu0 %v1730
  %2222 = vmatpush1.bf16.msra.mxu0 %v1729
  %2223 = vmatprep.subr.bf16.mxu0 %v1738
  %2224 = vmatpush1.bf16.msra.mxu0 %v1737
  %2225 = vmatprep.subr.bf16.mxu0 %v1746
  %2226 = vmatpush1.bf16.msra.mxu0 %v1745
  %2227 = vmatprep.subr.bf16.mxu0 %v1754
  %2228 = vmatpush1.bf16.msra.mxu0 %v1753
  %2229 = vmatprep.subr.bf16.mxu0 %v1762
  %2230 = vmatpush1.bf16.msra.mxu0 %v1761
  %2231 = vmatprep.subr.bf16.mxu0 %v1770
  %2232 = vmatpush1.bf16.msra.mxu0 %v1769
  %2233 = vmatprep.mubr.bf16.mxu0 %v2118
  %2234 = vmatmul.mubr.bf16.gmra.mrb[0].mxu0 %v2117
  %v2235 = vpop.f32.mrb[0].mxu0
  %v2236 = vadd.f32 0.0, %v2235
  %v2237 = vpop.f32.mrb[0].mxu0
  %v2238 = vadd.f32 0.0, %v2237
  %v2239 = vpop.f32.mrb[0].mxu0
  %v2240 = vpop.f32.mrb[0].mxu0
  %2241 = vdwg.mxu0
  %2242 = vmatprep.subr.bf16.mxu0 %v1652
  %2243 = vmatpush1.bf16.msra.mxu0 %v1651
  %2244 = vmatprep.subr.bf16.mxu0 %v1660
  %2245 = vmatpush1.bf16.msra.mxu0 %v1659
  %2246 = vmatprep.subr.bf16.mxu0 %v1668
  %2247 = vmatpush1.bf16.msra.mxu0 %v1667
  %2248 = vmatprep.subr.bf16.mxu0 %v1676
  %2249 = vmatpush1.bf16.msra.mxu0 %v1675
  %2250 = vmatprep.subr.bf16.mxu0 %v1684
  %2251 = vmatpush1.bf16.msra.mxu0 %v1683
  %2252 = vmatprep.subr.bf16.mxu0 %v1692
  %2253 = vmatpush1.bf16.msra.mxu0 %v1691
  %2254 = vmatprep.subr.bf16.mxu0 %v1700
  %2255 = vmatpush1.bf16.msra.mxu0 %v1699
  %2256 = vmatprep.subr.bf16.mxu0 %v1708
  %2257 = vmatpush1.bf16.msra.mxu0 %v1707
  %2258 = vmatprep.subr.bf16.mxu0 %v1716
  %2259 = vmatpush1.bf16.msra.mxu0 %v1715
  %2260 = vmatprep.subr.bf16.mxu0 %v1724
  %2261 = vmatpush1.bf16.msra.mxu0 %v1723
  %2262 = vmatprep.subr.bf16.mxu0 %v1732
  %2263 = vmatpush1.bf16.msra.mxu0 %v1731
  %2264 = vmatprep.subr.bf16.mxu0 %v1740
  %2265 = vmatpush1.bf16.msra.mxu0 %v1739
  %2266 = vmatprep.subr.bf16.mxu0 %v1748
  %2267 = vmatpush1.bf16.msra.mxu0 %v1747
  %2268 = vmatprep.subr.bf16.mxu0 %v1756
  %2269 = vmatpush1.bf16.msra.mxu0 %v1755
  %2270 = vmatprep.subr.bf16.mxu0 %v1764
  %2271 = vmatpush1.bf16.msra.mxu0 %v1763
  %2272 = vmatprep.subr.bf16.mxu0 %v1772
  %2273 = vmatpush1.bf16.msra.mxu0 %v1771
  %2274 = vmatprep.mubr.bf16.mxu0 %v2118
  %2275 = vmatmul.mubr.bf16.gmra.mrb[0].mxu0 %v2117
  %v2276 = vpop.f32.mrb[0].mxu0
  %v2277 = vadd.f32 0.0, %v2276
  %v2278 = vpop.f32.mrb[0].mxu0
  %v2279 = vadd.f32 0.0, %v2278
  %v2280 = vpop.f32.mrb[0].mxu0
  %v2281 = vpop.f32.mrb[0].mxu0
  %2282 = vdwg.mxu0
  %v2283 = vadd.f32 %v2109, %v2154
  %v2284 = vadd.f32 %v2110, %v2156
  %v2285 = vadd.f32 %v2111, %v2195
  %v2286 = vadd.f32 %v2112, %v2197
  %v2287 = vadd.f32 %v2113, %v2236
  %v2288 = vadd.f32 %v2114, %v2238
  %v2289 = vadd.f32 %v2115, %v2277
  %v2290 = vadd.f32 %v2116, %v2279
  %v2291 = vmul.f32 %v2283, 0.5
  %v2292 = vmul.f32 %v2284, 0.5
  %v2293 = vtanh.pop %v2291
  %v2294 = vtanh.pop %v2292
  %v2295 = vmul.f32 %v2293, 0.5
  %v2296 = vmul.f32 %v2294, 0.5
  %v2297 = vadd.f32 %v2295, 0.5
  %v2298 = vadd.f32 %v2296, 0.5
  %v2299 = vmul.f32 %v2285, 0.5
  %v2300 = vmul.f32 %v2286, 0.5
  %v2301 = vtanh.pop %v2299
  %v2302 = vtanh.pop %v2300
  %v2303 = vmul.f32 %v2301, 0.5
  %v2304 = vmul.f32 %v2302, 0.5
  %v2305 = vadd.f32 %v2303, 0.5
  %v2306 = vadd.f32 %v2304, 0.5
  %v2307 = vtanh.pop %v2287
  %v2308 = vtanh.pop %v2288
  %v2309 = vmul.f32 %v2289, 0.5
  %v2310 = vmul.f32 %v2290, 0.5
  %v2311 = vtanh.pop %v2309
  %v2312 = vtanh.pop %v2310
  %v2313 = vmul.f32 %v2311, 0.5
  %v2314 = vmul.f32 %v2312, 0.5
  %v2315 = vadd.f32 %v2313, 0.5
  %v2316 = vadd.f32 %v2314, 0.5
  %v2317 = vmul.f32 %v2305, %v2103
  %v2318 = vmul.f32 %v2306, %v2104
  %v2319 = vmul.f32 %v2297, %v2307
  %v2320 = vmul.f32 %v2298, %v2308
  %v2321 = vadd.f32 %v2317, %v2319
  %v2322 = vadd.f32 %v2318, %v2320
  %v2323 = vtanh.pop %v2321
  %v2324 = vtanh.pop %v2322
  %v2325 = vmul.f32 %v2315, %v2323
  %v2326 = vmul.f32 %v2316, %v2324
  %v2327 = vld [vmem:[#allocation2 + $0x80] sm:$0xff]
  %v2328 = vld [vmem:[#allocation2 + $0x88] sm:$0xff]
  %v2329 = vld [vmem:[#allocation2 + $0x90] sm:$0xff]
  %v2330 = vld [vmem:[#allocation2 + $0x98] sm:$0xff]
  %v2331 = vld [vmem:[#allocation2 + $0xa0] sm:$0xff]
  %v2332 = vld [vmem:[#allocation2 + $0xa8] sm:$0xff]
  %v2333 = vld [vmem:[#allocation2 + $0xb0] sm:$0xff]
  %v2334 = vld [vmem:[#allocation2 + $0xb8] sm:$0xff]
  %v2335 = vpack.c.bf16 %v2325, %v2325
  %v2336 = vpack.c.bf16 %v2326, %v2326
  %2337 = vmatprep.subr.bf16.mxu0 %v1646
  %2338 = vmatpush1.bf16.msra.mxu0 %v1645
  %2339 = vmatprep.subr.bf16.mxu0 %v1654
  %2340 = vmatpush1.bf16.msra.mxu0 %v1653
  %2341 = vmatprep.subr.bf16.mxu0 %v1662
  %2342 = vmatpush1.bf16.msra.mxu0 %v1661
  %2343 = vmatprep.subr.bf16.mxu0 %v1670
  %2344 = vmatpush1.bf16.msra.mxu0 %v1669
  %2345 = vmatprep.subr.bf16.mxu0 %v1678
  %2346 = vmatpush1.bf16.msra.mxu0 %v1677
  %2347 = vmatprep.subr.bf16.mxu0 %v1686
  %2348 = vmatpush1.bf16.msra.mxu0 %v1685
  %2349 = vmatprep.subr.bf16.mxu0 %v1694
  %2350 = vmatpush1.bf16.msra.mxu0 %v1693
  %2351 = vmatprep.subr.bf16.mxu0 %v1702
  %2352 = vmatpush1.bf16.msra.mxu0 %v1701
  %2353 = vmatprep.subr.bf16.mxu0 %v1710
  %2354 = vmatpush1.bf16.msra.mxu0 %v1709
  %2355 = vmatprep.subr.bf16.mxu0 %v1718
  %2356 = vmatpush1.bf16.msra.mxu0 %v1717
  %2357 = vmatprep.subr.bf16.mxu0 %v1726
  %2358 = vmatpush1.bf16.msra.mxu0 %v1725
  %2359 = vmatprep.subr.bf16.mxu0 %v1734
  %2360 = vmatpush1.bf16.msra.mxu0 %v1733
  %2361 = vmatprep.subr.bf16.mxu0 %v1742
  %2362 = vmatpush1.bf16.msra.mxu0 %v1741
  %2363 = vmatprep.subr.bf16.mxu0 %v1750
  %2364 = vmatpush1.bf16.msra.mxu0 %v1749
  %2365 = vmatprep.subr.bf16.mxu0 %v1758
  %2366 = vmatpush1.bf16.msra.mxu0 %v1757
  %2367 = vmatprep.subr.bf16.mxu0 %v1766
  %2368 = vmatpush1.bf16.msra.mxu0 %v1765
  %2369 = vmatprep.mubr.bf16.mxu0 %v2336
  %2370 = vmatmul.mubr.bf16.gmra.mrb[0].mxu0 %v2335
  %v2371 = vpop.f32.mrb[0].mxu0
  %v2372 = vadd.f32 0.0, %v2371
  %v2373 = vpop.f32.mrb[0].mxu0
  %v2374 = vadd.f32 0.0, %v2373
  %v2375 = vpop.f32.mrb[0].mxu0
  %v2376 = vpop.f32.mrb[0].mxu0
  %2377 = vdwg.mxu0
  %2378 = vmatprep.subr.bf16.mxu0 %v1648
  %2379 = vmatpush1.bf16.msra.mxu0 %v1647
  %2380 = vmatprep.subr.bf16.mxu0 %v1656
  %2381 = vmatpush1.bf16.msra.mxu0 %v1655
  %2382 = vmatprep.subr.bf16.mxu0 %v1664
  %2383 = vmatpush1.bf16.msra.mxu0 %v1663
  %2384 = vmatprep.subr.bf16.mxu0 %v1672
  %2385 = vmatpush1.bf16.msra.mxu0 %v1671
  %2386 = vmatprep.subr.bf16.mxu0 %v1680
  %2387 = vmatpush1.bf16.msra.mxu0 %v1679
  %2388 = vmatprep.subr.bf16.mxu0 %v1688
  %2389 = vmatpush1.bf16.msra.mxu0 %v1687
  %2390 = vmatprep.subr.bf16.mxu0 %v1696
  %2391 = vmatpush1.bf16.msra.mxu0 %v1695
  %2392 = vmatprep.subr.bf16.mxu0 %v1704
  %2393 = vmatpush1.bf16.msra.mxu0 %v1703
  %2394 = vmatprep.subr.bf16.mxu0 %v1712
  %2395 = vmatpush1.bf16.msra.mxu0 %v1711
  %2396 = vmatprep.subr.bf16.mxu0 %v1720
  %2397 = vmatpush1.bf16.msra.mxu0 %v1719
  %2398 = vmatprep.subr.bf16.mxu0 %v1728
  %2399 = vmatpush1.bf16.msra.mxu0 %v1727
  %2400 = vmatprep.subr.bf16.mxu0 %v1736
  %2401 = vmatpush1.bf16.msra.mxu0 %v1735
  %2402 = vmatprep.subr.bf16.mxu0 %v1744
  %2403 = vmatpush1.bf16.msra.mxu0 %v1743
  %2404 = vmatprep.subr.bf16.mxu0 %v1752
  %2405 = vmatpush1.bf16.msra.mxu0 %v1751
  %2406 = vmatprep.subr.bf16.mxu0 %v1760
  %2407 = vmatpush1.bf16.msra.mxu0 %v1759
  %2408 = vmatprep.subr.bf16.mxu0 %v1768
  %2409 = vmatpush1.bf16.msra.mxu0 %v1767
  %2410 = vmatprep.mubr.bf16.mxu0 %v2336
  %2411 = vmatmul.mubr.bf16.gmra.mrb[0].mxu0 %v2335
  %v2412 = vpop.f32.mrb[0].mxu0
  %v2413 = vadd.f32 0.0, %v2412
  %v2414 = vpop.f32.mrb[0].mxu0
  %v2415 = vadd.f32 0.0, %v2414
  %v2416 = vpop.f32.mrb[0].mxu0
  %v2417 = vpop.f32.mrb[0].mxu0
  %2418 = vdwg.mxu0
  %2419 = vmatprep.subr.bf16.mxu0 %v1650
  %2420 = vmatpush1.bf16.msra.mxu0 %v1649
  %2421 = vmatprep.subr.bf16.mxu0 %v1658
  %2422 = vmatpush1.bf16.msra.mxu0 %v1657
  %2423 = vmatprep.subr.bf16.mxu0 %v1666
  %2424 = vmatpush1.bf16.msra.mxu0 %v1665
  %2425 = vmatprep.subr.bf16.mxu0 %v1674
  %2426 = vmatpush1.bf16.msra.mxu0 %v1673
  %2427 = vmatprep.subr.bf16.mxu0 %v1682
  %2428 = vmatpush1.bf16.msra.mxu0 %v1681
  %2429 = vmatprep.subr.bf16.mxu0 %v1690
  %2430 = vmatpush1.bf16.msra.mxu0 %v1689
  %2431 = vmatprep.subr.bf16.mxu0 %v1698
  %2432 = vmatpush1.bf16.msra.mxu0 %v1697
  %2433 = vmatprep.subr.bf16.mxu0 %v1706
  %2434 = vmatpush1.bf16.msra.mxu0 %v1705
  %2435 = vmatprep.subr.bf16.mxu0 %v1714
  %2436 = vmatpush1.bf16.msra.mxu0 %v1713
  %2437 = vmatprep.subr.bf16.mxu0 %v1722
  %2438 = vmatpush1.bf16.msra.mxu0 %v1721
  %2439 = vmatprep.subr.bf16.mxu0 %v1730
  %2440 = vmatpush1.bf16.msra.mxu0 %v1729
  %2441 = vmatprep.subr.bf16.mxu0 %v1738
  %2442 = vmatpush1.bf16.msra.mxu0 %v1737
  %2443 = vmatprep.subr.bf16.mxu0 %v1746
  %2444 = vmatpush1.bf16.msra.mxu0 %v1745
  %2445 = vmatprep.subr.bf16.mxu0 %v1754
  %2446 = vmatpush1.bf16.msra.mxu0 %v1753
  %2447 = vmatprep.subr.bf16.mxu0 %v1762
  %2448 = vmatpush1.bf16.msra.mxu0 %v1761
  %2449 = vmatprep.subr.bf16.mxu0 %v1770
  %2450 = vmatpush1.bf16.msra.mxu0 %v1769
  %2451 = vmatprep.mubr.bf16.mxu0 %v2336
  %2452 = vmatmul.mubr.bf16.gmra.mrb[0].mxu0 %v2335
  %v2453 = vpop.f32.mrb[0].mxu0
  %v2454 = vadd.f32 0.0, %v2453
  %v2455 = vpop.f32.mrb[0].mxu0
  %v2456 = vadd.f32 0.0, %v2455
  %v2457 = vpop.f32.mrb[0].mxu0
  %v2458 = vpop.f32.mrb[0].mxu0
  %2459 = vdwg.mxu0
  %2460 = vmatprep.subr.bf16.mxu0 %v1652
  %2461 = vmatpush1.bf16.msra.mxu0 %v1651
  %2462 = vmatprep.subr.bf16.mxu0 %v1660
  %2463 = vmatpush1.bf16.msra.mxu0 %v1659
  %2464 = vmatprep.subr.bf16.mxu0 %v1668
  %2465 = vmatpush1.bf16.msra.mxu0 %v1667
  %2466 = vmatprep.subr.bf16.mxu0 %v1676
  %2467 = vmatpush1.bf16.msra.mxu0 %v1675
  %2468 = vmatprep.subr.bf16.mxu0 %v1684
  %2469 = vmatpush1.bf16.msra.mxu0 %v1683
  %2470 = vmatprep.subr.bf16.mxu0 %v1692
  %2471 = vmatpush1.bf16.msra.mxu0 %v1691
  %2472 = vmatprep.subr.bf16.mxu0 %v1700
  %2473 = vmatpush1.bf16.msra.mxu0 %v1699
  %2474 = vmatprep.subr.bf16.mxu0 %v1708
  %2475 = vmatpush1.bf16.msra.mxu0 %v1707
  %2476 = vmatprep.subr.bf16.mxu0 %v1716
  %2477 = vmatpush1.bf16.msra.mxu0 %v1715
  %2478 = vmatprep.subr.bf16.mxu0 %v1724
  %2479 = vmatpush1.bf16.msra.mxu0 %v1723
  %2480 = vmatprep.subr.bf16.mxu0 %v1732
  %2481 = vmatpush1.bf16.msra.mxu0 %v1731
  %2482 = vmatprep.subr.bf16.mxu0 %v1740
  %2483 = vmatpush1.bf16.msra.mxu0 %v1739
  %2484 = vmatprep.subr.bf16.mxu0 %v1748
  %2485 = vmatpush1.bf16.msra.mxu0 %v1747
  %2486 = vmatprep.subr.bf16.mxu0 %v1756
  %2487 = vmatpush1.bf16.msra.mxu0 %v1755
  %2488 = vmatprep.subr.bf16.mxu0 %v1764
  %2489 = vmatpush1.bf16.msra.mxu0 %v1763
  %2490 = vmatprep.subr.bf16.mxu0 %v1772
  %2491 = vmatpush1.bf16.msra.mxu0 %v1771
  %2492 = vmatprep.mubr.bf16.mxu0 %v2336
  %2493 = vmatmul.mubr.bf16.gmra.mrb[0].mxu0 %v2335
  %v2494 = vpop.f32.mrb[0].mxu0
  %v2495 = vadd.f32 0.0, %v2494
  %v2496 = vpop.f32.mrb[0].mxu0
  %v2497 = vadd.f32 0.0, %v2496
  %v2498 = vpop.f32.mrb[0].mxu0
  %v2499 = vpop.f32.mrb[0].mxu0
  %2500 = vdwg.mxu0
  %v2501 = vadd.f32 %v2327, %v2372
  %v2502 = vadd.f32 %v2328, %v2374
  %v2503 = vadd.f32 %v2329, %v2413
  %v2504 = vadd.f32 %v2330, %v2415
  %v2505 = vadd.f32 %v2331, %v2454
  %v2506 = vadd.f32 %v2332, %v2456
  %v2507 = vadd.f32 %v2333, %v2495
  %v2508 = vadd.f32 %v2334, %v2497
  %v2509 = vmul.f32 %v2501, 0.5
  %v2510 = vmul.f32 %v2502, 0.5
  %v2511 = vtanh.pop %v2509
  %v2512 = vtanh.pop %v2510
  %v2513 = vmul.f32 %v2511, 0.5
  %v2514 = vmul.f32 %v2512, 0.5
  %v2515 = vadd.f32 %v2513, 0.5
  %v2516 = vadd.f32 %v2514, 0.5
  %v2517 = vmul.f32 %v2503, 0.5
  %v2518 = vmul.f32 %v2504, 0.5
  %v2519 = vtanh.pop %v2517
  %v2520 = vtanh.pop %v2518
  %v2521 = vmul.f32 %v2519, 0.5
  %v2522 = vmul.f32 %v2520, 0.5
  %v2523 = vadd.f32 %v2521, 0.5
  %v2524 = vadd.f32 %v2522, 0.5
  %v2525 = vtanh.pop %v2505
  %v2526 = vtanh.pop %v2506
  %v2527 = vmul.f32 %v2507, 0.5
  %v2528 = vmul.f32 %v2508, 0.5
  %v2529 = vtanh.pop %v2527
  %v2530 = vtanh.pop %v2528
  %v2531 = vmul.f32 %v2529, 0.5
  %v2532 = vmul.f32 %v2530, 0.5
  %v2533 = vadd.f32 %v2531, 0.5
  %v2534 = vadd.f32 %v2532, 0.5
  %v2535 = vmul.f32 %v2523, %v2321
  %v2536 = vmul.f32 %v2524, %v2322
  %v2537 = vmul.f32 %v2515, %v2525
  %v2538 = vmul.f32 %v2516, %v2526
  %v2539 = vadd.f32 %v2535, %v2537
  %v2540 = vadd.f32 %v2536, %v2538
  %v2541 = vtanh.pop %v2539
  %v2542 = vtanh.pop %v2540
  %v2543 = vmul.f32 %v2533, %v2541
  %v2544 = vmul.f32 %v2534, %v2542
  %v2545 = vld [vmem:[#allocation2 + $0xc0] sm:$0xff]
  %v2546 = vld [vmem:[#allocation2 + $0xc8] sm:$0xff]
  %v2547 = vld [vmem:[#allocation2 + $0xd0] sm:$0xff]
  %v2548 = vld [vmem:[#allocation2 + $0xd8] sm:$0xff]
  %v2549 = vld [vmem:[#allocation2 + $0xe0] sm:$0xff]
  %v2550 = vld [vmem:[#allocation2 + $0xe8] sm:$0xff]
  %v2551 = vld [vmem:[#allocation2 + $0xf0] sm:$0xff]
  %v2552 = vld [vmem:[#allocation2 + $0xf8] sm:$0xff]
  %v2553 = vpack.c.bf16 %v2543, %v2543
  %v2554 = vpack.c.bf16 %v2544, %v2544
  %2555 = vmatprep.subr.bf16.mxu0 %v1646
  %2556 = vmatpush1.bf16.msra.mxu0 %v1645
  %2557 = vmatprep.subr.bf16.mxu0 %v1654
  %2558 = vmatpush1.bf16.msra.mxu0 %v1653
  %2559 = vmatprep.subr.bf16.mxu0 %v1662
  %2560 = vmatpush1.bf16.msra.mxu0 %v1661
  %2561 = vmatprep.subr.bf16.mxu0 %v1670
  %2562 = vmatpush1.bf16.msra.mxu0 %v1669
  %2563 = vmatprep.subr.bf16.mxu0 %v1678
  %2564 = vmatpush1.bf16.msra.mxu0 %v1677
  %2565 = vmatprep.subr.bf16.mxu0 %v1686
  %2566 = vmatpush1.bf16.msra.mxu0 %v1685
  %2567 = vmatprep.subr.bf16.mxu0 %v1694
  %2568 = vmatpush1.bf16.msra.mxu0 %v1693
  %2569 = vmatprep.subr.bf16.mxu0 %v1702
  %2570 = vmatpush1.bf16.msra.mxu0 %v1701
  %2571 = vmatprep.subr.bf16.mxu0 %v1710
  %2572 = vmatpush1.bf16.msra.mxu0 %v1709
  %2573 = vmatprep.subr.bf16.mxu0 %v1718
  %2574 = vmatpush1.bf16.msra.mxu0 %v1717
  %2575 = vmatprep.subr.bf16.mxu0 %v1726
  %2576 = vmatpush1.bf16.msra.mxu0 %v1725
  %2577 = vmatprep.subr.bf16.mxu0 %v1734
  %2578 = vmatpush1.bf16.msra.mxu0 %v1733
  %2579 = vmatprep.subr.bf16.mxu0 %v1742
  %2580 = vmatpush1.bf16.msra.mxu0 %v1741
  %2581 = vmatprep.subr.bf16.mxu0 %v1750
  %2582 = vmatpush1.bf16.msra.mxu0 %v1749
  %2583 = vmatprep.subr.bf16.mxu0 %v1758
  %2584 = vmatpush1.bf16.msra.mxu0 %v1757
  %2585 = vmatprep.subr.bf16.mxu0 %v1766
  %2586 = vmatpush1.bf16.msra.mxu0 %v1765
  %2587 = vmatprep.mubr.bf16.mxu0 %v2554
  %2588 = vmatmul.mubr.bf16.gmra.mrb[0].mxu0 %v2553
  %v2589 = vpop.f32.mrb[0].mxu0
  %v2590 = vadd.f32 0.0, %v2589
  %v2591 = vpop.f32.mrb[0].mxu0
  %v2592 = vadd.f32 0.0, %v2591
  %v2593 = vpop.f32.mrb[0].mxu0
  %v2594 = vpop.f32.mrb[0].mxu0
  %2595 = vdwg.mxu0
  %2596 = vmatprep.subr.bf16.mxu0 %v1648
  %2597 = vmatpush1.bf16.msra.mxu0 %v1647
  %2598 = vmatprep.subr.bf16.mxu0 %v1656
  %2599 = vmatpush1.bf16.msra.mxu0 %v1655
  %2600 = vmatprep.subr.bf16.mxu0 %v1664
  %2601 = vmatpush1.bf16.msra.mxu0 %v1663
  %2602 = vmatprep.subr.bf16.mxu0 %v1672
  %2603 = vmatpush1.bf16.msra.mxu0 %v1671
  %2604 = vmatprep.subr.bf16.mxu0 %v1680
  %2605 = vmatpush1.bf16.msra.mxu0 %v1679
  %2606 = vmatprep.subr.bf16.mxu0 %v1688
  %2607 = vmatpush1.bf16.msra.mxu0 %v1687
  %2608 = vmatprep.subr.bf16.mxu0 %v1696
  %2609 = vmatpush1.bf16.msra.mxu0 %v1695
  %2610 = vmatprep.subr.bf16.mxu0 %v1704
  %2611 = vmatpush1.bf16.msra.mxu0 %v1703
  %2612 = vmatprep.subr.bf16.mxu0 %v1712
  %2613 = vmatpush1.bf16.msra.mxu0 %v1711
  %2614 = vmatprep.subr.bf16.mxu0 %v1720
  %2615 = vmatpush1.bf16.msra.mxu0 %v1719
  %2616 = vmatprep.subr.bf16.mxu0 %v1728
  %2617 = vmatpush1.bf16.msra.mxu0 %v1727
  %2618 = vmatprep.subr.bf16.mxu0 %v1736
  %2619 = vmatpush1.bf16.msra.mxu0 %v1735
  %2620 = vmatprep.subr.bf16.mxu0 %v1744
  %2621 = vmatpush1.bf16.msra.mxu0 %v1743
  %2622 = vmatprep.subr.bf16.mxu0 %v1752
  %2623 = vmatpush1.bf16.msra.mxu0 %v1751
  %2624 = vmatprep.subr.bf16.mxu0 %v1760
  %2625 = vmatpush1.bf16.msra.mxu0 %v1759
  %2626 = vmatprep.subr.bf16.mxu0 %v1768
  %2627 = vmatpush1.bf16.msra.mxu0 %v1767
  %2628 = vmatprep.mubr.bf16.mxu0 %v2554
  %2629 = vmatmul.mubr.bf16.gmra.mrb[0].mxu0 %v2553
  %v2630 = vpop.f32.mrb[0].mxu0
  %v2631 = vadd.f32 0.0, %v2630
  %v2632 = vpop.f32.mrb[0].mxu0
  %v2633 = vadd.f32 0.0, %v2632
  %v2634 = vpop.f32.mrb[0].mxu0
  %v2635 = vpop.f32.mrb[0].mxu0
  %2636 = vdwg.mxu0
  %2637 = vmatprep.subr.bf16.mxu0 %v1650
  %2638 = vmatpush1.bf16.msra.mxu0 %v1649
  %2639 = vmatprep.subr.bf16.mxu0 %v1658
  %2640 = vmatpush1.bf16.msra.mxu0 %v1657
  %2641 = vmatprep.subr.bf16.mxu0 %v1666
  %2642 = vmatpush1.bf16.msra.mxu0 %v1665
  %2643 = vmatprep.subr.bf16.mxu0 %v1674
  %2644 = vmatpush1.bf16.msra.mxu0 %v1673
  %2645 = vmatprep.subr.bf16.mxu0 %v1682
  %2646 = vmatpush1.bf16.msra.mxu0 %v1681
  %2647 = vmatprep.subr.bf16.mxu0 %v1690
  %2648 = vmatpush1.bf16.msra.mxu0 %v1689
  %2649 = vmatprep.subr.bf16.mxu0 %v1698
  %2650 = vmatpush1.bf16.msra.mxu0 %v1697
  %2651 = vmatprep.subr.bf16.mxu0 %v1706
  %2652 = vmatpush1.bf16.msra.mxu0 %v1705
  %2653 = vmatprep.subr.bf16.mxu0 %v1714
  %2654 = vmatpush1.bf16.msra.mxu0 %v1713
  %2655 = vmatprep.subr.bf16.mxu0 %v1722
  %2656 = vmatpush1.bf16.msra.mxu0 %v1721
  %2657 = vmatprep.subr.bf16.mxu0 %v1730
  %2658 = vmatpush1.bf16.msra.mxu0 %v1729
  %2659 = vmatprep.subr.bf16.mxu0 %v1738
  %2660 = vmatpush1.bf16.msra.mxu0 %v1737
  %2661 = vmatprep.subr.bf16.mxu0 %v1746
  %2662 = vmatpush1.bf16.msra.mxu0 %v1745
  %2663 = vmatprep.subr.bf16.mxu0 %v1754
  %2664 = vmatpush1.bf16.msra.mxu0 %v1753
  %2665 = vmatprep.subr.bf16.mxu0 %v1762
  %2666 = vmatpush1.bf16.msra.mxu0 %v1761
  %2667 = vmatprep.subr.bf16.mxu0 %v1770
  %2668 = vmatpush1.bf16.msra.mxu0 %v1769
  %2669 = vmatprep.mubr.bf16.mxu0 %v2554
  %2670 = vmatmul.mubr.bf16.gmra.mrb[0].mxu0 %v2553
  %v2671 = vpop.f32.mrb[0].mxu0
  %v2672 = vadd.f32 0.0, %v2671
  %v2673 = vpop.f32.mrb[0].mxu0
  %v2674 = vadd.f32 0.0, %v2673
  %v2675 = vpop.f32.mrb[0].mxu0
  %v2676 = vpop.f32.mrb[0].mxu0
  %2677 = vdwg.mxu0
  %2678 = vmatprep.subr.bf16.mxu0 %v1652
  %2679 = vmatpush1.bf16.msra.mxu0 %v1651
  %2680 = vmatprep.subr.bf16.mxu0 %v1660
  %2681 = vmatpush1.bf16.msra.mxu0 %v1659
  %2682 = vmatprep.subr.bf16.mxu0 %v1668
  %2683 = vmatpush1.bf16.msra.mxu0 %v1667
  %2684 = vmatprep.subr.bf16.mxu0 %v1676
  %2685 = vmatpush1.bf16.msra.mxu0 %v1675
  %2686 = vmatprep.subr.bf16.mxu0 %v1684
  %2687 = vmatpush1.bf16.msra.mxu0 %v1683
  %2688 = vmatprep.subr.bf16.mxu0 %v1692
  %2689 = vmatpush1.bf16.msra.mxu0 %v1691
  %2690 = vmatprep.subr.bf16.mxu0 %v1700
  %2691 = vmatpush1.bf16.msra.mxu0 %v1699
  %2692 = vmatprep.subr.bf16.mxu0 %v1708
  %2693 = vmatpush1.bf16.msra.mxu0 %v1707
  %2694 = vmatprep.subr.bf16.mxu0 %v1716
  %2695 = vmatpush1.bf16.msra.mxu0 %v1715
  %2696 = vmatprep.subr.bf16.mxu0 %v1724
  %2697 = vmatpush1.bf16.msra.mxu0 %v1723
  %2698 = vmatprep.subr.bf16.mxu0 %v1732
  %2699 = vmatpush1.bf16.msra.mxu0 %v1731
  %2700 = vmatprep.subr.bf16.mxu0 %v1740
  %2701 = vmatpush1.bf16.msra.mxu0 %v1739
  %2702 = vmatprep.subr.bf16.mxu0 %v1748
  %2703 = vmatpush1.bf16.msra.mxu0 %v1747
  %2704 = vmatprep.subr.bf16.mxu0 %v1756
  %2705 = vmatpush1.bf16.msra.mxu0 %v1755
  %2706 = vmatprep.subr.bf16.mxu0 %v1764
  %2707 = vmatpush1.bf16.msra.mxu0 %v1763
  %2708 = vmatprep.subr.bf16.mxu0 %v1772
  %2709 = vmatpush1.bf16.msra.mxu0 %v1771
  %2710 = vmatprep.mubr.bf16.mxu0 %v2554
  %2711 = vmatmul.mubr.bf16.gmra.mrb[0].mxu0 %v2553
  %v2712 = vpop.f32.mrb[0].mxu0
  %v2713 = vadd.f32 0.0, %v2712
  %v2714 = vpop.f32.mrb[0].mxu0
  %v2715 = vadd.f32 0.0, %v2714
  %v2716 = vpop.f32.mrb[0].mxu0
  %v2717 = vpop.f32.mrb[0].mxu0
  %2718 = vdwg.mxu0
  %v2719 = vadd.f32 %v2545, %v2590
  %v2720 = vadd.f32 %v2546, %v2592
  %v2721 = vadd.f32 %v2547, %v2631
  %v2722 = vadd.f32 %v2548, %v2633
  %v2723 = vadd.f32 %v2549, %v2672
  %v2724 = vadd.f32 %v2550, %v2674
  %v2725 = vadd.f32 %v2551, %v2713
  %v2726 = vadd.f32 %v2552, %v2715
  %v2727 = vmul.f32 %v2719, 0.5
  %v2728 = vmul.f32 %v2720, 0.5
  %v2729 = vtanh.pop %v2727
  %v2730 = vtanh.pop %v2728
  %v2731 = vmul.f32 %v2729, 0.5
  %v2732 = vmul.f32 %v2730, 0.5
  %v2733 = vadd.f32 %v2731, 0.5
  %v2734 = vadd.f32 %v2732, 0.5
  %v2735 = vmul.f32 %v2721, 0.5
  %v2736 = vmul.f32 %v2722, 0.5
  %v2737 = vtanh.pop %v2735
  %v2738 = vtanh.pop %v2736
  %v2739 = vmul.f32 %v2737, 0.5
  %v2740 = vmul.f32 %v2738, 0.5
  %v2741 = vadd.f32 %v2739, 0.5
  %v2742 = vadd.f32 %v2740, 0.5
  %v2743 = vtanh.pop %v2723
  %v2744 = vtanh.pop %v2724
  %v2745 = vmul.f32 %v2725, 0.5
  %v2746 = vmul.f32 %v2726, 0.5
  %v2747 = vtanh.pop %v2745
  %v2748 = vtanh.pop %v2746
  %v2749 = vmul.f32 %v2747, 0.5
  %v2750 = vmul.f32 %v2748, 0.5
  %v2751 = vadd.f32 %v2749, 0.5
  %v2752 = vadd.f32 %v2750, 0.5
  %v2753 = vmul.f32 %v2741, %v2539
  %v2754 = vmul.f32 %v2742, %v2540
  %v2755 = vmul.f32 %v2733, %v2743
  %v2756 = vmul.f32 %v2734, %v2744
  %v2757 = vadd.f32 %v2753, %v2755
  %v2758 = vadd.f32 %v2754, %v2756
  %v2759 = vtanh.pop %v2757
  %v2760 = vtanh.pop %v2758
  %v2761 = vmul.f32 %v2751, %v2759
  %v2762 = vmul.f32 %v2752, %v2760
  %v2763 = vld [vmem:[#allocation2 + $0x100] sm:$0xff]
  %v2764 = vld [vmem:[#allocation2 + $0x108] sm:$0xff]
  %v2765 = vld [vmem:[#allocation2 + $0x110] sm:$0xff]
  %v2766 = vld [vmem:[#allocation2 + $0x118] sm:$0xff]
  %v2767 = vld [vmem:[#allocation2 + $0x120] sm:$0xff]
  %v2768 = vld [vmem:[#allocation2 + $0x128] sm:$0xff]
  %v2769 = vld [vmem:[#allocation2 + $0x130] sm:$0xff]
  %v2770 = vld [vmem:[#allocation2 + $0x138] sm:$0xff]
  %v2771 = vpack.c.bf16 %v2761, %v2761
  %v2772 = vpack.c.bf16 %v2762, %v2762
  %2773 = vmatprep.subr.bf16.mxu0 %v1646
  %2774 = vmatpush1.bf16.msra.mxu0 %v1645
  %2775 = vmatprep.subr.bf16.mxu0 %v1654
  %2776 = vmatpush1.bf16.msra.mxu0 %v1653
  %2777 = vmatprep.subr.bf16.mxu0 %v1662
  %2778 = vmatpush1.bf16.msra.mxu0 %v1661
  %2779 = vmatprep.subr.bf16.mxu0 %v1670
  %2780 = vmatpush1.bf16.msra.mxu0 %v1669
  %2781 = vmatprep.subr.bf16.mxu0 %v1678
  %2782 = vmatpush1.bf16.msra.mxu0 %v1677
  %2783 = vmatprep.subr.bf16.mxu0 %v1686
  %2784 = vmatpush1.bf16.msra.mxu0 %v1685
  %2785 = vmatprep.subr.bf16.mxu0 %v1694
  %2786 = vmatpush1.bf16.msra.mxu0 %v1693
  %2787 = vmatprep.subr.bf16.mxu0 %v1702
  %2788 = vmatpush1.bf16.msra.mxu0 %v1701
  %2789 = vmatprep.subr.bf16.mxu0 %v1710
  %2790 = vmatpush1.bf16.msra.mxu0 %v1709
  %2791 = vmatprep.subr.bf16.mxu0 %v1718
  %2792 = vmatpush1.bf16.msra.mxu0 %v1717
  %2793 = vmatprep.subr.bf16.mxu0 %v1726
  %2794 = vmatpush1.bf16.msra.mxu0 %v1725
  %2795 = vmatprep.subr.bf16.mxu0 %v1734
  %2796 = vmatpush1.bf16.msra.mxu0 %v1733
  %2797 = vmatprep.subr.bf16.mxu0 %v1742
  %2798 = vmatpush1.bf16.msra.mxu0 %v1741
  %2799 = vmatprep.subr.bf16.mxu0 %v1750
  %2800 = vmatpush1.bf16.msra.mxu0 %v1749
  %2801 = vmatprep.subr.bf16.mxu0 %v1758
  %2802 = vmatpush1.bf16.msra.mxu0 %v1757
  %2803 = vmatprep.subr.bf16.mxu0 %v1766
  %2804 = vmatpush1.bf16.msra.mxu0 %v1765
  %2805 = vmatprep.mubr.bf16.mxu0 %v2772
  %2806 = vmatmul.mubr.bf16.gmra.mrb[0].mxu0 %v2771
  %v2807 = vpop.f32.mrb[0].mxu0
  %v2808 = vadd.f32 0.0, %v2807
  %v2809 = vpop.f32.mrb[0].mxu0
  %v2810 = vadd.f32 0.0, %v2809
  %v2811 = vpop.f32.mrb[0].mxu0
  %v2812 = vpop.f32.mrb[0].mxu0
  %2813 = vdwg.mxu0
  %2814 = vmatprep.subr.bf16.mxu0 %v1648
  %2815 = vmatpush1.bf16.msra.mxu0 %v1647
  %2816 = vmatprep.subr.bf16.mxu0 %v1656
  %2817 = vmatpush1.bf16.msra.mxu0 %v1655
  %2818 = vmatprep.subr.bf16.mxu0 %v1664
  %2819 = vmatpush1.bf16.msra.mxu0 %v1663
  %2820 = vmatprep.subr.bf16.mxu0 %v1672
  %2821 = vmatpush1.bf16.msra.mxu0 %v1671
  %2822 = vmatprep.subr.bf16.mxu0 %v1680
  %2823 = vmatpush1.bf16.msra.mxu0 %v1679
  %2824 = vmatprep.subr.bf16.mxu0 %v1688
  %2825 = vmatpush1.bf16.msra.mxu0 %v1687
  %2826 = vmatprep.subr.bf16.mxu0 %v1696
  %2827 = vmatpush1.bf16.msra.mxu0 %v1695
  %2828 = vmatprep.subr.bf16.mxu0 %v1704
  %2829 = vmatpush1.bf16.msra.mxu0 %v1703
  %2830 = vmatprep.subr.bf16.mxu0 %v1712
  %2831 = vmatpush1.bf16.msra.mxu0 %v1711
  %2832 = vmatprep.subr.bf16.mxu0 %v1720
  %2833 = vmatpush1.bf16.msra.mxu0 %v1719
  %2834 = vmatprep.subr.bf16.mxu0 %v1728
  %2835 = vmatpush1.bf16.msra.mxu0 %v1727
  %2836 = vmatprep.subr.bf16.mxu0 %v1736
  %2837 = vmatpush1.bf16.msra.mxu0 %v1735
  %2838 = vmatprep.subr.bf16.mxu0 %v1744
  %2839 = vmatpush1.bf16.msra.mxu0 %v1743
  %2840 = vmatprep.subr.bf16.mxu0 %v1752
  %2841 = vmatpush1.bf16.msra.mxu0 %v1751
  %2842 = vmatprep.subr.bf16.mxu0 %v1760
  %2843 = vmatpush1.bf16.msra.mxu0 %v1759
  %2844 = vmatprep.subr.bf16.mxu0 %v1768
  %2845 = vmatpush1.bf16.msra.mxu0 %v1767
  %2846 = vmatprep.mubr.bf16.mxu0 %v2772
  %2847 = vmatmul.mubr.bf16.gmra.mrb[0].mxu0 %v2771
  %v2848 = vpop.f32.mrb[0].mxu0
  %v2849 = vadd.f32 0.0, %v2848
  %v2850 = vpop.f32.mrb[0].mxu0
  %v2851 = vadd.f32 0.0, %v2850
  %v2852 = vpop.f32.mrb[0].mxu0
  %v2853 = vpop.f32.mrb[0].mxu0
  %2854 = vdwg.mxu0
  %2855 = vmatprep.subr.bf16.mxu0 %v1650
  %2856 = vmatpush1.bf16.msra.mxu0 %v1649
  %2857 = vmatprep.subr.bf16.mxu0 %v1658
  %2858 = vmatpush1.bf16.msra.mxu0 %v1657
  %2859 = vmatprep.subr.bf16.mxu0 %v1666
  %2860 = vmatpush1.bf16.msra.mxu0 %v1665
  %2861 = vmatprep.subr.bf16.mxu0 %v1674
  %2862 = vmatpush1.bf16.msra.mxu0 %v1673
  %2863 = vmatprep.subr.bf16.mxu0 %v1682
  %2864 = vmatpush1.bf16.msra.mxu0 %v1681
  %2865 = vmatprep.subr.bf16.mxu0 %v1690
  %2866 = vmatpush1.bf16.msra.mxu0 %v1689
  %2867 = vmatprep.subr.bf16.mxu0 %v1698
  %2868 = vmatpush1.bf16.msra.mxu0 %v1697
  %2869 = vmatprep.subr.bf16.mxu0 %v1706
  %2870 = vmatpush1.bf16.msra.mxu0 %v1705
  %2871 = vmatprep.subr.bf16.mxu0 %v1714
  %2872 = vmatpush1.bf16.msra.mxu0 %v1713
  %2873 = vmatprep.subr.bf16.mxu0 %v1722
  %2874 = vmatpush1.bf16.msra.mxu0 %v1721
  %2875 = vmatprep.subr.bf16.mxu0 %v1730
  %2876 = vmatpush1.bf16.msra.mxu0 %v1729
  %2877 = vmatprep.subr.bf16.mxu0 %v1738
  %2878 = vmatpush1.bf16.msra.mxu0 %v1737
  %2879 = vmatprep.subr.bf16.mxu0 %v1746
  %2880 = vmatpush1.bf16.msra.mxu0 %v1745
  %2881 = vmatprep.subr.bf16.mxu0 %v1754
  %2882 = vmatpush1.bf16.msra.mxu0 %v1753
  %2883 = vmatprep.subr.bf16.mxu0 %v1762
  %2884 = vmatpush1.bf16.msra.mxu0 %v1761
  %2885 = vmatprep.subr.bf16.mxu0 %v1770
  %2886 = vmatpush1.bf16.msra.mxu0 %v1769
  %2887 = vmatprep.mubr.bf16.mxu0 %v2772
  %2888 = vmatmul.mubr.bf16.gmra.mrb[0].mxu0 %v2771
  %v2889 = vpop.f32.mrb[0].mxu0
  %v2890 = vadd.f32 0.0, %v2889
  %v2891 = vpop.f32.mrb[0].mxu0
  %v2892 = vadd.f32 0.0, %v2891
  %v2893 = vpop.f32.mrb[0].mxu0
  %v2894 = vpop.f32.mrb[0].mxu0
  %2895 = vdwg.mxu0
  %2896 = vmatprep.subr.bf16.mxu0 %v1652
  %2897 = vmatpush1.bf16.msra.mxu0 %v1651
  %2898 = vmatprep.subr.bf16.mxu0 %v1660
  %2899 = vmatpush1.bf16.msra.mxu0 %v1659
  %2900 = vmatprep.subr.bf16.mxu0 %v1668
  %2901 = vmatpush1.bf16.msra.mxu0 %v1667
  %2902 = vmatprep.subr.bf16.mxu0 %v1676
  %2903 = vmatpush1.bf16.msra.mxu0 %v1675
  %2904 = vmatprep.subr.bf16.mxu0 %v1684
  %2905 = vmatpush1.bf16.msra.mxu0 %v1683
  %2906 = vmatprep.subr.bf16.mxu0 %v1692
  %2907 = vmatpush1.bf16.msra.mxu0 %v1691
  %2908 = vmatprep.subr.bf16.mxu0 %v1700
  %2909 = vmatpush1.bf16.msra.mxu0 %v1699
  %2910 = vmatprep.subr.bf16.mxu0 %v1708
  %2911 = vmatpush1.bf16.msra.mxu0 %v1707
  %2912 = vmatprep.subr.bf16.mxu0 %v1716
  %2913 = vmatpush1.bf16.msra.mxu0 %v1715
  %2914 = vmatprep.subr.bf16.mxu0 %v1724
  %2915 = vmatpush1.bf16.msra.mxu0 %v1723
  %2916 = vmatprep.subr.bf16.mxu0 %v1732
  %2917 = vmatpush1.bf16.msra.mxu0 %v1731
  %2918 = vmatprep.subr.bf16.mxu0 %v1740
  %2919 = vmatpush1.bf16.msra.mxu0 %v1739
  %2920 = vmatprep.subr.bf16.mxu0 %v1748
  %2921 = vmatpush1.bf16.msra.mxu0 %v1747
  %2922 = vmatprep.subr.bf16.mxu0 %v1756
  %2923 = vmatpush1.bf16.msra.mxu0 %v1755
  %2924 = vmatprep.subr.bf16.mxu0 %v1764
  %2925 = vmatpush1.bf16.msra.mxu0 %v1763
  %2926 = vmatprep.subr.bf16.mxu0 %v1772
  %2927 = vmatpush1.bf16.msra.mxu0 %v1771
  %2928 = vmatprep.mubr.bf16.mxu0 %v2772
  %2929 = vmatmul.mubr.bf16.gmra.mrb[0].mxu0 %v2771
  %v2930 = vpop.f32.mrb[0].mxu0
  %v2931 = vadd.f32 0.0, %v2930
  %v2932 = vpop.f32.mrb[0].mxu0
  %v2933 = vadd.f32 0.0, %v2932
  %v2934 = vpop.f32.mrb[0].mxu0
  %v2935 = vpop.f32.mrb[0].mxu0
  %2936 = vdwg.mxu0
  %v2937 = vadd.f32 %v2763, %v2808
  %v2938 = vadd.f32 %v2764, %v2810
  %v2939 = vadd.f32 %v2765, %v2849
  %v2940 = vadd.f32 %v2766, %v2851
  %v2941 = vadd.f32 %v2767, %v2890
  %v2942 = vadd.f32 %v2768, %v2892
  %v2943 = vadd.f32 %v2769, %v2931
  %v2944 = vadd.f32 %v2770, %v2933
  %v2945 = vmul.f32 %v2937, 0.5
  %v2946 = vmul.f32 %v2938, 0.5
  %v2947 = vtanh.pop %v2945
  %v2948 = vtanh.pop %v2946
  %v2949 = vmul.f32 %v2947, 0.5
  %v2950 = vmul.f32 %v2948, 0.5
  %v2951 = vadd.f32 %v2949, 0.5
  %v2952 = vadd.f32 %v2950, 0.5
  %v2953 = vmul.f32 %v2939, 0.5
  %v2954 = vmul.f32 %v2940, 0.5
  %v2955 = vtanh.pop %v2953
  %v2956 = vtanh.pop %v2954
  %v2957 = vmul.f32 %v2955, 0.5
  %v2958 = vmul.f32 %v2956, 0.5
  %v2959 = vadd.f32 %v2957, 0.5
  %v2960 = vadd.f32 %v2958, 0.5
  %v2961 = vtanh.pop %v2941
  %v2962 = vtanh.pop %v2942
  %v2963 = vmul.f32 %v2943, 0.5
  %v2964 = vmul.f32 %v2944, 0.5
  %v2965 = vtanh.pop %v2963
  %v2966 = vtanh.pop %v2964
  %v2967 = vmul.f32 %v2965, 0.5
  %v2968 = vmul.f32 %v2966, 0.5
  %v2969 = vadd.f32 %v2967, 0.5
  %v2970 = vadd.f32 %v2968, 0.5
  %v2971 = vmul.f32 %v2959, %v2757
  %v2972 = vmul.f32 %v2960, %v2758
  %v2973 = vmul.f32 %v2951, %v2961
  %v2974 = vmul.f32 %v2952, %v2962
  %v2975 = vadd.f32 %v2971, %v2973
  %v2976 = vadd.f32 %v2972, %v2974
  %v2977 = vtanh.pop %v2975
  %v2978 = vtanh.pop %v2976
  %v2979 = vmul.f32 %v2969, %v2977
  %v2980 = vmul.f32 %v2970, %v2978
  %v2981 = vld [vmem:[#allocation2 + $0x140] sm:$0xff]
  %v2982 = vld [vmem:[#allocation2 + $0x148] sm:$0xff]
  %v2983 = vld [vmem:[#allocation2 + $0x150] sm:$0xff]
  %v2984 = vld [vmem:[#allocation2 + $0x158] sm:$0xff]
  %v2985 = vld [vmem:[#allocation2 + $0x160] sm:$0xff]
  %v2986 = vld [vmem:[#allocation2 + $0x168] sm:$0xff]
  %v2987 = vld [vmem:[#allocation2 + $0x170] sm:$0xff]
  %v2988 = vld [vmem:[#allocation2 + $0x178] sm:$0xff]
  %v2989 = vpack.c.bf16 %v2979, %v2979
  %v2990 = vpack.c.bf16 %v2980, %v2980
  %2991 = vmatprep.subr.bf16.mxu0 %v1646
  %2992 = vmatpush1.bf16.msra.mxu0 %v1645
  %2993 = vmatprep.subr.bf16.mxu0 %v1654
  %2994 = vmatpush1.bf16.msra.mxu0 %v1653
  %2995 = vmatprep.subr.bf16.mxu0 %v1662
  %2996 = vmatpush1.bf16.msra.mxu0 %v1661
  %2997 = vmatprep.subr.bf16.mxu0 %v1670
  %2998 = vmatpush1.bf16.msra.mxu0 %v1669
  %2999 = vmatprep.subr.bf16.mxu0 %v1678
  %3000 = vmatpush1.bf16.msra.mxu0 %v1677
  %3001 = vmatprep.subr.bf16.mxu0 %v1686
  %3002 = vmatpush1.bf16.msra.mxu0 %v1685
  %3003 = vmatprep.subr.bf16.mxu0 %v1694
  %3004 = vmatpush1.bf16.msra.mxu0 %v1693
  %3005 = vmatprep.subr.bf16.mxu0 %v1702
  %3006 = vmatpush1.bf16.msra.mxu0 %v1701
  %3007 = vmatprep.subr.bf16.mxu0 %v1710
  %3008 = vmatpush1.bf16.msra.mxu0 %v1709
  %3009 = vmatprep.subr.bf16.mxu0 %v1718
  %3010 = vmatpush1.bf16.msra.mxu0 %v1717
  %3011 = vmatprep.subr.bf16.mxu0 %v1726
  %3012 = vmatpush1.bf16.msra.mxu0 %v1725
  %3013 = vmatprep.subr.bf16.mxu0 %v1734
  %3014 = vmatpush1.bf16.msra.mxu0 %v1733
  %3015 = vmatprep.subr.bf16.mxu0 %v1742
  %3016 = vmatpush1.bf16.msra.mxu0 %v1741
  %3017 = vmatprep.subr.bf16.mxu0 %v1750
  %3018 = vmatpush1.bf16.msra.mxu0 %v1749
  %3019 = vmatprep.subr.bf16.mxu0 %v1758
  %3020 = vmatpush1.bf16.msra.mxu0 %v1757
  %3021 = vmatprep.subr.bf16.mxu0 %v1766
  %3022 = vmatpush1.bf16.msra.mxu0 %v1765
  %3023 = vmatprep.mubr.bf16.mxu0 %v2990
  %3024 = vmatmul.mubr.bf16.gmra.mrb[0].mxu0 %v2989
  %v3025 = vpop.f32.mrb[0].mxu0
  %v3026 = vadd.f32 0.0, %v3025
  %v3027 = vpop.f32.mrb[0].mxu0
  %v3028 = vadd.f32 0.0, %v3027
  %v3029 = vpop.f32.mrb[0].mxu0
  %v3030 = vpop.f32.mrb[0].mxu0
  %3031 = vdwg.mxu0
  %3032 = vmatprep.subr.bf16.mxu0 %v1648
  %3033 = vmatpush1.bf16.msra.mxu0 %v1647
  %3034 = vmatprep.subr.bf16.mxu0 %v1656
  %3035 = vmatpush1.bf16.msra.mxu0 %v1655
  %3036 = vmatprep.subr.bf16.mxu0 %v1664
  %3037 = vmatpush1.bf16.msra.mxu0 %v1663
  %3038 = vmatprep.subr.bf16.mxu0 %v1672
  %3039 = vmatpush1.bf16.msra.mxu0 %v1671
  %3040 = vmatprep.subr.bf16.mxu0 %v1680
  %3041 = vmatpush1.bf16.msra.mxu0 %v1679
  %3042 = vmatprep.subr.bf16.mxu0 %v1688
  %3043 = vmatpush1.bf16.msra.mxu0 %v1687
  %3044 = vmatprep.subr.bf16.mxu0 %v1696
  %3045 = vmatpush1.bf16.msra.mxu0 %v1695
  %3046 = vmatprep.subr.bf16.mxu0 %v1704
  %3047 = vmatpush1.bf16.msra.mxu0 %v1703
  %3048 = vmatprep.subr.bf16.mxu0 %v1712
  %3049 = vmatpush1.bf16.msra.mxu0 %v1711
  %3050 = vmatprep.subr.bf16.mxu0 %v1720
  %3051 = vmatpush1.bf16.msra.mxu0 %v1719
  %3052 = vmatprep.subr.bf16.mxu0 %v1728
  %3053 = vmatpush1.bf16.msra.mxu0 %v1727
  %3054 = vmatprep.subr.bf16.mxu0 %v1736
  %3055 = vmatpush1.bf16.msra.mxu0 %v1735
  %3056 = vmatprep.subr.bf16.mxu0 %v1744
  %3057 = vmatpush1.bf16.msra.mxu0 %v1743
  %3058 = vmatprep.subr.bf16.mxu0 %v1752
  %3059 = vmatpush1.bf16.msra.mxu0 %v1751
  %3060 = vmatprep.subr.bf16.mxu0 %v1760
  %3061 = vmatpush1.bf16.msra.mxu0 %v1759
  %3062 = vmatprep.subr.bf16.mxu0 %v1768
  %3063 = vmatpush1.bf16.msra.mxu0 %v1767
  %3064 = vmatprep.mubr.bf16.mxu0 %v2990
  %3065 = vmatmul.mubr.bf16.gmra.mrb[0].mxu0 %v2989
  %v3066 = vpop.f32.mrb[0].mxu0
  %v3067 = vadd.f32 0.0, %v3066
  %v3068 = vpop.f32.mrb[0].mxu0
  %v3069 = vadd.f32 0.0, %v3068
  %v3070 = vpop.f32.mrb[0].mxu0
  %v3071 = vpop.f32.mrb[0].mxu0
  %3072 = vdwg.mxu0
  %3073 = vmatprep.subr.bf16.mxu0 %v1650
  %3074 = vmatpush1.bf16.msra.mxu0 %v1649
  %3075 = vmatprep.subr.bf16.mxu0 %v1658
  %3076 = vmatpush1.bf16.msra.mxu0 %v1657
  %3077 = vmatprep.subr.bf16.mxu0 %v1666
  %3078 = vmatpush1.bf16.msra.mxu0 %v1665
  %3079 = vmatprep.subr.bf16.mxu0 %v1674
  %3080 = vmatpush1.bf16.msra.mxu0 %v1673
  %3081 = vmatprep.subr.bf16.mxu0 %v1682
  %3082 = vmatpush1.bf16.msra.mxu0 %v1681
  %3083 = vmatprep.subr.bf16.mxu0 %v1690
  %3084 = vmatpush1.bf16.msra.mxu0 %v1689
  %3085 = vmatprep.subr.bf16.mxu0 %v1698
  %3086 = vmatpush1.bf16.msra.mxu0 %v1697
  %3087 = vmatprep.subr.bf16.mxu0 %v1706
  %3088 = vmatpush1.bf16.msra.mxu0 %v1705
  %3089 = vmatprep.subr.bf16.mxu0 %v1714
  %3090 = vmatpush1.bf16.msra.mxu0 %v1713
  %3091 = vmatprep.subr.bf16.mxu0 %v1722
  %3092 = vmatpush1.bf16.msra.mxu0 %v1721
  %3093 = vmatprep.subr.bf16.mxu0 %v1730
  %3094 = vmatpush1.bf16.msra.mxu0 %v1729
  %3095 = vmatprep.subr.bf16.mxu0 %v1738
  %3096 = vmatpush1.bf16.msra.mxu0 %v1737
  %3097 = vmatprep.subr.bf16.mxu0 %v1746
  %3098 = vmatpush1.bf16.msra.mxu0 %v1745
  %3099 = vmatprep.subr.bf16.mxu0 %v1754
  %3100 = vmatpush1.bf16.msra.mxu0 %v1753
  %3101 = vmatprep.subr.bf16.mxu0 %v1762
  %3102 = vmatpush1.bf16.msra.mxu0 %v1761
  %3103 = vmatprep.subr.bf16.mxu0 %v1770
  %3104 = vmatpush1.bf16.msra.mxu0 %v1769
  %3105 = vmatprep.mubr.bf16.mxu0 %v2990
  %3106 = vmatmul.mubr.bf16.gmra.mrb[0].mxu0 %v2989
  %v3107 = vpop.f32.mrb[0].mxu0
  %v3108 = vadd.f32 0.0, %v3107
  %v3109 = vpop.f32.mrb[0].mxu0
  %v3110 = vadd.f32 0.0, %v3109
  %v3111 = vpop.f32.mrb[0].mxu0
  %v3112 = vpop.f32.mrb[0].mxu0
  %3113 = vdwg.mxu0
  %3114 = vmatprep.subr.bf16.mxu0 %v1652
  %3115 = vmatpush1.bf16.msra.mxu0 %v1651
  %3116 = vmatprep.subr.bf16.mxu0 %v1660
  %3117 = vmatpush1.bf16.msra.mxu0 %v1659
  %3118 = vmatprep.subr.bf16.mxu0 %v1668
  %3119 = vmatpush1.bf16.msra.mxu0 %v1667
  %3120 = vmatprep.subr.bf16.mxu0 %v1676
  %3121 = vmatpush1.bf16.msra.mxu0 %v1675
  %3122 = vmatprep.subr.bf16.mxu0 %v1684
  %3123 = vmatpush1.bf16.msra.mxu0 %v1683
  %3124 = vmatprep.subr.bf16.mxu0 %v1692
  %3125 = vmatpush1.bf16.msra.mxu0 %v1691
  %3126 = vmatprep.subr.bf16.mxu0 %v1700
  %3127 = vmatpush1.bf16.msra.mxu0 %v1699
  %3128 = vmatprep.subr.bf16.mxu0 %v1708
  %3129 = vmatpush1.bf16.msra.mxu0 %v1707
  %3130 = vmatprep.subr.bf16.mxu0 %v1716
  %3131 = vmatpush1.bf16.msra.mxu0 %v1715
  %3132 = vmatprep.subr.bf16.mxu0 %v1724
  %3133 = vmatpush1.bf16.msra.mxu0 %v1723
  %3134 = vmatprep.subr.bf16.mxu0 %v1732
  %3135 = vmatpush1.bf16.msra.mxu0 %v1731
  %3136 = vmatprep.subr.bf16.mxu0 %v1740
  %3137 = vmatpush1.bf16.msra.mxu0 %v1739
  %3138 = vmatprep.subr.bf16.mxu0 %v1748
  %3139 = vmatpush1.bf16.msra.mxu0 %v1747
  %3140 = vmatprep.subr.bf16.mxu0 %v1756
  %3141 = vmatpush1.bf16.msra.mxu0 %v1755
  %3142 = vmatprep.subr.bf16.mxu0 %v1764
  %3143 = vmatpush1.bf16.msra.mxu0 %v1763
  %3144 = vmatprep.subr.bf16.mxu0 %v1772
  %3145 = vmatpush1.bf16.msra.mxu0 %v1771
  %3146 = vmatprep.mubr.bf16.mxu0 %v2990
  %3147 = vmatmul.mubr.bf16.gmra.mrb[0].mxu0 %v2989
  %v3148 = vpop.f32.mrb[0].mxu0
  %v3149 = vadd.f32 0.0, %v3148
  %v3150 = vpop.f32.mrb[0].mxu0
  %v3151 = vadd.f32 0.0, %v3150
  %v3152 = vpop.f32.mrb[0].mxu0
  %v3153 = vpop.f32.mrb[0].mxu0
  %3154 = vdwg.mxu0
  %v3155 = vadd.f32 %v2981, %v3026
  %v3156 = vadd.f32 %v2982, %v3028
  %v3157 = vadd.f32 %v2983, %v3067
  %v3158 = vadd.f32 %v2984, %v3069
  %v3159 = vadd.f32 %v2985, %v3108
  %v3160 = vadd.f32 %v2986, %v3110
  %v3161 = vadd.f32 %v2987, %v3149
  %v3162 = vadd.f32 %v2988, %v3151
  %v3163 = vmul.f32 %v3155, 0.5
  %v3164 = vmul.f32 %v3156, 0.5
  %v3165 = vtanh.pop %v3163
  %v3166 = vtanh.pop %v3164
  %v3167 = vmul.f32 %v3165, 0.5
  %v3168 = vmul.f32 %v3166, 0.5
  %v3169 = vadd.f32 %v3167, 0.5
  %v3170 = vadd.f32 %v3168, 0.5
  %v3171 = vmul.f32 %v3157, 0.5
  %v3172 = vmul.f32 %v3158, 0.5
  %v3173 = vtanh.pop %v3171
  %v3174 = vtanh.pop %v3172
  %v3175 = vmul.f32 %v3173, 0.5
  %v3176 = vmul.f32 %v3174, 0.5
  %v3177 = vadd.f32 %v3175, 0.5
  %v3178 = vadd.f32 %v3176, 0.5
  %v3179 = vtanh.pop %v3159
  %v3180 = vtanh.pop %v3160
  %v3181 = vmul.f32 %v3161, 0.5
  %v3182 = vmul.f32 %v3162, 0.5
  %v3183 = vtanh.pop %v3181
  %v3184 = vtanh.pop %v3182
  %v3185 = vmul.f32 %v3183, 0.5
  %v3186 = vmul.f32 %v3184, 0.5
  %v3187 = vadd.f32 %v3185, 0.5
  %v3188 = vadd.f32 %v3186, 0.5
  %v3189 = vmul.f32 %v3177, %v2975
  %v3190 = vmul.f32 %v3178, %v2976
  %v3191 = vmul.f32 %v3169, %v3179
  %v3192 = vmul.f32 %v3170, %v3180
  %v3193 = vadd.f32 %v3189, %v3191
  %v3194 = vadd.f32 %v3190, %v3192
  %v3195 = vtanh.pop %v3193
  %v3196 = vtanh.pop %v3194
  %v3197 = vmul.f32 %v3187, %v3195
  %v3198 = vmul.f32 %v3188, %v3196
  %v3199 = vld [vmem:[#allocation2 + $0x180] sm:$0xff]
  %v3200 = vld [vmem:[#allocation2 + $0x188] sm:$0xff]
  %v3201 = vld [vmem:[#allocation2 + $0x190] sm:$0xff]
  %v3202 = vld [vmem:[#allocation2 + $0x198] sm:$0xff]
  %v3203 = vld [vmem:[#allocation2 + $0x1a0] sm:$0xff]
  %v3204 = vld [vmem:[#allocation2 + $0x1a8] sm:$0xff]
  %v3205 = vld [vmem:[#allocation2 + $0x1b0] sm:$0xff]
  %v3206 = vld [vmem:[#allocation2 + $0x1b8] sm:$0xff]
  %v3207 = vpack.c.bf16 %v3197, %v3197
  %v3208 = vpack.c.bf16 %v3198, %v3198
  %3209 = vmatprep.subr.bf16.mxu0 %v1646
  %3210 = vmatpush1.bf16.msra.mxu0 %v1645
  %3211 = vmatprep.subr.bf16.mxu0 %v1654
  %3212 = vmatpush1.bf16.msra.mxu0 %v1653
  %3213 = vmatprep.subr.bf16.mxu0 %v1662
  %3214 = vmatpush1.bf16.msra.mxu0 %v1661
  %3215 = vmatprep.subr.bf16.mxu0 %v1670
  %3216 = vmatpush1.bf16.msra.mxu0 %v1669
  %3217 = vmatprep.subr.bf16.mxu0 %v1678
  %3218 = vmatpush1.bf16.msra.mxu0 %v1677
  %3219 = vmatprep.subr.bf16.mxu0 %v1686
  %3220 = vmatpush1.bf16.msra.mxu0 %v1685
  %3221 = vmatprep.subr.bf16.mxu0 %v1694
  %3222 = vmatpush1.bf16.msra.mxu0 %v1693
  %3223 = vmatprep.subr.bf16.mxu0 %v1702
  %3224 = vmatpush1.bf16.msra.mxu0 %v1701
  %3225 = vmatprep.subr.bf16.mxu0 %v1710
  %3226 = vmatpush1.bf16.msra.mxu0 %v1709
  %3227 = vmatprep.subr.bf16.mxu0 %v1718
  %3228 = vmatpush1.bf16.msra.mxu0 %v1717
  %3229 = vmatprep.subr.bf16.mxu0 %v1726
  %3230 = vmatpush1.bf16.msra.mxu0 %v1725
  %3231 = vmatprep.subr.bf16.mxu0 %v1734
  %3232 = vmatpush1.bf16.msra.mxu0 %v1733
  %3233 = vmatprep.subr.bf16.mxu0 %v1742
  %3234 = vmatpush1.bf16.msra.mxu0 %v1741
  %3235 = vmatprep.subr.bf16.mxu0 %v1750
  %3236 = vmatpush1.bf16.msra.mxu0 %v1749
  %3237 = vmatprep.subr.bf16.mxu0 %v1758
  %3238 = vmatpush1.bf16.msra.mxu0 %v1757
  %3239 = vmatprep.subr.bf16.mxu0 %v1766
  %3240 = vmatpush1.bf16.msra.mxu0 %v1765
  %3241 = vmatprep.mubr.bf16.mxu0 %v3208
  %3242 = vmatmul.mubr.bf16.gmra.mrb[0].mxu0 %v3207
  %v3243 = vpop.f32.mrb[0].mxu0
  %v3244 = vadd.f32 0.0, %v3243
  %v3245 = vpop.f32.mrb[0].mxu0
  %v3246 = vadd.f32 0.0, %v3245
  %v3247 = vpop.f32.mrb[0].mxu0
  %v3248 = vpop.f32.mrb[0].mxu0
  %3249 = vdwg.mxu0
  %3250 = vmatprep.subr.bf16.mxu0 %v1648
  %3251 = vmatpush1.bf16.msra.mxu0 %v1647
  %3252 = vmatprep.subr.bf16.mxu0 %v1656
  %3253 = vmatpush1.bf16.msra.mxu0 %v1655
  %3254 = vmatprep.subr.bf16.mxu0 %v1664
  %3255 = vmatpush1.bf16.msra.mxu0 %v1663
  %3256 = vmatprep.subr.bf16.mxu0 %v1672
  %3257 = vmatpush1.bf16.msra.mxu0 %v1671
  %3258 = vmatprep.subr.bf16.mxu0 %v1680
  %3259 = vmatpush1.bf16.msra.mxu0 %v1679
  %3260 = vmatprep.subr.bf16.mxu0 %v1688
  %3261 = vmatpush1.bf16.msra.mxu0 %v1687
  %3262 = vmatprep.subr.bf16.mxu0 %v1696
  %3263 = vmatpush1.bf16.msra.mxu0 %v1695
  %3264 = vmatprep.subr.bf16.mxu0 %v1704
  %3265 = vmatpush1.bf16.msra.mxu0 %v1703
  %3266 = vmatprep.subr.bf16.mxu0 %v1712
  %3267 = vmatpush1.bf16.msra.mxu0 %v1711
  %3268 = vmatprep.subr.bf16.mxu0 %v1720
  %3269 = vmatpush1.bf16.msra.mxu0 %v1719
  %3270 = vmatprep.subr.bf16.mxu0 %v1728
  %3271 = vmatpush1.bf16.msra.mxu0 %v1727
  %3272 = vmatprep.subr.bf16.mxu0 %v1736
  %3273 = vmatpush1.bf16.msra.mxu0 %v1735
  %3274 = vmatprep.subr.bf16.mxu0 %v1744
  %3275 = vmatpush1.bf16.msra.mxu0 %v1743
  %3276 = vmatprep.subr.bf16.mxu0 %v1752
  %3277 = vmatpush1.bf16.msra.mxu0 %v1751
  %3278 = vmatprep.subr.bf16.mxu0 %v1760
  %3279 = vmatpush1.bf16.msra.mxu0 %v1759
  %3280 = vmatprep.subr.bf16.mxu0 %v1768
  %3281 = vmatpush1.bf16.msra.mxu0 %v1767
  %3282 = vmatprep.mubr.bf16.mxu0 %v3208
  %3283 = vmatmul.mubr.bf16.gmra.mrb[0].mxu0 %v3207
  %v3284 = vpop.f32.mrb[0].mxu0
  %v3285 = vadd.f32 0.0, %v3284
  %v3286 = vpop.f32.mrb[0].mxu0
  %v3287 = vadd.f32 0.0, %v3286
  %v3288 = vpop.f32.mrb[0].mxu0
  %v3289 = vpop.f32.mrb[0].mxu0
  %3290 = vdwg.mxu0
  %3291 = vmatprep.subr.bf16.mxu0 %v1650
  %3292 = vmatpush1.bf16.msra.mxu0 %v1649
  %3293 = vmatprep.subr.bf16.mxu0 %v1658
  %3294 = vmatpush1.bf16.msra.mxu0 %v1657
  %3295 = vmatprep.subr.bf16.mxu0 %v1666
  %3296 = vmatpush1.bf16.msra.mxu0 %v1665
  %3297 = vmatprep.subr.bf16.mxu0 %v1674
  %3298 = vmatpush1.bf16.msra.mxu0 %v1673
  %3299 = vmatprep.subr.bf16.mxu0 %v1682
  %3300 = vmatpush1.bf16.msra.mxu0 %v1681
  %3301 = vmatprep.subr.bf16.mxu0 %v1690
  %3302 = vmatpush1.bf16.msra.mxu0 %v1689
  %3303 = vmatprep.subr.bf16.mxu0 %v1698
  %3304 = vmatpush1.bf16.msra.mxu0 %v1697
  %3305 = vmatprep.subr.bf16.mxu0 %v1706
  %3306 = vmatpush1.bf16.msra.mxu0 %v1705
  %3307 = vmatprep.subr.bf16.mxu0 %v1714
  %3308 = vmatpush1.bf16.msra.mxu0 %v1713
  %3309 = vmatprep.subr.bf16.mxu0 %v1722
  %3310 = vmatpush1.bf16.msra.mxu0 %v1721
  %3311 = vmatprep.subr.bf16.mxu0 %v1730
  %3312 = vmatpush1.bf16.msra.mxu0 %v1729
  %3313 = vmatprep.subr.bf16.mxu0 %v1738
  %3314 = vmatpush1.bf16.msra.mxu0 %v1737
  %3315 = vmatprep.subr.bf16.mxu0 %v1746
  %3316 = vmatpush1.bf16.msra.mxu0 %v1745
  %3317 = vmatprep.subr.bf16.mxu0 %v1754
  %3318 = vmatpush1.bf16.msra.mxu0 %v1753
  %3319 = vmatprep.subr.bf16.mxu0 %v1762
  %3320 = vmatpush1.bf16.msra.mxu0 %v1761
  %3321 = vmatprep.subr.bf16.mxu0 %v1770
  %3322 = vmatpush1.bf16.msra.mxu0 %v1769
  %3323 = vmatprep.mubr.bf16.mxu0 %v3208
  %3324 = vmatmul.mubr.bf16.gmra.mrb[0].mxu0 %v3207
  %v3325 = vpop.f32.mrb[0].mxu0
  %v3326 = vadd.f32 0.0, %v3325
  %v3327 = vpop.f32.mrb[0].mxu0
  %v3328 = vadd.f32 0.0, %v3327
  %v3329 = vpop.f32.mrb[0].mxu0
  %v3330 = vpop.f32.mrb[0].mxu0
  %3331 = vdwg.mxu0
  %3332 = vmatprep.subr.bf16.mxu0 %v1652
  %3333 = vmatpush1.bf16.msra.mxu0 %v1651
  %3334 = vmatprep.subr.bf16.mxu0 %v1660
  %3335 = vmatpush1.bf16.msra.mxu0 %v1659
  %3336 = vmatprep.subr.bf16.mxu0 %v1668
  %3337 = vmatpush1.bf16.msra.mxu0 %v1667
  %3338 = vmatprep.subr.bf16.mxu0 %v1676
  %3339 = vmatpush1.bf16.msra.mxu0 %v1675
  %3340 = vmatprep.subr.bf16.mxu0 %v1684
  %3341 = vmatpush1.bf16.msra.mxu0 %v1683
  %3342 = vmatprep.subr.bf16.mxu0 %v1692
  %3343 = vmatpush1.bf16.msra.mxu0 %v1691
  %3344 = vmatprep.subr.bf16.mxu0 %v1700
  %3345 = vmatpush1.bf16.msra.mxu0 %v1699
  %3346 = vmatprep.subr.bf16.mxu0 %v1708
  %3347 = vmatpush1.bf16.msra.mxu0 %v1707
  %3348 = vmatprep.subr.bf16.mxu0 %v1716
  %3349 = vmatpush1.bf16.msra.mxu0 %v1715
  %3350 = vmatprep.subr.bf16.mxu0 %v1724
  %3351 = vmatpush1.bf16.msra.mxu0 %v1723
  %3352 = vmatprep.subr.bf16.mxu0 %v1732
  %3353 = vmatpush1.bf16.msra.mxu0 %v1731
  %3354 = vmatprep.subr.bf16.mxu0 %v1740
  %3355 = vmatpush1.bf16.msra.mxu0 %v1739
  %3356 = vmatprep.subr.bf16.mxu0 %v1748
  %3357 = vmatpush1.bf16.msra.mxu0 %v1747
  %3358 = vmatprep.subr.bf16.mxu0 %v1756
  %3359 = vmatpush1.bf16.msra.mxu0 %v1755
  %3360 = vmatprep.subr.bf16.mxu0 %v1764
  %3361 = vmatpush1.bf16.msra.mxu0 %v1763
  %3362 = vmatprep.subr.bf16.mxu0 %v1772
  %3363 = vmatpush1.bf16.msra.mxu0 %v1771
  %3364 = vmatprep.mubr.bf16.mxu0 %v3208
  %3365 = vmatmul.mubr.bf16.gmra.mrb[0].mxu0 %v3207
  %v3366 = vpop.f32.mrb[0].mxu0
  %v3367 = vadd.f32 0.0, %v3366
  %v3368 = vpop.f32.mrb[0].mxu0
  %v3369 = vadd.f32 0.0, %v3368
  %v3370 = vpop.f32.mrb[0].mxu0
  %v3371 = vpop.f32.mrb[0].mxu0
  %3372 = vdwg.mxu0
  %v3373 = vadd.f32 %v3199, %v3244
  %v3374 = vadd.f32 %v3200, %v3246
  %v3375 = vadd.f32 %v3201, %v3285
  %v3376 = vadd.f32 %v3202, %v3287
  %v3377 = vadd.f32 %v3203, %v3326
  %v3378 = vadd.f32 %v3204, %v3328
  %v3379 = vadd.f32 %v3205, %v3367
  %v3380 = vadd.f32 %v3206, %v3369
  %v3381 = vmul.f32 %v3373, 0.5
  %v3382 = vmul.f32 %v3374, 0.5
  %v3383 = vtanh.pop %v3381
  %v3384 = vtanh.pop %v3382
  %v3385 = vmul.f32 %v3383, 0.5
  %v3386 = vmul.f32 %v3384, 0.5
  %v3387 = vadd.f32 %v3385, 0.5
  %v3388 = vadd.f32 %v3386, 0.5
  %v3389 = vmul.f32 %v3375, 0.5
  %v3390 = vmul.f32 %v3376, 0.5
  %v3391 = vtanh.pop %v3389
  %v3392 = vtanh.pop %v3390
  %v3393 = vmul.f32 %v3391, 0.5
  %v3394 = vmul.f32 %v3392, 0.5
  %v3395 = vadd.f32 %v3393, 0.5
  %v3396 = vadd.f32 %v3394, 0.5
  %v3397 = vtanh.pop %v3377
  %v3398 = vtanh.pop %v3378
  %v3399 = vmul.f32 %v3379, 0.5
  %v3400 = vmul.f32 %v3380, 0.5
  %v3401 = vtanh.pop %v3399
  %v3402 = vtanh.pop %v3400
  %v3403 = vmul.f32 %v3401, 0.5
  %v3404 = vmul.f32 %v3402, 0.5
  %v3405 = vadd.f32 %v3403, 0.5
  %v3406 = vadd.f32 %v3404, 0.5
  %v3407 = vmul.f32 %v3395, %v3193
  %v3408 = vmul.f32 %v3396, %v3194
  %v3409 = vmul.f32 %v3387, %v3397
  %v3410 = vmul.f32 %v3388, %v3398
  %v3411 = vadd.f32 %v3407, %v3409
  %v3412 = vadd.f32 %v3408, %v3410
  %v3413 = vtanh.pop %v3411
  %v3414 = vtanh.pop %v3412
  %v3415 = vmul.f32 %v3405, %v3413
  %v3416 = vmul.f32 %v3406, %v3414
  %v3417 = vld [vmem:[#allocation2 + $0x1c0] sm:$0xff]
  %v3418 = vld [vmem:[#allocation2 + $0x1c8] sm:$0xff]
  %v3419 = vld [vmem:[#allocation2 + $0x1d0] sm:$0xff]
  %v3420 = vld [vmem:[#allocation2 + $0x1d8] sm:$0xff]
  %v3421 = vld [vmem:[#allocation2 + $0x1e0] sm:$0xff]
  %v3422 = vld [vmem:[#allocation2 + $0x1e8] sm:$0xff]
  %v3423 = vld [vmem:[#allocation2 + $0x1f0] sm:$0xff]
  %v3424 = vld [vmem:[#allocation2 + $0x1f8] sm:$0xff]
  %v3425 = vpack.c.bf16 %v3415, %v3415
  %v3426 = vpack.c.bf16 %v3416, %v3416
  %3427 = vmatprep.subr.bf16.mxu0 %v1646
  %3428 = vmatpush1.bf16.msra.mxu0 %v1645
  %3429 = vmatprep.subr.bf16.mxu0 %v1654
  %3430 = vmatpush1.bf16.msra.mxu0 %v1653
  %3431 = vmatprep.subr.bf16.mxu0 %v1662
  %3432 = vmatpush1.bf16.msra.mxu0 %v1661
  %3433 = vmatprep.subr.bf16.mxu0 %v1670
  %3434 = vmatpush1.bf16.msra.mxu0 %v1669
  %3435 = vmatprep.subr.bf16.mxu0 %v1678
  %3436 = vmatpush1.bf16.msra.mxu0 %v1677
  %3437 = vmatprep.subr.bf16.mxu0 %v1686
  %3438 = vmatpush1.bf16.msra.mxu0 %v1685
  %3439 = vmatprep.subr.bf16.mxu0 %v1694
  %3440 = vmatpush1.bf16.msra.mxu0 %v1693
  %3441 = vmatprep.subr.bf16.mxu0 %v1702
  %3442 = vmatpush1.bf16.msra.mxu0 %v1701
  %3443 = vmatprep.subr.bf16.mxu0 %v1710
  %3444 = vmatpush1.bf16.msra.mxu0 %v1709
  %3445 = vmatprep.subr.bf16.mxu0 %v1718
  %3446 = vmatpush1.bf16.msra.mxu0 %v1717
  %3447 = vmatprep.subr.bf16.mxu0 %v1726
  %3448 = vmatpush1.bf16.msra.mxu0 %v1725
  %3449 = vmatprep.subr.bf16.mxu0 %v1734
  %3450 = vmatpush1.bf16.msra.mxu0 %v1733
  %3451 = vmatprep.subr.bf16.mxu0 %v1742
  %3452 = vmatpush1.bf16.msra.mxu0 %v1741
  %3453 = vmatprep.subr.bf16.mxu0 %v1750
  %3454 = vmatpush1.bf16.msra.mxu0 %v1749
  %3455 = vmatprep.subr.bf16.mxu0 %v1758
  %3456 = vmatpush1.bf16.msra.mxu0 %v1757
  %3457 = vmatprep.subr.bf16.mxu0 %v1766
  %3458 = vmatpush1.bf16.msra.mxu0 %v1765
  %3459 = vmatprep.mubr.bf16.mxu0 %v3426
  %3460 = vmatmul.mubr.bf16.gmra.mrb[0].mxu0 %v3425
  %v3461 = vpop.f32.mrb[0].mxu0
  %v3462 = vadd.f32 0.0, %v3461
  %v3463 = vpop.f32.mrb[0].mxu0
  %v3464 = vadd.f32 0.0, %v3463
  %v3465 = vpop.f32.mrb[0].mxu0
  %v3466 = vpop.f32.mrb[0].mxu0
  %3467 = vdwg.mxu0
  %3468 = vmatprep.subr.bf16.mxu0 %v1648
  %3469 = vmatpush1.bf16.msra.mxu0 %v1647
  %3470 = vmatprep.subr.bf16.mxu0 %v1656
  %3471 = vmatpush1.bf16.msra.mxu0 %v1655
  %3472 = vmatprep.subr.bf16.mxu0 %v1664
  %3473 = vmatpush1.bf16.msra.mxu0 %v1663
  %3474 = vmatprep.subr.bf16.mxu0 %v1672
  %3475 = vmatpush1.bf16.msra.mxu0 %v1671
  %3476 = vmatprep.subr.bf16.mxu0 %v1680
  %3477 = vmatpush1.bf16.msra.mxu0 %v1679
  %3478 = vmatprep.subr.bf16.mxu0 %v1688
  %3479 = vmatpush1.bf16.msra.mxu0 %v1687
  %3480 = vmatprep.subr.bf16.mxu0 %v1696
  %3481 = vmatpush1.bf16.msra.mxu0 %v1695
  %3482 = vmatprep.subr.bf16.mxu0 %v1704
  %3483 = vmatpush1.bf16.msra.mxu0 %v1703
  %3484 = vmatprep.subr.bf16.mxu0 %v1712
  %3485 = vmatpush1.bf16.msra.mxu0 %v1711
  %3486 = vmatprep.subr.bf16.mxu0 %v1720
  %3487 = vmatpush1.bf16.msra.mxu0 %v1719
  %3488 = vmatprep.subr.bf16.mxu0 %v1728
  %3489 = vmatpush1.bf16.msra.mxu0 %v1727
  %3490 = vmatprep.subr.bf16.mxu0 %v1736
  %3491 = vmatpush1.bf16.msra.mxu0 %v1735
  %3492 = vmatprep.subr.bf16.mxu0 %v1744
  %3493 = vmatpush1.bf16.msra.mxu0 %v1743
  %3494 = vmatprep.subr.bf16.mxu0 %v1752
  %3495 = vmatpush1.bf16.msra.mxu0 %v1751
  %3496 = vmatprep.subr.bf16.mxu0 %v1760
  %3497 = vmatpush1.bf16.msra.mxu0 %v1759
  %3498 = vmatprep.subr.bf16.mxu0 %v1768
  %3499 = vmatpush1.bf16.msra.mxu0 %v1767
  %3500 = vmatprep.mubr.bf16.mxu0 %v3426
  %3501 = vmatmul.mubr.bf16.gmra.mrb[0].mxu0 %v3425
  %v3502 = vpop.f32.mrb[0].mxu0
  %v3503 = vadd.f32 0.0, %v3502
  %v3504 = vpop.f32.mrb[0].mxu0
  %v3505 = vadd.f32 0.0, %v3504
  %v3506 = vpop.f32.mrb[0].mxu0
  %v3507 = vpop.f32.mrb[0].mxu0
  %3508 = vdwg.mxu0
  %3509 = vmatprep.subr.bf16.mxu0 %v1650
  %3510 = vmatpush1.bf16.msra.mxu0 %v1649
  %3511 = vmatprep.subr.bf16.mxu0 %v1658
  %3512 = vmatpush1.bf16.msra.mxu0 %v1657
  %3513 = vmatprep.subr.bf16.mxu0 %v1666
  %3514 = vmatpush1.bf16.msra.mxu0 %v1665
  %3515 = vmatprep.subr.bf16.mxu0 %v1674
  %3516 = vmatpush1.bf16.msra.mxu0 %v1673
  %3517 = vmatprep.subr.bf16.mxu0 %v1682
  %3518 = vmatpush1.bf16.msra.mxu0 %v1681
  %3519 = vmatprep.subr.bf16.mxu0 %v1690
  %3520 = vmatpush1.bf16.msra.mxu0 %v1689
  %3521 = vmatprep.subr.bf16.mxu0 %v1698
  %3522 = vmatpush1.bf16.msra.mxu0 %v1697
  %3523 = vmatprep.subr.bf16.mxu0 %v1706
  %3524 = vmatpush1.bf16.msra.mxu0 %v1705
  %3525 = vmatprep.subr.bf16.mxu0 %v1714
  %3526 = vmatpush1.bf16.msra.mxu0 %v1713
  %3527 = vmatprep.subr.bf16.mxu0 %v1722
  %3528 = vmatpush1.bf16.msra.mxu0 %v1721
  %3529 = vmatprep.subr.bf16.mxu0 %v1730
  %3530 = vmatpush1.bf16.msra.mxu0 %v1729
  %3531 = vmatprep.subr.bf16.mxu0 %v1738
  %3532 = vmatpush1.bf16.msra.mxu0 %v1737
  %3533 = vmatprep.subr.bf16.mxu0 %v1746
  %3534 = vmatpush1.bf16.msra.mxu0 %v1745
  %3535 = vmatprep.subr.bf16.mxu0 %v1754
  %3536 = vmatpush1.bf16.msra.mxu0 %v1753
  %3537 = vmatprep.subr.bf16.mxu0 %v1762
  %3538 = vmatpush1.bf16.msra.mxu0 %v1761
  %3539 = vmatprep.subr.bf16.mxu0 %v1770
  %3540 = vmatpush1.bf16.msra.mxu0 %v1769
  %3541 = vmatprep.mubr.bf16.mxu0 %v3426
  %3542 = vmatmul.mubr.bf16.gmra.mrb[0].mxu0 %v3425
  %v3543 = vpop.f32.mrb[0].mxu0
  %v3544 = vadd.f32 0.0, %v3543
  %v3545 = vpop.f32.mrb[0].mxu0
  %v3546 = vadd.f32 0.0, %v3545
  %v3547 = vpop.f32.mrb[0].mxu0
  %v3548 = vpop.f32.mrb[0].mxu0
  %3549 = vdwg.mxu0
  %3550 = vmatprep.subr.bf16.mxu0 %v1652
  %3551 = vmatpush1.bf16.msra.mxu0 %v1651
  %3552 = vmatprep.subr.bf16.mxu0 %v1660
  %3553 = vmatpush1.bf16.msra.mxu0 %v1659
  %3554 = vmatprep.subr.bf16.mxu0 %v1668
  %3555 = vmatpush1.bf16.msra.mxu0 %v1667
  %3556 = vmatprep.subr.bf16.mxu0 %v1676
  %3557 = vmatpush1.bf16.msra.mxu0 %v1675
  %3558 = vmatprep.subr.bf16.mxu0 %v1684
  %3559 = vmatpush1.bf16.msra.mxu0 %v1683
  %3560 = vmatprep.subr.bf16.mxu0 %v1692
  %3561 = vmatpush1.bf16.msra.mxu0 %v1691
  %3562 = vmatprep.subr.bf16.mxu0 %v1700
  %3563 = vmatpush1.bf16.msra.mxu0 %v1699
  %3564 = vmatprep.subr.bf16.mxu0 %v1708
  %3565 = vmatpush1.bf16.msra.mxu0 %v1707
  %3566 = vmatprep.subr.bf16.mxu0 %v1716
  %3567 = vmatpush1.bf16.msra.mxu0 %v1715
  %3568 = vmatprep.subr.bf16.mxu0 %v1724
  %3569 = vmatpush1.bf16.msra.mxu0 %v1723
  %3570 = vmatprep.subr.bf16.mxu0 %v1732
  %3571 = vmatpush1.bf16.msra.mxu0 %v1731
  %3572 = vmatprep.subr.bf16.mxu0 %v1740
  %3573 = vmatpush1.bf16.msra.mxu0 %v1739
  %3574 = vmatprep.subr.bf16.mxu0 %v1748
  %3575 = vmatpush1.bf16.msra.mxu0 %v1747
  %3576 = vmatprep.subr.bf16.mxu0 %v1756
  %3577 = vmatpush1.bf16.msra.mxu0 %v1755
  %3578 = vmatprep.subr.bf16.mxu0 %v1764
  %3579 = vmatpush1.bf16.msra.mxu0 %v1763
  %3580 = vmatprep.subr.bf16.mxu0 %v1772
  %3581 = vmatpush1.bf16.msra.mxu0 %v1771
  %3582 = vmatprep.mubr.bf16.mxu0 %v3426
  %3583 = vmatmul.mubr.bf16.gmra.mrb[0].mxu0 %v3425
  %v3584 = vpop.f32.mrb[0].mxu0
  %v3585 = vadd.f32 0.0, %v3584
  %v3586 = vpop.f32.mrb[0].mxu0
  %v3587 = vadd.f32 0.0, %v3586
  %v3588 = vpop.f32.mrb[0].mxu0
  %v3589 = vpop.f32.mrb[0].mxu0
  %3590 = vdwg.mxu0
  %v3591 = vadd.f32 %v3417, %v3462
  %v3592 = vadd.f32 %v3418, %v3464
  %v3593 = vadd.f32 %v3419, %v3503
  %v3594 = vadd.f32 %v3420, %v3505
  %v3595 = vadd.f32 %v3421, %v3544
  %v3596 = vadd.f32 %v3422, %v3546
  %v3597 = vadd.f32 %v3423, %v3585
  %v3598 = vadd.f32 %v3424, %v3587
  %v3599 = vmul.f32 %v3591, 0.5
  %v3600 = vmul.f32 %v3592, 0.5
  %v3601 = vtanh.pop %v3599
  %v3602 = vtanh.pop %v3600
  %v3603 = vmul.f32 %v3601, 0.5
  %v3604 = vmul.f32 %v3602, 0.5
  %v3605 = vadd.f32 %v3603, 0.5
  %v3606 = vadd.f32 %v3604, 0.5
  %v3607 = vmul.f32 %v3593, 0.5
  %v3608 = vmul.f32 %v3594, 0.5
  %v3609 = vtanh.pop %v3607
  %v3610 = vtanh.pop %v3608
  %v3611 = vmul.f32 %v3609, 0.5
  %v3612 = vmul.f32 %v3610, 0.5
  %v3613 = vadd.f32 %v3611, 0.5
  %v3614 = vadd.f32 %v3612, 0.5
  %v3615 = vtanh.pop %v3595
  %v3616 = vtanh.pop %v3596
  %v3617 = vmul.f32 %v3597, 0.5
  %v3618 = vmul.f32 %v3598, 0.5
  %v3619 = vtanh.pop %v3617
  %v3620 = vtanh.pop %v3618
  %v3621 = vmul.f32 %v3619, 0.5
  %v3622 = vmul.f32 %v3620, 0.5
  %v3623 = vadd.f32 %v3621, 0.5
  %v3624 = vadd.f32 %v3622, 0.5
  %v3625 = vmul.f32 %v3613, %v3411
  %v3626 = vmul.f32 %v3614, %v3412
  %v3627 = vmul.f32 %v3605, %v3615
  %v3628 = vmul.f32 %v3606, %v3616
  %v3629 = vadd.f32 %v3625, %v3627
  %v3630 = vadd.f32 %v3626, %v3628
  %v3631 = vtanh.pop %v3629
  %v3632 = vtanh.pop %v3630
  %v3633 = vmul.f32 %v3623, %v3631
  %v3634 = vmul.f32 %v3624, %v3632
  %v3635 = vld [vmem:[#allocation2 + $0x200] sm:$0xff]
  %v3636 = vld [vmem:[#allocation2 + $0x208] sm:$0xff]
  %v3637 = vld [vmem:[#allocation2 + $0x210] sm:$0xff]
  %v3638 = vld [vmem:[#allocation2 + $0x218] sm:$0xff]
  %v3639 = vld [vmem:[#allocation2 + $0x220] sm:$0xff]
  %v3640 = vld [vmem:[#allocation2 + $0x228] sm:$0xff]
  %v3641 = vld [vmem:[#allocation2 + $0x230] sm:$0xff]
  %v3642 = vld [vmem:[#allocation2 + $0x238] sm:$0xff]
  %v3643 = vpack.c.bf16 %v3633, %v3633
  %v3644 = vpack.c.bf16 %v3634, %v3634
  %3645 = vmatprep.subr.bf16.mxu0 %v1646
  %3646 = vmatpush1.bf16.msra.mxu0 %v1645
  %3647 = vmatprep.subr.bf16.mxu0 %v1654
  %3648 = vmatpush1.bf16.msra.mxu0 %v1653
  %3649 = vmatprep.subr.bf16.mxu0 %v1662
  %3650 = vmatpush1.bf16.msra.mxu0 %v1661
  %3651 = vmatprep.subr.bf16.mxu0 %v1670
  %3652 = vmatpush1.bf16.msra.mxu0 %v1669
  %3653 = vmatprep.subr.bf16.mxu0 %v1678
  %3654 = vmatpush1.bf16.msra.mxu0 %v1677
  %3655 = vmatprep.subr.bf16.mxu0 %v1686
  %3656 = vmatpush1.bf16.msra.mxu0 %v1685
  %3657 = vmatprep.subr.bf16.mxu0 %v1694
  %3658 = vmatpush1.bf16.msra.mxu0 %v1693
  %3659 = vmatprep.subr.bf16.mxu0 %v1702
  %3660 = vmatpush1.bf16.msra.mxu0 %v1701
  %3661 = vmatprep.subr.bf16.mxu0 %v1710
  %3662 = vmatpush1.bf16.msra.mxu0 %v1709
  %3663 = vmatprep.subr.bf16.mxu0 %v1718
  %3664 = vmatpush1.bf16.msra.mxu0 %v1717
  %3665 = vmatprep.subr.bf16.mxu0 %v1726
  %3666 = vmatpush1.bf16.msra.mxu0 %v1725
  %3667 = vmatprep.subr.bf16.mxu0 %v1734
  %3668 = vmatpush1.bf16.msra.mxu0 %v1733
  %3669 = vmatprep.subr.bf16.mxu0 %v1742
  %3670 = vmatpush1.bf16.msra.mxu0 %v1741
  %3671 = vmatprep.subr.bf16.mxu0 %v1750
  %3672 = vmatpush1.bf16.msra.mxu0 %v1749
  %3673 = vmatprep.subr.bf16.mxu0 %v1758
  %3674 = vmatpush1.bf16.msra.mxu0 %v1757
  %3675 = vmatprep.subr.bf16.mxu0 %v1766
  %3676 = vmatpush1.bf16.msra.mxu0 %v1765
  %3677 = vmatprep.mubr.bf16.mxu0 %v3644
  %3678 = vmatmul.mubr.bf16.gmra.mrb[0].mxu0 %v3643
  %v3679 = vpop.f32.mrb[0].mxu0
  %v3680 = vadd.f32 0.0, %v3679
  %v3681 = vpop.f32.mrb[0].mxu0
  %v3682 = vadd.f32 0.0, %v3681
  %v3683 = vpop.f32.mrb[0].mxu0
  %v3684 = vpop.f32.mrb[0].mxu0
  %3685 = vdwg.mxu0
  %3686 = vmatprep.subr.bf16.mxu0 %v1648
  %3687 = vmatpush1.bf16.msra.mxu0 %v1647
  %3688 = vmatprep.subr.bf16.mxu0 %v1656
  %3689 = vmatpush1.bf16.msra.mxu0 %v1655
  %3690 = vmatprep.subr.bf16.mxu0 %v1664
  %3691 = vmatpush1.bf16.msra.mxu0 %v1663
  %3692 = vmatprep.subr.bf16.mxu0 %v1672
  %3693 = vmatpush1.bf16.msra.mxu0 %v1671
  %3694 = vmatprep.subr.bf16.mxu0 %v1680
  %3695 = vmatpush1.bf16.msra.mxu0 %v1679
  %3696 = vmatprep.subr.bf16.mxu0 %v1688
  %3697 = vmatpush1.bf16.msra.mxu0 %v1687
  %3698 = vmatprep.subr.bf16.mxu0 %v1696
  %3699 = vmatpush1.bf16.msra.mxu0 %v1695
  %3700 = vmatprep.subr.bf16.mxu0 %v1704
  %3701 = vmatpush1.bf16.msra.mxu0 %v1703
  %3702 = vmatprep.subr.bf16.mxu0 %v1712
  %3703 = vmatpush1.bf16.msra.mxu0 %v1711
  %3704 = vmatprep.subr.bf16.mxu0 %v1720
  %3705 = vmatpush1.bf16.msra.mxu0 %v1719
  %3706 = vmatprep.subr.bf16.mxu0 %v1728
  %3707 = vmatpush1.bf16.msra.mxu0 %v1727
  %3708 = vmatprep.subr.bf16.mxu0 %v1736
  %3709 = vmatpush1.bf16.msra.mxu0 %v1735
  %3710 = vmatprep.subr.bf16.mxu0 %v1744
  %3711 = vmatpush1.bf16.msra.mxu0 %v1743
  %3712 = vmatprep.subr.bf16.mxu0 %v1752
  %3713 = vmatpush1.bf16.msra.mxu0 %v1751
  %3714 = vmatprep.subr.bf16.mxu0 %v1760
  %3715 = vmatpush1.bf16.msra.mxu0 %v1759
  %3716 = vmatprep.subr.bf16.mxu0 %v1768
  %3717 = vmatpush1.bf16.msra.mxu0 %v1767
  %3718 = vmatprep.mubr.bf16.mxu0 %v3644
  %3719 = vmatmul.mubr.bf16.gmra.mrb[0].mxu0 %v3643
  %v3720 = vpop.f32.mrb[0].mxu0
  %v3721 = vadd.f32 0.0, %v3720
  %v3722 = vpop.f32.mrb[0].mxu0
  %v3723 = vadd.f32 0.0, %v3722
  %v3724 = vpop.f32.mrb[0].mxu0
  %v3725 = vpop.f32.mrb[0].mxu0
  %3726 = vdwg.mxu0
  %3727 = vmatprep.subr.bf16.mxu0 %v1650
  %3728 = vmatpush1.bf16.msra.mxu0 %v1649
  %3729 = vmatprep.subr.bf16.mxu0 %v1658
  %3730 = vmatpush1.bf16.msra.mxu0 %v1657
  %3731 = vmatprep.subr.bf16.mxu0 %v1666
  %3732 = vmatpush1.bf16.msra.mxu0 %v1665
  %3733 = vmatprep.subr.bf16.mxu0 %v1674
  %3734 = vmatpush1.bf16.msra.mxu0 %v1673
  %3735 = vmatprep.subr.bf16.mxu0 %v1682
  %3736 = vmatpush1.bf16.msra.mxu0 %v1681
  %3737 = vmatprep.subr.bf16.mxu0 %v1690
  %3738 = vmatpush1.bf16.msra.mxu0 %v1689
  %3739 = vmatprep.subr.bf16.mxu0 %v1698
  %3740 = vmatpush1.bf16.msra.mxu0 %v1697
  %3741 = vmatprep.subr.bf16.mxu0 %v1706
  %3742 = vmatpush1.bf16.msra.mxu0 %v1705
  %3743 = vmatprep.subr.bf16.mxu0 %v1714
  %3744 = vmatpush1.bf16.msra.mxu0 %v1713
  %3745 = vmatprep.subr.bf16.mxu0 %v1722
  %3746 = vmatpush1.bf16.msra.mxu0 %v1721
  %3747 = vmatprep.subr.bf16.mxu0 %v1730
  %3748 = vmatpush1.bf16.msra.mxu0 %v1729
  %3749 = vmatprep.subr.bf16.mxu0 %v1738
  %3750 = vmatpush1.bf16.msra.mxu0 %v1737
  %3751 = vmatprep.subr.bf16.mxu0 %v1746
  %3752 = vmatpush1.bf16.msra.mxu0 %v1745
  %3753 = vmatprep.subr.bf16.mxu0 %v1754
  %3754 = vmatpush1.bf16.msra.mxu0 %v1753
  %3755 = vmatprep.subr.bf16.mxu0 %v1762
  %3756 = vmatpush1.bf16.msra.mxu0 %v1761
  %3757 = vmatprep.subr.bf16.mxu0 %v1770
  %3758 = vmatpush1.bf16.msra.mxu0 %v1769
  %3759 = vmatprep.mubr.bf16.mxu0 %v3644
  %3760 = vmatmul.mubr.bf16.gmra.mrb[0].mxu0 %v3643
  %v3761 = vpop.f32.mrb[0].mxu0
  %v3762 = vadd.f32 0.0, %v3761
  %v3763 = vpop.f32.mrb[0].mxu0
  %v3764 = vadd.f32 0.0, %v3763
  %v3765 = vpop.f32.mrb[0].mxu0
  %v3766 = vpop.f32.mrb[0].mxu0
  %3767 = vdwg.mxu0
  %3768 = vmatprep.subr.bf16.mxu0 %v1652
  %3769 = vmatpush1.bf16.msra.mxu0 %v1651
  %3770 = vmatprep.subr.bf16.mxu0 %v1660
  %3771 = vmatpush1.bf16.msra.mxu0 %v1659
  %3772 = vmatprep.subr.bf16.mxu0 %v1668
  %3773 = vmatpush1.bf16.msra.mxu0 %v1667
  %3774 = vmatprep.subr.bf16.mxu0 %v1676
  %3775 = vmatpush1.bf16.msra.mxu0 %v1675
  %3776 = vmatprep.subr.bf16.mxu0 %v1684
  %3777 = vmatpush1.bf16.msra.mxu0 %v1683
  %3778 = vmatprep.subr.bf16.mxu0 %v1692
  %3779 = vmatpush1.bf16.msra.mxu0 %v1691
  %3780 = vmatprep.subr.bf16.mxu0 %v1700
  %3781 = vmatpush1.bf16.msra.mxu0 %v1699
  %3782 = vmatprep.subr.bf16.mxu0 %v1708
  %3783 = vmatpush1.bf16.msra.mxu0 %v1707
  %3784 = vmatprep.subr.bf16.mxu0 %v1716
  %3785 = vmatpush1.bf16.msra.mxu0 %v1715
  %3786 = vmatprep.subr.bf16.mxu0 %v1724
  %3787 = vmatpush1.bf16.msra.mxu0 %v1723
  %3788 = vmatprep.subr.bf16.mxu0 %v1732
  %3789 = vmatpush1.bf16.msra.mxu0 %v1731
  %3790 = vmatprep.subr.bf16.mxu0 %v1740
  %3791 = vmatpush1.bf16.msra.mxu0 %v1739
  %3792 = vmatprep.subr.bf16.mxu0 %v1748
  %3793 = vmatpush1.bf16.msra.mxu0 %v1747
  %3794 = vmatprep.subr.bf16.mxu0 %v1756
  %3795 = vmatpush1.bf16.msra.mxu0 %v1755
  %3796 = vmatprep.subr.bf16.mxu0 %v1764
  %3797 = vmatpush1.bf16.msra.mxu0 %v1763
  %3798 = vmatprep.subr.bf16.mxu0 %v1772
  %3799 = vmatpush1.bf16.msra.mxu0 %v1771
  %3800 = vmatprep.mubr.bf16.mxu0 %v3644
  %3801 = vmatmul.mubr.bf16.gmra.mrb[0].mxu0 %v3643
  %v3802 = vpop.f32.mrb[0].mxu0
  %v3803 = vadd.f32 0.0, %v3802
  %v3804 = vpop.f32.mrb[0].mxu0
  %v3805 = vadd.f32 0.0, %v3804
  %v3806 = vpop.f32.mrb[0].mxu0
  %v3807 = vpop.f32.mrb[0].mxu0
  %3808 = vdwg.mxu0
  %v3809 = vadd.f32 %v3635, %v3680
  %v3810 = vadd.f32 %v3636, %v3682
  %v3811 = vadd.f32 %v3637, %v3721
  %v3812 = vadd.f32 %v3638, %v3723
  %v3813 = vadd.f32 %v3639, %v3762
  %v3814 = vadd.f32 %v3640, %v3764
  %v3815 = vadd.f32 %v3641, %v3803
  %v3816 = vadd.f32 %v3642, %v3805
  %v3817 = vmul.f32 %v3809, 0.5
  %v3818 = vmul.f32 %v3810, 0.5
  %v3819 = vtanh.pop %v3817
  %v3820 = vtanh.pop %v3818
  %v3821 = vmul.f32 %v3819, 0.5
  %v3822 = vmul.f32 %v3820, 0.5
  %v3823 = vadd.f32 %v3821, 0.5
  %v3824 = vadd.f32 %v3822, 0.5
  %v3825 = vmul.f32 %v3811, 0.5
  %v3826 = vmul.f32 %v3812, 0.5
  %v3827 = vtanh.pop %v3825
  %v3828 = vtanh.pop %v3826
  %v3829 = vmul.f32 %v3827, 0.5
  %v3830 = vmul.f32 %v3828, 0.5
  %v3831 = vadd.f32 %v3829, 0.5
  %v3832 = vadd.f32 %v3830, 0.5
  %v3833 = vtanh.pop %v3813
  %v3834 = vtanh.pop %v3814
  %v3835 = vmul.f32 %v3815, 0.5
  %v3836 = vmul.f32 %v3816, 0.5
  %v3837 = vtanh.pop %v3835
  %v3838 = vtanh.pop %v3836
  %v3839 = vmul.f32 %v3837, 0.5
  %v3840 = vmul.f32 %v3838, 0.5
  %v3841 = vadd.f32 %v3839, 0.5
  %v3842 = vadd.f32 %v3840, 0.5
  %v3843 = vmul.f32 %v3831, %v3629
  %v3844 = vmul.f32 %v3832, %v3630
  %v3845 = vmul.f32 %v3823, %v3833
  %v3846 = vmul.f32 %v3824, %v3834
  %v3847 = vadd.f32 %v3843, %v3845
  %v3848 = vadd.f32 %v3844, %v3846
  %v3849 = vtanh.pop %v3847
  %v3850 = vtanh.pop %v3848
  %v3851 = vmul.f32 %v3841, %v3849
  %v3852 = vmul.f32 %v3842, %v3850
  %v3853 = vsel %vm1239, %v3851, 0.0
  %v3854 = vsel %vm1240, %v3852, 0.0
  %v3855 = vld [vmem:[#allocation2 + $0x240] sm:$0xff]
  %v3856 = vld [vmem:[#allocation2 + $0x248] sm:$0xff]
  %v3857 = vld [vmem:[#allocation2 + $0x250] sm:$0xff]
  %v3858 = vld [vmem:[#allocation2 + $0x258] sm:$0xff]
  %v3859 = vld [vmem:[#allocation2 + $0x260] sm:$0xff]
  %v3860 = vld [vmem:[#allocation2 + $0x268] sm:$0xff]
  %v3861 = vld [vmem:[#allocation2 + $0x270] sm:$0xff]
  %v3862 = vld [vmem:[#allocation2 + $0x278] sm:$0xff]
  %v3863 = vpack.c.bf16 %v3851, %v3851
  %v3864 = vpack.c.bf16 %v3852, %v3852
  %3865 = vmatprep.subr.bf16.mxu0 %v1646
  %3866 = vmatpush1.bf16.msra.mxu0 %v1645
  %3867 = vmatprep.subr.bf16.mxu0 %v1654
  %3868 = vmatpush1.bf16.msra.mxu0 %v1653
  %3869 = vmatprep.subr.bf16.mxu0 %v1662
  %3870 = vmatpush1.bf16.msra.mxu0 %v1661
  %3871 = vmatprep.subr.bf16.mxu0 %v1670
  %3872 = vmatpush1.bf16.msra.mxu0 %v1669
  %3873 = vmatprep.subr.bf16.mxu0 %v1678
  %3874 = vmatpush1.bf16.msra.mxu0 %v1677
  %3875 = vmatprep.subr.bf16.mxu0 %v1686
  %3876 = vmatpush1.bf16.msra.mxu0 %v1685
  %3877 = vmatprep.subr.bf16.mxu0 %v1694
  %3878 = vmatpush1.bf16.msra.mxu0 %v1693
  %3879 = vmatprep.subr.bf16.mxu0 %v1702
  %3880 = vmatpush1.bf16.msra.mxu0 %v1701
  %3881 = vmatprep.subr.bf16.mxu0 %v1710
  %3882 = vmatpush1.bf16.msra.mxu0 %v1709
  %3883 = vmatprep.subr.bf16.mxu0 %v1718
  %3884 = vmatpush1.bf16.msra.mxu0 %v1717
  %3885 = vmatprep.subr.bf16.mxu0 %v1726
  %3886 = vmatpush1.bf16.msra.mxu0 %v1725
  %3887 = vmatprep.subr.bf16.mxu0 %v1734
  %3888 = vmatpush1.bf16.msra.mxu0 %v1733
  %3889 = vmatprep.subr.bf16.mxu0 %v1742
  %3890 = vmatpush1.bf16.msra.mxu0 %v1741
  %3891 = vmatprep.subr.bf16.mxu0 %v1750
  %3892 = vmatpush1.bf16.msra.mxu0 %v1749
  %3893 = vmatprep.subr.bf16.mxu0 %v1758
  %3894 = vmatpush1.bf16.msra.mxu0 %v1757
  %3895 = vmatprep.subr.bf16.mxu0 %v1766
  %3896 = vmatpush1.bf16.msra.mxu0 %v1765
  %3897 = vmatprep.mubr.bf16.mxu0 %v3864
  %3898 = vmatmul.mubr.bf16.gmra.mrb[0].mxu0 %v3863
  %v3899 = vpop.f32.mrb[0].mxu0
  %v3900 = vadd.f32 0.0, %v3899
  %v3901 = vpop.f32.mrb[0].mxu0
  %v3902 = vadd.f32 0.0, %v3901
  %v3903 = vpop.f32.mrb[0].mxu0
  %v3904 = vpop.f32.mrb[0].mxu0
  %3905 = vdwg.mxu0
  %3906 = vmatprep.subr.bf16.mxu0 %v1648
  %3907 = vmatpush1.bf16.msra.mxu0 %v1647
  %3908 = vmatprep.subr.bf16.mxu0 %v1656
  %3909 = vmatpush1.bf16.msra.mxu0 %v1655
  %3910 = vmatprep.subr.bf16.mxu0 %v1664
  %3911 = vmatpush1.bf16.msra.mxu0 %v1663
  %3912 = vmatprep.subr.bf16.mxu0 %v1672
  %3913 = vmatpush1.bf16.msra.mxu0 %v1671
  %3914 = vmatprep.subr.bf16.mxu0 %v1680
  %3915 = vmatpush1.bf16.msra.mxu0 %v1679
  %3916 = vmatprep.subr.bf16.mxu0 %v1688
  %3917 = vmatpush1.bf16.msra.mxu0 %v1687
  %3918 = vmatprep.subr.bf16.mxu0 %v1696
  %3919 = vmatpush1.bf16.msra.mxu0 %v1695
  %3920 = vmatprep.subr.bf16.mxu0 %v1704
  %3921 = vmatpush1.bf16.msra.mxu0 %v1703
  %3922 = vmatprep.subr.bf16.mxu0 %v1712
  %3923 = vmatpush1.bf16.msra.mxu0 %v1711
  %3924 = vmatprep.subr.bf16.mxu0 %v1720
  %3925 = vmatpush1.bf16.msra.mxu0 %v1719
  %3926 = vmatprep.subr.bf16.mxu0 %v1728
  %3927 = vmatpush1.bf16.msra.mxu0 %v1727
  %3928 = vmatprep.subr.bf16.mxu0 %v1736
  %3929 = vmatpush1.bf16.msra.mxu0 %v1735
  %3930 = vmatprep.subr.bf16.mxu0 %v1744
  %3931 = vmatpush1.bf16.msra.mxu0 %v1743
  %3932 = vmatprep.subr.bf16.mxu0 %v1752
  %3933 = vmatpush1.bf16.msra.mxu0 %v1751
  %3934 = vmatprep.subr.bf16.mxu0 %v1760
  %3935 = vmatpush1.bf16.msra.mxu0 %v1759
  %3936 = vmatprep.subr.bf16.mxu0 %v1768
  %3937 = vmatpush1.bf16.msra.mxu0 %v1767
  %3938 = vmatprep.mubr.bf16.mxu0 %v3864
  %3939 = vmatmul.mubr.bf16.gmra.mrb[0].mxu0 %v3863
  %v3940 = vpop.f32.mrb[0].mxu0
  %v3941 = vadd.f32 0.0, %v3940
  %v3942 = vpop.f32.mrb[0].mxu0
  %v3943 = vadd.f32 0.0, %v3942
  %v3944 = vpop.f32.mrb[0].mxu0
  %v3945 = vpop.f32.mrb[0].mxu0
  %3946 = vdwg.mxu0
  %3947 = vmatprep.subr.bf16.mxu0 %v1650
  %3948 = vmatpush1.bf16.msra.mxu0 %v1649
  %3949 = vmatprep.subr.bf16.mxu0 %v1658
  %3950 = vmatpush1.bf16.msra.mxu0 %v1657
  %3951 = vmatprep.subr.bf16.mxu0 %v1666
  %3952 = vmatpush1.bf16.msra.mxu0 %v1665
  %3953 = vmatprep.subr.bf16.mxu0 %v1674
  %3954 = vmatpush1.bf16.msra.mxu0 %v1673
  %3955 = vmatprep.subr.bf16.mxu0 %v1682
  %3956 = vmatpush1.bf16.msra.mxu0 %v1681
  %3957 = vmatprep.subr.bf16.mxu0 %v1690
  %3958 = vmatpush1.bf16.msra.mxu0 %v1689
  %3959 = vmatprep.subr.bf16.mxu0 %v1698
  %3960 = vmatpush1.bf16.msra.mxu0 %v1697
  %3961 = vmatprep.subr.bf16.mxu0 %v1706
  %3962 = vmatpush1.bf16.msra.mxu0 %v1705
  %3963 = vmatprep.subr.bf16.mxu0 %v1714
  %3964 = vmatpush1.bf16.msra.mxu0 %v1713
  %3965 = vmatprep.subr.bf16.mxu0 %v1722
  %3966 = vmatpush1.bf16.msra.mxu0 %v1721
  %3967 = vmatprep.subr.bf16.mxu0 %v1730
  %3968 = vmatpush1.bf16.msra.mxu0 %v1729
  %3969 = vmatprep.subr.bf16.mxu0 %v1738
  %3970 = vmatpush1.bf16.msra.mxu0 %v1737
  %3971 = vmatprep.subr.bf16.mxu0 %v1746
  %3972 = vmatpush1.bf16.msra.mxu0 %v1745
  %3973 = vmatprep.subr.bf16.mxu0 %v1754
  %3974 = vmatpush1.bf16.msra.mxu0 %v1753
  %3975 = vmatprep.subr.bf16.mxu0 %v1762
  %3976 = vmatpush1.bf16.msra.mxu0 %v1761
  %3977 = vmatprep.subr.bf16.mxu0 %v1770
  %3978 = vmatpush1.bf16.msra.mxu0 %v1769
  %3979 = vmatprep.mubr.bf16.mxu0 %v3864
  %3980 = vmatmul.mubr.bf16.gmra.mrb[0].mxu0 %v3863
  %v3981 = vpop.f32.mrb[0].mxu0
  %v3982 = vadd.f32 0.0, %v3981
  %v3983 = vpop.f32.mrb[0].mxu0
  %v3984 = vadd.f32 0.0, %v3983
  %v3985 = vpop.f32.mrb[0].mxu0
  %v3986 = vpop.f32.mrb[0].mxu0
  %3987 = vdwg.mxu0
  %3988 = vmatprep.subr.bf16.mxu0 %v1652
  %3989 = vmatpush1.bf16.msra.mxu0 %v1651
  %3990 = vmatprep.subr.bf16.mxu0 %v1660
  %3991 = vmatpush1.bf16.msra.mxu0 %v1659
  %3992 = vmatprep.subr.bf16.mxu0 %v1668
  %3993 = vmatpush1.bf16.msra.mxu0 %v1667
  %3994 = vmatprep.subr.bf16.mxu0 %v1676
  %3995 = vmatpush1.bf16.msra.mxu0 %v1675
  %3996 = vmatprep.subr.bf16.mxu0 %v1684
  %3997 = vmatpush1.bf16.msra.mxu0 %v1683
  %3998 = vmatprep.subr.bf16.mxu0 %v1692
  %3999 = vmatpush1.bf16.msra.mxu0 %v1691
  %4000 = vmatprep.subr.bf16.mxu0 %v1700
  %4001 = vmatpush1.bf16.msra.mxu0 %v1699
  %4002 = vmatprep.subr.bf16.mxu0 %v1708
  %4003 = vmatpush1.bf16.msra.mxu0 %v1707
  %4004 = vmatprep.subr.bf16.mxu0 %v1716
  %4005 = vmatpush1.bf16.msra.mxu0 %v1715
  %4006 = vmatprep.subr.bf16.mxu0 %v1724
  %4007 = vmatpush1.bf16.msra.mxu0 %v1723
  %4008 = vmatprep.subr.bf16.mxu0 %v1732
  %4009 = vmatpush1.bf16.msra.mxu0 %v1731
  %4010 = vmatprep.subr.bf16.mxu0 %v1740
  %4011 = vmatpush1.bf16.msra.mxu0 %v1739
  %4012 = vmatprep.subr.bf16.mxu0 %v1748
  %4013 = vmatpush1.bf16.msra.mxu0 %v1747
  %4014 = vmatprep.subr.bf16.mxu0 %v1756
  %4015 = vmatpush1.bf16.msra.mxu0 %v1755
  %4016 = vmatprep.subr.bf16.mxu0 %v1764
  %4017 = vmatpush1.bf16.msra.mxu0 %v1763
  %4018 = vmatprep.subr.bf16.mxu0 %v1772
  %4019 = vmatpush1.bf16.msra.mxu0 %v1771
  %4020 = vmatprep.mubr.bf16.mxu0 %v3864
  %4021 = vmatmul.mubr.bf16.gmra.mrb[0].mxu0 %v3863
  %v4022 = vpop.f32.mrb[0].mxu0
  %v4023 = vadd.f32 0.0, %v4022
  %v4024 = vpop.f32.mrb[0].mxu0
  %v4025 = vadd.f32 0.0, %v4024
  %v4026 = vpop.f32.mrb[0].mxu0
  %v4027 = vpop.f32.mrb[0].mxu0
  %4028 = vdwg.mxu0
  %v4029 = vadd.f32 %v3855, %v3900
  %v4030 = vadd.f32 %v3856, %v3902
  %v4031 = vadd.f32 %v3857, %v3941
  %v4032 = vadd.f32 %v3858, %v3943
  %v4033 = vadd.f32 %v3859, %v3982
  %v4034 = vadd.f32 %v3860, %v3984
  %v4035 = vadd.f32 %v3861, %v4023
  %v4036 = vadd.f32 %v3862, %v4025
  %v4037 = vmul.f32 %v4029, 0.5
  %v4038 = vmul.f32 %v4030, 0.5
  %v4039 = vtanh.pop %v4037
  %v4040 = vtanh.pop %v4038
  %v4041 = vmul.f32 %v4039, 0.5
  %v4042 = vmul.f32 %v4040, 0.5
  %v4043 = vadd.f32 %v4041, 0.5
  %v4044 = vadd.f32 %v4042, 0.5
  %v4045 = vmul.f32 %v4031, 0.5
  %v4046 = vmul.f32 %v4032, 0.5
  %v4047 = vtanh.pop %v4045
  %v4048 = vtanh.pop %v4046
  %v4049 = vmul.f32 %v4047, 0.5
  %v4050 = vmul.f32 %v4048, 0.5
  %v4051 = vadd.f32 %v4049, 0.5
  %v4052 = vadd.f32 %v4050, 0.5
  %v4053 = vtanh.pop %v4033
  %v4054 = vtanh.pop %v4034
  %v4055 = vmul.f32 %v4035, 0.5
  %v4056 = vmul.f32 %v4036, 0.5
  %v4057 = vtanh.pop %v4055
  %v4058 = vtanh.pop %v4056
  %v4059 = vmul.f32 %v4057, 0.5
  %v4060 = vmul.f32 %v4058, 0.5
  %v4061 = vadd.f32 %v4059, 0.5
  %v4062 = vadd.f32 %v4060, 0.5
  %v4063 = vmul.f32 %v4051, %v3847
  %v4064 = vmul.f32 %v4052, %v3848
  %v4065 = vmul.f32 %v4043, %v4053
  %v4066 = vmul.f32 %v4044, %v4054
  %v4067 = vadd.f32 %v4063, %v4065
  %v4068 = vadd.f32 %v4064, %v4066
  %v4069 = vtanh.pop %v4067
  %v4070 = vtanh.pop %v4068
  %v4071 = vmul.f32 %v4061, %v4069
  %v4072 = vmul.f32 %v4062, %v4070
  %v4073 = vld [vmem:[#allocation2 + $0x280] sm:$0xff]
  %v4074 = vld [vmem:[#allocation2 + $0x288] sm:$0xff]
  %v4075 = vld [vmem:[#allocation2 + $0x290] sm:$0xff]
  %v4076 = vld [vmem:[#allocation2 + $0x298] sm:$0xff]
  %v4077 = vld [vmem:[#allocation2 + $0x2a0] sm:$0xff]
  %v4078 = vld [vmem:[#allocation2 + $0x2a8] sm:$0xff]
  %v4079 = vld [vmem:[#allocation2 + $0x2b0] sm:$0xff]
  %v4080 = vld [vmem:[#allocation2 + $0x2b8] sm:$0xff]
  %v4081 = vpack.c.bf16 %v4071, %v4071
  %v4082 = vpack.c.bf16 %v4072, %v4072
  %4083 = vmatprep.subr.bf16.mxu0 %v1646
  %4084 = vmatpush1.bf16.msra.mxu0 %v1645
  %4085 = vmatprep.subr.bf16.mxu0 %v1654
  %4086 = vmatpush1.bf16.msra.mxu0 %v1653
  %4087 = vmatprep.subr.bf16.mxu0 %v1662
  %4088 = vmatpush1.bf16.msra.mxu0 %v1661
  %4089 = vmatprep.subr.bf16.mxu0 %v1670
  %4090 = vmatpush1.bf16.msra.mxu0 %v1669
  %4091 = vmatprep.subr.bf16.mxu0 %v1678
  %4092 = vmatpush1.bf16.msra.mxu0 %v1677
  %4093 = vmatprep.subr.bf16.mxu0 %v1686
  %4094 = vmatpush1.bf16.msra.mxu0 %v1685
  %4095 = vmatprep.subr.bf16.mxu0 %v1694
  %4096 = vmatpush1.bf16.msra.mxu0 %v1693
  %4097 = vmatprep.subr.bf16.mxu0 %v1702
  %4098 = vmatpush1.bf16.msra.mxu0 %v1701
  %4099 = vmatprep.subr.bf16.mxu0 %v1710
  %4100 = vmatpush1.bf16.msra.mxu0 %v1709
  %4101 = vmatprep.subr.bf16.mxu0 %v1718
  %4102 = vmatpush1.bf16.msra.mxu0 %v1717
  %4103 = vmatprep.subr.bf16.mxu0 %v1726
  %4104 = vmatpush1.bf16.msra.mxu0 %v1725
  %4105 = vmatprep.subr.bf16.mxu0 %v1734
  %4106 = vmatpush1.bf16.msra.mxu0 %v1733
  %4107 = vmatprep.subr.bf16.mxu0 %v1742
  %4108 = vmatpush1.bf16.msra.mxu0 %v1741
  %4109 = vmatprep.subr.bf16.mxu0 %v1750
  %4110 = vmatpush1.bf16.msra.mxu0 %v1749
  %4111 = vmatprep.subr.bf16.mxu0 %v1758
  %4112 = vmatpush1.bf16.msra.mxu0 %v1757
  %4113 = vmatprep.subr.bf16.mxu0 %v1766
  %4114 = vmatpush1.bf16.msra.mxu0 %v1765
  %4115 = vmatprep.mubr.bf16.mxu0 %v4082
  %4116 = vmatmul.mubr.bf16.gmra.mrb[0].mxu0 %v4081
  %v4117 = vpop.f32.mrb[0].mxu0
  %v4118 = vadd.f32 0.0, %v4117
  %v4119 = vpop.f32.mrb[0].mxu0
  %v4120 = vadd.f32 0.0, %v4119
  %v4121 = vpop.f32.mrb[0].mxu0
  %v4122 = vpop.f32.mrb[0].mxu0
  %4123 = vdwg.mxu0
  %4124 = vmatprep.subr.bf16.mxu0 %v1648
  %4125 = vmatpush1.bf16.msra.mxu0 %v1647
  %4126 = vmatprep.subr.bf16.mxu0 %v1656
  %4127 = vmatpush1.bf16.msra.mxu0 %v1655
  %4128 = vmatprep.subr.bf16.mxu0 %v1664
  %4129 = vmatpush1.bf16.msra.mxu0 %v1663
  %4130 = vmatprep.subr.bf16.mxu0 %v1672
  %4131 = vmatpush1.bf16.msra.mxu0 %v1671
  %4132 = vmatprep.subr.bf16.mxu0 %v1680
  %4133 = vmatpush1.bf16.msra.mxu0 %v1679
  %4134 = vmatprep.subr.bf16.mxu0 %v1688
  %4135 = vmatpush1.bf16.msra.mxu0 %v1687
  %4136 = vmatprep.subr.bf16.mxu0 %v1696
  %4137 = vmatpush1.bf16.msra.mxu0 %v1695
  %4138 = vmatprep.subr.bf16.mxu0 %v1704
  %4139 = vmatpush1.bf16.msra.mxu0 %v1703
  %4140 = vmatprep.subr.bf16.mxu0 %v1712
  %4141 = vmatpush1.bf16.msra.mxu0 %v1711
  %4142 = vmatprep.subr.bf16.mxu0 %v1720
  %4143 = vmatpush1.bf16.msra.mxu0 %v1719
  %4144 = vmatprep.subr.bf16.mxu0 %v1728
  %4145 = vmatpush1.bf16.msra.mxu0 %v1727
  %4146 = vmatprep.subr.bf16.mxu0 %v1736
  %4147 = vmatpush1.bf16.msra.mxu0 %v1735
  %4148 = vmatprep.subr.bf16.mxu0 %v1744
  %4149 = vmatpush1.bf16.msra.mxu0 %v1743
  %4150 = vmatprep.subr.bf16.mxu0 %v1752
  %4151 = vmatpush1.bf16.msra.mxu0 %v1751
  %4152 = vmatprep.subr.bf16.mxu0 %v1760
  %4153 = vmatpush1.bf16.msra.mxu0 %v1759
  %4154 = vmatprep.subr.bf16.mxu0 %v1768
  %4155 = vmatpush1.bf16.msra.mxu0 %v1767
  %4156 = vmatprep.mubr.bf16.mxu0 %v4082
  %4157 = vmatmul.mubr.bf16.gmra.mrb[0].mxu0 %v4081
  %v4158 = vpop.f32.mrb[0].mxu0
  %v4159 = vadd.f32 0.0, %v4158
  %v4160 = vpop.f32.mrb[0].mxu0
  %v4161 = vadd.f32 0.0, %v4160
  %v4162 = vpop.f32.mrb[0].mxu0
  %v4163 = vpop.f32.mrb[0].mxu0
  %4164 = vdwg.mxu0
  %4165 = vmatprep.subr.bf16.mxu0 %v1650
  %4166 = vmatpush1.bf16.msra.mxu0 %v1649
  %4167 = vmatprep.subr.bf16.mxu0 %v1658
  %4168 = vmatpush1.bf16.msra.mxu0 %v1657
  %4169 = vmatprep.subr.bf16.mxu0 %v1666
  %4170 = vmatpush1.bf16.msra.mxu0 %v1665
  %4171 = vmatprep.subr.bf16.mxu0 %v1674
  %4172 = vmatpush1.bf16.msra.mxu0 %v1673
  %4173 = vmatprep.subr.bf16.mxu0 %v1682
  %4174 = vmatpush1.bf16.msra.mxu0 %v1681
  %4175 = vmatprep.subr.bf16.mxu0 %v1690
  %4176 = vmatpush1.bf16.msra.mxu0 %v1689
  %4177 = vmatprep.subr.bf16.mxu0 %v1698
  %4178 = vmatpush1.bf16.msra.mxu0 %v1697
  %4179 = vmatprep.subr.bf16.mxu0 %v1706
  %4180 = vmatpush1.bf16.msra.mxu0 %v1705
  %4181 = vmatprep.subr.bf16.mxu0 %v1714
  %4182 = vmatpush1.bf16.msra.mxu0 %v1713
  %4183 = vmatprep.subr.bf16.mxu0 %v1722
  %4184 = vmatpush1.bf16.msra.mxu0 %v1721
  %4185 = vmatprep.subr.bf16.mxu0 %v1730
  %4186 = vmatpush1.bf16.msra.mxu0 %v1729
  %4187 = vmatprep.subr.bf16.mxu0 %v1738
  %4188 = vmatpush1.bf16.msra.mxu0 %v1737
  %4189 = vmatprep.subr.bf16.mxu0 %v1746
  %4190 = vmatpush1.bf16.msra.mxu0 %v1745
  %4191 = vmatprep.subr.bf16.mxu0 %v1754
  %4192 = vmatpush1.bf16.msra.mxu0 %v1753
  %4193 = vmatprep.subr.bf16.mxu0 %v1762
  %4194 = vmatpush1.bf16.msra.mxu0 %v1761
  %4195 = vmatprep.subr.bf16.mxu0 %v1770
  %4196 = vmatpush1.bf16.msra.mxu0 %v1769
  %4197 = vmatprep.mubr.bf16.mxu0 %v4082
  %4198 = vmatmul.mubr.bf16.gmra.mrb[0].mxu0 %v4081
  %v4199 = vpop.f32.mrb[0].mxu0
  %v4200 = vadd.f32 0.0, %v4199
  %v4201 = vpop.f32.mrb[0].mxu0
  %v4202 = vadd.f32 0.0, %v4201
  %v4203 = vpop.f32.mrb[0].mxu0
  %v4204 = vpop.f32.mrb[0].mxu0
  %4205 = vdwg.mxu0
  %4206 = vmatprep.subr.bf16.mxu0 %v1652
  %4207 = vmatpush1.bf16.msra.mxu0 %v1651
  %4208 = vmatprep.subr.bf16.mxu0 %v1660
  %4209 = vmatpush1.bf16.msra.mxu0 %v1659
  %4210 = vmatprep.subr.bf16.mxu0 %v1668
  %4211 = vmatpush1.bf16.msra.mxu0 %v1667
  %4212 = vmatprep.subr.bf16.mxu0 %v1676
  %4213 = vmatpush1.bf16.msra.mxu0 %v1675
  %4214 = vmatprep.subr.bf16.mxu0 %v1684
  %4215 = vmatpush1.bf16.msra.mxu0 %v1683
  %4216 = vmatprep.subr.bf16.mxu0 %v1692
  %4217 = vmatpush1.bf16.msra.mxu0 %v1691
  %4218 = vmatprep.subr.bf16.mxu0 %v1700
  %4219 = vmatpush1.bf16.msra.mxu0 %v1699
  %4220 = vmatprep.subr.bf16.mxu0 %v1708
  %4221 = vmatpush1.bf16.msra.mxu0 %v1707
  %4222 = vmatprep.subr.bf16.mxu0 %v1716
  %4223 = vmatpush1.bf16.msra.mxu0 %v1715
  %4224 = vmatprep.subr.bf16.mxu0 %v1724
  %4225 = vmatpush1.bf16.msra.mxu0 %v1723
  %4226 = vmatprep.subr.bf16.mxu0 %v1732
  %4227 = vmatpush1.bf16.msra.mxu0 %v1731
  %4228 = vmatprep.subr.bf16.mxu0 %v1740
  %4229 = vmatpush1.bf16.msra.mxu0 %v1739
  %4230 = vmatprep.subr.bf16.mxu0 %v1748
  %4231 = vmatpush1.bf16.msra.mxu0 %v1747
  %4232 = vmatprep.subr.bf16.mxu0 %v1756
  %4233 = vmatpush1.bf16.msra.mxu0 %v1755
  %4234 = vmatprep.subr.bf16.mxu0 %v1764
  %4235 = vmatpush1.bf16.msra.mxu0 %v1763
  %4236 = vmatprep.subr.bf16.mxu0 %v1772
  %4237 = vmatpush1.bf16.msra.mxu0 %v1771
  %4238 = vmatprep.mubr.bf16.mxu0 %v4082
  %4239 = vmatmul.mubr.bf16.gmra.mrb[0].mxu0 %v4081
  %v4240 = vpop.f32.mrb[0].mxu0
  %v4241 = vadd.f32 0.0, %v4240
  %v4242 = vpop.f32.mrb[0].mxu0
  %v4243 = vadd.f32 0.0, %v4242
  %v4244 = vpop.f32.mrb[0].mxu0
  %v4245 = vpop.f32.mrb[0].mxu0
  %4246 = vdwg.mxu0
  %v4247 = vadd.f32 %v4073, %v4118
  %v4248 = vadd.f32 %v4074, %v4120
  %v4249 = vadd.f32 %v4075, %v4159
  %v4250 = vadd.f32 %v4076, %v4161
  %v4251 = vadd.f32 %v4077, %v4200
  %v4252 = vadd.f32 %v4078, %v4202
  %v4253 = vadd.f32 %v4079, %v4241
  %v4254 = vadd.f32 %v4080, %v4243
  %v4255 = vmul.f32 %v4247, 0.5
  %v4256 = vmul.f32 %v4248, 0.5
  %v4257 = vtanh.pop %v4255
  %v4258 = vtanh.pop %v4256
  %v4259 = vmul.f32 %v4257, 0.5
  %v4260 = vmul.f32 %v4258, 0.5
  %v4261 = vadd.f32 %v4259, 0.5
  %v4262 = vadd.f32 %v4260, 0.5
  %v4263 = vmul.f32 %v4249, 0.5
  %v4264 = vmul.f32 %v4250, 0.5
  %v4265 = vtanh.pop %v4263
  %v4266 = vtanh.pop %v4264
  %v4267 = vmul.f32 %v4265, 0.5
  %v4268 = vmul.f32 %v4266, 0.5
  %v4269 = vadd.f32 %v4267, 0.5
  %v4270 = vadd.f32 %v4268, 0.5
  %v4271 = vtanh.pop %v4251
  %v4272 = vtanh.pop %v4252
  %v4273 = vmul.f32 %v4253, 0.5
  %v4274 = vmul.f32 %v4254, 0.5
  %v4275 = vtanh.pop %v4273
  %v4276 = vtanh.pop %v4274
  %v4277 = vmul.f32 %v4275, 0.5
  %v4278 = vmul.f32 %v4276, 0.5
  %v4279 = vadd.f32 %v4277, 0.5
  %v4280 = vadd.f32 %v4278, 0.5
  %v4281 = vmul.f32 %v4269, %v4067
  %v4282 = vmul.f32 %v4270, %v4068
  %v4283 = vmul.f32 %v4261, %v4271
  %v4284 = vmul.f32 %v4262, %v4272
  %v4285 = vadd.f32 %v4281, %v4283
  %v4286 = vadd.f32 %v4282, %v4284
  %v4287 = vtanh.pop %v4285
  %v4288 = vtanh.pop %v4286
  %v4289 = vmul.f32 %v4279, %v4287
  %v4290 = vmul.f32 %v4280, %v4288
  %v4291 = vld [vmem:[#allocation2 + $0x2c0] sm:$0xff]
  %v4292 = vld [vmem:[#allocation2 + $0x2c8] sm:$0xff]
  %v4293 = vld [vmem:[#allocation2 + $0x2d0] sm:$0xff]
  %v4294 = vld [vmem:[#allocation2 + $0x2d8] sm:$0xff]
  %v4295 = vld [vmem:[#allocation2 + $0x2e0] sm:$0xff]
  %v4296 = vld [vmem:[#allocation2 + $0x2e8] sm:$0xff]
  %v4297 = vld [vmem:[#allocation2 + $0x2f0] sm:$0xff]
  %v4298 = vld [vmem:[#allocation2 + $0x2f8] sm:$0xff]
  %v4299 = vpack.c.bf16 %v4289, %v4289
  %v4300 = vpack.c.bf16 %v4290, %v4290
  %4301 = vmatprep.subr.bf16.mxu0 %v1646
  %4302 = vmatpush1.bf16.msra.mxu0 %v1645
  %4303 = vmatprep.subr.bf16.mxu0 %v1654
  %4304 = vmatpush1.bf16.msra.mxu0 %v1653
  %4305 = vmatprep.subr.bf16.mxu0 %v1662
  %4306 = vmatpush1.bf16.msra.mxu0 %v1661
  %4307 = vmatprep.subr.bf16.mxu0 %v1670
  %4308 = vmatpush1.bf16.msra.mxu0 %v1669
  %4309 = vmatprep.subr.bf16.mxu0 %v1678
  %4310 = vmatpush1.bf16.msra.mxu0 %v1677
  %4311 = vmatprep.subr.bf16.mxu0 %v1686
  %4312 = vmatpush1.bf16.msra.mxu0 %v1685
  %4313 = vmatprep.subr.bf16.mxu0 %v1694
  %4314 = vmatpush1.bf16.msra.mxu0 %v1693
  %4315 = vmatprep.subr.bf16.mxu0 %v1702
  %4316 = vmatpush1.bf16.msra.mxu0 %v1701
  %4317 = vmatprep.subr.bf16.mxu0 %v1710
  %4318 = vmatpush1.bf16.msra.mxu0 %v1709
  %4319 = vmatprep.subr.bf16.mxu0 %v1718
  %4320 = vmatpush1.bf16.msra.mxu0 %v1717
  %4321 = vmatprep.subr.bf16.mxu0 %v1726
  %4322 = vmatpush1.bf16.msra.mxu0 %v1725
  %4323 = vmatprep.subr.bf16.mxu0 %v1734
  %4324 = vmatpush1.bf16.msra.mxu0 %v1733
  %4325 = vmatprep.subr.bf16.mxu0 %v1742
  %4326 = vmatpush1.bf16.msra.mxu0 %v1741
  %4327 = vmatprep.subr.bf16.mxu0 %v1750
  %4328 = vmatpush1.bf16.msra.mxu0 %v1749
  %4329 = vmatprep.subr.bf16.mxu0 %v1758
  %4330 = vmatpush1.bf16.msra.mxu0 %v1757
  %4331 = vmatprep.subr.bf16.mxu0 %v1766
  %4332 = vmatpush1.bf16.msra.mxu0 %v1765
  %4333 = vmatprep.mubr.bf16.mxu0 %v4300
  %4334 = vmatmul.mubr.bf16.gmra.mrb[0].mxu0 %v4299
  %v4335 = vpop.f32.mrb[0].mxu0
  %v4336 = vadd.f32 0.0, %v4335
  %v4337 = vpop.f32.mrb[0].mxu0
  %v4338 = vadd.f32 0.0, %v4337
  %v4339 = vpop.f32.mrb[0].mxu0
  %v4340 = vpop.f32.mrb[0].mxu0
  %4341 = vdwg.mxu0
  %4342 = vmatprep.subr.bf16.mxu0 %v1648
  %4343 = vmatpush1.bf16.msra.mxu0 %v1647
  %4344 = vmatprep.subr.bf16.mxu0 %v1656
  %4345 = vmatpush1.bf16.msra.mxu0 %v1655
  %4346 = vmatprep.subr.bf16.mxu0 %v1664
  %4347 = vmatpush1.bf16.msra.mxu0 %v1663
  %4348 = vmatprep.subr.bf16.mxu0 %v1672
  %4349 = vmatpush1.bf16.msra.mxu0 %v1671
  %4350 = vmatprep.subr.bf16.mxu0 %v1680
  %4351 = vmatpush1.bf16.msra.mxu0 %v1679
  %4352 = vmatprep.subr.bf16.mxu0 %v1688
  %4353 = vmatpush1.bf16.msra.mxu0 %v1687
  %4354 = vmatprep.subr.bf16.mxu0 %v1696
  %4355 = vmatpush1.bf16.msra.mxu0 %v1695
  %4356 = vmatprep.subr.bf16.mxu0 %v1704
  %4357 = vmatpush1.bf16.msra.mxu0 %v1703
  %4358 = vmatprep.subr.bf16.mxu0 %v1712
  %4359 = vmatpush1.bf16.msra.mxu0 %v1711
  %4360 = vmatprep.subr.bf16.mxu0 %v1720
  %4361 = vmatpush1.bf16.msra.mxu0 %v1719
  %4362 = vmatprep.subr.bf16.mxu0 %v1728
  %4363 = vmatpush1.bf16.msra.mxu0 %v1727
  %4364 = vmatprep.subr.bf16.mxu0 %v1736
  %4365 = vmatpush1.bf16.msra.mxu0 %v1735
  %4366 = vmatprep.subr.bf16.mxu0 %v1744
  %4367 = vmatpush1.bf16.msra.mxu0 %v1743
  %4368 = vmatprep.subr.bf16.mxu0 %v1752
  %4369 = vmatpush1.bf16.msra.mxu0 %v1751
  %4370 = vmatprep.subr.bf16.mxu0 %v1760
  %4371 = vmatpush1.bf16.msra.mxu0 %v1759
  %4372 = vmatprep.subr.bf16.mxu0 %v1768
  %4373 = vmatpush1.bf16.msra.mxu0 %v1767
  %4374 = vmatprep.mubr.bf16.mxu0 %v4300
  %4375 = vmatmul.mubr.bf16.gmra.mrb[0].mxu0 %v4299
  %v4376 = vpop.f32.mrb[0].mxu0
  %v4377 = vadd.f32 0.0, %v4376
  %v4378 = vpop.f32.mrb[0].mxu0
  %v4379 = vadd.f32 0.0, %v4378
  %v4380 = vpop.f32.mrb[0].mxu0
  %v4381 = vpop.f32.mrb[0].mxu0
  %4382 = vdwg.mxu0
  %4383 = vmatprep.subr.bf16.mxu0 %v1650
  %4384 = vmatpush1.bf16.msra.mxu0 %v1649
  %4385 = vmatprep.subr.bf16.mxu0 %v1658
  %4386 = vmatpush1.bf16.msra.mxu0 %v1657
  %4387 = vmatprep.subr.bf16.mxu0 %v1666
  %4388 = vmatpush1.bf16.msra.mxu0 %v1665
  %4389 = vmatprep.subr.bf16.mxu0 %v1674
  %4390 = vmatpush1.bf16.msra.mxu0 %v1673
  %4391 = vmatprep.subr.bf16.mxu0 %v1682
  %4392 = vmatpush1.bf16.msra.mxu0 %v1681
  %4393 = vmatprep.subr.bf16.mxu0 %v1690
  %4394 = vmatpush1.bf16.msra.mxu0 %v1689
  %4395 = vmatprep.subr.bf16.mxu0 %v1698
  %4396 = vmatpush1.bf16.msra.mxu0 %v1697
  %4397 = vmatprep.subr.bf16.mxu0 %v1706
  %4398 = vmatpush1.bf16.msra.mxu0 %v1705
  %4399 = vmatprep.subr.bf16.mxu0 %v1714
  %4400 = vmatpush1.bf16.msra.mxu0 %v1713
  %4401 = vmatprep.subr.bf16.mxu0 %v1722
  %4402 = vmatpush1.bf16.msra.mxu0 %v1721
  %4403 = vmatprep.subr.bf16.mxu0 %v1730
  %4404 = vmatpush1.bf16.msra.mxu0 %v1729
  %4405 = vmatprep.subr.bf16.mxu0 %v1738
  %4406 = vmatpush1.bf16.msra.mxu0 %v1737
  %4407 = vmatprep.subr.bf16.mxu0 %v1746
  %4408 = vmatpush1.bf16.msra.mxu0 %v1745
  %4409 = vmatprep.subr.bf16.mxu0 %v1754
  %4410 = vmatpush1.bf16.msra.mxu0 %v1753
  %4411 = vmatprep.subr.bf16.mxu0 %v1762
  %4412 = vmatpush1.bf16.msra.mxu0 %v1761
  %4413 = vmatprep.subr.bf16.mxu0 %v1770
  %4414 = vmatpush1.bf16.msra.mxu0 %v1769
  %4415 = vmatprep.mubr.bf16.mxu0 %v4300
  %4416 = vmatmul.mubr.bf16.gmra.mrb[0].mxu0 %v4299
  %v4417 = vpop.f32.mrb[0].mxu0
  %v4418 = vadd.f32 0.0, %v4417
  %v4419 = vpop.f32.mrb[0].mxu0
  %v4420 = vadd.f32 0.0, %v4419
  %v4421 = vpop.f32.mrb[0].mxu0
  %v4422 = vpop.f32.mrb[0].mxu0
  %4423 = vdwg.mxu0
  %4424 = vmatprep.subr.bf16.mxu0 %v1652
  %4425 = vmatpush1.bf16.msra.mxu0 %v1651
  %4426 = vmatprep.subr.bf16.mxu0 %v1660
  %4427 = vmatpush1.bf16.msra.mxu0 %v1659
  %4428 = vmatprep.subr.bf16.mxu0 %v1668
  %4429 = vmatpush1.bf16.msra.mxu0 %v1667
  %4430 = vmatprep.subr.bf16.mxu0 %v1676
  %4431 = vmatpush1.bf16.msra.mxu0 %v1675
  %4432 = vmatprep.subr.bf16.mxu0 %v1684
  %4433 = vmatpush1.bf16.msra.mxu0 %v1683
  %4434 = vmatprep.subr.bf16.mxu0 %v1692
  %4435 = vmatpush1.bf16.msra.mxu0 %v1691
  %4436 = vmatprep.subr.bf16.mxu0 %v1700
  %4437 = vmatpush1.bf16.msra.mxu0 %v1699
  %4438 = vmatprep.subr.bf16.mxu0 %v1708
  %4439 = vmatpush1.bf16.msra.mxu0 %v1707
  %4440 = vmatprep.subr.bf16.mxu0 %v1716
  %4441 = vmatpush1.bf16.msra.mxu0 %v1715
  %4442 = vmatprep.subr.bf16.mxu0 %v1724
  %4443 = vmatpush1.bf16.msra.mxu0 %v1723
  %4444 = vmatprep.subr.bf16.mxu0 %v1732
  %4445 = vmatpush1.bf16.msra.mxu0 %v1731
  %4446 = vmatprep.subr.bf16.mxu0 %v1740
  %4447 = vmatpush1.bf16.msra.mxu0 %v1739
  %4448 = vmatprep.subr.bf16.mxu0 %v1748
  %4449 = vmatpush1.bf16.msra.mxu0 %v1747
  %4450 = vmatprep.subr.bf16.mxu0 %v1756
  %4451 = vmatpush1.bf16.msra.mxu0 %v1755
  %4452 = vmatprep.subr.bf16.mxu0 %v1764
  %4453 = vmatpush1.bf16.msra.mxu0 %v1763
  %4454 = vmatprep.subr.bf16.mxu0 %v1772
  %4455 = vmatpush1.bf16.msra.mxu0 %v1771
  %4456 = vmatprep.mubr.bf16.mxu0 %v4300
  %4457 = vmatmul.mubr.bf16.gmra.mrb[0].mxu0 %v4299
  %v4458 = vpop.f32.mrb[0].mxu0
  %v4459 = vadd.f32 0.0, %v4458
  %v4460 = vpop.f32.mrb[0].mxu0
  %v4461 = vadd.f32 0.0, %v4460
  %v4462 = vpop.f32.mrb[0].mxu0
  %v4463 = vpop.f32.mrb[0].mxu0
  %4464 = vdwg.mxu0
  %v4465 = vadd.f32 %v4291, %v4336
  %v4466 = vadd.f32 %v4292, %v4338
  %v4467 = vadd.f32 %v4293, %v4377
  %v4468 = vadd.f32 %v4294, %v4379
  %v4469 = vadd.f32 %v4295, %v4418
  %v4470 = vadd.f32 %v4296, %v4420
  %v4471 = vadd.f32 %v4297, %v4459
  %v4472 = vadd.f32 %v4298, %v4461
  %v4473 = vmul.f32 %v4465, 0.5
  %v4474 = vmul.f32 %v4466, 0.5
  %v4475 = vtanh.pop %v4473
  %v4476 = vtanh.pop %v4474
  %v4477 = vmul.f32 %v4475, 0.5
  %v4478 = vmul.f32 %v4476, 0.5
  %v4479 = vadd.f32 %v4477, 0.5
  %v4480 = vadd.f32 %v4478, 0.5
  %v4481 = vmul.f32 %v4467, 0.5
  %v4482 = vmul.f32 %v4468, 0.5
  %v4483 = vtanh.pop %v4481
  %v4484 = vtanh.pop %v4482
  %v4485 = vmul.f32 %v4483, 0.5
  %v4486 = vmul.f32 %v4484, 0.5
  %v4487 = vadd.f32 %v4485, 0.5
  %v4488 = vadd.f32 %v4486, 0.5
  %v4489 = vtanh.pop %v4469
  %v4490 = vtanh.pop %v4470
  %v4491 = vmul.f32 %v4471, 0.5
  %v4492 = vmul.f32 %v4472, 0.5
  %v4493 = vtanh.pop %v4491
  %v4494 = vtanh.pop %v4492
  %v4495 = vmul.f32 %v4493, 0.5
  %v4496 = vmul.f32 %v4494, 0.5
  %v4497 = vadd.f32 %v4495, 0.5
  %v4498 = vadd.f32 %v4496, 0.5
  %v4499 = vmul.f32 %v4487, %v4285
  %v4500 = vmul.f32 %v4488, %v4286
  %v4501 = vmul.f32 %v4479, %v4489
  %v4502 = vmul.f32 %v4480, %v4490
  %v4503 = vadd.f32 %v4499, %v4501
  %v4504 = vadd.f32 %v4500, %v4502
  %v4505 = vtanh.pop %v4503
  %v4506 = vtanh.pop %v4504
  %v4507 = vmul.f32 %v4497, %v4505
  %v4508 = vmul.f32 %v4498, %v4506
  %v4509 = vld [vmem:[#allocation2 + $0x300] sm:$0xff]
  %v4510 = vld [vmem:[#allocation2 + $0x308] sm:$0xff]
  %v4511 = vld [vmem:[#allocation2 + $0x310] sm:$0xff]
  %v4512 = vld [vmem:[#allocation2 + $0x318] sm:$0xff]
  %v4513 = vld [vmem:[#allocation2 + $0x320] sm:$0xff]
  %v4514 = vld [vmem:[#allocation2 + $0x328] sm:$0xff]
  %v4515 = vld [vmem:[#allocation2 + $0x330] sm:$0xff]
  %v4516 = vld [vmem:[#allocation2 + $0x338] sm:$0xff]
  %v4517 = vpack.c.bf16 %v4507, %v4507
  %v4518 = vpack.c.bf16 %v4508, %v4508
  %4519 = vmatprep.subr.bf16.mxu0 %v1646
  %4520 = vmatpush1.bf16.msra.mxu0 %v1645
  %4521 = vmatprep.subr.bf16.mxu0 %v1654
  %4522 = vmatpush1.bf16.msra.mxu0 %v1653
  %4523 = vmatprep.subr.bf16.mxu0 %v1662
  %4524 = vmatpush1.bf16.msra.mxu0 %v1661
  %4525 = vmatprep.subr.bf16.mxu0 %v1670
  %4526 = vmatpush1.bf16.msra.mxu0 %v1669
  %4527 = vmatprep.subr.bf16.mxu0 %v1678
  %4528 = vmatpush1.bf16.msra.mxu0 %v1677
  %4529 = vmatprep.subr.bf16.mxu0 %v1686
  %4530 = vmatpush1.bf16.msra.mxu0 %v1685
  %4531 = vmatprep.subr.bf16.mxu0 %v1694
  %4532 = vmatpush1.bf16.msra.mxu0 %v1693
  %4533 = vmatprep.subr.bf16.mxu0 %v1702
  %4534 = vmatpush1.bf16.msra.mxu0 %v1701
  %4535 = vmatprep.subr.bf16.mxu0 %v1710
  %4536 = vmatpush1.bf16.msra.mxu0 %v1709
  %4537 = vmatprep.subr.bf16.mxu0 %v1718
  %4538 = vmatpush1.bf16.msra.mxu0 %v1717
  %4539 = vmatprep.subr.bf16.mxu0 %v1726
  %4540 = vmatpush1.bf16.msra.mxu0 %v1725
  %4541 = vmatprep.subr.bf16.mxu0 %v1734
  %4542 = vmatpush1.bf16.msra.mxu0 %v1733
  %4543 = vmatprep.subr.bf16.mxu0 %v1742
  %4544 = vmatpush1.bf16.msra.mxu0 %v1741
  %4545 = vmatprep.subr.bf16.mxu0 %v1750
  %4546 = vmatpush1.bf16.msra.mxu0 %v1749
  %4547 = vmatprep.subr.bf16.mxu0 %v1758
  %4548 = vmatpush1.bf16.msra.mxu0 %v1757
  %4549 = vmatprep.subr.bf16.mxu0 %v1766
  %4550 = vmatpush1.bf16.msra.mxu0 %v1765
  %4551 = vmatprep.mubr.bf16.mxu0 %v4518
  %4552 = vmatmul.mubr.bf16.gmra.mrb[0].mxu0 %v4517
  %v4553 = vpop.f32.mrb[0].mxu0
  %v4554 = vadd.f32 0.0, %v4553
  %v4555 = vpop.f32.mrb[0].mxu0
  %v4556 = vadd.f32 0.0, %v4555
  %v4557 = vpop.f32.mrb[0].mxu0
  %v4558 = vpop.f32.mrb[0].mxu0
  %4559 = vdwg.mxu0
  %4560 = vmatprep.subr.bf16.mxu0 %v1648
  %4561 = vmatpush1.bf16.msra.mxu0 %v1647
  %4562 = vmatprep.subr.bf16.mxu0 %v1656
  %4563 = vmatpush1.bf16.msra.mxu0 %v1655
  %4564 = vmatprep.subr.bf16.mxu0 %v1664
  %4565 = vmatpush1.bf16.msra.mxu0 %v1663
  %4566 = vmatprep.subr.bf16.mxu0 %v1672
  %4567 = vmatpush1.bf16.msra.mxu0 %v1671
  %4568 = vmatprep.subr.bf16.mxu0 %v1680
  %4569 = vmatpush1.bf16.msra.mxu0 %v1679
  %4570 = vmatprep.subr.bf16.mxu0 %v1688
  %4571 = vmatpush1.bf16.msra.mxu0 %v1687
  %4572 = vmatprep.subr.bf16.mxu0 %v1696
  %4573 = vmatpush1.bf16.msra.mxu0 %v1695
  %4574 = vmatprep.subr.bf16.mxu0 %v1704
  %4575 = vmatpush1.bf16.msra.mxu0 %v1703
  %4576 = vmatprep.subr.bf16.mxu0 %v1712
  %4577 = vmatpush1.bf16.msra.mxu0 %v1711
  %4578 = vmatprep.subr.bf16.mxu0 %v1720
  %4579 = vmatpush1.bf16.msra.mxu0 %v1719
  %4580 = vmatprep.subr.bf16.mxu0 %v1728
  %4581 = vmatpush1.bf16.msra.mxu0 %v1727
  %4582 = vmatprep.subr.bf16.mxu0 %v1736
  %4583 = vmatpush1.bf16.msra.mxu0 %v1735
  %4584 = vmatprep.subr.bf16.mxu0 %v1744
  %4585 = vmatpush1.bf16.msra.mxu0 %v1743
  %4586 = vmatprep.subr.bf16.mxu0 %v1752
  %4587 = vmatpush1.bf16.msra.mxu0 %v1751
  %4588 = vmatprep.subr.bf16.mxu0 %v1760
  %4589 = vmatpush1.bf16.msra.mxu0 %v1759
  %4590 = vmatprep.subr.bf16.mxu0 %v1768
  %4591 = vmatpush1.bf16.msra.mxu0 %v1767
  %4592 = vmatprep.mubr.bf16.mxu0 %v4518
  %4593 = vmatmul.mubr.bf16.gmra.mrb[0].mxu0 %v4517
  %v4594 = vpop.f32.mrb[0].mxu0
  %v4595 = vadd.f32 0.0, %v4594
  %v4596 = vpop.f32.mrb[0].mxu0
  %v4597 = vadd.f32 0.0, %v4596
  %v4598 = vpop.f32.mrb[0].mxu0
  %v4599 = vpop.f32.mrb[0].mxu0
  %4600 = vdwg.mxu0
  %4601 = vmatprep.subr.bf16.mxu0 %v1650
  %4602 = vmatpush1.bf16.msra.mxu0 %v1649
  %4603 = vmatprep.subr.bf16.mxu0 %v1658
  %4604 = vmatpush1.bf16.msra.mxu0 %v1657
  %4605 = vmatprep.subr.bf16.mxu0 %v1666
  %4606 = vmatpush1.bf16.msra.mxu0 %v1665
  %4607 = vmatprep.subr.bf16.mxu0 %v1674
  %4608 = vmatpush1.bf16.msra.mxu0 %v1673
  %4609 = vmatprep.subr.bf16.mxu0 %v1682
  %4610 = vmatpush1.bf16.msra.mxu0 %v1681
  %4611 = vmatprep.subr.bf16.mxu0 %v1690
  %4612 = vmatpush1.bf16.msra.mxu0 %v1689
  %4613 = vmatprep.subr.bf16.mxu0 %v1698
  %4614 = vmatpush1.bf16.msra.mxu0 %v1697
  %4615 = vmatprep.subr.bf16.mxu0 %v1706
  %4616 = vmatpush1.bf16.msra.mxu0 %v1705
  %4617 = vmatprep.subr.bf16.mxu0 %v1714
  %4618 = vmatpush1.bf16.msra.mxu0 %v1713
  %4619 = vmatprep.subr.bf16.mxu0 %v1722
  %4620 = vmatpush1.bf16.msra.mxu0 %v1721
  %4621 = vmatprep.subr.bf16.mxu0 %v1730
  %4622 = vmatpush1.bf16.msra.mxu0 %v1729
  %4623 = vmatprep.subr.bf16.mxu0 %v1738
  %4624 = vmatpush1.bf16.msra.mxu0 %v1737
  %4625 = vmatprep.subr.bf16.mxu0 %v1746
  %4626 = vmatpush1.bf16.msra.mxu0 %v1745
  %4627 = vmatprep.subr.bf16.mxu0 %v1754
  %4628 = vmatpush1.bf16.msra.mxu0 %v1753
  %4629 = vmatprep.subr.bf16.mxu0 %v1762
  %4630 = vmatpush1.bf16.msra.mxu0 %v1761
  %4631 = vmatprep.subr.bf16.mxu0 %v1770
  %4632 = vmatpush1.bf16.msra.mxu0 %v1769
  %4633 = vmatprep.mubr.bf16.mxu0 %v4518
  %4634 = vmatmul.mubr.bf16.gmra.mrb[0].mxu0 %v4517
  %v4635 = vpop.f32.mrb[0].mxu0
  %v4636 = vadd.f32 0.0, %v4635
  %v4637 = vpop.f32.mrb[0].mxu0
  %v4638 = vadd.f32 0.0, %v4637
  %v4639 = vpop.f32.mrb[0].mxu0
  %v4640 = vpop.f32.mrb[0].mxu0
  %4641 = vdwg.mxu0
  %4642 = vmatprep.subr.bf16.mxu0 %v1652
  %4643 = vmatpush1.bf16.msra.mxu0 %v1651
  %4644 = vmatprep.subr.bf16.mxu0 %v1660
  %4645 = vmatpush1.bf16.msra.mxu0 %v1659
  %4646 = vmatprep.subr.bf16.mxu0 %v1668
  %4647 = vmatpush1.bf16.msra.mxu0 %v1667
  %4648 = vmatprep.subr.bf16.mxu0 %v1676
  %4649 = vmatpush1.bf16.msra.mxu0 %v1675
  %4650 = vmatprep.subr.bf16.mxu0 %v1684
  %4651 = vmatpush1.bf16.msra.mxu0 %v1683
  %4652 = vmatprep.subr.bf16.mxu0 %v1692
  %4653 = vmatpush1.bf16.msra.mxu0 %v1691
  %4654 = vmatprep.subr.bf16.mxu0 %v1700
  %4655 = vmatpush1.bf16.msra.mxu0 %v1699
  %4656 = vmatprep.subr.bf16.mxu0 %v1708
  %4657 = vmatpush1.bf16.msra.mxu0 %v1707
  %4658 = vmatprep.subr.bf16.mxu0 %v1716
  %4659 = vmatpush1.bf16.msra.mxu0 %v1715
  %4660 = vmatprep.subr.bf16.mxu0 %v1724
  %4661 = vmatpush1.bf16.msra.mxu0 %v1723
  %4662 = vmatprep.subr.bf16.mxu0 %v1732
  %4663 = vmatpush1.bf16.msra.mxu0 %v1731
  %4664 = vmatprep.subr.bf16.mxu0 %v1740
  %4665 = vmatpush1.bf16.msra.mxu0 %v1739
  %4666 = vmatprep.subr.bf16.mxu0 %v1748
  %4667 = vmatpush1.bf16.msra.mxu0 %v1747
  %4668 = vmatprep.subr.bf16.mxu0 %v1756
  %4669 = vmatpush1.bf16.msra.mxu0 %v1755
  %4670 = vmatprep.subr.bf16.mxu0 %v1764
  %4671 = vmatpush1.bf16.msra.mxu0 %v1763
  %4672 = vmatprep.subr.bf16.mxu0 %v1772
  %4673 = vmatpush1.bf16.msra.mxu0 %v1771
  %4674 = vmatprep.mubr.bf16.mxu0 %v4518
  %4675 = vmatmul.mubr.bf16.gmra.mrb[0].mxu0 %v4517
  %v4676 = vpop.f32.mrb[0].mxu0
  %v4677 = vadd.f32 0.0, %v4676
  %v4678 = vpop.f32.mrb[0].mxu0
  %v4679 = vadd.f32 0.0, %v4678
  %v4680 = vpop.f32.mrb[0].mxu0
  %v4681 = vpop.f32.mrb[0].mxu0
  %4682 = vdwg.mxu0
  %v4683 = vadd.f32 %v4509, %v4554
  %v4684 = vadd.f32 %v4510, %v4556
  %v4685 = vadd.f32 %v4511, %v4595
  %v4686 = vadd.f32 %v4512, %v4597
  %v4687 = vadd.f32 %v4513, %v4636
  %v4688 = vadd.f32 %v4514, %v4638
  %v4689 = vadd.f32 %v4515, %v4677
  %v4690 = vadd.f32 %v4516, %v4679
  %v4691 = vmul.f32 %v4683, 0.5
  %v4692 = vmul.f32 %v4684, 0.5
  %v4693 = vtanh.pop %v4691
  %v4694 = vtanh.pop %v4692
  %v4695 = vmul.f32 %v4693, 0.5
  %v4696 = vmul.f32 %v4694, 0.5
  %v4697 = vadd.f32 %v4695, 0.5
  %v4698 = vadd.f32 %v4696, 0.5
  %v4699 = vmul.f32 %v4685, 0.5
  %v4700 = vmul.f32 %v4686, 0.5
  %v4701 = vtanh.pop %v4699
  %v4702 = vtanh.pop %v4700
  %v4703 = vmul.f32 %v4701, 0.5
  %v4704 = vmul.f32 %v4702, 0.5
  %v4705 = vadd.f32 %v4703, 0.5
  %v4706 = vadd.f32 %v4704, 0.5
  %v4707 = vtanh.pop %v4687
  %v4708 = vtanh.pop %v4688
  %v4709 = vmul.f32 %v4689, 0.5
  %v4710 = vmul.f32 %v4690, 0.5
  %v4711 = vtanh.pop %v4709
  %v4712 = vtanh.pop %v4710
  %v4713 = vmul.f32 %v4711, 0.5
  %v4714 = vmul.f32 %v4712, 0.5
  %v4715 = vadd.f32 %v4713, 0.5
  %v4716 = vadd.f32 %v4714, 0.5
  %v4717 = vmul.f32 %v4705, %v4503
  %v4718 = vmul.f32 %v4706, %v4504
  %v4719 = vmul.f32 %v4697, %v4707
  %v4720 = vmul.f32 %v4698, %v4708
  %v4721 = vadd.f32 %v4717, %v4719
  %v4722 = vadd.f32 %v4718, %v4720
  %v4723 = vtanh.pop %v4721
  %v4724 = vtanh.pop %v4722
  %v4725 = vmul.f32 %v4715, %v4723
  %v4726 = vmul.f32 %v4716, %v4724
  %v4727 = vld [vmem:[#allocation2 + $0x340] sm:$0xff]
  %v4728 = vld [vmem:[#allocation2 + $0x348] sm:$0xff]
  %v4729 = vld [vmem:[#allocation2 + $0x350] sm:$0xff]
  %v4730 = vld [vmem:[#allocation2 + $0x358] sm:$0xff]
  %v4731 = vld [vmem:[#allocation2 + $0x360] sm:$0xff]
  %v4732 = vld [vmem:[#allocation2 + $0x368] sm:$0xff]
  %v4733 = vld [vmem:[#allocation2 + $0x370] sm:$0xff]
  %v4734 = vld [vmem:[#allocation2 + $0x378] sm:$0xff]
  %v4735 = vpack.c.bf16 %v4725, %v4725
  %v4736 = vpack.c.bf16 %v4726, %v4726
  %4737 = vmatprep.subr.bf16.mxu0 %v1646
  %4738 = vmatpush1.bf16.msra.mxu0 %v1645
  %4739 = vmatprep.subr.bf16.mxu0 %v1654
  %4740 = vmatpush1.bf16.msra.mxu0 %v1653
  %4741 = vmatprep.subr.bf16.mxu0 %v1662
  %4742 = vmatpush1.bf16.msra.mxu0 %v1661
  %4743 = vmatprep.subr.bf16.mxu0 %v1670
  %4744 = vmatpush1.bf16.msra.mxu0 %v1669
  %4745 = vmatprep.subr.bf16.mxu0 %v1678
  %4746 = vmatpush1.bf16.msra.mxu0 %v1677
  %4747 = vmatprep.subr.bf16.mxu0 %v1686
  %4748 = vmatpush1.bf16.msra.mxu0 %v1685
  %4749 = vmatprep.subr.bf16.mxu0 %v1694
  %4750 = vmatpush1.bf16.msra.mxu0 %v1693
  %4751 = vmatprep.subr.bf16.mxu0 %v1702
  %4752 = vmatpush1.bf16.msra.mxu0 %v1701
  %4753 = vmatprep.subr.bf16.mxu0 %v1710
  %4754 = vmatpush1.bf16.msra.mxu0 %v1709
  %4755 = vmatprep.subr.bf16.mxu0 %v1718
  %4756 = vmatpush1.bf16.msra.mxu0 %v1717
  %4757 = vmatprep.subr.bf16.mxu0 %v1726
  %4758 = vmatpush1.bf16.msra.mxu0 %v1725
  %4759 = vmatprep.subr.bf16.mxu0 %v1734
  %4760 = vmatpush1.bf16.msra.mxu0 %v1733
  %4761 = vmatprep.subr.bf16.mxu0 %v1742
  %4762 = vmatpush1.bf16.msra.mxu0 %v1741
  %4763 = vmatprep.subr.bf16.mxu0 %v1750
  %4764 = vmatpush1.bf16.msra.mxu0 %v1749
  %4765 = vmatprep.subr.bf16.mxu0 %v1758
  %4766 = vmatpush1.bf16.msra.mxu0 %v1757
  %4767 = vmatprep.subr.bf16.mxu0 %v1766
  %4768 = vmatpush1.bf16.msra.mxu0 %v1765
  %4769 = vmatprep.mubr.bf16.mxu0 %v4736
  %4770 = vmatmul.mubr.bf16.gmra.mrb[0].mxu0 %v4735
  %v4771 = vpop.f32.mrb[0].mxu0
  %v4772 = vadd.f32 0.0, %v4771
  %v4773 = vpop.f32.mrb[0].mxu0
  %v4774 = vadd.f32 0.0, %v4773
  %v4775 = vpop.f32.mrb[0].mxu0
  %v4776 = vpop.f32.mrb[0].mxu0
  %4777 = vdwg.mxu0
  %4778 = vmatprep.subr.bf16.mxu0 %v1648
  %4779 = vmatpush1.bf16.msra.mxu0 %v1647
  %4780 = vmatprep.subr.bf16.mxu0 %v1656
  %4781 = vmatpush1.bf16.msra.mxu0 %v1655
  %4782 = vmatprep.subr.bf16.mxu0 %v1664
  %4783 = vmatpush1.bf16.msra.mxu0 %v1663
  %4784 = vmatprep.subr.bf16.mxu0 %v1672
  %4785 = vmatpush1.bf16.msra.mxu0 %v1671
  %4786 = vmatprep.subr.bf16.mxu0 %v1680
  %4787 = vmatpush1.bf16.msra.mxu0 %v1679
  %4788 = vmatprep.subr.bf16.mxu0 %v1688
  %4789 = vmatpush1.bf16.msra.mxu0 %v1687
  %4790 = vmatprep.subr.bf16.mxu0 %v1696
  %4791 = vmatpush1.bf16.msra.mxu0 %v1695
  %4792 = vmatprep.subr.bf16.mxu0 %v1704
  %4793 = vmatpush1.bf16.msra.mxu0 %v1703
  %4794 = vmatprep.subr.bf16.mxu0 %v1712
  %4795 = vmatpush1.bf16.msra.mxu0 %v1711
  %4796 = vmatprep.subr.bf16.mxu0 %v1720
  %4797 = vmatpush1.bf16.msra.mxu0 %v1719
  %4798 = vmatprep.subr.bf16.mxu0 %v1728
  %4799 = vmatpush1.bf16.msra.mxu0 %v1727
  %4800 = vmatprep.subr.bf16.mxu0 %v1736
  %4801 = vmatpush1.bf16.msra.mxu0 %v1735
  %4802 = vmatprep.subr.bf16.mxu0 %v1744
  %4803 = vmatpush1.bf16.msra.mxu0 %v1743
  %4804 = vmatprep.subr.bf16.mxu0 %v1752
  %4805 = vmatpush1.bf16.msra.mxu0 %v1751
  %4806 = vmatprep.subr.bf16.mxu0 %v1760
  %4807 = vmatpush1.bf16.msra.mxu0 %v1759
  %4808 = vmatprep.subr.bf16.mxu0 %v1768
  %4809 = vmatpush1.bf16.msra.mxu0 %v1767
  %4810 = vmatprep.mubr.bf16.mxu0 %v4736
  %4811 = vmatmul.mubr.bf16.gmra.mrb[0].mxu0 %v4735
  %v4812 = vpop.f32.mrb[0].mxu0
  %v4813 = vadd.f32 0.0, %v4812
  %v4814 = vpop.f32.mrb[0].mxu0
  %v4815 = vadd.f32 0.0, %v4814
  %v4816 = vpop.f32.mrb[0].mxu0
  %v4817 = vpop.f32.mrb[0].mxu0
  %4818 = vdwg.mxu0
  %4819 = vmatprep.subr.bf16.mxu0 %v1650
  %4820 = vmatpush1.bf16.msra.mxu0 %v1649
  %4821 = vmatprep.subr.bf16.mxu0 %v1658
  %4822 = vmatpush1.bf16.msra.mxu0 %v1657
  %4823 = vmatprep.subr.bf16.mxu0 %v1666
  %4824 = vmatpush1.bf16.msra.mxu0 %v1665
  %4825 = vmatprep.subr.bf16.mxu0 %v1674
  %4826 = vmatpush1.bf16.msra.mxu0 %v1673
  %4827 = vmatprep.subr.bf16.mxu0 %v1682
  %4828 = vmatpush1.bf16.msra.mxu0 %v1681
  %4829 = vmatprep.subr.bf16.mxu0 %v1690
  %4830 = vmatpush1.bf16.msra.mxu0 %v1689
  %4831 = vmatprep.subr.bf16.mxu0 %v1698
  %4832 = vmatpush1.bf16.msra.mxu0 %v1697
  %4833 = vmatprep.subr.bf16.mxu0 %v1706
  %4834 = vmatpush1.bf16.msra.mxu0 %v1705
  %4835 = vmatprep.subr.bf16.mxu0 %v1714
  %4836 = vmatpush1.bf16.msra.mxu0 %v1713
  %4837 = vmatprep.subr.bf16.mxu0 %v1722
  %4838 = vmatpush1.bf16.msra.mxu0 %v1721
  %4839 = vmatprep.subr.bf16.mxu0 %v1730
  %4840 = vmatpush1.bf16.msra.mxu0 %v1729
  %4841 = vmatprep.subr.bf16.mxu0 %v1738
  %4842 = vmatpush1.bf16.msra.mxu0 %v1737
  %4843 = vmatprep.subr.bf16.mxu0 %v1746
  %4844 = vmatpush1.bf16.msra.mxu0 %v1745
  %4845 = vmatprep.subr.bf16.mxu0 %v1754
  %4846 = vmatpush1.bf16.msra.mxu0 %v1753
  %4847 = vmatprep.subr.bf16.mxu0 %v1762
  %4848 = vmatpush1.bf16.msra.mxu0 %v1761
  %4849 = vmatprep.subr.bf16.mxu0 %v1770
  %4850 = vmatpush1.bf16.msra.mxu0 %v1769
  %4851 = vmatprep.mubr.bf16.mxu0 %v4736
  %4852 = vmatmul.mubr.bf16.gmra.mrb[0].mxu0 %v4735
  %v4853 = vpop.f32.mrb[0].mxu0
  %v4854 = vadd.f32 0.0, %v4853
  %v4855 = vpop.f32.mrb[0].mxu0
  %v4856 = vadd.f32 0.0, %v4855
  %v4857 = vpop.f32.mrb[0].mxu0
  %v4858 = vpop.f32.mrb[0].mxu0
  %4859 = vdwg.mxu0
  %4860 = vmatprep.subr.bf16.mxu0 %v1652
  %4861 = vmatpush1.bf16.msra.mxu0 %v1651
  %4862 = vmatprep.subr.bf16.mxu0 %v1660
  %4863 = vmatpush1.bf16.msra.mxu0 %v1659
  %4864 = vmatprep.subr.bf16.mxu0 %v1668
  %4865 = vmatpush1.bf16.msra.mxu0 %v1667
  %4866 = vmatprep.subr.bf16.mxu0 %v1676
  %4867 = vmatpush1.bf16.msra.mxu0 %v1675
  %4868 = vmatprep.subr.bf16.mxu0 %v1684
  %4869 = vmatpush1.bf16.msra.mxu0 %v1683
  %4870 = vmatprep.subr.bf16.mxu0 %v1692
  %4871 = vmatpush1.bf16.msra.mxu0 %v1691
  %4872 = vmatprep.subr.bf16.mxu0 %v1700
  %4873 = vmatpush1.bf16.msra.mxu0 %v1699
  %4874 = vmatprep.subr.bf16.mxu0 %v1708
  %4875 = vmatpush1.bf16.msra.mxu0 %v1707
  %4876 = vmatprep.subr.bf16.mxu0 %v1716
  %4877 = vmatpush1.bf16.msra.mxu0 %v1715
  %4878 = vmatprep.subr.bf16.mxu0 %v1724
  %4879 = vmatpush1.bf16.msra.mxu0 %v1723
  %4880 = vmatprep.subr.bf16.mxu0 %v1732
  %4881 = vmatpush1.bf16.msra.mxu0 %v1731
  %4882 = vmatprep.subr.bf16.mxu0 %v1740
  %4883 = vmatpush1.bf16.msra.mxu0 %v1739
  %4884 = vmatprep.subr.bf16.mxu0 %v1748
  %4885 = vmatpush1.bf16.msra.mxu0 %v1747
  %4886 = vmatprep.subr.bf16.mxu0 %v1756
  %4887 = vmatpush1.bf16.msra.mxu0 %v1755
  %4888 = vmatprep.subr.bf16.mxu0 %v1764
  %4889 = vmatpush1.bf16.msra.mxu0 %v1763
  %4890 = vmatprep.subr.bf16.mxu0 %v1772
  %4891 = vmatpush1.bf16.msra.mxu0 %v1771
  %4892 = vmatprep.mubr.bf16.mxu0 %v4736
  %4893 = vmatmul.mubr.bf16.gmra.mrb[0].mxu0 %v4735
  %v4894 = vpop.f32.mrb[0].mxu0
  %v4895 = vadd.f32 0.0, %v4894
  %v4896 = vpop.f32.mrb[0].mxu0
  %v4897 = vadd.f32 0.0, %v4896
  %v4898 = vpop.f32.mrb[0].mxu0
  %v4899 = vpop.f32.mrb[0].mxu0
  %4900 = vdwg.mxu0
  %v4901 = vadd.f32 %v4727, %v4772
  %v4902 = vadd.f32 %v4728, %v4774
  %v4903 = vadd.f32 %v4729, %v4813
  %v4904 = vadd.f32 %v4730, %v4815
  %v4905 = vadd.f32 %v4731, %v4854
  %v4906 = vadd.f32 %v4732, %v4856
  %v4907 = vadd.f32 %v4733, %v4895
  %v4908 = vadd.f32 %v4734, %v4897
  %v4909 = vmul.f32 %v4901, 0.5
  %v4910 = vmul.f32 %v4902, 0.5
  %v4911 = vtanh.pop %v4909
  %v4912 = vtanh.pop %v4910
  %v4913 = vmul.f32 %v4911, 0.5
  %v4914 = vmul.f32 %v4912, 0.5
  %v4915 = vadd.f32 %v4913, 0.5
  %v4916 = vadd.f32 %v4914, 0.5
  %v4917 = vmul.f32 %v4903, 0.5
  %v4918 = vmul.f32 %v4904, 0.5
  %v4919 = vtanh.pop %v4917
  %v4920 = vtanh.pop %v4918
  %v4921 = vmul.f32 %v4919, 0.5
  %v4922 = vmul.f32 %v4920, 0.5
  %v4923 = vadd.f32 %v4921, 0.5
  %v4924 = vadd.f32 %v4922, 0.5
  %v4925 = vtanh.pop %v4905
  %v4926 = vtanh.pop %v4906
  %v4927 = vmul.f32 %v4907, 0.5
  %v4928 = vmul.f32 %v4908, 0.5
  %v4929 = vtanh.pop %v4927
  %v4930 = vtanh.pop %v4928
  %v4931 = vmul.f32 %v4929, 0.5
  %v4932 = vmul.f32 %v4930, 0.5
  %v4933 = vadd.f32 %v4931, 0.5
  %v4934 = vadd.f32 %v4932, 0.5
  %v4935 = vmul.f32 %v4923, %v4721
  %v4936 = vmul.f32 %v4924, %v4722
  %v4937 = vmul.f32 %v4915, %v4925
  %v4938 = vmul.f32 %v4916, %v4926
  %v4939 = vadd.f32 %v4935, %v4937
  %v4940 = vadd.f32 %v4936, %v4938
  %v4941 = vtanh.pop %v4939
  %v4942 = vtanh.pop %v4940
  %v4943 = vmul.f32 %v4933, %v4941
  %v4944 = vmul.f32 %v4934, %v4942
  %v4945 = vld [vmem:[#allocation2 + $0x380] sm:$0xff]
  %v4946 = vld [vmem:[#allocation2 + $0x388] sm:$0xff]
  %v4947 = vld [vmem:[#allocation2 + $0x390] sm:$0xff]
  %v4948 = vld [vmem:[#allocation2 + $0x398] sm:$0xff]
  %v4949 = vld [vmem:[#allocation2 + $0x3a0] sm:$0xff]
  %v4950 = vld [vmem:[#allocation2 + $0x3a8] sm:$0xff]
  %v4951 = vld [vmem:[#allocation2 + $0x3b0] sm:$0xff]
  %v4952 = vld [vmem:[#allocation2 + $0x3b8] sm:$0xff]
  %v4953 = vpack.c.bf16 %v4943, %v4943
  %v4954 = vpack.c.bf16 %v4944, %v4944
  %4955 = vmatprep.subr.bf16.mxu0 %v1646
  %4956 = vmatpush1.bf16.msra.mxu0 %v1645
  %4957 = vmatprep.subr.bf16.mxu0 %v1654
  %4958 = vmatpush1.bf16.msra.mxu0 %v1653
  %4959 = vmatprep.subr.bf16.mxu0 %v1662
  %4960 = vmatpush1.bf16.msra.mxu0 %v1661
  %4961 = vmatprep.subr.bf16.mxu0 %v1670
  %4962 = vmatpush1.bf16.msra.mxu0 %v1669
  %4963 = vmatprep.subr.bf16.mxu0 %v1678
  %4964 = vmatpush1.bf16.msra.mxu0 %v1677
  %4965 = vmatprep.subr.bf16.mxu0 %v1686
  %4966 = vmatpush1.bf16.msra.mxu0 %v1685
  %4967 = vmatprep.subr.bf16.mxu0 %v1694
  %4968 = vmatpush1.bf16.msra.mxu0 %v1693
  %4969 = vmatprep.subr.bf16.mxu0 %v1702
  %4970 = vmatpush1.bf16.msra.mxu0 %v1701
  %4971 = vmatprep.subr.bf16.mxu0 %v1710
  %4972 = vmatpush1.bf16.msra.mxu0 %v1709
  %4973 = vmatprep.subr.bf16.mxu0 %v1718
  %4974 = vmatpush1.bf16.msra.mxu0 %v1717
  %4975 = vmatprep.subr.bf16.mxu0 %v1726
  %4976 = vmatpush1.bf16.msra.mxu0 %v1725
  %4977 = vmatprep.subr.bf16.mxu0 %v1734
  %4978 = vmatpush1.bf16.msra.mxu0 %v1733
  %4979 = vmatprep.subr.bf16.mxu0 %v1742
  %4980 = vmatpush1.bf16.msra.mxu0 %v1741
  %4981 = vmatprep.subr.bf16.mxu0 %v1750
  %4982 = vmatpush1.bf16.msra.mxu0 %v1749
  %4983 = vmatprep.subr.bf16.mxu0 %v1758
  %4984 = vmatpush1.bf16.msra.mxu0 %v1757
  %4985 = vmatprep.subr.bf16.mxu0 %v1766
  %4986 = vmatpush1.bf16.msra.mxu0 %v1765
  %4987 = vmatprep.mubr.bf16.mxu0 %v4954
  %4988 = vmatmul.mubr.bf16.gmra.mrb[0].mxu0 %v4953
  %v4989 = vpop.f32.mrb[0].mxu0
  %v4990 = vadd.f32 0.0, %v4989
  %v4991 = vpop.f32.mrb[0].mxu0
  %v4992 = vadd.f32 0.0, %v4991
  %v4993 = vpop.f32.mrb[0].mxu0
  %v4994 = vpop.f32.mrb[0].mxu0
  %4995 = vdwg.mxu0
  %4996 = vmatprep.subr.bf16.mxu0 %v1648
  %4997 = vmatpush1.bf16.msra.mxu0 %v1647
  %4998 = vmatprep.subr.bf16.mxu0 %v1656
  %4999 = vmatpush1.bf16.msra.mxu0 %v1655
  %5000 = vmatprep.subr.bf16.mxu0 %v1664
  %5001 = vmatpush1.bf16.msra.mxu0 %v1663
  %5002 = vmatprep.subr.bf16.mxu0 %v1672
  %5003 = vmatpush1.bf16.msra.mxu0 %v1671
  %5004 = vmatprep.subr.bf16.mxu0 %v1680
  %5005 = vmatpush1.bf16.msra.mxu0 %v1679
  %5006 = vmatprep.subr.bf16.mxu0 %v1688
  %5007 = vmatpush1.bf16.msra.mxu0 %v1687
  %5008 = vmatprep.subr.bf16.mxu0 %v1696
  %5009 = vmatpush1.bf16.msra.mxu0 %v1695
  %5010 = vmatprep.subr.bf16.mxu0 %v1704
  %5011 = vmatpush1.bf16.msra.mxu0 %v1703
  %5012 = vmatprep.subr.bf16.mxu0 %v1712
  %5013 = vmatpush1.bf16.msra.mxu0 %v1711
  %5014 = vmatprep.subr.bf16.mxu0 %v1720
  %5015 = vmatpush1.bf16.msra.mxu0 %v1719
  %5016 = vmatprep.subr.bf16.mxu0 %v1728
  %5017 = vmatpush1.bf16.msra.mxu0 %v1727
  %5018 = vmatprep.subr.bf16.mxu0 %v1736
  %5019 = vmatpush1.bf16.msra.mxu0 %v1735
  %5020 = vmatprep.subr.bf16.mxu0 %v1744
  %5021 = vmatpush1.bf16.msra.mxu0 %v1743
  %5022 = vmatprep.subr.bf16.mxu0 %v1752
  %5023 = vmatpush1.bf16.msra.mxu0 %v1751
  %5024 = vmatprep.subr.bf16.mxu0 %v1760
  %5025 = vmatpush1.bf16.msra.mxu0 %v1759
  %5026 = vmatprep.subr.bf16.mxu0 %v1768
  %5027 = vmatpush1.bf16.msra.mxu0 %v1767
  %5028 = vmatprep.mubr.bf16.mxu0 %v4954
  %5029 = vmatmul.mubr.bf16.gmra.mrb[0].mxu0 %v4953
  %v5030 = vpop.f32.mrb[0].mxu0
  %v5031 = vadd.f32 0.0, %v5030
  %v5032 = vpop.f32.mrb[0].mxu0
  %v5033 = vadd.f32 0.0, %v5032
  %v5034 = vpop.f32.mrb[0].mxu0
  %v5035 = vpop.f32.mrb[0].mxu0
  %5036 = vdwg.mxu0
  %5037 = vmatprep.subr.bf16.mxu0 %v1650
  %5038 = vmatpush1.bf16.msra.mxu0 %v1649
  %5039 = vmatprep.subr.bf16.mxu0 %v1658
  %5040 = vmatpush1.bf16.msra.mxu0 %v1657
  %5041 = vmatprep.subr.bf16.mxu0 %v1666
  %5042 = vmatpush1.bf16.msra.mxu0 %v1665
  %5043 = vmatprep.subr.bf16.mxu0 %v1674
  %5044 = vmatpush1.bf16.msra.mxu0 %v1673
  %5045 = vmatprep.subr.bf16.mxu0 %v1682
  %5046 = vmatpush1.bf16.msra.mxu0 %v1681
  %5047 = vmatprep.subr.bf16.mxu0 %v1690
  %5048 = vmatpush1.bf16.msra.mxu0 %v1689
  %5049 = vmatprep.subr.bf16.mxu0 %v1698
  %5050 = vmatpush1.bf16.msra.mxu0 %v1697
  %5051 = vmatprep.subr.bf16.mxu0 %v1706
  %5052 = vmatpush1.bf16.msra.mxu0 %v1705
  %5053 = vmatprep.subr.bf16.mxu0 %v1714
  %5054 = vmatpush1.bf16.msra.mxu0 %v1713
  %5055 = vmatprep.subr.bf16.mxu0 %v1722
  %5056 = vmatpush1.bf16.msra.mxu0 %v1721
  %5057 = vmatprep.subr.bf16.mxu0 %v1730
  %5058 = vmatpush1.bf16.msra.mxu0 %v1729
  %5059 = vmatprep.subr.bf16.mxu0 %v1738
  %5060 = vmatpush1.bf16.msra.mxu0 %v1737
  %5061 = vmatprep.subr.bf16.mxu0 %v1746
  %5062 = vmatpush1.bf16.msra.mxu0 %v1745
  %5063 = vmatprep.subr.bf16.mxu0 %v1754
  %5064 = vmatpush1.bf16.msra.mxu0 %v1753
  %5065 = vmatprep.subr.bf16.mxu0 %v1762
  %5066 = vmatpush1.bf16.msra.mxu0 %v1761
  %5067 = vmatprep.subr.bf16.mxu0 %v1770
  %5068 = vmatpush1.bf16.msra.mxu0 %v1769
  %5069 = vmatprep.mubr.bf16.mxu0 %v4954
  %5070 = vmatmul.mubr.bf16.gmra.mrb[0].mxu0 %v4953
  %v5071 = vpop.f32.mrb[0].mxu0
  %v5072 = vadd.f32 0.0, %v5071
  %v5073 = vpop.f32.mrb[0].mxu0
  %v5074 = vadd.f32 0.0, %v5073
  %v5075 = vpop.f32.mrb[0].mxu0
  %v5076 = vpop.f32.mrb[0].mxu0
  %5077 = vdwg.mxu0
  %5078 = vmatprep.subr.bf16.mxu0 %v1652
  %5079 = vmatpush1.bf16.msra.mxu0 %v1651
  %5080 = vmatprep.subr.bf16.mxu0 %v1660
  %5081 = vmatpush1.bf16.msra.mxu0 %v1659
  %5082 = vmatprep.subr.bf16.mxu0 %v1668
  %5083 = vmatpush1.bf16.msra.mxu0 %v1667
  %5084 = vmatprep.subr.bf16.mxu0 %v1676
  %5085 = vmatpush1.bf16.msra.mxu0 %v1675
  %5086 = vmatprep.subr.bf16.mxu0 %v1684
  %5087 = vmatpush1.bf16.msra.mxu0 %v1683
  %5088 = vmatprep.subr.bf16.mxu0 %v1692
  %5089 = vmatpush1.bf16.msra.mxu0 %v1691
  %5090 = vmatprep.subr.bf16.mxu0 %v1700
  %5091 = vmatpush1.bf16.msra.mxu0 %v1699
  %5092 = vmatprep.subr.bf16.mxu0 %v1708
  %5093 = vmatpush1.bf16.msra.mxu0 %v1707
  %5094 = vmatprep.subr.bf16.mxu0 %v1716
  %5095 = vmatpush1.bf16.msra.mxu0 %v1715
  %5096 = vmatprep.subr.bf16.mxu0 %v1724
  %5097 = vmatpush1.bf16.msra.mxu0 %v1723
  %5098 = vmatprep.subr.bf16.mxu0 %v1732
  %5099 = vmatpush1.bf16.msra.mxu0 %v1731
  %5100 = vmatprep.subr.bf16.mxu0 %v1740
  %5101 = vmatpush1.bf16.msra.mxu0 %v1739
  %5102 = vmatprep.subr.bf16.mxu0 %v1748
  %5103 = vmatpush1.bf16.msra.mxu0 %v1747
  %5104 = vmatprep.subr.bf16.mxu0 %v1756
  %5105 = vmatpush1.bf16.msra.mxu0 %v1755
  %5106 = vmatprep.subr.bf16.mxu0 %v1764
  %5107 = vmatpush1.bf16.msra.mxu0 %v1763
  %5108 = vmatprep.subr.bf16.mxu0 %v1772
  %5109 = vmatpush1.bf16.msra.mxu0 %v1771
  %5110 = vmatprep.mubr.bf16.mxu0 %v4954
  %5111 = vmatmul.mubr.bf16.gmra.mrb[0].mxu0 %v4953
  %v5112 = vpop.f32.mrb[0].mxu0
  %v5113 = vadd.f32 0.0, %v5112
  %v5114 = vpop.f32.mrb[0].mxu0
  %v5115 = vadd.f32 0.0, %v5114
  %v5116 = vpop.f32.mrb[0].mxu0
  %v5117 = vpop.f32.mrb[0].mxu0
  %5118 = vdwg.mxu0
  %v5119 = vadd.f32 %v4945, %v4990
  %v5120 = vadd.f32 %v4946, %v4992
  %v5121 = vadd.f32 %v4947, %v5031
  %v5122 = vadd.f32 %v4948, %v5033
  %v5123 = vadd.f32 %v4949, %v5072
  %v5124 = vadd.f32 %v4950, %v5074
  %v5125 = vadd.f32 %v4951, %v5113
  %v5126 = vadd.f32 %v4952, %v5115
  %v5127 = vmul.f32 %v5119, 0.5
  %v5128 = vmul.f32 %v5120, 0.5
  %v5129 = vtanh.pop %v5127
  %v5130 = vtanh.pop %v5128
  %v5131 = vmul.f32 %v5129, 0.5
  %v5132 = vmul.f32 %v5130, 0.5
  %v5133 = vadd.f32 %v5131, 0.5
  %v5134 = vadd.f32 %v5132, 0.5
  %v5135 = vmul.f32 %v5121, 0.5
  %v5136 = vmul.f32 %v5122, 0.5
  %v5137 = vtanh.pop %v5135
  %v5138 = vtanh.pop %v5136
  %v5139 = vmul.f32 %v5137, 0.5
  %v5140 = vmul.f32 %v5138, 0.5
  %v5141 = vadd.f32 %v5139, 0.5
  %v5142 = vadd.f32 %v5140, 0.5
  %v5143 = vtanh.pop %v5123
  %v5144 = vtanh.pop %v5124
  %v5145 = vmul.f32 %v5125, 0.5
  %v5146 = vmul.f32 %v5126, 0.5
  %v5147 = vtanh.pop %v5145
  %v5148 = vtanh.pop %v5146
  %v5149 = vmul.f32 %v5147, 0.5
  %v5150 = vmul.f32 %v5148, 0.5
  %v5151 = vadd.f32 %v5149, 0.5
  %v5152 = vadd.f32 %v5150, 0.5
  %v5153 = vmul.f32 %v5141, %v4939
  %v5154 = vmul.f32 %v5142, %v4940
  %v5155 = vmul.f32 %v5133, %v5143
  %v5156 = vmul.f32 %v5134, %v5144
  %v5157 = vadd.f32 %v5153, %v5155
  %v5158 = vadd.f32 %v5154, %v5156
  %v5159 = vtanh.pop %v5157
  %v5160 = vtanh.pop %v5158
  %v5161 = vmul.f32 %v5151, %v5159
  %v5162 = vmul.f32 %v5152, %v5160
  %v5163 = vsel %vm1245, %v5161, %v3853
  %v5164 = vsel %vm1246, %v5162, %v3854
  %v5165 = vld [vmem:[#allocation2 + $0x3c0] sm:$0xff]
  %v5166 = vld [vmem:[#allocation2 + $0x3c8] sm:$0xff]
  %v5167 = vld [vmem:[#allocation2 + $0x3d0] sm:$0xff]
  %v5168 = vld [vmem:[#allocation2 + $0x3d8] sm:$0xff]
  %v5169 = vld [vmem:[#allocation2 + $0x3e0] sm:$0xff]
  %v5170 = vld [vmem:[#allocation2 + $0x3e8] sm:$0xff]
  %v5171 = vld [vmem:[#allocation2 + $0x3f0] sm:$0xff]
  %v5172 = vld [vmem:[#allocation2 + $0x3f8] sm:$0xff]
  %v5173 = vpack.c.bf16 %v5161, %v5161
  %v5174 = vpack.c.bf16 %v5162, %v5162
  %5175 = vmatprep.subr.bf16.mxu0 %v1646
  %5176 = vmatpush1.bf16.msra.mxu0 %v1645
  %5177 = vmatprep.subr.bf16.mxu0 %v1654
  %5178 = vmatpush1.bf16.msra.mxu0 %v1653
  %5179 = vmatprep.subr.bf16.mxu0 %v1662
  %5180 = vmatpush1.bf16.msra.mxu0 %v1661
  %5181 = vmatprep.subr.bf16.mxu0 %v1670
  %5182 = vmatpush1.bf16.msra.mxu0 %v1669
  %5183 = vmatprep.subr.bf16.mxu0 %v1678
  %5184 = vmatpush1.bf16.msra.mxu0 %v1677
  %5185 = vmatprep.subr.bf16.mxu0 %v1686
  %5186 = vmatpush1.bf16.msra.mxu0 %v1685
  %5187 = vmatprep.subr.bf16.mxu0 %v1694
  %5188 = vmatpush1.bf16.msra.mxu0 %v1693
  %5189 = vmatprep.subr.bf16.mxu0 %v1702
  %5190 = vmatpush1.bf16.msra.mxu0 %v1701
  %5191 = vmatprep.subr.bf16.mxu0 %v1710
  %5192 = vmatpush1.bf16.msra.mxu0 %v1709
  %5193 = vmatprep.subr.bf16.mxu0 %v1718
  %5194 = vmatpush1.bf16.msra.mxu0 %v1717
  %5195 = vmatprep.subr.bf16.mxu0 %v1726
  %5196 = vmatpush1.bf16.msra.mxu0 %v1725
  %5197 = vmatprep.subr.bf16.mxu0 %v1734
  %5198 = vmatpush1.bf16.msra.mxu0 %v1733
  %5199 = vmatprep.subr.bf16.mxu0 %v1742
  %5200 = vmatpush1.bf16.msra.mxu0 %v1741
  %5201 = vmatprep.subr.bf16.mxu0 %v1750
  %5202 = vmatpush1.bf16.msra.mxu0 %v1749
  %5203 = vmatprep.subr.bf16.mxu0 %v1758
  %5204 = vmatpush1.bf16.msra.mxu0 %v1757
  %5205 = vmatprep.subr.bf16.mxu0 %v1766
  %5206 = vmatpush1.bf16.msra.mxu0 %v1765
  %5207 = vmatprep.mubr.bf16.mxu0 %v5174
  %5208 = vmatmul.mubr.bf16.gmra.mrb[0].mxu0 %v5173
  %v5209 = vpop.f32.mrb[0].mxu0
  %v5210 = vadd.f32 0.0, %v5209
  %v5211 = vpop.f32.mrb[0].mxu0
  %v5212 = vadd.f32 0.0, %v5211
  %v5213 = vpop.f32.mrb[0].mxu0
  %v5214 = vpop.f32.mrb[0].mxu0
  %5215 = vdwg.mxu0
  %5216 = vmatprep.subr.bf16.mxu0 %v1648
  %5217 = vmatpush1.bf16.msra.mxu0 %v1647
  %5218 = vmatprep.subr.bf16.mxu0 %v1656
  %5219 = vmatpush1.bf16.msra.mxu0 %v1655
  %5220 = vmatprep.subr.bf16.mxu0 %v1664
  %5221 = vmatpush1.bf16.msra.mxu0 %v1663
  %5222 = vmatprep.subr.bf16.mxu0 %v1672
  %5223 = vmatpush1.bf16.msra.mxu0 %v1671
  %5224 = vmatprep.subr.bf16.mxu0 %v1680
  %5225 = vmatpush1.bf16.msra.mxu0 %v1679
  %5226 = vmatprep.subr.bf16.mxu0 %v1688
  %5227 = vmatpush1.bf16.msra.mxu0 %v1687
  %5228 = vmatprep.subr.bf16.mxu0 %v1696
  %5229 = vmatpush1.bf16.msra.mxu0 %v1695
  %5230 = vmatprep.subr.bf16.mxu0 %v1704
  %5231 = vmatpush1.bf16.msra.mxu0 %v1703
  %5232 = vmatprep.subr.bf16.mxu0 %v1712
  %5233 = vmatpush1.bf16.msra.mxu0 %v1711
  %5234 = vmatprep.subr.bf16.mxu0 %v1720
  %5235 = vmatpush1.bf16.msra.mxu0 %v1719
  %5236 = vmatprep.subr.bf16.mxu0 %v1728
  %5237 = vmatpush1.bf16.msra.mxu0 %v1727
  %5238 = vmatprep.subr.bf16.mxu0 %v1736
  %5239 = vmatpush1.bf16.msra.mxu0 %v1735
  %5240 = vmatprep.subr.bf16.mxu0 %v1744
  %5241 = vmatpush1.bf16.msra.mxu0 %v1743
  %5242 = vmatprep.subr.bf16.mxu0 %v1752
  %5243 = vmatpush1.bf16.msra.mxu0 %v1751
  %5244 = vmatprep.subr.bf16.mxu0 %v1760
  %5245 = vmatpush1.bf16.msra.mxu0 %v1759
  %5246 = vmatprep.subr.bf16.mxu0 %v1768
  %5247 = vmatpush1.bf16.msra.mxu0 %v1767
  %5248 = vmatprep.mubr.bf16.mxu0 %v5174
  %5249 = vmatmul.mubr.bf16.gmra.mrb[0].mxu0 %v5173
  %v5250 = vpop.f32.mrb[0].mxu0
  %v5251 = vadd.f32 0.0, %v5250
  %v5252 = vpop.f32.mrb[0].mxu0
  %v5253 = vadd.f32 0.0, %v5252
  %v5254 = vpop.f32.mrb[0].mxu0
  %v5255 = vpop.f32.mrb[0].mxu0
  %5256 = vdwg.mxu0
  %5257 = vmatprep.subr.bf16.mxu0 %v1650
  %5258 = vmatpush1.bf16.msra.mxu0 %v1649
  %5259 = vmatprep.subr.bf16.mxu0 %v1658
  %5260 = vmatpush1.bf16.msra.mxu0 %v1657
  %5261 = vmatprep.subr.bf16.mxu0 %v1666
  %5262 = vmatpush1.bf16.msra.mxu0 %v1665
  %5263 = vmatprep.subr.bf16.mxu0 %v1674
  %5264 = vmatpush1.bf16.msra.mxu0 %v1673
  %5265 = vmatprep.subr.bf16.mxu0 %v1682
  %5266 = vmatpush1.bf16.msra.mxu0 %v1681
  %5267 = vmatprep.subr.bf16.mxu0 %v1690
  %5268 = vmatpush1.bf16.msra.mxu0 %v1689
  %5269 = vmatprep.subr.bf16.mxu0 %v1698
  %5270 = vmatpush1.bf16.msra.mxu0 %v1697
  %5271 = vmatprep.subr.bf16.mxu0 %v1706
  %5272 = vmatpush1.bf16.msra.mxu0 %v1705
  %5273 = vmatprep.subr.bf16.mxu0 %v1714
  %5274 = vmatpush1.bf16.msra.mxu0 %v1713
  %5275 = vmatprep.subr.bf16.mxu0 %v1722
  %5276 = vmatpush1.bf16.msra.mxu0 %v1721
  %5277 = vmatprep.subr.bf16.mxu0 %v1730
  %5278 = vmatpush1.bf16.msra.mxu0 %v1729
  %5279 = vmatprep.subr.bf16.mxu0 %v1738
  %5280 = vmatpush1.bf16.msra.mxu0 %v1737
  %5281 = vmatprep.subr.bf16.mxu0 %v1746
  %5282 = vmatpush1.bf16.msra.mxu0 %v1745
  %5283 = vmatprep.subr.bf16.mxu0 %v1754
  %5284 = vmatpush1.bf16.msra.mxu0 %v1753
  %5285 = vmatprep.subr.bf16.mxu0 %v1762
  %5286 = vmatpush1.bf16.msra.mxu0 %v1761
  %5287 = vmatprep.subr.bf16.mxu0 %v1770
  %5288 = vmatpush1.bf16.msra.mxu0 %v1769
  %5289 = vmatprep.mubr.bf16.mxu0 %v5174
  %5290 = vmatmul.mubr.bf16.gmra.mrb[0].mxu0 %v5173
  %v5291 = vpop.f32.mrb[0].mxu0
  %v5292 = vadd.f32 0.0, %v5291
  %v5293 = vpop.f32.mrb[0].mxu0
  %v5294 = vadd.f32 0.0, %v5293
  %v5295 = vpop.f32.mrb[0].mxu0
  %v5296 = vpop.f32.mrb[0].mxu0
  %5297 = vdwg.mxu0
  %5298 = vmatprep.subr.bf16.mxu0 %v1652
  %5299 = vmatpush1.bf16.msra.mxu0 %v1651
  %5300 = vmatprep.subr.bf16.mxu0 %v1660
  %5301 = vmatpush1.bf16.msra.mxu0 %v1659
  %5302 = vmatprep.subr.bf16.mxu0 %v1668
  %5303 = vmatpush1.bf16.msra.mxu0 %v1667
  %5304 = vmatprep.subr.bf16.mxu0 %v1676
  %5305 = vmatpush1.bf16.msra.mxu0 %v1675
  %5306 = vmatprep.subr.bf16.mxu0 %v1684
  %5307 = vmatpush1.bf16.msra.mxu0 %v1683
  %5308 = vmatprep.subr.bf16.mxu0 %v1692
  %5309 = vmatpush1.bf16.msra.mxu0 %v1691
  %5310 = vmatprep.subr.bf16.mxu0 %v1700
  %5311 = vmatpush1.bf16.msra.mxu0 %v1699
  %5312 = vmatprep.subr.bf16.mxu0 %v1708
  %5313 = vmatpush1.bf16.msra.mxu0 %v1707
  %5314 = vmatprep.subr.bf16.mxu0 %v1716
  %5315 = vmatpush1.bf16.msra.mxu0 %v1715
  %5316 = vmatprep.subr.bf16.mxu0 %v1724
  %5317 = vmatpush1.bf16.msra.mxu0 %v1723
  %5318 = vmatprep.subr.bf16.mxu0 %v1732
  %5319 = vmatpush1.bf16.msra.mxu0 %v1731
  %5320 = vmatprep.subr.bf16.mxu0 %v1740
  %5321 = vmatpush1.bf16.msra.mxu0 %v1739
  %5322 = vmatprep.subr.bf16.mxu0 %v1748
  %5323 = vmatpush1.bf16.msra.mxu0 %v1747
  %5324 = vmatprep.subr.bf16.mxu0 %v1756
  %5325 = vmatpush1.bf16.msra.mxu0 %v1755
  %5326 = vmatprep.subr.bf16.mxu0 %v1764
  %5327 = vmatpush1.bf16.msra.mxu0 %v1763
  %5328 = vmatprep.subr.bf16.mxu0 %v1772
  %5329 = vmatpush1.bf16.msra.mxu0 %v1771
  %5330 = vmatprep.mubr.bf16.mxu0 %v5174
  %5331 = vmatmul.mubr.bf16.gmra.mrb[0].mxu0 %v5173
  %v5332 = vpop.f32.mrb[0].mxu0
  %v5333 = vadd.f32 0.0, %v5332
  %v5334 = vpop.f32.mrb[0].mxu0
  %v5335 = vadd.f32 0.0, %v5334
  %v5336 = vpop.f32.mrb[0].mxu0
  %v5337 = vpop.f32.mrb[0].mxu0
  %5338 = vdwg.mxu0
  %v5339 = vadd.f32 %v5165, %v5210
  %v5340 = vadd.f32 %v5166, %v5212
  %v5341 = vadd.f32 %v5167, %v5251
  %v5342 = vadd.f32 %v5168, %v5253
  %v5343 = vadd.f32 %v5169, %v5292
  %v5344 = vadd.f32 %v5170, %v5294
  %v5345 = vadd.f32 %v5171, %v5333
  %v5346 = vadd.f32 %v5172, %v5335
  %v5347 = vmul.f32 %v5339, 0.5
  %v5348 = vmul.f32 %v5340, 0.5
  %v5349 = vtanh.pop %v5347
  %v5350 = vtanh.pop %v5348
  %v5351 = vmul.f32 %v5349, 0.5
  %v5352 = vmul.f32 %v5350, 0.5
  %v5353 = vadd.f32 %v5351, 0.5
  %v5354 = vadd.f32 %v5352, 0.5
  %v5355 = vmul.f32 %v5341, 0.5
  %v5356 = vmul.f32 %v5342, 0.5
  %v5357 = vtanh.pop %v5355
  %v5358 = vtanh.pop %v5356
  %v5359 = vmul.f32 %v5357, 0.5
  %v5360 = vmul.f32 %v5358, 0.5
  %v5361 = vadd.f32 %v5359, 0.5
  %v5362 = vadd.f32 %v5360, 0.5
  %v5363 = vtanh.pop %v5343
  %v5364 = vtanh.pop %v5344
  %v5365 = vmul.f32 %v5345, 0.5
  %v5366 = vmul.f32 %v5346, 0.5
  %v5367 = vtanh.pop %v5365
  %v5368 = vtanh.pop %v5366
  %v5369 = vmul.f32 %v5367, 0.5
  %v5370 = vmul.f32 %v5368, 0.5
  %v5371 = vadd.f32 %v5369, 0.5
  %v5372 = vadd.f32 %v5370, 0.5
  %v5373 = vmul.f32 %v5361, %v5157
  %v5374 = vmul.f32 %v5362, %v5158
  %v5375 = vmul.f32 %v5353, %v5363
  %v5376 = vmul.f32 %v5354, %v5364
  %v5377 = vadd.f32 %v5373, %v5375
  %v5378 = vadd.f32 %v5374, %v5376
  %v5379 = vtanh.pop %v5377
  %v5380 = vtanh.pop %v5378
  %v5381 = vmul.f32 %v5371, %v5379
  %v5382 = vmul.f32 %v5372, %v5380
  %v5383 = vld [vmem:[#allocation2 + $0x400] sm:$0xff]
  %v5384 = vld [vmem:[#allocation2 + $0x408] sm:$0xff]
  %v5385 = vld [vmem:[#allocation2 + $0x410] sm:$0xff]
  %v5386 = vld [vmem:[#allocation2 + $0x418] sm:$0xff]
  %v5387 = vld [vmem:[#allocation2 + $0x420] sm:$0xff]
  %v5388 = vld [vmem:[#allocation2 + $0x428] sm:$0xff]
  %v5389 = vld [vmem:[#allocation2 + $0x430] sm:$0xff]
  %v5390 = vld [vmem:[#allocation2 + $0x438] sm:$0xff]
  %v5391 = vpack.c.bf16 %v5381, %v5381
  %v5392 = vpack.c.bf16 %v5382, %v5382
  %5393 = vmatprep.subr.bf16.mxu0 %v1646
  %5394 = vmatpush1.bf16.msra.mxu0 %v1645
  %5395 = vmatprep.subr.bf16.mxu0 %v1654
  %5396 = vmatpush1.bf16.msra.mxu0 %v1653
  %5397 = vmatprep.subr.bf16.mxu0 %v1662
  %5398 = vmatpush1.bf16.msra.mxu0 %v1661
  %5399 = vmatprep.subr.bf16.mxu0 %v1670
  %5400 = vmatpush1.bf16.msra.mxu0 %v1669
  %5401 = vmatprep.subr.bf16.mxu0 %v1678
  %5402 = vmatpush1.bf16.msra.mxu0 %v1677
  %5403 = vmatprep.subr.bf16.mxu0 %v1686
  %5404 = vmatpush1.bf16.msra.mxu0 %v1685
  %5405 = vmatprep.subr.bf16.mxu0 %v1694
  %5406 = vmatpush1.bf16.msra.mxu0 %v1693
  %5407 = vmatprep.subr.bf16.mxu0 %v1702
  %5408 = vmatpush1.bf16.msra.mxu0 %v1701
  %5409 = vmatprep.subr.bf16.mxu0 %v1710
  %5410 = vmatpush1.bf16.msra.mxu0 %v1709
  %5411 = vmatprep.subr.bf16.mxu0 %v1718
  %5412 = vmatpush1.bf16.msra.mxu0 %v1717
  %5413 = vmatprep.subr.bf16.mxu0 %v1726
  %5414 = vmatpush1.bf16.msra.mxu0 %v1725
  %5415 = vmatprep.subr.bf16.mxu0 %v1734
  %5416 = vmatpush1.bf16.msra.mxu0 %v1733
  %5417 = vmatprep.subr.bf16.mxu0 %v1742
  %5418 = vmatpush1.bf16.msra.mxu0 %v1741
  %5419 = vmatprep.subr.bf16.mxu0 %v1750
  %5420 = vmatpush1.bf16.msra.mxu0 %v1749
  %5421 = vmatprep.subr.bf16.mxu0 %v1758
  %5422 = vmatpush1.bf16.msra.mxu0 %v1757
  %5423 = vmatprep.subr.bf16.mxu0 %v1766
  %5424 = vmatpush1.bf16.msra.mxu0 %v1765
  %5425 = vmatprep.mubr.bf16.mxu0 %v5392
  %5426 = vmatmul.mubr.bf16.gmra.mrb[0].mxu0 %v5391
  %v5427 = vpop.f32.mrb[0].mxu0
  %v5428 = vadd.f32 0.0, %v5427
  %v5429 = vpop.f32.mrb[0].mxu0
  %v5430 = vadd.f32 0.0, %v5429
  %v5431 = vpop.f32.mrb[0].mxu0
  %v5432 = vpop.f32.mrb[0].mxu0
  %5433 = vdwg.mxu0
  %5434 = vmatprep.subr.bf16.mxu0 %v1648
  %5435 = vmatpush1.bf16.msra.mxu0 %v1647
  %5436 = vmatprep.subr.bf16.mxu0 %v1656
  %5437 = vmatpush1.bf16.msra.mxu0 %v1655
  %5438 = vmatprep.subr.bf16.mxu0 %v1664
  %5439 = vmatpush1.bf16.msra.mxu0 %v1663
  %5440 = vmatprep.subr.bf16.mxu0 %v1672
  %5441 = vmatpush1.bf16.msra.mxu0 %v1671
  %5442 = vmatprep.subr.bf16.mxu0 %v1680
  %5443 = vmatpush1.bf16.msra.mxu0 %v1679
  %5444 = vmatprep.subr.bf16.mxu0 %v1688
  %5445 = vmatpush1.bf16.msra.mxu0 %v1687
  %5446 = vmatprep.subr.bf16.mxu0 %v1696
  %5447 = vmatpush1.bf16.msra.mxu0 %v1695
  %5448 = vmatprep.subr.bf16.mxu0 %v1704
  %5449 = vmatpush1.bf16.msra.mxu0 %v1703
  %5450 = vmatprep.subr.bf16.mxu0 %v1712
  %5451 = vmatpush1.bf16.msra.mxu0 %v1711
  %5452 = vmatprep.subr.bf16.mxu0 %v1720
  %5453 = vmatpush1.bf16.msra.mxu0 %v1719
  %5454 = vmatprep.subr.bf16.mxu0 %v1728
  %5455 = vmatpush1.bf16.msra.mxu0 %v1727
  %5456 = vmatprep.subr.bf16.mxu0 %v1736
  %5457 = vmatpush1.bf16.msra.mxu0 %v1735
  %5458 = vmatprep.subr.bf16.mxu0 %v1744
  %5459 = vmatpush1.bf16.msra.mxu0 %v1743
  %5460 = vmatprep.subr.bf16.mxu0 %v1752
  %5461 = vmatpush1.bf16.msra.mxu0 %v1751
  %5462 = vmatprep.subr.bf16.mxu0 %v1760
  %5463 = vmatpush1.bf16.msra.mxu0 %v1759
  %5464 = vmatprep.subr.bf16.mxu0 %v1768
  %5465 = vmatpush1.bf16.msra.mxu0 %v1767
  %5466 = vmatprep.mubr.bf16.mxu0 %v5392
  %5467 = vmatmul.mubr.bf16.gmra.mrb[0].mxu0 %v5391
  %v5468 = vpop.f32.mrb[0].mxu0
  %v5469 = vadd.f32 0.0, %v5468
  %v5470 = vpop.f32.mrb[0].mxu0
  %v5471 = vadd.f32 0.0, %v5470
  %v5472 = vpop.f32.mrb[0].mxu0
  %v5473 = vpop.f32.mrb[0].mxu0
  %5474 = vdwg.mxu0
  %5475 = vmatprep.subr.bf16.mxu0 %v1650
  %5476 = vmatpush1.bf16.msra.mxu0 %v1649
  %5477 = vmatprep.subr.bf16.mxu0 %v1658
  %5478 = vmatpush1.bf16.msra.mxu0 %v1657
  %5479 = vmatprep.subr.bf16.mxu0 %v1666
  %5480 = vmatpush1.bf16.msra.mxu0 %v1665
  %5481 = vmatprep.subr.bf16.mxu0 %v1674
  %5482 = vmatpush1.bf16.msra.mxu0 %v1673
  %5483 = vmatprep.subr.bf16.mxu0 %v1682
  %5484 = vmatpush1.bf16.msra.mxu0 %v1681
  %5485 = vmatprep.subr.bf16.mxu0 %v1690
  %5486 = vmatpush1.bf16.msra.mxu0 %v1689
  %5487 = vmatprep.subr.bf16.mxu0 %v1698
  %5488 = vmatpush1.bf16.msra.mxu0 %v1697
  %5489 = vmatprep.subr.bf16.mxu0 %v1706
  %5490 = vmatpush1.bf16.msra.mxu0 %v1705
  %5491 = vmatprep.subr.bf16.mxu0 %v1714
  %5492 = vmatpush1.bf16.msra.mxu0 %v1713
  %5493 = vmatprep.subr.bf16.mxu0 %v1722
  %5494 = vmatpush1.bf16.msra.mxu0 %v1721
  %5495 = vmatprep.subr.bf16.mxu0 %v1730
  %5496 = vmatpush1.bf16.msra.mxu0 %v1729
  %5497 = vmatprep.subr.bf16.mxu0 %v1738
  %5498 = vmatpush1.bf16.msra.mxu0 %v1737
  %5499 = vmatprep.subr.bf16.mxu0 %v1746
  %5500 = vmatpush1.bf16.msra.mxu0 %v1745
  %5501 = vmatprep.subr.bf16.mxu0 %v1754
  %5502 = vmatpush1.bf16.msra.mxu0 %v1753
  %5503 = vmatprep.subr.bf16.mxu0 %v1762
  %5504 = vmatpush1.bf16.msra.mxu0 %v1761
  %5505 = vmatprep.subr.bf16.mxu0 %v1770
  %5506 = vmatpush1.bf16.msra.mxu0 %v1769
  %5507 = vmatprep.mubr.bf16.mxu0 %v5392
  %5508 = vmatmul.mubr.bf16.gmra.mrb[0].mxu0 %v5391
  %v5509 = vpop.f32.mrb[0].mxu0
  %v5510 = vadd.f32 0.0, %v5509
  %v5511 = vpop.f32.mrb[0].mxu0
  %v5512 = vadd.f32 0.0, %v5511
  %v5513 = vpop.f32.mrb[0].mxu0
  %v5514 = vpop.f32.mrb[0].mxu0
  %5515 = vdwg.mxu0
  %5516 = vmatprep.subr.bf16.mxu0 %v1652
  %5517 = vmatpush1.bf16.msra.mxu0 %v1651
  %5518 = vmatprep.subr.bf16.mxu0 %v1660
  %5519 = vmatpush1.bf16.msra.mxu0 %v1659
  %5520 = vmatprep.subr.bf16.mxu0 %v1668
  %5521 = vmatpush1.bf16.msra.mxu0 %v1667
  %5522 = vmatprep.subr.bf16.mxu0 %v1676
  %5523 = vmatpush1.bf16.msra.mxu0 %v1675
  %5524 = vmatprep.subr.bf16.mxu0 %v1684
  %5525 = vmatpush1.bf16.msra.mxu0 %v1683
  %5526 = vmatprep.subr.bf16.mxu0 %v1692
  %5527 = vmatpush1.bf16.msra.mxu0 %v1691
  %5528 = vmatprep.subr.bf16.mxu0 %v1700
  %5529 = vmatpush1.bf16.msra.mxu0 %v1699
  %5530 = vmatprep.subr.bf16.mxu0 %v1708
  %5531 = vmatpush1.bf16.msra.mxu0 %v1707
  %5532 = vmatprep.subr.bf16.mxu0 %v1716
  %5533 = vmatpush1.bf16.msra.mxu0 %v1715
  %5534 = vmatprep.subr.bf16.mxu0 %v1724
  %5535 = vmatpush1.bf16.msra.mxu0 %v1723
  %5536 = vmatprep.subr.bf16.mxu0 %v1732
  %5537 = vmatpush1.bf16.msra.mxu0 %v1731
  %5538 = vmatprep.subr.bf16.mxu0 %v1740
  %5539 = vmatpush1.bf16.msra.mxu0 %v1739
  %5540 = vmatprep.subr.bf16.mxu0 %v1748
  %5541 = vmatpush1.bf16.msra.mxu0 %v1747
  %5542 = vmatprep.subr.bf16.mxu0 %v1756
  %5543 = vmatpush1.bf16.msra.mxu0 %v1755
  %5544 = vmatprep.subr.bf16.mxu0 %v1764
  %5545 = vmatpush1.bf16.msra.mxu0 %v1763
  %5546 = vmatprep.subr.bf16.mxu0 %v1772
  %5547 = vmatpush1.bf16.msra.mxu0 %v1771
  %5548 = vmatprep.mubr.bf16.mxu0 %v5392
  %5549 = vmatmul.mubr.bf16.gmra.mrb[0].mxu0 %v5391
  %v5550 = vpop.f32.mrb[0].mxu0
  %v5551 = vadd.f32 0.0, %v5550
  %v5552 = vpop.f32.mrb[0].mxu0
  %v5553 = vadd.f32 0.0, %v5552
  %v5554 = vpop.f32.mrb[0].mxu0
  %v5555 = vpop.f32.mrb[0].mxu0
  %5556 = vdwg.mxu0
  %v5557 = vadd.f32 %v5383, %v5428
  %v5558 = vadd.f32 %v5384, %v5430
  %v5559 = vadd.f32 %v5385, %v5469
  %v5560 = vadd.f32 %v5386, %v5471
  %v5561 = vadd.f32 %v5387, %v5510
  %v5562 = vadd.f32 %v5388, %v5512
  %v5563 = vadd.f32 %v5389, %v5551
  %v5564 = vadd.f32 %v5390, %v5553
  %v5565 = vmul.f32 %v5557, 0.5
  %v5566 = vmul.f32 %v5558, 0.5
  %v5567 = vtanh.pop %v5565
  %v5568 = vtanh.pop %v5566
  %v5569 = vmul.f32 %v5567, 0.5
  %v5570 = vmul.f32 %v5568, 0.5
  %v5571 = vadd.f32 %v5569, 0.5
  %v5572 = vadd.f32 %v5570, 0.5
  %v5573 = vmul.f32 %v5559, 0.5
  %v5574 = vmul.f32 %v5560, 0.5
  %v5575 = vtanh.pop %v5573
  %v5576 = vtanh.pop %v5574
  %v5577 = vmul.f32 %v5575, 0.5
  %v5578 = vmul.f32 %v5576, 0.5
  %v5579 = vadd.f32 %v5577, 0.5
  %v5580 = vadd.f32 %v5578, 0.5
  %v5581 = vtanh.pop %v5561
  %v5582 = vtanh.pop %v5562
  %v5583 = vmul.f32 %v5563, 0.5
  %v5584 = vmul.f32 %v5564, 0.5
  %v5585 = vtanh.pop %v5583
  %v5586 = vtanh.pop %v5584
  %v5587 = vmul.f32 %v5585, 0.5
  %v5588 = vmul.f32 %v5586, 0.5
  %v5589 = vadd.f32 %v5587, 0.5
  %v5590 = vadd.f32 %v5588, 0.5
  %v5591 = vmul.f32 %v5579, %v5377
  %v5592 = vmul.f32 %v5580, %v5378
  %v5593 = vmul.f32 %v5571, %v5581
  %v5594 = vmul.f32 %v5572, %v5582
  %v5595 = vadd.f32 %v5591, %v5593
  %v5596 = vadd.f32 %v5592, %v5594
  %v5597 = vtanh.pop %v5595
  %v5598 = vtanh.pop %v5596
  %v5599 = vmul.f32 %v5589, %v5597
  %v5600 = vmul.f32 %v5590, %v5598
  %v5601 = vsel %vm1251, %v5599, %v5163
  %v5602 = vsel %vm1252, %v5600, %v5164
  %v5603 = vpack.c.bf16 %v5601, %v5601
  %v5604 = vpack.c.bf16 %v5602, %v5602
  %v5605 = vld [vmem:[%s4] sm:$0xf]
  %v5606 = vld [vmem:[%s4 + $0x4] sm:$0xf]
  %v5607 = vld [vmem:[%s4 + $0x8] sm:$0xf]
  %v5608 = vld [vmem:[%s4 + $0xc] sm:$0xf]
  %v5609 = vld [vmem:[%s4 + $0x10] sm:$0xf]
  %v5610 = vld [vmem:[%s4 + $0x14] sm:$0xf]
  %v5611 = vld [vmem:[%s4 + $0x18] sm:$0xf]
  %v5612 = vld [vmem:[%s4 + $0x1c] sm:$0xf]
  %v5613 = vld [vmem:[%s4 + $0x20] sm:$0xf]
  %v5614 = vld [vmem:[%s4 + $0x24] sm:$0xf]
  %v5615 = vld [vmem:[%s4 + $0x28] sm:$0xf]
  %v5616 = vld [vmem:[%s4 + $0x2c] sm:$0xf]
  %v5617 = vld [vmem:[%s4 + $0x30] sm:$0xf]
  %v5618 = vld [vmem:[%s4 + $0x34] sm:$0xf]
  %v5619 = vld [vmem:[%s4 + $0x38] sm:$0xf]
  %v5620 = vld [vmem:[%s4 + $0x3c] sm:$0xf]
  %v5621 = vld [vmem:[%s4 + $0x40] sm:$0xf]
  %v5622 = vld [vmem:[%s4 + $0x44] sm:$0xf]
  %v5623 = vld [vmem:[%s4 + $0x48] sm:$0xf]
  %v5624 = vld [vmem:[%s4 + $0x4c] sm:$0xf]
  %v5625 = vld [vmem:[%s4 + $0x50] sm:$0xf]
  %v5626 = vld [vmem:[%s4 + $0x54] sm:$0xf]
  %v5627 = vld [vmem:[%s4 + $0x58] sm:$0xf]
  %v5628 = vld [vmem:[%s4 + $0x5c] sm:$0xf]
  %v5629 = vld [vmem:[%s4 + $0x60] sm:$0xf]
  %v5630 = vld [vmem:[%s4 + $0x64] sm:$0xf]
  %v5631 = vld [vmem:[%s4 + $0x68] sm:$0xf]
  %v5632 = vld [vmem:[%s4 + $0x6c] sm:$0xf]
  %v5633 = vld [vmem:[%s4 + $0x70] sm:$0xf]
  %v5634 = vld [vmem:[%s4 + $0x74] sm:$0xf]
  %v5635 = vld [vmem:[%s4 + $0x78] sm:$0xf]
  %v5636 = vld [vmem:[%s4 + $0x7c] sm:$0xf]
  %v5637 = vld [vmem:[%s5] sm:$0x1]
  %v5639 = vlaneseq
  %v5640 = vshrl.u32 %v5639, 7
  %v5641 = vsub.s32 0, %v5640
  %v5642 = vrot.slane %v5637, %v5641
  %v5676 = vunpack.c.l.b16 %v5605
  %v5677 = vunpack.c.l.b16 %v5606
  %v5678 = vunpack.c.l.b16 %v5607
  %v5679 = vunpack.c.l.b16 %v5608
  %v5680 = vunpack.c.l.b16 %v5609
  %v5681 = vunpack.c.l.b16 %v5610
  %v5682 = vunpack.c.l.b16 %v5611
  %v5683 = vunpack.c.l.b16 %v5612
  %v5684 = vunpack.c.l.b16 %v5613
  %v5685 = vunpack.c.l.b16 %v5614
  %v5686 = vunpack.c.l.b16 %v5615
  %v5687 = vunpack.c.l.b16 %v5616
  %v5688 = vunpack.c.l.b16 %v5617
  %v5689 = vunpack.c.l.b16 %v5618
  %v5690 = vunpack.c.l.b16 %v5619
  %v5691 = vunpack.c.l.b16 %v5620
  %v5692 = vunpack.c.l.b16 %v5621
  %v5693 = vunpack.c.l.b16 %v5622
  %v5694 = vunpack.c.l.b16 %v5623
  %v5695 = vunpack.c.l.b16 %v5624
  %v5696 = vunpack.c.l.b16 %v5625
  %v5697 = vunpack.c.l.b16 %v5626
  %v5698 = vunpack.c.l.b16 %v5627
  %v5699 = vunpack.c.l.b16 %v5628
  %v5700 = vunpack.c.l.b16 %v5629
  %v5701 = vunpack.c.l.b16 %v5630
  %v5702 = vunpack.c.l.b16 %v5631
  %v5703 = vunpack.c.l.b16 %v5632
  %v5704 = vunpack.c.l.b16 %v5633
  %v5705 = vunpack.c.l.b16 %v5634
  %v5706 = vunpack.c.l.b16 %v5635
  %v5707 = vunpack.c.l.b16 %v5636
  %v5708 = vpack.c.b16 %v5677, %v5676
  %v5709 = vpack.c.b16 %v5679, %v5678
  %v5710 = vpack.c.b16 %v5681, %v5680
  %v5711 = vpack.c.b16 %v5683, %v5682
  %v5712 = vpack.c.b16 %v5685, %v5684
  %v5713 = vpack.c.b16 %v5687, %v5686
  %v5714 = vpack.c.b16 %v5689, %v5688
  %v5715 = vpack.c.b16 %v5691, %v5690
  %v5716 = vpack.c.b16 %v5693, %v5692
  %v5717 = vpack.c.b16 %v5695, %v5694
  %v5718 = vpack.c.b16 %v5697, %v5696
  %v5719 = vpack.c.b16 %v5699, %v5698
  %v5720 = vpack.c.b16 %v5701, %v5700
  %v5721 = vpack.c.b16 %v5703, %v5702
  %v5722 = vpack.c.b16 %v5705, %v5704
  %v5723 = vpack.c.b16 %v5707, %v5706
  %5740 = vmatprep.subr.bf16.mxu0 0
  %5741 = vmatpush1.bf16.msra.mxu0 %v5708
  %5742 = vmatprep.subr.bf16.mxu0 0
  %5743 = vmatpush1.bf16.msra.mxu0 %v5709
  %5744 = vmatprep.subr.bf16.mxu0 0
  %5745 = vmatpush1.bf16.msra.mxu0 %v5710
  %5746 = vmatprep.subr.bf16.mxu0 0
  %5747 = vmatpush1.bf16.msra.mxu0 %v5711
  %5748 = vmatprep.subr.bf16.mxu0 0
  %5749 = vmatpush1.bf16.msra.mxu0 %v5712
  %5750 = vmatprep.subr.bf16.mxu0 0
  %5751 = vmatpush1.bf16.msra.mxu0 %v5713
  %5752 = vmatprep.subr.bf16.mxu0 0
  %5753 = vmatpush1.bf16.msra.mxu0 %v5714
  %5754 = vmatprep.subr.bf16.mxu0 0
  %5755 = vmatpush1.bf16.msra.mxu0 %v5715
  %5756 = vmatprep.subr.bf16.mxu0 0
  %5757 = vmatpush1.bf16.msra.mxu0 %v5716
  %5758 = vmatprep.subr.bf16.mxu0 0
  %5759 = vmatpush1.bf16.msra.mxu0 %v5717
  %5760 = vmatprep.subr.bf16.mxu0 0
  %5761 = vmatpush1.bf16.msra.mxu0 %v5718
  %5762 = vmatprep.subr.bf16.mxu0 0
  %5763 = vmatpush1.bf16.msra.mxu0 %v5719
  %5764 = vmatprep.subr.bf16.mxu0 0
  %5765 = vmatpush1.bf16.msra.mxu0 %v5720
  %5766 = vmatprep.subr.bf16.mxu0 0
  %5767 = vmatpush1.bf16.msra.mxu0 %v5721
  %5768 = vmatprep.subr.bf16.mxu0 0
  %5769 = vmatpush1.bf16.msra.mxu0 %v5722
  %5770 = vmatprep.subr.bf16.mxu0 0
  %5771 = vmatpush1.bf16.msra.mxu0 %v5723
  %5772 = vmatprep.mubr.bf16.mxu0 %v5604
  %5773 = vmatmul.mubr.bf16.gmra.mrb[0].mxu0 %v5603
  %v5774 = vpop.f32.mrb[0].mxu0
  %v5775 = vadd.f32 %v5642, %v5774
  %v5776 = vpop.f32.mrb[0].mxu0
  %v5777 = vpop.f32.mrb[0].mxu0
  %v5778 = vpop.f32.mrb[0].mxu0
  %5779 = vdwg.mxu0
  %v5780 = vmax.f32 %v5775, 0.0
  %v5781 = vpack.c.bf16 %v5780, %v5780
  %v5782 = vld [vmem:[%s6] sm:$0xf]
  %v5783 = vld [vmem:[%s6 + $0x4] sm:$0xf]
  %v5784 = vld [vmem:[%s6 + $0x8] sm:$0xf]
  %v5785 = vld [vmem:[%s6 + $0xc] sm:$0xf]
  %v5786 = vld [vmem:[%s6 + $0x10] sm:$0xf]
  %v5787 = vld [vmem:[%s6 + $0x14] sm:$0xf]
  %v5788 = vld [vmem:[%s6 + $0x18] sm:$0xf]
  %v5789 = vld [vmem:[%s6 + $0x1c] sm:$0xf]
  %v5790 = vld [vmem:[#allocation3] sm:$0x1]
  %v5792 = vlaneseq
  %v5793 = vshrl.u32 %v5792, 7
  %v5794 = vsub.s32 0, %v5793
  %v5795 = vrot.slane %v5790, %v5794
  %v5805 = vunpack.c.l.b16 %v5782
  %v5806 = vunpack.c.l.b16 %v5783
  %v5807 = vunpack.c.l.b16 %v5784
  %v5808 = vunpack.c.l.b16 %v5785
  %v5809 = vunpack.c.l.b16 %v5786
  %v5810 = vunpack.c.l.b16 %v5787
  %v5811 = vunpack.c.l.b16 %v5788
  %v5812 = vunpack.c.l.b16 %v5789
  %v5813 = vpack.c.b16 %v5806, %v5805
  %v5814 = vpack.c.b16 %v5808, %v5807
  %v5815 = vpack.c.b16 %v5810, %v5809
  %v5816 = vpack.c.b16 %v5812, %v5811
  %vm5821 = vcmask 523264
  %v5823 = vsel %vm5821, %v5781, 0
  %5825 = vmatprep.subr.bf16.mxu0 0
  %5826 = vmatpush1.bf16.msra.mxu0 %v5813
  %5827 = vmatprep.subr.bf16.mxu0 0
  %5828 = vmatpush1.bf16.msra.mxu0 %v5814
  %5829 = vmatprep.subr.bf16.mxu0 0
  %5830 = vmatpush1.bf16.msra.mxu0 %v5815
  %5831 = vmatprep.subr.bf16.mxu0 0
  %5832 = vmatpush1.bf16.msra.mxu0 %v5816
  %5833 = vmatprep.subr.bf16.mxu0 0
  %5834 = vmatpush1.bf16.msra.mxu0 0
  %5835 = vmatprep.subr.bf16.mxu0 0
  %5836 = vmatpush1.bf16.msra.mxu0 0
  %5837 = vmatprep.subr.bf16.mxu0 0
  %5838 = vmatpush1.bf16.msra.mxu0 0
  %5839 = vmatprep.subr.bf16.mxu0 0
  %5840 = vmatpush1.bf16.msra.mxu0 0
  %5841 = vmatprep.subr.bf16.mxu0 0
  %5842 = vmatpush1.bf16.msra.mxu0 0
  %5843 = vmatprep.subr.bf16.mxu0 0
  %5844 = vmatpush1.bf16.msra.mxu0 0
  %5845 = vmatprep.subr.bf16.mxu0 0
  %5846 = vmatpush1.bf16.msra.mxu0 0
  %5847 = vmatprep.subr.bf16.mxu0 0
  %5848 = vmatpush1.bf16.msra.mxu0 0
  %5849 = vmatprep.subr.bf16.mxu0 0
  %5850 = vmatpush1.bf16.msra.mxu0 0
  %5851 = vmatprep.subr.bf16.mxu0 0
  %5852 = vmatpush1.bf16.msra.mxu0 0
  %5853 = vmatprep.subr.bf16.mxu0 0
  %5854 = vmatpush1.bf16.msra.mxu0 0
  %5855 = vmatprep.subr.bf16.mxu0 0
  %5856 = vmatpush1.bf16.msra.mxu0 0
  %5857 = vmatprep.mubr.bf16.mxu0 0
  %5858 = vmatmul.mubr.bf16.gmra.mrb[0].mxu0 %v5823
  %v5859 = vpop.f32.mrb[0].mxu0
  %v5860 = vadd.f32 %v5795, %v5859
  %v5861 = vpop.f32.mrb[0].mxu0
  %v5862 = vpop.f32.mrb[0].mxu0
  %v5863 = vpop.f32.mrb[0].mxu0
  %5864 = vdwg.mxu0
  %v5865 = vmul.f32 %v5860, 0.5
  %v5866 = vtanh.pop %v5865
  %v5867 = vmul.f32 %v5866, 0.5
  %v5868 = vadd.f32 %v5867, 0.5
  %vm5869 = vcmask 7168
  %5870 = vst.msk [vmem:[%s8] sm:$0xff] %vm5869, %v5868
  // Predicated region
  $region34: #{lstm_net_forward.1} parent=0 // pred_check
    _
  $region35: #{lstm_net_forward.1} parent=0 // pred_check_branch
    %5872 = sbr.rel (0) target = $region37
  $region36: #{lstm_net_forward.1} parent=0 // pred_region
    _
  $region37: #{lstm_net_forward.1} parent=0 // pred_fallthru
    _
  // Predicated region
  $region38: #{lstm_net_forward.1} parent=0 // pred_check
    _
  $region39: #{lstm_net_forward.1} parent=0 // pred_check_branch
    %5874 = sbr.rel (0) target = $region41
  $region40: #{lstm_net_forward.1} parent=0 // pred_region
    _
  $region41: #{lstm_net_forward.1} parent=0 // pred_fallthru
    _

</llo_original>
